<compile_context>
chip_gen: v7x
topology: tpu7x:2x2x1
jax: 0.10.0
libtpu: 0.0.40
codegen_flags: <defaults>
</compile_context>

<pallas_src>
import jax
import jax.numpy as jnp
from jax import lax
from jax.experimental import pallas as pl
from jax.experimental.pallas import tpu as pltpu

C_OUT = 10
KH = KW = 3
H_IN = W_IN = 32
HW = H_IN * W_IN                 # 1024 -- flattened image, lane axis
H_CONV = H_IN - KH + 1           # 30
W_CONV = W_IN - KW + 1           # 30
H_POOL = H_CONV // 2             # 15
W_POOL = W_CONV // 2             # 15
P = H_POOL * W_POOL              # 225
FC_IN = C_OUT * P                # 2250
FC_OUT = 10
STRIP = 8                        # sublane strip: keeps the conv chain in vregs

# flat lane offset of conv tap (di, dj): di*32 + dj  (no row wrap for w+dj <= 31)
TAP_OFFSETS = tuple(di * W_IN + dj for di in range(KH) for dj in range(KW))


def _round_up(a, b):
    return (a + b - 1) // b * b


def _roll_left(a, off):
    """out[:, j] = a[:, (j + off) % n].  pltpu.roll follows the jnp.roll convention
    (positive shift moves elements toward higher indices), so left-shift by `off`
    is a right-rotate by n - off."""
    n = a.shape[-1]
    off = off % n
    if off == 0:
        return a
    return pltpu.roll(a, n - off, 1)


def _fused_kernel(x_ref, cw_ref, cb_ref, w_ref, fb_ref, out_ref, pm_ref):
    # x_ref : (TN, 1024)        f32 VMEM  -- flattened 32x32 images
    # cw_ref: (90,)             f32 SMEM  -- conv weight flattened (oc, kh, kw)
    # cb_ref: (10,)             f32 SMEM  -- conv bias
    # w_ref : (10, 1024, 10)    bf16 VMEM -- pool-select+flatten+FC matrix per oc
    # fb_ref: (1, 10)           f32 VMEM  -- FC bias
    # out_ref:(TN, 10)          f32 VMEM
    # pm_ref: (10, TN, 1024)    f32 VMEM scratch -- pooled maps (only valid at
    #                                               even (h,w) lanes; the rest
    #                                               hits zero weight rows)
    tn = x_ref.shape[0]
    n_strips = tn // STRIP

    # --- Phase 1: conv + bias + ReLU + 2x2 max-pool, one 8-row strip at a time.
    # Per strip everything is (8, 1024) = 8 vregs, so the whole 9-tap accumulate
    # and the two pool maxes stay in registers (VPU/XLU bound, no VMEM ping-pong).
    def strip_body(s, carry):
        r0 = pl.multiple_of(s * STRIP, STRIP)
        x_s = x_ref[pl.ds(r0, STRIP), :]
        # Nine shifted copies of the strip, shared by all 10 output channels (XLU).
        xr = [_roll_left(x_s, off) for off in TAP_OFFSETS]
        for oc in range(C_OUT):
            base = oc * KH * KW
            acc = cw_ref[base] * xr[0] + cb_ref[oc]
            for t in range(1, KH * KW):
                acc = acc + cw_ref[base + t] * xr[t]
            acc = jnp.maximum(acc, 0.0)                      # ReLU
            # 2x2 stride-2 max-pool via max-of-shifted; only even (h,w) lanes are
            # consumed by the FC slab, so wrapped lanes never matter.
            m = jnp.maximum(acc, _roll_left(acc, 1))         # horizontal pair max
            m = jnp.maximum(m, _roll_left(m, W_IN))          # vertical pair max
            # (second ReLU of the reference is a no-op: m >= 0 already)
            pm_ref[oc, pl.ds(r0, STRIP), :] = m
        return carry

    lax.fori_loop(0, n_strips, strip_body, 0)

    # --- Phase 2: pool-cell selection + flatten + FC as 10 MXU matmuls over the
    # whole batch tile (weight loads amortized over TN rows).  bf16 operands,
    # f32 accumulation.
    out = jnp.zeros(out_ref.shape, jnp.float32)
    for oc in range(C_OUT):
        lhs = pm_ref[oc].astype(jnp.bfloat16)                # (TN, 1024)
        out = out + jnp.dot(lhs, w_ref[oc], preferred_element_type=jnp.float32)
    out_ref[...] = out + fb_ref[...]


def _build_combined_fc(fc_w):
    """Fold pool-cell selection + PyTorch (C,H,W)-order flatten + FC weights into
    one (C_OUT, 1024, FC_OUT) bf16 slab, using interleave/pad/reshape (no scatter).
    Cheap enough to trace per call; constant-folds for literal weights."""
    w = fc_w.astype(jnp.float32).T.reshape(C_OUT, H_POOL, W_POOL, FC_OUT)
    # interleave zeros along W: (C,15,15,O) -> (C,15,30,O), nonzero at even w
    w = jnp.stack([w, jnp.zeros_like(w)], axis=3).reshape(C_OUT, H_POOL, 2 * W_POOL, FC_OUT)
    w = jnp.pad(w, ((0, 0), (0, 0), (0, W_IN - 2 * W_POOL), (0, 0)))        # 30 -> 32
    # interleave zeros along H: (C,15,32,O) -> (C,30,32,O), nonzero at even h
    w = jnp.stack([w, jnp.zeros_like(w)], axis=2).reshape(C_OUT, 2 * H_POOL, W_IN, FC_OUT)
    w = jnp.pad(w, ((0, 0), (0, H_IN - 2 * H_POOL), (0, 0), (0, 0)))        # 30 -> 32
    return w.reshape(C_OUT, HW, FC_OUT).astype(jnp.bfloat16)


def study_net_forward(x, conv_w, conv_b, fc_w, fc_b, *, batch_tile=256):
    """x: (N, 1, 32, 32) float32 NCHW.  Returns (N, 10) float32 logits."""
    n = x.shape[0]
    x_flat = x.astype(jnp.float32).reshape(n, HW)             # lane-dense (N, 1024)

    # Batch tile: multiple of the strip (8), capped at batch_tile (<=256 keeps v7x's
    # 64 MiB VMEM safe), and small enough that the grid has >=2 steps whenever the
    # batch allows it, so v7x's two TensorCores both get work.
    n8 = _round_up(max(n, 1), 8)
    half = _round_up((n8 + 1) // 2, 8)
    tn = max(STRIP, min(_round_up(batch_tile, 8), half))
    n_pad = _round_up(n, tn)
    if n_pad != n:
        x_flat = jnp.pad(x_flat, ((0, n_pad - n), (0, 0)))    # zero rows, sliced off

    combined_w = _build_combined_fc(fc_w)                     # (10, 1024, 10) bf16

    out = pl.pallas_call(
        _fused_kernel,
        out_shape=jax.ShapeDtypeStruct((n_pad, FC_OUT), jnp.float32),
        grid=(n_pad // tn,),
        in_specs=[
            pl.BlockSpec((tn, HW), lambda i: (i, 0)),                    # images
            pl.BlockSpec(memory_space=pltpu.MemorySpace.SMEM),           # conv w (90,)
            pl.BlockSpec(memory_space=pltpu.MemorySpace.SMEM),           # conv b (10,)
            pl.BlockSpec((C_OUT, HW, FC_OUT), lambda i: (0, 0, 0)),      # fused FC W
            pl.BlockSpec((1, FC_OUT), lambda i: (0, 0)),                 # fc bias
        ],
        out_specs=pl.BlockSpec((tn, FC_OUT), lambda i: (i, 0)),
        scratch_shapes=[pltpu.VMEM((C_OUT, tn, HW), jnp.float32)],       # pooled maps
        compiler_params=pltpu.CompilerParams(
            dimension_semantics=("parallel",),      # shard batch tiles across TCs (v7x)
            vmem_limit_bytes=32 * 1024 * 1024,      # safe on v5e/v6e/v7x
        ),
    )(x_flat,
      conv_w.reshape(-1).astype(jnp.float32),
      conv_b.astype(jnp.float32),
      combined_w,
      fc_b.reshape(1, FC_OUT).astype(jnp.float32))
    return out[:n]


def reference_forward(x, conv_w, conv_b, fc_w, fc_b):
    """Pure-JAX reference matching the PyTorch forward."""
    y = lax.conv_general_dilated(
        x, conv_w, (1, 1), "VALID",
        dimension_numbers=("NCHW", "OIHW", "NCHW"),
        precision=lax.Precision.HIGHEST)
    y = y + conv_b.reshape(1, -1, 1, 1)
    y = jnp.maximum(y, 0.0)
    y = lax.reduce_window(y, -jnp.inf, lax.max,
                          (1, 1, 2, 2), (1, 1, 2, 2), "VALID")
    y = jnp.maximum(y, 0.0)
    y = y.reshape(y.shape[0], -1)
    return jnp.dot(y, fc_w.T, precision=lax.Precision.HIGHEST) + fc_b


if __name__ == "__main__":
    key = jax.random.PRNGKey(0)
    kx, kw1, kb1, kw2, kb2 = jax.random.split(key, 5)

    # Linear(2250, 10) implies a (N, 1, 32, 32) input (conv->30x30, pool->15x15).
    # N=12 exercises batch padding (to 16) and a 2-step grid (2 TC sharding on v7x).
    N = 12
    x = jax.random.normal(kx, (N, 1, H_IN, W_IN), jnp.float32)
    conv_w = jax.random.normal(kw1, (C_OUT, 1, KH, KW), jnp.float32) * 0.1
    conv_b = jax.random.normal(kb1, (C_OUT,), jnp.float32) * 0.1
    fc_w = jax.random.normal(kw2, (FC_OUT, FC_IN), jnp.float32) * 0.02  # PyTorch layout
    fc_b = jax.random.normal(kb2, (FC_OUT,), jnp.float32) * 0.02

    fwd = jax.jit(study_net_forward)   # wrapper is now trace-safe (no runtime probe)
    out = jax.block_until_ready(fwd(x, conv_w, conv_b, fc_w, fc_b))
    ref = jax.block_until_ready(reference_forward(x, conv_w, conv_b, fc_w, fc_b))

    assert out.shape == (N, FC_OUT), out.shape
    # FC matmul uses bf16 operands (f32 accumulation) per the perf review, so the
    # tolerance vs. the HIGHEST-precision f32 reference is deliberately loosened.
    assert jnp.allclose(out, ref, rtol=1e-2, atol=1e-2), (out, ref)
    print("KERNEL_OK")
</pallas_src>

<mosaic_0001>
module attributes {stable_mosaic.version = 11 : i64} {
  func.func @_fused_kernel(%arg0: i32, %arg1: memref<8x1024xf32, #tpu.memory_space<vmem>>, %arg2: memref<90xf32, #tpu.memory_space<smem>>, %arg3: memref<10xf32, #tpu.memory_space<smem>>, %arg4: memref<10x1024x10xbf16, #tpu.memory_space<vmem>>, %arg5: memref<1x10xf32, #tpu.memory_space<vmem>>, %arg6: memref<8x10xf32, #tpu.memory_space<vmem>>, %arg7: memref<10x8x1024xf32, #tpu.memory_space<vmem>>) attributes {dimension_semantics = [#tpu.dimension_semantics<parallel>], iteration_bounds = array<i64: 2>, scalar_prefetch = 0 : i64, scratch_operands = 1 : i64, tpu.core_type = #tpu.core_type<tc>, window_params = [{transform_indices = @transform_0, window_bounds = array<i64: 8, 1024>}, {transform_indices = @transform_1, window_bounds = array<i64: 90>}, {transform_indices = @transform_2, window_bounds = array<i64: 10>}, {pipeline_mode = #tpu.pipeline_mode<synchronous>, transform_indices = @transform_3, window_bounds = array<i64: 10, 1024, 10>}, {pipeline_mode = #tpu.pipeline_mode<synchronous>, transform_indices = @transform_4, window_bounds = array<i64: 1, 10>}, {transform_indices = @transform_5, window_bounds = array<i64: 8, 10>}]} {
    %c0_i32 = arith.constant 0 : i32
    %c8_i32 = arith.constant 8 : i32
    %0 = arith.muli %c0_i32, %c8_i32 : i32
    %1 = tpu.assume_multiple %0, 8 : i32
    %2 = arith.index_cast %1 : i32 to index
    %c0 = arith.constant 0 : index
    %3 = vector.load %arg1[%2, %c0] : memref<8x1024xf32, #tpu.memory_space<vmem>>, vector<8x1024xf32>
    %c1023_i32 = arith.constant 1023 : i32
    %4 = tpu.dynamic_rotate %3 by %c1023_i32 dim 1 : vector<8x1024xf32>, i32 -> vector<8x1024xf32>
    %c1022_i32 = arith.constant 1022 : i32
    %5 = tpu.dynamic_rotate %3 by %c1022_i32 dim 1 : vector<8x1024xf32>, i32 -> vector<8x1024xf32>
    %c992_i32 = arith.constant 992 : i32
    %6 = tpu.dynamic_rotate %3 by %c992_i32 dim 1 : vector<8x1024xf32>, i32 -> vector<8x1024xf32>
    %c991_i32 = arith.constant 991 : i32
    %7 = tpu.dynamic_rotate %3 by %c991_i32 dim 1 : vector<8x1024xf32>, i32 -> vector<8x1024xf32>
    %c990_i32 = arith.constant 990 : i32
    %8 = tpu.dynamic_rotate %3 by %c990_i32 dim 1 : vector<8x1024xf32>, i32 -> vector<8x1024xf32>
    %c960_i32 = arith.constant 960 : i32
    %9 = tpu.dynamic_rotate %3 by %c960_i32 dim 1 : vector<8x1024xf32>, i32 -> vector<8x1024xf32>
    %c959_i32 = arith.constant 959 : i32
    %10 = tpu.dynamic_rotate %3 by %c959_i32 dim 1 : vector<8x1024xf32>, i32 -> vector<8x1024xf32>
    %c958_i32 = arith.constant 958 : i32
    %11 = tpu.dynamic_rotate %3 by %c958_i32 dim 1 : vector<8x1024xf32>, i32 -> vector<8x1024xf32>
    %c0_0 = arith.constant 0 : index
    %12 = memref.load %arg2[%c0_0] : memref<90xf32, #tpu.memory_space<smem>>
    %13 = vector.broadcast %12 : f32 to vector<8x1024xf32>
    %14 = arith.mulf %13, %3 : vector<8x1024xf32>
    %c0_1 = arith.constant 0 : index
    %15 = memref.load %arg3[%c0_1] : memref<10xf32, #tpu.memory_space<smem>>
    %16 = vector.broadcast %15 : f32 to vector<8x1024xf32>
    %17 = arith.addf %14, %16 : vector<8x1024xf32>
    %c1 = arith.constant 1 : index
    %18 = memref.load %arg2[%c1] : memref<90xf32, #tpu.memory_space<smem>>
    %19 = vector.broadcast %18 : f32 to vector<8x1024xf32>
    %20 = arith.mulf %19, %4 : vector<8x1024xf32>
    %21 = arith.addf %17, %20 : vector<8x1024xf32>
    %c2 = arith.constant 2 : index
    %22 = memref.load %arg2[%c2] : memref<90xf32, #tpu.memory_space<smem>>
    %23 = vector.broadcast %22 : f32 to vector<8x1024xf32>
    %24 = arith.mulf %23, %5 : vector<8x1024xf32>
    %25 = arith.addf %21, %24 : vector<8x1024xf32>
    %c3 = arith.constant 3 : index
    %26 = memref.load %arg2[%c3] : memref<90xf32, #tpu.memory_space<smem>>
    %27 = vector.broadcast %26 : f32 to vector<8x1024xf32>
    %28 = arith.mulf %27, %6 : vector<8x1024xf32>
    %29 = arith.addf %25, %28 : vector<8x1024xf32>
    %c4 = arith.constant 4 : index
    %30 = memref.load %arg2[%c4] : memref<90xf32, #tpu.memory_space<smem>>
    %31 = vector.broadcast %30 : f32 to vector<8x1024xf32>
    %32 = arith.mulf %31, %7 : vector<8x1024xf32>
    %33 = arith.addf %29, %32 : vector<8x1024xf32>
    %c5 = arith.constant 5 : index
    %34 = memref.load %arg2[%c5] : memref<90xf32, #tpu.memory_space<smem>>
    %35 = vector.broadcast %34 : f32 to vector<8x1024xf32>
    %36 = arith.mulf %35, %8 : vector<8x1024xf32>
    %37 = arith.addf %33, %36 : vector<8x1024xf32>
    %c6 = arith.constant 6 : index
    %38 = memref.load %arg2[%c6] : memref<90xf32, #tpu.memory_space<smem>>
    %39 = vector.broadcast %38 : f32 to vector<8x1024xf32>
    %40 = arith.mulf %39, %9 : vector<8x1024xf32>
    %41 = arith.addf %37, %40 : vector<8x1024xf32>
    %c7 = arith.constant 7 : index
    %42 = memref.load %arg2[%c7] : memref<90xf32, #tpu.memory_space<smem>>
    %43 = vector.broadcast %42 : f32 to vector<8x1024xf32>
    %44 = arith.mulf %43, %10 : vector<8x1024xf32>
    %45 = arith.addf %41, %44 : vector<8x1024xf32>
    %c8 = arith.constant 8 : index
    %46 = memref.load %arg2[%c8] : memref<90xf32, #tpu.memory_space<smem>>
    %47 = vector.broadcast %46 : f32 to vector<8x1024xf32>
    %48 = arith.mulf %47, %11 : vector<8x1024xf32>
    %49 = arith.addf %45, %48 : vector<8x1024xf32>
    %cst = arith.constant 0.000000e+00 : f32
    %50 = vector.broadcast %cst : f32 to vector<8x1024xf32>
    %51 = arith.maximumf %49, %50 : vector<8x1024xf32>
    %c1023_i32_2 = arith.constant 1023 : i32
    %52 = tpu.dynamic_rotate %51 by %c1023_i32_2 dim 1 : vector<8x1024xf32>, i32 -> vector<8x1024xf32>
    %53 = arith.maximumf %51, %52 : vector<8x1024xf32>
    %c992_i32_3 = arith.constant 992 : i32
    %54 = tpu.dynamic_rotate %53 by %c992_i32_3 dim 1 : vector<8x1024xf32>, i32 -> vector<8x1024xf32>
    %55 = arith.maximumf %53, %54 : vector<8x1024xf32>
    %c0_4 = arith.constant 0 : index
    %56 = arith.index_cast %1 : i32 to index
    %c0_5 = arith.constant 0 : index
    %57 = vector.load %arg7[%c0_4, %56, %c0_5] : memref<10x8x1024xf32, #tpu.memory_space<vmem>>, vector<1x8x1024xf32>
    %58 = vector.shape_cast %57 : vector<1x8x1024xf32> to vector<8x1024xf32>
    %59 = vector.shape_cast %55 : vector<8x1024xf32> to vector<1x8x1024xf32>
    tpu.vector_store %arg7[%c0_4, %56, %c0_5], %59 {strides = array<i32>} : memref<10x8x1024xf32, #tpu.memory_space<vmem>>, vector<1x8x1024xf32>,
    %c9 = arith.constant 9 : index
    %60 = memref.load %arg2[%c9] : memref<90xf32, #tpu.memory_space<smem>>
    %61 = vector.broadcast %60 : f32 to vector<8x1024xf32>
    %62 = arith.mulf %61, %3 : vector<8x1024xf32>
    %c1_6 = arith.constant 1 : index
    %63 = memref.load %arg3[%c1_6] : memref<10xf32, #tpu.memory_space<smem>>
    %64 = vector.broadcast %63 : f32 to vector<8x1024xf32>
    %65 = arith.addf %62, %64 : vector<8x1024xf32>
    %c10 = arith.constant 10 : index
    %66 = memref.load %arg2[%c10] : memref<90xf32, #tpu.memory_space<smem>>
    %67 = vector.broadcast %66 : f32 to vector<8x1024xf32>
    %68 = arith.mulf %67, %4 : vector<8x1024xf32>
    %69 = arith.addf %65, %68 : vector<8x1024xf32>
    %c11 = arith.constant 11 : index
    %70 = memref.load %arg2[%c11] : memref<90xf32, #tpu.memory_space<smem>>
    %71 = vector.broadcast %70 : f32 to vector<8x1024xf32>
    %72 = arith.mulf %71, %5 : vector<8x1024xf32>
    %73 = arith.addf %69, %72 : vector<8x1024xf32>
    %c12 = arith.constant 12 : index
    %74 = memref.load %arg2[%c12] : memref<90xf32, #tpu.memory_space<smem>>
    %75 = vector.broadcast %74 : f32 to vector<8x1024xf32>
    %76 = arith.mulf %75, %6 : vector<8x1024xf32>
    %77 = arith.addf %73, %76 : vector<8x1024xf32>
    %c13 = arith.constant 13 : index
    %78 = memref.load %arg2[%c13] : memref<90xf32, #tpu.memory_space<smem>>
    %79 = vector.broadcast %78 : f32 to vector<8x1024xf32>
    %80 = arith.mulf %79, %7 : vector<8x1024xf32>
    %81 = arith.addf %77, %80 : vector<8x1024xf32>
    %c14 = arith.constant 14 : index
    %82 = memref.load %arg2[%c14] : memref<90xf32, #tpu.memory_space<smem>>
    %83 = vector.broadcast %82 : f32 to vector<8x1024xf32>
    %84 = arith.mulf %83, %8 : vector<8x1024xf32>
    %85 = arith.addf %81, %84 : vector<8x1024xf32>
    %c15 = arith.constant 15 : index
    %86 = memref.load %arg2[%c15] : memref<90xf32, #tpu.memory_space<smem>>
    %87 = vector.broadcast %86 : f32 to vector<8x1024xf32>
    %88 = arith.mulf %87, %9 : vector<8x1024xf32>
    %89 = arith.addf %85, %88 : vector<8x1024xf32>
    %c16 = arith.constant 16 : index
    %90 = memref.load %arg2[%c16] : memref<90xf32, #tpu.memory_space<smem>>
    %91 = vector.broadcast %90 : f32 to vector<8x1024xf32>
    %92 = arith.mulf %91, %10 : vector<8x1024xf32>
    %93 = arith.addf %89, %92 : vector<8x1024xf32>
    %c17 = arith.constant 17 : index
    %94 = memref.load %arg2[%c17] : memref<90xf32, #tpu.memory_space<smem>>
    %95 = vector.broadcast %94 : f32 to vector<8x1024xf32>
    %96 = arith.mulf %95, %11 : vector<8x1024xf32>
    %97 = arith.addf %93, %96 : vector<8x1024xf32>
    %cst_7 = arith.constant 0.000000e+00 : f32
    %98 = vector.broadcast %cst_7 : f32 to vector<8x1024xf32>
    %99 = arith.maximumf %97, %98 : vector<8x1024xf32>
    %c1023_i32_8 = arith.constant 1023 : i32
    %100 = tpu.dynamic_rotate %99 by %c1023_i32_8 dim 1 : vector<8x1024xf32>, i32 -> vector<8x1024xf32>
    %101 = arith.maximumf %99, %100 : vector<8x1024xf32>
    %c992_i32_9 = arith.constant 992 : i32
    %102 = tpu.dynamic_rotate %101 by %c992_i32_9 dim 1 : vector<8x1024xf32>, i32 -> vector<8x1024xf32>
    %103 = arith.maximumf %101, %102 : vector<8x1024xf32>
    %c1_10 = arith.constant 1 : index
    %104 = arith.index_cast %1 : i32 to index
    %c0_11 = arith.constant 0 : index
    %105 = vector.load %arg7[%c1_10, %104, %c0_11] : memref<10x8x1024xf32, #tpu.memory_space<vmem>>, vector<1x8x1024xf32>
    %106 = vector.shape_cast %105 : vector<1x8x1024xf32> to vector<8x1024xf32>
    %107 = vector.shape_cast %103 : vector<8x1024xf32> to vector<1x8x1024xf32>
    tpu.vector_store %arg7[%c1_10, %104, %c0_11], %107 {strides = array<i32>} : memref<10x8x1024xf32, #tpu.memory_space<vmem>>, vector<1x8x1024xf32>,
    %c18 = arith.constant 18 : index
    %108 = memref.load %arg2[%c18] : memref<90xf32, #tpu.memory_space<smem>>
    %109 = vector.broadcast %108 : f32 to vector<8x1024xf32>
    %110 = arith.mulf %109, %3 : vector<8x1024xf32>
    %c2_12 = arith.constant 2 : index
    %111 = memref.load %arg3[%c2_12] : memref<10xf32, #tpu.memory_space<smem>>
    %112 = vector.broadcast %111 : f32 to vector<8x1024xf32>
    %113 = arith.addf %110, %112 : vector<8x1024xf32>
    %c19 = arith.constant 19 : index
    %114 = memref.load %arg2[%c19] : memref<90xf32, #tpu.memory_space<smem>>
    %115 = vector.broadcast %114 : f32 to vector<8x1024xf32>
    %116 = arith.mulf %115, %4 : vector<8x1024xf32>
    %117 = arith.addf %113, %116 : vector<8x1024xf32>
    %c20 = arith.constant 20 : index
    %118 = memref.load %arg2[%c20] : memref<90xf32, #tpu.memory_space<smem>>
    %119 = vector.broadcast %118 : f32 to vector<8x1024xf32>
    %120 = arith.mulf %119, %5 : vector<8x1024xf32>
    %121 = arith.addf %117, %120 : vector<8x1024xf32>
    %c21 = arith.constant 21 : index
    %122 = memref.load %arg2[%c21] : memref<90xf32, #tpu.memory_space<smem>>
    %123 = vector.broadcast %122 : f32 to vector<8x1024xf32>
    %124 = arith.mulf %123, %6 : vector<8x1024xf32>
    %125 = arith.addf %121, %124 : vector<8x1024xf32>
    %c22 = arith.constant 22 : index
    %126 = memref.load %arg2[%c22] : memref<90xf32, #tpu.memory_space<smem>>
    %127 = vector.broadcast %126 : f32 to vector<8x1024xf32>
    %128 = arith.mulf %127, %7 : vector<8x1024xf32>
    %129 = arith.addf %125, %128 : vector<8x1024xf32>
    %c23 = arith.constant 23 : index
    %130 = memref.load %arg2[%c23] : memref<90xf32, #tpu.memory_space<smem>>
    %131 = vector.broadcast %130 : f32 to vector<8x1024xf32>
    %132 = arith.mulf %131, %8 : vector<8x1024xf32>
    %133 = arith.addf %129, %132 : vector<8x1024xf32>
    %c24 = arith.constant 24 : index
    %134 = memref.load %arg2[%c24] : memref<90xf32, #tpu.memory_space<smem>>
    %135 = vector.broadcast %134 : f32 to vector<8x1024xf32>
    %136 = arith.mulf %135, %9 : vector<8x1024xf32>
    %137 = arith.addf %133, %136 : vector<8x1024xf32>
    %c25 = arith.constant 25 : index
    %138 = memref.load %arg2[%c25] : memref<90xf32, #tpu.memory_space<smem>>
    %139 = vector.broadcast %138 : f32 to vector<8x1024xf32>
    %140 = arith.mulf %139, %10 : vector<8x1024xf32>
    %141 = arith.addf %137, %140 : vector<8x1024xf32>
    %c26 = arith.constant 26 : index
    %142 = memref.load %arg2[%c26] : memref<90xf32, #tpu.memory_space<smem>>
    %143 = vector.broadcast %142 : f32 to vector<8x1024xf32>
    %144 = arith.mulf %143, %11 : vector<8x1024xf32>
    %145 = arith.addf %141, %144 : vector<8x1024xf32>
    %cst_13 = arith.constant 0.000000e+00 : f32
    %146 = vector.broadcast %cst_13 : f32 to vector<8x1024xf32>
    %147 = arith.maximumf %145, %146 : vector<8x1024xf32>
    %c1023_i32_14 = arith.constant 1023 : i32
    %148 = tpu.dynamic_rotate %147 by %c1023_i32_14 dim 1 : vector<8x1024xf32>, i32 -> vector<8x1024xf32>
    %149 = arith.maximumf %147, %148 : vector<8x1024xf32>
    %c992_i32_15 = arith.constant 992 : i32
    %150 = tpu.dynamic_rotate %149 by %c992_i32_15 dim 1 : vector<8x1024xf32>, i32 -> vector<8x1024xf32>
    %151 = arith.maximumf %149, %150 : vector<8x1024xf32>
    %c2_16 = arith.constant 2 : index
    %152 = arith.index_cast %1 : i32 to index
    %c0_17 = arith.constant 0 : index
    %153 = vector.load %arg7[%c2_16, %152, %c0_17] : memref<10x8x1024xf32, #tpu.memory_space<vmem>>, vector<1x8x1024xf32>
    %154 = vector.shape_cast %153 : vector<1x8x1024xf32> to vector<8x1024xf32>
    %155 = vector.shape_cast %151 : vector<8x1024xf32> to vector<1x8x1024xf32>
    tpu.vector_store %arg7[%c2_16, %152, %c0_17], %155 {strides = array<i32>} : memref<10x8x1024xf32, #tpu.memory_space<vmem>>, vector<1x8x1024xf32>,
    %c27 = arith.constant 27 : index
    %156 = memref.load %arg2[%c27] : memref<90xf32, #tpu.memory_space<smem>>
    %157 = vector.broadcast %156 : f32 to vector<8x1024xf32>
    %158 = arith.mulf %157, %3 : vector<8x1024xf32>
    %c3_18 = arith.constant 3 : index
    %159 = memref.load %arg3[%c3_18] : memref<10xf32, #tpu.memory_space<smem>>
    %160 = vector.broadcast %159 : f32 to vector<8x1024xf32>
    %161 = arith.addf %158, %160 : vector<8x1024xf32>
    %c28 = arith.constant 28 : index
    %162 = memref.load %arg2[%c28] : memref<90xf32, #tpu.memory_space<smem>>
    %163 = vector.broadcast %162 : f32 to vector<8x1024xf32>
    %164 = arith.mulf %163, %4 : vector<8x1024xf32>
    %165 = arith.addf %161, %164 : vector<8x1024xf32>
    %c29 = arith.constant 29 : index
    %166 = memref.load %arg2[%c29] : memref<90xf32, #tpu.memory_space<smem>>
    %167 = vector.broadcast %166 : f32 to vector<8x1024xf32>
    %168 = arith.mulf %167, %5 : vector<8x1024xf32>
    %169 = arith.addf %165, %168 : vector<8x1024xf32>
    %c30 = arith.constant 30 : index
    %170 = memref.load %arg2[%c30] : memref<90xf32, #tpu.memory_space<smem>>
    %171 = vector.broadcast %170 : f32 to vector<8x1024xf32>
    %172 = arith.mulf %171, %6 : vector<8x1024xf32>
    %173 = arith.addf %169, %172 : vector<8x1024xf32>
    %c31 = arith.constant 31 : index
    %174 = memref.load %arg2[%c31] : memref<90xf32, #tpu.memory_space<smem>>
    %175 = vector.broadcast %174 : f32 to vector<8x1024xf32>
    %176 = arith.mulf %175, %7 : vector<8x1024xf32>
    %177 = arith.addf %173, %176 : vector<8x1024xf32>
    %c32 = arith.constant 32 : index
    %178 = memref.load %arg2[%c32] : memref<90xf32, #tpu.memory_space<smem>>
    %179 = vector.broadcast %178 : f32 to vector<8x1024xf32>
    %180 = arith.mulf %179, %8 : vector<8x1024xf32>
    %181 = arith.addf %177, %180 : vector<8x1024xf32>
    %c33 = arith.constant 33 : index
    %182 = memref.load %arg2[%c33] : memref<90xf32, #tpu.memory_space<smem>>
    %183 = vector.broadcast %182 : f32 to vector<8x1024xf32>
    %184 = arith.mulf %183, %9 : vector<8x1024xf32>
    %185 = arith.addf %181, %184 : vector<8x1024xf32>
    %c34 = arith.constant 34 : index
    %186 = memref.load %arg2[%c34] : memref<90xf32, #tpu.memory_space<smem>>
    %187 = vector.broadcast %186 : f32 to vector<8x1024xf32>
    %188 = arith.mulf %187, %10 : vector<8x1024xf32>
    %189 = arith.addf %185, %188 : vector<8x1024xf32>
    %c35 = arith.constant 35 : index
    %190 = memref.load %arg2[%c35] : memref<90xf32, #tpu.memory_space<smem>>
    %191 = vector.broadcast %190 : f32 to vector<8x1024xf32>
    %192 = arith.mulf %191, %11 : vector<8x1024xf32>
    %193 = arith.addf %189, %192 : vector<8x1024xf32>
    %cst_19 = arith.constant 0.000000e+00 : f32
    %194 = vector.broadcast %cst_19 : f32 to vector<8x1024xf32>
    %195 = arith.maximumf %193, %194 : vector<8x1024xf32>
    %c1023_i32_20 = arith.constant 1023 : i32
    %196 = tpu.dynamic_rotate %195 by %c1023_i32_20 dim 1 : vector<8x1024xf32>, i32 -> vector<8x1024xf32>
    %197 = arith.maximumf %195, %196 : vector<8x1024xf32>
    %c992_i32_21 = arith.constant 992 : i32
    %198 = tpu.dynamic_rotate %197 by %c992_i32_21 dim 1 : vector<8x1024xf32>, i32 -> vector<8x1024xf32>
    %199 = arith.maximumf %197, %198 : vector<8x1024xf32>
    %c3_22 = arith.constant 3 : index
    %200 = arith.index_cast %1 : i32 to index
    %c0_23 = arith.constant 0 : index
    %201 = vector.load %arg7[%c3_22, %200, %c0_23] : memref<10x8x1024xf32, #tpu.memory_space<vmem>>, vector<1x8x1024xf32>
    %202 = vector.shape_cast %201 : vector<1x8x1024xf32> to vector<8x1024xf32>
    %203 = vector.shape_cast %199 : vector<8x1024xf32> to vector<1x8x1024xf32>
    tpu.vector_store %arg7[%c3_22, %200, %c0_23], %203 {strides = array<i32>} : memref<10x8x1024xf32, #tpu.memory_space<vmem>>, vector<1x8x1024xf32>,
    %c36 = arith.constant 36 : index
    %204 = memref.load %arg2[%c36] : memref<90xf32, #tpu.memory_space<smem>>
    %205 = vector.broadcast %204 : f32 to vector<8x1024xf32>
    %206 = arith.mulf %205, %3 : vector<8x1024xf32>
    %c4_24 = arith.constant 4 : index
    %207 = memref.load %arg3[%c4_24] : memref<10xf32, #tpu.memory_space<smem>>
    %208 = vector.broadcast %207 : f32 to vector<8x1024xf32>
    %209 = arith.addf %206, %208 : vector<8x1024xf32>
    %c37 = arith.constant 37 : index
    %210 = memref.load %arg2[%c37] : memref<90xf32, #tpu.memory_space<smem>>
    %211 = vector.broadcast %210 : f32 to vector<8x1024xf32>
    %212 = arith.mulf %211, %4 : vector<8x1024xf32>
    %213 = arith.addf %209, %212 : vector<8x1024xf32>
    %c38 = arith.constant 38 : index
    %214 = memref.load %arg2[%c38] : memref<90xf32, #tpu.memory_space<smem>>
    %215 = vector.broadcast %214 : f32 to vector<8x1024xf32>
    %216 = arith.mulf %215, %5 : vector<8x1024xf32>
    %217 = arith.addf %213, %216 : vector<8x1024xf32>
    %c39 = arith.constant 39 : index
    %218 = memref.load %arg2[%c39] : memref<90xf32, #tpu.memory_space<smem>>
    %219 = vector.broadcast %218 : f32 to vector<8x1024xf32>
    %220 = arith.mulf %219, %6 : vector<8x1024xf32>
    %221 = arith.addf %217, %220 : vector<8x1024xf32>
    %c40 = arith.constant 40 : index
    %222 = memref.load %arg2[%c40] : memref<90xf32, #tpu.memory_space<smem>>
    %223 = vector.broadcast %222 : f32 to vector<8x1024xf32>
    %224 = arith.mulf %223, %7 : vector<8x1024xf32>
    %225 = arith.addf %221, %224 : vector<8x1024xf32>
    %c41 = arith.constant 41 : index
    %226 = memref.load %arg2[%c41] : memref<90xf32, #tpu.memory_space<smem>>
    %227 = vector.broadcast %226 : f32 to vector<8x1024xf32>
    %228 = arith.mulf %227, %8 : vector<8x1024xf32>
    %229 = arith.addf %225, %228 : vector<8x1024xf32>
    %c42 = arith.constant 42 : index
    %230 = memref.load %arg2[%c42] : memref<90xf32, #tpu.memory_space<smem>>
    %231 = vector.broadcast %230 : f32 to vector<8x1024xf32>
    %232 = arith.mulf %231, %9 : vector<8x1024xf32>
    %233 = arith.addf %229, %232 : vector<8x1024xf32>
    %c43 = arith.constant 43 : index
    %234 = memref.load %arg2[%c43] : memref<90xf32, #tpu.memory_space<smem>>
    %235 = vector.broadcast %234 : f32 to vector<8x1024xf32>
    %236 = arith.mulf %235, %10 : vector<8x1024xf32>
    %237 = arith.addf %233, %236 : vector<8x1024xf32>
    %c44 = arith.constant 44 : index
    %238 = memref.load %arg2[%c44] : memref<90xf32, #tpu.memory_space<smem>>
    %239 = vector.broadcast %238 : f32 to vector<8x1024xf32>
    %240 = arith.mulf %239, %11 : vector<8x1024xf32>
    %241 = arith.addf %237, %240 : vector<8x1024xf32>
    %cst_25 = arith.constant 0.000000e+00 : f32
    %242 = vector.broadcast %cst_25 : f32 to vector<8x1024xf32>
    %243 = arith.maximumf %241, %242 : vector<8x1024xf32>
    %c1023_i32_26 = arith.constant 1023 : i32
    %244 = tpu.dynamic_rotate %243 by %c1023_i32_26 dim 1 : vector<8x1024xf32>, i32 -> vector<8x1024xf32>
    %245 = arith.maximumf %243, %244 : vector<8x1024xf32>
    %c992_i32_27 = arith.constant 992 : i32
    %246 = tpu.dynamic_rotate %245 by %c992_i32_27 dim 1 : vector<8x1024xf32>, i32 -> vector<8x1024xf32>
    %247 = arith.maximumf %245, %246 : vector<8x1024xf32>
    %c4_28 = arith.constant 4 : index
    %248 = arith.index_cast %1 : i32 to index
    %c0_29 = arith.constant 0 : index
    %249 = vector.load %arg7[%c4_28, %248, %c0_29] : memref<10x8x1024xf32, #tpu.memory_space<vmem>>, vector<1x8x1024xf32>
    %250 = vector.shape_cast %249 : vector<1x8x1024xf32> to vector<8x1024xf32>
    %251 = vector.shape_cast %247 : vector<8x1024xf32> to vector<1x8x1024xf32>
    tpu.vector_store %arg7[%c4_28, %248, %c0_29], %251 {strides = array<i32>} : memref<10x8x1024xf32, #tpu.memory_space<vmem>>, vector<1x8x1024xf32>,
    %c45 = arith.constant 45 : index
    %252 = memref.load %arg2[%c45] : memref<90xf32, #tpu.memory_space<smem>>
    %253 = vector.broadcast %252 : f32 to vector<8x1024xf32>
    %254 = arith.mulf %253, %3 : vector<8x1024xf32>
    %c5_30 = arith.constant 5 : index
    %255 = memref.load %arg3[%c5_30] : memref<10xf32, #tpu.memory_space<smem>>
    %256 = vector.broadcast %255 : f32 to vector<8x1024xf32>
    %257 = arith.addf %254, %256 : vector<8x1024xf32>
    %c46 = arith.constant 46 : index
    %258 = memref.load %arg2[%c46] : memref<90xf32, #tpu.memory_space<smem>>
    %259 = vector.broadcast %258 : f32 to vector<8x1024xf32>
    %260 = arith.mulf %259, %4 : vector<8x1024xf32>
    %261 = arith.addf %257, %260 : vector<8x1024xf32>
    %c47 = arith.constant 47 : index
    %262 = memref.load %arg2[%c47] : memref<90xf32, #tpu.memory_space<smem>>
    %263 = vector.broadcast %262 : f32 to vector<8x1024xf32>
    %264 = arith.mulf %263, %5 : vector<8x1024xf32>
    %265 = arith.addf %261, %264 : vector<8x1024xf32>
    %c48 = arith.constant 48 : index
    %266 = memref.load %arg2[%c48] : memref<90xf32, #tpu.memory_space<smem>>
    %267 = vector.broadcast %266 : f32 to vector<8x1024xf32>
    %268 = arith.mulf %267, %6 : vector<8x1024xf32>
    %269 = arith.addf %265, %268 : vector<8x1024xf32>
    %c49 = arith.constant 49 : index
    %270 = memref.load %arg2[%c49] : memref<90xf32, #tpu.memory_space<smem>>
    %271 = vector.broadcast %270 : f32 to vector<8x1024xf32>
    %272 = arith.mulf %271, %7 : vector<8x1024xf32>
    %273 = arith.addf %269, %272 : vector<8x1024xf32>
    %c50 = arith.constant 50 : index
    %274 = memref.load %arg2[%c50] : memref<90xf32, #tpu.memory_space<smem>>
    %275 = vector.broadcast %274 : f32 to vector<8x1024xf32>
    %276 = arith.mulf %275, %8 : vector<8x1024xf32>
    %277 = arith.addf %273, %276 : vector<8x1024xf32>
    %c51 = arith.constant 51 : index
    %278 = memref.load %arg2[%c51] : memref<90xf32, #tpu.memory_space<smem>>
    %279 = vector.broadcast %278 : f32 to vector<8x1024xf32>
    %280 = arith.mulf %279, %9 : vector<8x1024xf32>
    %281 = arith.addf %277, %280 : vector<8x1024xf32>
    %c52 = arith.constant 52 : index
    %282 = memref.load %arg2[%c52] : memref<90xf32, #tpu.memory_space<smem>>
    %283 = vector.broadcast %282 : f32 to vector<8x1024xf32>
    %284 = arith.mulf %283, %10 : vector<8x1024xf32>
    %285 = arith.addf %281, %284 : vector<8x1024xf32>
    %c53 = arith.constant 53 : index
    %286 = memref.load %arg2[%c53] : memref<90xf32, #tpu.memory_space<smem>>
    %287 = vector.broadcast %286 : f32 to vector<8x1024xf32>
    %288 = arith.mulf %287, %11 : vector<8x1024xf32>
    %289 = arith.addf %285, %288 : vector<8x1024xf32>
    %cst_31 = arith.constant 0.000000e+00 : f32
    %290 = vector.broadcast %cst_31 : f32 to vector<8x1024xf32>
    %291 = arith.maximumf %289, %290 : vector<8x1024xf32>
    %c1023_i32_32 = arith.constant 1023 : i32
    %292 = tpu.dynamic_rotate %291 by %c1023_i32_32 dim 1 : vector<8x1024xf32>, i32 -> vector<8x1024xf32>
    %293 = arith.maximumf %291, %292 : vector<8x1024xf32>
    %c992_i32_33 = arith.constant 992 : i32
    %294 = tpu.dynamic_rotate %293 by %c992_i32_33 dim 1 : vector<8x1024xf32>, i32 -> vector<8x1024xf32>
    %295 = arith.maximumf %293, %294 : vector<8x1024xf32>
    %c5_34 = arith.constant 5 : index
    %296 = arith.index_cast %1 : i32 to index
    %c0_35 = arith.constant 0 : index
    %297 = vector.load %arg7[%c5_34, %296, %c0_35] : memref<10x8x1024xf32, #tpu.memory_space<vmem>>, vector<1x8x1024xf32>
    %298 = vector.shape_cast %297 : vector<1x8x1024xf32> to vector<8x1024xf32>
    %299 = vector.shape_cast %295 : vector<8x1024xf32> to vector<1x8x1024xf32>
    tpu.vector_store %arg7[%c5_34, %296, %c0_35], %299 {strides = array<i32>} : memref<10x8x1024xf32, #tpu.memory_space<vmem>>, vector<1x8x1024xf32>,
    %c54 = arith.constant 54 : index
    %300 = memref.load %arg2[%c54] : memref<90xf32, #tpu.memory_space<smem>>
    %301 = vector.broadcast %300 : f32 to vector<8x1024xf32>
    %302 = arith.mulf %301, %3 : vector<8x1024xf32>
    %c6_36 = arith.constant 6 : index
    %303 = memref.load %arg3[%c6_36] : memref<10xf32, #tpu.memory_space<smem>>
    %304 = vector.broadcast %303 : f32 to vector<8x1024xf32>
    %305 = arith.addf %302, %304 : vector<8x1024xf32>
    %c55 = arith.constant 55 : index
    %306 = memref.load %arg2[%c55] : memref<90xf32, #tpu.memory_space<smem>>
    %307 = vector.broadcast %306 : f32 to vector<8x1024xf32>
    %308 = arith.mulf %307, %4 : vector<8x1024xf32>
    %309 = arith.addf %305, %308 : vector<8x1024xf32>
    %c56 = arith.constant 56 : index
    %310 = memref.load %arg2[%c56] : memref<90xf32, #tpu.memory_space<smem>>
    %311 = vector.broadcast %310 : f32 to vector<8x1024xf32>
    %312 = arith.mulf %311, %5 : vector<8x1024xf32>
    %313 = arith.addf %309, %312 : vector<8x1024xf32>
    %c57 = arith.constant 57 : index
    %314 = memref.load %arg2[%c57] : memref<90xf32, #tpu.memory_space<smem>>
    %315 = vector.broadcast %314 : f32 to vector<8x1024xf32>
    %316 = arith.mulf %315, %6 : vector<8x1024xf32>
    %317 = arith.addf %313, %316 : vector<8x1024xf32>
    %c58 = arith.constant 58 : index
    %318 = memref.load %arg2[%c58] : memref<90xf32, #tpu.memory_space<smem>>
    %319 = vector.broadcast %318 : f32 to vector<8x1024xf32>
    %320 = arith.mulf %319, %7 : vector<8x1024xf32>
    %321 = arith.addf %317, %320 : vector<8x1024xf32>
    %c59 = arith.constant 59 : index
    %322 = memref.load %arg2[%c59] : memref<90xf32, #tpu.memory_space<smem>>
    %323 = vector.broadcast %322 : f32 to vector<8x1024xf32>
    %324 = arith.mulf %323, %8 : vector<8x1024xf32>
    %325 = arith.addf %321, %324 : vector<8x1024xf32>
    %c60 = arith.constant 60 : index
    %326 = memref.load %arg2[%c60] : memref<90xf32, #tpu.memory_space<smem>>
    %327 = vector.broadcast %326 : f32 to vector<8x1024xf32>
    %328 = arith.mulf %327, %9 : vector<8x1024xf32>
    %329 = arith.addf %325, %328 : vector<8x1024xf32>
    %c61 = arith.constant 61 : index
    %330 = memref.load %arg2[%c61] : memref<90xf32, #tpu.memory_space<smem>>
    %331 = vector.broadcast %330 : f32 to vector<8x1024xf32>
    %332 = arith.mulf %331, %10 : vector<8x1024xf32>
    %333 = arith.addf %329, %332 : vector<8x1024xf32>
    %c62 = arith.constant 62 : index
    %334 = memref.load %arg2[%c62] : memref<90xf32, #tpu.memory_space<smem>>
    %335 = vector.broadcast %334 : f32 to vector<8x1024xf32>
    %336 = arith.mulf %335, %11 : vector<8x1024xf32>
    %337 = arith.addf %333, %336 : vector<8x1024xf32>
    %cst_37 = arith.constant 0.000000e+00 : f32
    %338 = vector.broadcast %cst_37 : f32 to vector<8x1024xf32>
    %339 = arith.maximumf %337, %338 : vector<8x1024xf32>
    %c1023_i32_38 = arith.constant 1023 : i32
    %340 = tpu.dynamic_rotate %339 by %c1023_i32_38 dim 1 : vector<8x1024xf32>, i32 -> vector<8x1024xf32>
    %341 = arith.maximumf %339, %340 : vector<8x1024xf32>
    %c992_i32_39 = arith.constant 992 : i32
    %342 = tpu.dynamic_rotate %341 by %c992_i32_39 dim 1 : vector<8x1024xf32>, i32 -> vector<8x1024xf32>
    %343 = arith.maximumf %341, %342 : vector<8x1024xf32>
    %c6_40 = arith.constant 6 : index
    %344 = arith.index_cast %1 : i32 to index
    %c0_41 = arith.constant 0 : index
    %345 = vector.load %arg7[%c6_40, %344, %c0_41] : memref<10x8x1024xf32, #tpu.memory_space<vmem>>, vector<1x8x1024xf32>
    %346 = vector.shape_cast %345 : vector<1x8x1024xf32> to vector<8x1024xf32>
    %347 = vector.shape_cast %343 : vector<8x1024xf32> to vector<1x8x1024xf32>
    tpu.vector_store %arg7[%c6_40, %344, %c0_41], %347 {strides = array<i32>} : memref<10x8x1024xf32, #tpu.memory_space<vmem>>, vector<1x8x1024xf32>,
    %c63 = arith.constant 63 : index
    %348 = memref.load %arg2[%c63] : memref<90xf32, #tpu.memory_space<smem>>
    %349 = vector.broadcast %348 : f32 to vector<8x1024xf32>
    %350 = arith.mulf %349, %3 : vector<8x1024xf32>
    %c7_42 = arith.constant 7 : index
    %351 = memref.load %arg3[%c7_42] : memref<10xf32, #tpu.memory_space<smem>>
    %352 = vector.broadcast %351 : f32 to vector<8x1024xf32>
    %353 = arith.addf %350, %352 : vector<8x1024xf32>
    %c64 = arith.constant 64 : index
    %354 = memref.load %arg2[%c64] : memref<90xf32, #tpu.memory_space<smem>>
    %355 = vector.broadcast %354 : f32 to vector<8x1024xf32>
    %356 = arith.mulf %355, %4 : vector<8x1024xf32>
    %357 = arith.addf %353, %356 : vector<8x1024xf32>
    %c65 = arith.constant 65 : index
    %358 = memref.load %arg2[%c65] : memref<90xf32, #tpu.memory_space<smem>>
    %359 = vector.broadcast %358 : f32 to vector<8x1024xf32>
    %360 = arith.mulf %359, %5 : vector<8x1024xf32>
    %361 = arith.addf %357, %360 : vector<8x1024xf32>
    %c66 = arith.constant 66 : index
    %362 = memref.load %arg2[%c66] : memref<90xf32, #tpu.memory_space<smem>>
    %363 = vector.broadcast %362 : f32 to vector<8x1024xf32>
    %364 = arith.mulf %363, %6 : vector<8x1024xf32>
    %365 = arith.addf %361, %364 : vector<8x1024xf32>
    %c67 = arith.constant 67 : index
    %366 = memref.load %arg2[%c67] : memref<90xf32, #tpu.memory_space<smem>>
    %367 = vector.broadcast %366 : f32 to vector<8x1024xf32>
    %368 = arith.mulf %367, %7 : vector<8x1024xf32>
    %369 = arith.addf %365, %368 : vector<8x1024xf32>
    %c68 = arith.constant 68 : index
    %370 = memref.load %arg2[%c68] : memref<90xf32, #tpu.memory_space<smem>>
    %371 = vector.broadcast %370 : f32 to vector<8x1024xf32>
    %372 = arith.mulf %371, %8 : vector<8x1024xf32>
    %373 = arith.addf %369, %372 : vector<8x1024xf32>
    %c69 = arith.constant 69 : index
    %374 = memref.load %arg2[%c69] : memref<90xf32, #tpu.memory_space<smem>>
    %375 = vector.broadcast %374 : f32 to vector<8x1024xf32>
    %376 = arith.mulf %375, %9 : vector<8x1024xf32>
    %377 = arith.addf %373, %376 : vector<8x1024xf32>
    %c70 = arith.constant 70 : index
    %378 = memref.load %arg2[%c70] : memref<90xf32, #tpu.memory_space<smem>>
    %379 = vector.broadcast %378 : f32 to vector<8x1024xf32>
    %380 = arith.mulf %379, %10 : vector<8x1024xf32>
    %381 = arith.addf %377, %380 : vector<8x1024xf32>
    %c71 = arith.constant 71 : index
    %382 = memref.load %arg2[%c71] : memref<90xf32, #tpu.memory_space<smem>>
    %383 = vector.broadcast %382 : f32 to vector<8x1024xf32>
    %384 = arith.mulf %383, %11 : vector<8x1024xf32>
    %385 = arith.addf %381, %384 : vector<8x1024xf32>
    %cst_43 = arith.constant 0.000000e+00 : f32
    %386 = vector.broadcast %cst_43 : f32 to vector<8x1024xf32>
    %387 = arith.maximumf %385, %386 : vector<8x1024xf32>
    %c1023_i32_44 = arith.constant 1023 : i32
    %388 = tpu.dynamic_rotate %387 by %c1023_i32_44 dim 1 : vector<8x1024xf32>, i32 -> vector<8x1024xf32>
    %389 = arith.maximumf %387, %388 : vector<8x1024xf32>
    %c992_i32_45 = arith.constant 992 : i32
    %390 = tpu.dynamic_rotate %389 by %c992_i32_45 dim 1 : vector<8x1024xf32>, i32 -> vector<8x1024xf32>
    %391 = arith.maximumf %389, %390 : vector<8x1024xf32>
    %c7_46 = arith.constant 7 : index
    %392 = arith.index_cast %1 : i32 to index
    %c0_47 = arith.constant 0 : index
    %393 = vector.load %arg7[%c7_46, %392, %c0_47] : memref<10x8x1024xf32, #tpu.memory_space<vmem>>, vector<1x8x1024xf32>
    %394 = vector.shape_cast %393 : vector<1x8x1024xf32> to vector<8x1024xf32>
    %395 = vector.shape_cast %391 : vector<8x1024xf32> to vector<1x8x1024xf32>
    tpu.vector_store %arg7[%c7_46, %392, %c0_47], %395 {strides = array<i32>} : memref<10x8x1024xf32, #tpu.memory_space<vmem>>, vector<1x8x1024xf32>,
    %c72 = arith.constant 72 : index
    %396 = memref.load %arg2[%c72] : memref<90xf32, #tpu.memory_space<smem>>
    %397 = vector.broadcast %396 : f32 to vector<8x1024xf32>
    %398 = arith.mulf %397, %3 : vector<8x1024xf32>
    %c8_48 = arith.constant 8 : index
    %399 = memref.load %arg3[%c8_48] : memref<10xf32, #tpu.memory_space<smem>>
    %400 = vector.broadcast %399 : f32 to vector<8x1024xf32>
    %401 = arith.addf %398, %400 : vector<8x1024xf32>
    %c73 = arith.constant 73 : index
    %402 = memref.load %arg2[%c73] : memref<90xf32, #tpu.memory_space<smem>>
    %403 = vector.broadcast %402 : f32 to vector<8x1024xf32>
    %404 = arith.mulf %403, %4 : vector<8x1024xf32>
    %405 = arith.addf %401, %404 : vector<8x1024xf32>
    %c74 = arith.constant 74 : index
    %406 = memref.load %arg2[%c74] : memref<90xf32, #tpu.memory_space<smem>>
    %407 = vector.broadcast %406 : f32 to vector<8x1024xf32>
    %408 = arith.mulf %407, %5 : vector<8x1024xf32>
    %409 = arith.addf %405, %408 : vector<8x1024xf32>
    %c75 = arith.constant 75 : index
    %410 = memref.load %arg2[%c75] : memref<90xf32, #tpu.memory_space<smem>>
    %411 = vector.broadcast %410 : f32 to vector<8x1024xf32>
    %412 = arith.mulf %411, %6 : vector<8x1024xf32>
    %413 = arith.addf %409, %412 : vector<8x1024xf32>
    %c76 = arith.constant 76 : index
    %414 = memref.load %arg2[%c76] : memref<90xf32, #tpu.memory_space<smem>>
    %415 = vector.broadcast %414 : f32 to vector<8x1024xf32>
    %416 = arith.mulf %415, %7 : vector<8x1024xf32>
    %417 = arith.addf %413, %416 : vector<8x1024xf32>
    %c77 = arith.constant 77 : index
    %418 = memref.load %arg2[%c77] : memref<90xf32, #tpu.memory_space<smem>>
    %419 = vector.broadcast %418 : f32 to vector<8x1024xf32>
    %420 = arith.mulf %419, %8 : vector<8x1024xf32>
    %421 = arith.addf %417, %420 : vector<8x1024xf32>
    %c78 = arith.constant 78 : index
    %422 = memref.load %arg2[%c78] : memref<90xf32, #tpu.memory_space<smem>>
    %423 = vector.broadcast %422 : f32 to vector<8x1024xf32>
    %424 = arith.mulf %423, %9 : vector<8x1024xf32>
    %425 = arith.addf %421, %424 : vector<8x1024xf32>
    %c79 = arith.constant 79 : index
    %426 = memref.load %arg2[%c79] : memref<90xf32, #tpu.memory_space<smem>>
    %427 = vector.broadcast %426 : f32 to vector<8x1024xf32>
    %428 = arith.mulf %427, %10 : vector<8x1024xf32>
    %429 = arith.addf %425, %428 : vector<8x1024xf32>
    %c80 = arith.constant 80 : index
    %430 = memref.load %arg2[%c80] : memref<90xf32, #tpu.memory_space<smem>>
    %431 = vector.broadcast %430 : f32 to vector<8x1024xf32>
    %432 = arith.mulf %431, %11 : vector<8x1024xf32>
    %433 = arith.addf %429, %432 : vector<8x1024xf32>
    %cst_49 = arith.constant 0.000000e+00 : f32
    %434 = vector.broadcast %cst_49 : f32 to vector<8x1024xf32>
    %435 = arith.maximumf %433, %434 : vector<8x1024xf32>
    %c1023_i32_50 = arith.constant 1023 : i32
    %436 = tpu.dynamic_rotate %435 by %c1023_i32_50 dim 1 : vector<8x1024xf32>, i32 -> vector<8x1024xf32>
    %437 = arith.maximumf %435, %436 : vector<8x1024xf32>
    %c992_i32_51 = arith.constant 992 : i32
    %438 = tpu.dynamic_rotate %437 by %c992_i32_51 dim 1 : vector<8x1024xf32>, i32 -> vector<8x1024xf32>
    %439 = arith.maximumf %437, %438 : vector<8x1024xf32>
    %c8_52 = arith.constant 8 : index
    %440 = arith.index_cast %1 : i32 to index
    %c0_53 = arith.constant 0 : index
    %441 = vector.load %arg7[%c8_52, %440, %c0_53] : memref<10x8x1024xf32, #tpu.memory_space<vmem>>, vector<1x8x1024xf32>
    %442 = vector.shape_cast %441 : vector<1x8x1024xf32> to vector<8x1024xf32>
    %443 = vector.shape_cast %439 : vector<8x1024xf32> to vector<1x8x1024xf32>
    tpu.vector_store %arg7[%c8_52, %440, %c0_53], %443 {strides = array<i32>} : memref<10x8x1024xf32, #tpu.memory_space<vmem>>, vector<1x8x1024xf32>,
    %c81 = arith.constant 81 : index
    %444 = memref.load %arg2[%c81] : memref<90xf32, #tpu.memory_space<smem>>
    %445 = vector.broadcast %444 : f32 to vector<8x1024xf32>
    %446 = arith.mulf %445, %3 : vector<8x1024xf32>
    %c9_54 = arith.constant 9 : index
    %447 = memref.load %arg3[%c9_54] : memref<10xf32, #tpu.memory_space<smem>>
    %448 = vector.broadcast %447 : f32 to vector<8x1024xf32>
    %449 = arith.addf %446, %448 : vector<8x1024xf32>
    %c82 = arith.constant 82 : index
    %450 = memref.load %arg2[%c82] : memref<90xf32, #tpu.memory_space<smem>>
    %451 = vector.broadcast %450 : f32 to vector<8x1024xf32>
    %452 = arith.mulf %451, %4 : vector<8x1024xf32>
    %453 = arith.addf %449, %452 : vector<8x1024xf32>
    %c83 = arith.constant 83 : index
    %454 = memref.load %arg2[%c83] : memref<90xf32, #tpu.memory_space<smem>>
    %455 = vector.broadcast %454 : f32 to vector<8x1024xf32>
    %456 = arith.mulf %455, %5 : vector<8x1024xf32>
    %457 = arith.addf %453, %456 : vector<8x1024xf32>
    %c84 = arith.constant 84 : index
    %458 = memref.load %arg2[%c84] : memref<90xf32, #tpu.memory_space<smem>>
    %459 = vector.broadcast %458 : f32 to vector<8x1024xf32>
    %460 = arith.mulf %459, %6 : vector<8x1024xf32>
    %461 = arith.addf %457, %460 : vector<8x1024xf32>
    %c85 = arith.constant 85 : index
    %462 = memref.load %arg2[%c85] : memref<90xf32, #tpu.memory_space<smem>>
    %463 = vector.broadcast %462 : f32 to vector<8x1024xf32>
    %464 = arith.mulf %463, %7 : vector<8x1024xf32>
    %465 = arith.addf %461, %464 : vector<8x1024xf32>
    %c86 = arith.constant 86 : index
    %466 = memref.load %arg2[%c86] : memref<90xf32, #tpu.memory_space<smem>>
    %467 = vector.broadcast %466 : f32 to vector<8x1024xf32>
    %468 = arith.mulf %467, %8 : vector<8x1024xf32>
    %469 = arith.addf %465, %468 : vector<8x1024xf32>
    %c87 = arith.constant 87 : index
    %470 = memref.load %arg2[%c87] : memref<90xf32, #tpu.memory_space<smem>>
    %471 = vector.broadcast %470 : f32 to vector<8x1024xf32>
    %472 = arith.mulf %471, %9 : vector<8x1024xf32>
    %473 = arith.addf %469, %472 : vector<8x1024xf32>
    %c88 = arith.constant 88 : index
    %474 = memref.load %arg2[%c88] : memref<90xf32, #tpu.memory_space<smem>>
    %475 = vector.broadcast %474 : f32 to vector<8x1024xf32>
    %476 = arith.mulf %475, %10 : vector<8x1024xf32>
    %477 = arith.addf %473, %476 : vector<8x1024xf32>
    %c89 = arith.constant 89 : index
    %478 = memref.load %arg2[%c89] : memref<90xf32, #tpu.memory_space<smem>>
    %479 = vector.broadcast %478 : f32 to vector<8x1024xf32>
    %480 = arith.mulf %479, %11 : vector<8x1024xf32>
    %481 = arith.addf %477, %480 : vector<8x1024xf32>
    %cst_55 = arith.constant 0.000000e+00 : f32
    %482 = vector.broadcast %cst_55 : f32 to vector<8x1024xf32>
    %483 = arith.maximumf %481, %482 : vector<8x1024xf32>
    %c1023_i32_56 = arith.constant 1023 : i32
    %484 = tpu.dynamic_rotate %483 by %c1023_i32_56 dim 1 : vector<8x1024xf32>, i32 -> vector<8x1024xf32>
    %485 = arith.maximumf %483, %484 : vector<8x1024xf32>
    %c992_i32_57 = arith.constant 992 : i32
    %486 = tpu.dynamic_rotate %485 by %c992_i32_57 dim 1 : vector<8x1024xf32>, i32 -> vector<8x1024xf32>
    %487 = arith.maximumf %485, %486 : vector<8x1024xf32>
    %c9_58 = arith.constant 9 : index
    %488 = arith.index_cast %1 : i32 to index
    %c0_59 = arith.constant 0 : index
    %489 = vector.load %arg7[%c9_58, %488, %c0_59] : memref<10x8x1024xf32, #tpu.memory_space<vmem>>, vector<1x8x1024xf32>
    %490 = vector.shape_cast %489 : vector<1x8x1024xf32> to vector<8x1024xf32>
    %491 = vector.shape_cast %487 : vector<8x1024xf32> to vector<1x8x1024xf32>
    tpu.vector_store %arg7[%c9_58, %488, %c0_59], %491 {strides = array<i32>} : memref<10x8x1024xf32, #tpu.memory_space<vmem>>, vector<1x8x1024xf32>,
    %c1_i32 = arith.constant 1 : i32
    %cst_60 = arith.constant 0.000000e+00 : f32
    %492 = vector.broadcast %cst_60 : f32 to vector<8x10xf32>
    %c0_61 = arith.constant 0 : index
    %c0_62 = arith.constant 0 : index
    %c0_63 = arith.constant 0 : index
    %493 = vector.load %arg7[%c0_61, %c0_62, %c0_63] : memref<10x8x1024xf32, #tpu.memory_space<vmem>>, vector<1x8x1024xf32>
    %494 = vector.shape_cast %493 : vector<1x8x1024xf32> to vector<8x1024xf32>
    %495 = arith.truncf %494 : vector<8x1024xf32> to vector<8x1024xbf16>
    %c0_64 = arith.constant 0 : index
    %c0_65 = arith.constant 0 : index
    %c0_66 = arith.constant 0 : index
    %496 = vector.load %arg4[%c0_64, %c0_65, %c0_66] : memref<10x1024x10xbf16, #tpu.memory_space<vmem>>, vector<1x1024x10xbf16>
    %497 = vector.shape_cast %496 : vector<1x1024x10xbf16> to vector<1024x10xbf16>
    %cst_67 = arith.constant dense<0.000000e+00> : vector<8x10xf32>
    %498 = tpu.matmul %495, %497, %cst_67 {dimension_numbers = #tpu.dot_dimension_numbers<[1], [0], [0], [1], [0, 0, 1, 1], [], []>} : vector<8x1024xbf16>, vector<1024x10xbf16>, vector<8x10xf32> -> vector<8x10xf32>
    %499 = arith.addf %492, %498 : vector<8x10xf32>
    %c1_68 = arith.constant 1 : index
    %c0_69 = arith.constant 0 : index
    %c0_70 = arith.constant 0 : index
    %500 = vector.load %arg7[%c1_68, %c0_69, %c0_70] : memref<10x8x1024xf32, #tpu.memory_space<vmem>>, vector<1x8x1024xf32>
    %501 = vector.shape_cast %500 : vector<1x8x1024xf32> to vector<8x1024xf32>
    %502 = arith.truncf %501 : vector<8x1024xf32> to vector<8x1024xbf16>
    %c1_71 = arith.constant 1 : index
    %c0_72 = arith.constant 0 : index
    %c0_73 = arith.constant 0 : index
    %503 = vector.load %arg4[%c1_71, %c0_72, %c0_73] : memref<10x1024x10xbf16, #tpu.memory_space<vmem>>, vector<1x1024x10xbf16>
    %504 = vector.shape_cast %503 : vector<1x1024x10xbf16> to vector<1024x10xbf16>
    %cst_74 = arith.constant dense<0.000000e+00> : vector<8x10xf32>
    %505 = tpu.matmul %502, %504, %cst_74 {dimension_numbers = #tpu.dot_dimension_numbers<[1], [0], [0], [1], [0, 0, 1, 1], [], []>} : vector<8x1024xbf16>, vector<1024x10xbf16>, vector<8x10xf32> -> vector<8x10xf32>
    %506 = arith.addf %499, %505 : vector<8x10xf32>
    %c2_75 = arith.constant 2 : index
    %c0_76 = arith.constant 0 : index
    %c0_77 = arith.constant 0 : index
    %507 = vector.load %arg7[%c2_75, %c0_76, %c0_77] : memref<10x8x1024xf32, #tpu.memory_space<vmem>>, vector<1x8x1024xf32>
    %508 = vector.shape_cast %507 : vector<1x8x1024xf32> to vector<8x1024xf32>
    %509 = arith.truncf %508 : vector<8x1024xf32> to vector<8x1024xbf16>
    %c2_78 = arith.constant 2 : index
    %c0_79 = arith.constant 0 : index
    %c0_80 = arith.constant 0 : index
    %510 = vector.load %arg4[%c2_78, %c0_79, %c0_80] : memref<10x1024x10xbf16, #tpu.memory_space<vmem>>, vector<1x1024x10xbf16>
    %511 = vector.shape_cast %510 : vector<1x1024x10xbf16> to vector<1024x10xbf16>
    %cst_81 = arith.constant dense<0.000000e+00> : vector<8x10xf32>
    %512 = tpu.matmul %509, %511, %cst_81 {dimension_numbers = #tpu.dot_dimension_numbers<[1], [0], [0], [1], [0, 0, 1, 1], [], []>} : vector<8x1024xbf16>, vector<1024x10xbf16>, vector<8x10xf32> -> vector<8x10xf32>
    %513 = arith.addf %506, %512 : vector<8x10xf32>
    %c3_82 = arith.constant 3 : index
    %c0_83 = arith.constant 0 : index
    %c0_84 = arith.constant 0 : index
    %514 = vector.load %arg7[%c3_82, %c0_83, %c0_84] : memref<10x8x1024xf32, #tpu.memory_space<vmem>>, vector<1x8x1024xf32>
    %515 = vector.shape_cast %514 : vector<1x8x1024xf32> to vector<8x1024xf32>
    %516 = arith.truncf %515 : vector<8x1024xf32> to vector<8x1024xbf16>
    %c3_85 = arith.constant 3 : index
    %c0_86 = arith.constant 0 : index
    %c0_87 = arith.constant 0 : index
    %517 = vector.load %arg4[%c3_85, %c0_86, %c0_87] : memref<10x1024x10xbf16, #tpu.memory_space<vmem>>, vector<1x1024x10xbf16>
    %518 = vector.shape_cast %517 : vector<1x1024x10xbf16> to vector<1024x10xbf16>
    %cst_88 = arith.constant dense<0.000000e+00> : vector<8x10xf32>
    %519 = tpu.matmul %516, %518, %cst_88 {dimension_numbers = #tpu.dot_dimension_numbers<[1], [0], [0], [1], [0, 0, 1, 1], [], []>} : vector<8x1024xbf16>, vector<1024x10xbf16>, vector<8x10xf32> -> vector<8x10xf32>
    %520 = arith.addf %513, %519 : vector<8x10xf32>
    %c4_89 = arith.constant 4 : index
    %c0_90 = arith.constant 0 : index
    %c0_91 = arith.constant 0 : index
    %521 = vector.load %arg7[%c4_89, %c0_90, %c0_91] : memref<10x8x1024xf32, #tpu.memory_space<vmem>>, vector<1x8x1024xf32>
    %522 = vector.shape_cast %521 : vector<1x8x1024xf32> to vector<8x1024xf32>
    %523 = arith.truncf %522 : vector<8x1024xf32> to vector<8x1024xbf16>
    %c4_92 = arith.constant 4 : index
    %c0_93 = arith.constant 0 : index
    %c0_94 = arith.constant 0 : index
    %524 = vector.load %arg4[%c4_92, %c0_93, %c0_94] : memref<10x1024x10xbf16, #tpu.memory_space<vmem>>, vector<1x1024x10xbf16>
    %525 = vector.shape_cast %524 : vector<1x1024x10xbf16> to vector<1024x10xbf16>
    %cst_95 = arith.constant dense<0.000000e+00> : vector<8x10xf32>
    %526 = tpu.matmul %523, %525, %cst_95 {dimension_numbers = #tpu.dot_dimension_numbers<[1], [0], [0], [1], [0, 0, 1, 1], [], []>} : vector<8x1024xbf16>, vector<1024x10xbf16>, vector<8x10xf32> -> vector<8x10xf32>
    %527 = arith.addf %520, %526 : vector<8x10xf32>
    %c5_96 = arith.constant 5 : index
    %c0_97 = arith.constant 0 : index
    %c0_98 = arith.constant 0 : index
    %528 = vector.load %arg7[%c5_96, %c0_97, %c0_98] : memref<10x8x1024xf32, #tpu.memory_space<vmem>>, vector<1x8x1024xf32>
    %529 = vector.shape_cast %528 : vector<1x8x1024xf32> to vector<8x1024xf32>
    %530 = arith.truncf %529 : vector<8x1024xf32> to vector<8x1024xbf16>
    %c5_99 = arith.constant 5 : index
    %c0_100 = arith.constant 0 : index
    %c0_101 = arith.constant 0 : index
    %531 = vector.load %arg4[%c5_99, %c0_100, %c0_101] : memref<10x1024x10xbf16, #tpu.memory_space<vmem>>, vector<1x1024x10xbf16>
    %532 = vector.shape_cast %531 : vector<1x1024x10xbf16> to vector<1024x10xbf16>
    %cst_102 = arith.constant dense<0.000000e+00> : vector<8x10xf32>
    %533 = tpu.matmul %530, %532, %cst_102 {dimension_numbers = #tpu.dot_dimension_numbers<[1], [0], [0], [1], [0, 0, 1, 1], [], []>} : vector<8x1024xbf16>, vector<1024x10xbf16>, vector<8x10xf32> -> vector<8x10xf32>
    %534 = arith.addf %527, %533 : vector<8x10xf32>
    %c6_103 = arith.constant 6 : index
    %c0_104 = arith.constant 0 : index
    %c0_105 = arith.constant 0 : index
    %535 = vector.load %arg7[%c6_103, %c0_104, %c0_105] : memref<10x8x1024xf32, #tpu.memory_space<vmem>>, vector<1x8x1024xf32>
    %536 = vector.shape_cast %535 : vector<1x8x1024xf32> to vector<8x1024xf32>
    %537 = arith.truncf %536 : vector<8x1024xf32> to vector<8x1024xbf16>
    %c6_106 = arith.constant 6 : index
    %c0_107 = arith.constant 0 : index
    %c0_108 = arith.constant 0 : index
    %538 = vector.load %arg4[%c6_106, %c0_107, %c0_108] : memref<10x1024x10xbf16, #tpu.memory_space<vmem>>, vector<1x1024x10xbf16>
    %539 = vector.shape_cast %538 : vector<1x1024x10xbf16> to vector<1024x10xbf16>
    %cst_109 = arith.constant dense<0.000000e+00> : vector<8x10xf32>
    %540 = tpu.matmul %537, %539, %cst_109 {dimension_numbers = #tpu.dot_dimension_numbers<[1], [0], [0], [1], [0, 0, 1, 1], [], []>} : vector<8x1024xbf16>, vector<1024x10xbf16>, vector<8x10xf32> -> vector<8x10xf32>
    %541 = arith.addf %534, %540 : vector<8x10xf32>
    %c7_110 = arith.constant 7 : index
    %c0_111 = arith.constant 0 : index
    %c0_112 = arith.constant 0 : index
    %542 = vector.load %arg7[%c7_110, %c0_111, %c0_112] : memref<10x8x1024xf32, #tpu.memory_space<vmem>>, vector<1x8x1024xf32>
    %543 = vector.shape_cast %542 : vector<1x8x1024xf32> to vector<8x1024xf32>
    %544 = arith.truncf %543 : vector<8x1024xf32> to vector<8x1024xbf16>
    %c7_113 = arith.constant 7 : index
    %c0_114 = arith.constant 0 : index
    %c0_115 = arith.constant 0 : index
    %545 = vector.load %arg4[%c7_113, %c0_114, %c0_115] : memref<10x1024x10xbf16, #tpu.memory_space<vmem>>, vector<1x1024x10xbf16>
    %546 = vector.shape_cast %545 : vector<1x1024x10xbf16> to vector<1024x10xbf16>
    %cst_116 = arith.constant dense<0.000000e+00> : vector<8x10xf32>
    %547 = tpu.matmul %544, %546, %cst_116 {dimension_numbers = #tpu.dot_dimension_numbers<[1], [0], [0], [1], [0, 0, 1, 1], [], []>} : vector<8x1024xbf16>, vector<1024x10xbf16>, vector<8x10xf32> -> vector<8x10xf32>
    %548 = arith.addf %541, %547 : vector<8x10xf32>
    %c8_117 = arith.constant 8 : index
    %c0_118 = arith.constant 0 : index
    %c0_119 = arith.constant 0 : index
    %549 = vector.load %arg7[%c8_117, %c0_118, %c0_119] : memref<10x8x1024xf32, #tpu.memory_space<vmem>>, vector<1x8x1024xf32>
    %550 = vector.shape_cast %549 : vector<1x8x1024xf32> to vector<8x1024xf32>
    %551 = arith.truncf %550 : vector<8x1024xf32> to vector<8x1024xbf16>
    %c8_120 = arith.constant 8 : index
    %c0_121 = arith.constant 0 : index
    %c0_122 = arith.constant 0 : index
    %552 = vector.load %arg4[%c8_120, %c0_121, %c0_122] : memref<10x1024x10xbf16, #tpu.memory_space<vmem>>, vector<1x1024x10xbf16>
    %553 = vector.shape_cast %552 : vector<1x1024x10xbf16> to vector<1024x10xbf16>
    %cst_123 = arith.constant dense<0.000000e+00> : vector<8x10xf32>
    %554 = tpu.matmul %551, %553, %cst_123 {dimension_numbers = #tpu.dot_dimension_numbers<[1], [0], [0], [1], [0, 0, 1, 1], [], []>} : vector<8x1024xbf16>, vector<1024x10xbf16>, vector<8x10xf32> -> vector<8x10xf32>
    %555 = arith.addf %548, %554 : vector<8x10xf32>
    %c9_124 = arith.constant 9 : index
    %c0_125 = arith.constant 0 : index
    %c0_126 = arith.constant 0 : index
    %556 = vector.load %arg7[%c9_124, %c0_125, %c0_126] : memref<10x8x1024xf32, #tpu.memory_space<vmem>>, vector<1x8x1024xf32>
    %557 = vector.shape_cast %556 : vector<1x8x1024xf32> to vector<8x1024xf32>
    %558 = arith.truncf %557 : vector<8x1024xf32> to vector<8x1024xbf16>
    %c9_127 = arith.constant 9 : index
    %c0_128 = arith.constant 0 : index
    %c0_129 = arith.constant 0 : index
    %559 = vector.load %arg4[%c9_127, %c0_128, %c0_129] : memref<10x1024x10xbf16, #tpu.memory_space<vmem>>, vector<1x1024x10xbf16>
    %560 = vector.shape_cast %559 : vector<1x1024x10xbf16> to vector<1024x10xbf16>
    %cst_130 = arith.constant dense<0.000000e+00> : vector<8x10xf32>
    %561 = tpu.matmul %558, %560, %cst_130 {dimension_numbers = #tpu.dot_dimension_numbers<[1], [0], [0], [1], [0, 0, 1, 1], [], []>} : vector<8x1024xbf16>, vector<1024x10xbf16>, vector<8x10xf32> -> vector<8x10xf32>
    %562 = arith.addf %555, %561 : vector<8x10xf32>
    %c0_131 = arith.constant 0 : index
    %c0_132 = arith.constant 0 : index
    %563 = vector.load %arg5[%c0_131, %c0_132] : memref<1x10xf32, #tpu.memory_space<vmem>>, vector<1x10xf32>
    %564 = vector.broadcast %563 : vector<1x10xf32> to vector<8x10xf32>
    %565 = arith.addf %562, %564 : vector<8x10xf32>
    %c0_133 = arith.constant 0 : index
    %c0_134 = arith.constant 0 : index
    %566 = vector.load %arg6[%c0_133, %c0_134] : memref<8x10xf32, #tpu.memory_space<vmem>>, vector<8x10xf32>
    tpu.vector_store %arg6[%c0_133, %c0_134], %565 {strides = array<i32>} : memref<8x10xf32, #tpu.memory_space<vmem>>, vector<8x10xf32>,
    return
  }
  func.func @transform_0(%arg0: i32) -> (i32, i32) {
    %c0_i32 = arith.constant 0 : i32
    %c0_i32_0 = arith.constant 0 : i32
    return %arg0, %c0_i32 : i32, i32
  }
  func.func @transform_1(%arg0: i32) -> i32 {
    %c0_i32 = arith.constant 0 : i32
    %c0_i32_0 = arith.constant 0 : i32
    return %c0_i32 : i32
  }
  func.func @transform_2(%arg0: i32) -> i32 {
    %c0_i32 = arith.constant 0 : i32
    %c0_i32_0 = arith.constant 0 : i32
    return %c0_i32 : i32
  }
  func.func @transform_3(%arg0: i32) -> (i32, i32, i32) {
    %c0_i32 = arith.constant 0 : i32
    %c0_i32_0 = arith.constant 0 : i32
    %c0_i32_1 = arith.constant 0 : i32
    %c0_i32_2 = arith.constant 0 : i32
    return %c0_i32, %c0_i32_0, %c0_i32_1 : i32, i32, i32
  }
  func.func @transform_4(%arg0: i32) -> (i32, i32) {
    %c0_i32 = arith.constant 0 : i32
    %c0_i32_0 = arith.constant 0 : i32
    %c0_i32_1 = arith.constant 0 : i32
    return %c0_i32, %c0_i32_0 : i32, i32
  }
  func.func @transform_5(%arg0: i32) -> (i32, i32) {
    %c0_i32 = arith.constant 0 : i32
    %c0_i32_0 = arith.constant 0 : i32
    return %arg0, %c0_i32 : i32, i32
  }
}

</mosaic_0001>

<llo_original>
// kernel: study_net_forward.1
$region0: #{study_net_forward.1}
  #allocation0 [shape = 'u32[]', space=smem, size = 0x4, offset = 0x4, fixed_abs, tag = 'smem constant byte address 0x4 - core index']
  #allocation1 [shape = 'u32[144,128]{1,0:T(1,128)}', space=vmem, size = 0x12000, scoped, tag = 'internal scratch']
  #allocation2 [shape = 'f32[10,8,1024]{2,1,0:T(8,128)}', space=vmem, size = 0x50000, scoped, tag = 'scratch operand']
  %s0 = inlined_call_operand.vmem [shape: f32[16,1024], index: 0, kind: input, shape index: {}]
  %s1 = inlined_call_operand.vmem [shape: f32[90], index: 1, kind: input, shape index: {}]
  %s2 = inlined_call_operand.vmem [shape: f32[10], index: 2, kind: input, shape index: {}]
  %s3 = inlined_call_operand.vmem [shape: bf16[10,1024,10], index: 3, kind: input, shape index: {}]
  %s4 = inlined_call_operand.vmem [shape: f32[1,10], index: 4, kind: input, shape index: {}]
  %s5 = inlined_call_operand.hbm [shape: f32[16,10], index: 5, kind: output, shape index: {}]
  %s6 = sld [smem:[#allocation0]]
  $region61: #{study_net_forward.1} parent=0
    _
  %s8 = ssub.s32 1, %s6
  %s9 = scalar_select 0, %s8, %s6
  $region1: #{study_net_forward.1} parent=0
    #allocation3 [shape = 'u8[512]{0}', space=smem, size = 0x200, scoped, tag = 'input window, operand 1, single buffered']
    #allocation4 [shape = 's32[2]{0}', space=sflag, size = 0x8, scoped, tag = 'scoped memory for study_net_forward.1']
    #allocation5 [shape = 's32[2]{0}', space=sflag, size = 0x8, scoped, tag = 'scoped memory for study_net_forward.1']
    #allocation6 [shape = 'u8[512]{0}', space=smem, size = 0x200, scoped, tag = 'input window, operand 2, single buffered']
    #allocation7 [shape = 's32[1]{0}', space=sflag, size = 0x4, scoped, tag = 'scoped memory for study_net_forward.1']
    #allocation8 [shape = 'u8[8192]{0}', space=vmem, size = 0x2000, scoped, tag = 'output window, operand 0']
    %10 = vsyncpa [#allocation5], 0
    %11 = vsyncpa [#allocation7], 0
    %12 = vsyncpa [#allocation4], 0
    %s13 = scalar_lea.sflag [#allocation4], 1
    %14 = vsyncpa %s13, 0
    loop: start=0, step=1, limit=4
    $region2: #{study_net_forward.1} parent=1 // loop_pre_header
      _
    $region3: #{study_net_forward.1} parent=1 // loop_header
      %s16 = sphi 0, %s20
      %p17 = scmp.ge.s32.totalorder %s16, 4
      %s26 = sphi 0, %s28
      %s29 = sphi 0, %s26
      %s30 = sphi 0, %s29
      %s46 = sphi 0, %s30
      %s50 = sphi 0, %s50
      %s52 = sphi 0, %s50
      %s53 = sphi 0, %s52
      %s67 = sphi 0, %s53
      %s71 = sphi 0, %s71
      %s73 = sphi 0, %s71
      %s74 = sphi 0, %s73
      %s88 = sphi 0, %s74
      %s92 = sphi 0, %s92
      %s94 = sphi 0, %s92
      %s95 = sphi 0, %s94
      %s109 = sphi 0, %s95
      %s113 = sphi 0, %s113
      %s115 = sphi 0, %s113
      %s116 = sphi 0, %s115
      %s130 = sphi 0, %s116
      %s136 = sphi 0, %s138
      %s139 = sphi 0, %s136
      %s140 = sphi 0, %s139
      %s156 = sphi 0, %s140
    $region4: #{study_net_forward.1} parent=1 // loop_header_branch
      %19 = sbr.rel (%p17) target = $region8
    $region5: #{study_net_forward.1} parent=1 // loop_body
      %s21 = ssub.s32 %s16, 1
      %s22 = ssub.s32 %s16, 2
      %s23 = sadd.s32 %s16, 1
      %s24 = ssub.s32 %s16, %s23
      %p25 = scmp.eq.s32.totalorder %s24, 0
      %s27 = sadd.s32 %s26, 1
      %s28 = scalar_select %p25, %s26, %s27
      %p31 = pneg %p25
      %p32 = scmp.eq.s32.totalorder %s16, 1
      %p33 = por %p31, %p32
      %p34 = scmp.ne.s32.totalorder %s26, %s29
      %p35 = scmp.eq.s32.totalorder %s16, 0
      %p36 = por %p34, %p35
      %p37 = scmp.ne.s32.totalorder %s26, %s29
      %p38 = scmp.eq.s32.totalorder %s21, 1
      %p39 = por %p37, %p38
      %p40 = scmp.ne.s32.totalorder %s29, %s30
      %p41 = scmp.eq.s32.totalorder %s21, 0
      %p42 = por %p40, %p41
      %p43 = scmp.ne.s32.totalorder %s29, %s30
      %p44 = scmp.eq.s32.totalorder %s22, 1
      %p45 = por %p43, %p44
      %p47 = scmp.ne.s32.totalorder %s30, %s46
      %p48 = scmp.eq.s32.totalorder %s22, 0
      %p49 = por %p47, %p48
      %s51 = sadd.s32 %s50, 1
      %p54 = scmp.eq.s32.totalorder %s16, 1
      %p55 = scmp.ne.s32.totalorder %s50, %s52
      %p56 = scmp.eq.s32.totalorder %s16, 0
      %p57 = por %p55, %p56
      %p58 = scmp.ne.s32.totalorder %s50, %s52
      %p59 = scmp.eq.s32.totalorder %s21, 1
      %p60 = por %p58, %p59
      %p61 = scmp.ne.s32.totalorder %s52, %s53
      %p62 = scmp.eq.s32.totalorder %s21, 0
      %p63 = por %p61, %p62
      %p64 = scmp.ne.s32.totalorder %s52, %s53
      %p65 = scmp.eq.s32.totalorder %s22, 1
      %p66 = por %p64, %p65
      %p68 = scmp.ne.s32.totalorder %s53, %s67
      %p69 = scmp.eq.s32.totalorder %s22, 0
      %p70 = por %p68, %p69
      %s72 = sadd.s32 %s71, 1
      %p75 = scmp.eq.s32.totalorder %s16, 1
      %p76 = scmp.ne.s32.totalorder %s71, %s73
      %p77 = scmp.eq.s32.totalorder %s16, 0
      %p78 = por %p76, %p77
      %p79 = scmp.ne.s32.totalorder %s71, %s73
      %p80 = scmp.eq.s32.totalorder %s21, 1
      %p81 = por %p79, %p80
      %p82 = scmp.ne.s32.totalorder %s73, %s74
      %p83 = scmp.eq.s32.totalorder %s21, 0
      %p84 = por %p82, %p83
      %p85 = scmp.ne.s32.totalorder %s73, %s74
      %p86 = scmp.eq.s32.totalorder %s22, 1
      %p87 = por %p85, %p86
      %p89 = scmp.ne.s32.totalorder %s74, %s88
      %p90 = scmp.eq.s32.totalorder %s22, 0
      %p91 = por %p89, %p90
      %s93 = sadd.s32 %s92, 1
      %p96 = scmp.eq.s32.totalorder %s16, 1
      %p97 = scmp.ne.s32.totalorder %s92, %s94
      %p98 = scmp.eq.s32.totalorder %s16, 0
      %p99 = por %p97, %p98
      %p100 = scmp.ne.s32.totalorder %s92, %s94
      %p101 = scmp.eq.s32.totalorder %s21, 1
      %p102 = por %p100, %p101
      %p103 = scmp.ne.s32.totalorder %s94, %s95
      %p104 = scmp.eq.s32.totalorder %s21, 0
      %p105 = por %p103, %p104
      %p106 = scmp.ne.s32.totalorder %s94, %s95
      %p107 = scmp.eq.s32.totalorder %s22, 1
      %p108 = por %p106, %p107
      %p110 = scmp.ne.s32.totalorder %s95, %s109
      %p111 = scmp.eq.s32.totalorder %s22, 0
      %p112 = por %p110, %p111
      %s114 = sadd.s32 %s113, 1
      %p117 = scmp.eq.s32.totalorder %s16, 1
      %p118 = scmp.ne.s32.totalorder %s113, %s115
      %p119 = scmp.eq.s32.totalorder %s16, 0
      %p120 = por %p118, %p119
      %p121 = scmp.ne.s32.totalorder %s113, %s115
      %p122 = scmp.eq.s32.totalorder %s21, 1
      %p123 = por %p121, %p122
      %p124 = scmp.ne.s32.totalorder %s115, %s116
      %p125 = scmp.eq.s32.totalorder %s21, 0
      %p126 = por %p124, %p125
      %p127 = scmp.ne.s32.totalorder %s115, %s116
      %p128 = scmp.eq.s32.totalorder %s22, 1
      %p129 = por %p127, %p128
      %p131 = scmp.ne.s32.totalorder %s116, %s130
      %p132 = scmp.eq.s32.totalorder %s22, 0
      %p133 = por %p131, %p132
      %s134 = ssub.s32 %s16, %s23
      %p135 = scmp.eq.s32.totalorder %s134, 0
      %s137 = sadd.s32 %s136, 1
      %s138 = scalar_select %p135, %s136, %s137
      %p141 = pneg %p135
      %p142 = scmp.eq.s32.totalorder %s16, 1
      %p143 = por %p141, %p142
      %p144 = scmp.ne.s32.totalorder %s136, %s139
      %p145 = scmp.eq.s32.totalorder %s16, 0
      %p146 = por %p144, %p145
      %p147 = scmp.ne.s32.totalorder %s136, %s139
      %p148 = scmp.eq.s32.totalorder %s21, 1
      %p149 = por %p147, %p148
      %p150 = scmp.ne.s32.totalorder %s139, %s140
      %p151 = scmp.eq.s32.totalorder %s21, 0
      %p152 = por %p150, %p151
      %p153 = scmp.ne.s32.totalorder %s139, %s140
      %p154 = scmp.eq.s32.totalorder %s22, 1
      %p155 = por %p153, %p154
      %p157 = scmp.ne.s32.totalorder %s140, %s156
      %p158 = scmp.eq.s32.totalorder %s22, 0
      %p159 = por %p157, %p158
      %p160 = scmp.le.s32.totalorder 1, %s16
      %p161 = scmp.lt.s32.totalorder %s16, 3
      %p162 = pnand %p160, %p161
      %p163 = pneg %p162
      // Predicated region
      $region9: #{study_net_forward.1} parent=5 // pred_check
        _
      $region10: #{study_net_forward.1} parent=5 // pred_check_branch
        %165 = sbr.rel (%p162) target = $region12
      $region11: #{study_net_forward.1} parent=5 // pred_region
        %s166 = ssub.s32 %s16, 1
        // Predicated region
        $region13: #{study_net_forward.1} parent=11 // pred_check
          %p167 = pneg %p63
        $region14: #{study_net_forward.1} parent=11 // pred_check_branch
          %169 = sbr.rel (%p167) target = $region16
        $region15: #{study_net_forward.1} parent=11 // pred_region
          %s171 = ssub.s32 16, 16
          %172 = vsyncadd [#allocation5], %s171
          %s174 = sshll.u32 %s1, 4
          %s175 = int_to_ptr.vmem [resolvable:$true] %s174
          %177 = dma.vmem_to_smem %s175, 16, [#allocation3], [#allocation5]
        $region16: #{study_net_forward.1} parent=11 // pred_fallthru
          _
        // Predicated region
        $region17: #{study_net_forward.1} parent=11 // pred_check
          %p178 = pneg %p84
        $region18: #{study_net_forward.1} parent=11 // pred_check_branch
          %180 = sbr.rel (%p178) target = $region20
        $region19: #{study_net_forward.1} parent=11 // pred_region
          %s182 = ssub.s32 16, 16
          %183 = vsyncadd [#allocation7], %s182
          %s185 = sshll.u32 %s2, 4
          %s186 = int_to_ptr.vmem [resolvable:$true] %s185
          %188 = dma.vmem_to_smem %s186, 16, [#allocation6], [#allocation7]
        $region20: #{study_net_forward.1} parent=11 // pred_fallthru
          _
        // Predicated region
        $region21: #{study_net_forward.1} parent=11 // pred_check
          %p189 = pneg %p105
        $region22: #{study_net_forward.1} parent=11 // pred_check_branch
          %191 = sbr.rel (%p189) target = $region24
        $region23: #{study_net_forward.1} parent=11 // pred_region
          _
        $region24: #{study_net_forward.1} parent=11 // pred_fallthru
          _
        // Predicated region
        $region25: #{study_net_forward.1} parent=11 // pred_check
          %p192 = pneg %p126
        $region26: #{study_net_forward.1} parent=11 // pred_check_branch
          %194 = sbr.rel (%p192) target = $region28
        $region27: #{study_net_forward.1} parent=11 // pred_region
          _
        $region28: #{study_net_forward.1} parent=11 // pred_fallthru
          _
      $region12: #{study_net_forward.1} parent=5 // pred_fallthru
        _
      %p195 = scmp.lt.s32.totalorder %s16, 2
      // Predicated region
      $region29: #{study_net_forward.1} parent=5 // pred_check
        %p196 = pneg %p195
      $region30: #{study_net_forward.1} parent=5 // pred_check_branch
        %198 = sbr.rel (%p196) target = $region32
      $region31: #{study_net_forward.1} parent=5 // pred_region
        // Predicated region
        $region33: #{study_net_forward.1} parent=31 // pred_check
          %p199 = pneg %p36
        $region34: #{study_net_forward.1} parent=31 // pred_check_branch
          %201 = sbr.rel (%p199) target = $region36
        $region35: #{study_net_forward.1} parent=31 // pred_region
          %p202 = scmp.lt.s32.totalorder %s16, 1
          %s203 = scalar_select %p202, %s16, 1
          %s204 = smul.addr %s203, 8
          %s205 = smul.addr %s204, 8
          %s206 = scalar_lea.vmem %s0, %s205
        $region36: #{study_net_forward.1} parent=31 // pred_fallthru
          _
      $region32: #{study_net_forward.1} parent=5 // pred_fallthru
        _
      %p207 = scmp.le.s32.totalorder 1, %s16
      %p208 = scmp.lt.s32.totalorder %s16, 3
      %p209 = pnand %p207, %p208
      %p210 = pneg %p209
      // Predicated region
      $region37: #{study_net_forward.1} parent=5 // pred_check
        _
      $region38: #{study_net_forward.1} parent=5 // pred_check_branch
        %212 = sbr.rel (%p209) target = $region40
      $region39: #{study_net_forward.1} parent=5 // pred_region
        %s213 = ssub.s32 %s16, 1
        // Predicated region
        $region41: #{study_net_forward.1} parent=39 // pred_check
          %p214 = pneg %p63
        $region42: #{study_net_forward.1} parent=39 // pred_check_branch
          %216 = sbr.rel (%p214) target = $region44
        $region43: #{study_net_forward.1} parent=39 // pred_region
          %217 = dma.done [#allocation5], 16
        $region44: #{study_net_forward.1} parent=39 // pred_fallthru
          _
        // Predicated region
        $region45: #{study_net_forward.1} parent=39 // pred_check
          %p218 = pneg %p84
        $region46: #{study_net_forward.1} parent=39 // pred_check_branch
          %220 = sbr.rel (%p218) target = $region48
        $region47: #{study_net_forward.1} parent=39 // pred_region
          %221 = dma.done [#allocation7], 16
        $region48: #{study_net_forward.1} parent=39 // pred_fallthru
          _
        %222 = sfence
        %p223 = scmp.lt.s32.totalorder %s21, 1
        %s224 = scalar_select %p223, %s21, 1
        %s225 = smul.addr %s224, 8
        %s226 = smul.addr %s225, 8
        %s227 = scalar_lea.vmem %s0, %s226
        %p228 = pneg %p42
        %p229 = pneg %p39
        %p230 = pneg %p63
        %p231 = pneg %p60
        %p232 = pneg %p84
        %p233 = pneg %p81
        %p234 = pneg %p105
        %p235 = pneg %p102
        %p236 = pneg %p126
        %p237 = pneg %p123
        %p238 = pneg %p152
        %p239 = pneg %p149
        %s240 = sand.u32 %s139, 1
        %s241 = scalar_lea.sflag [#allocation4], %s240
        %s242 = sand.u32 %s139, 1
        %s243 = smul.addr %s242, 8
        %s244 = scalar_lea.vmem [#allocation8], %s243
        %p245 = scmp.lt.s32.totalorder %s21, 1
        %s246 = scalar_select %p245, %s21, 1
        %s247 = smul.addr %s246, 8
        %s248 = smul.addr %s247, 8
        %s249 = scalar_lea.vmem %s0, %s248
        %s251 = smul.u32 0, 8
        %s252 = smul.addr %s251, 8
        %s253 = scalar_lea.vmem %s249, %s252
        %v254 = vld [vmem:[%s253] sm:$0xff]
        %v255 = vld [vmem:[%s253 + $0x8] sm:$0xff]
        %v256 = vld [vmem:[%s253 + $0x10] sm:$0xff]
        %v257 = vld [vmem:[%s253 + $0x18] sm:$0xff]
        %v258 = vld [vmem:[%s253 + $0x20] sm:$0xff]
        %v259 = vld [vmem:[%s253 + $0x28] sm:$0xff]
        %v260 = vld [vmem:[%s253 + $0x30] sm:$0xff]
        %v261 = vld [vmem:[%s253 + $0x38] sm:$0xff]
        %262 = vrot.lane.b32.xlu0 %v254, 127
        %v263 = vpop.permute.xlu0 %262
        %264 = vrot.lane.b32.xlu0 %v255, 127
        %v265 = vpop.permute.xlu0 %264
        %266 = vrot.lane.b32.xlu0 %v256, 127
        %v267 = vpop.permute.xlu0 %266
        %268 = vrot.lane.b32.xlu0 %v257, 127
        %v269 = vpop.permute.xlu0 %268
        %270 = vrot.lane.b32.xlu0 %v258, 127
        %v271 = vpop.permute.xlu0 %270
        %272 = vrot.lane.b32.xlu0 %v259, 127
        %v273 = vpop.permute.xlu0 %272
        %274 = vrot.lane.b32.xlu0 %v260, 127
        %v275 = vpop.permute.xlu0 %274
        %276 = vrot.lane.b32.xlu0 %v261, 127
        %v277 = vpop.permute.xlu0 %276
        %v278 = vlaneseq
        %v279 = vand.u32 %v278, 127
        %vm280 = vcmp.lt.s32.totalorder %v279, 127
        %v281 = vsel %vm280, %v275, %v277
        %v282 = vsel %vm280, %v273, %v275
        %v283 = vsel %vm280, %v271, %v273
        %v284 = vsel %vm280, %v269, %v271
        %v285 = vsel %vm280, %v267, %v269
        %v286 = vsel %vm280, %v265, %v267
        %v287 = vsel %vm280, %v263, %v265
        %v288 = vsel %vm280, %v277, %v263
        %289 = vrot.lane.b32.xlu0 %v254, 126
        %v290 = vpop.permute.xlu0 %289
        %291 = vrot.lane.b32.xlu0 %v255, 126
        %v292 = vpop.permute.xlu0 %291
        %293 = vrot.lane.b32.xlu0 %v256, 126
        %v294 = vpop.permute.xlu0 %293
        %295 = vrot.lane.b32.xlu0 %v257, 126
        %v296 = vpop.permute.xlu0 %295
        %297 = vrot.lane.b32.xlu0 %v258, 126
        %v298 = vpop.permute.xlu0 %297
        %299 = vrot.lane.b32.xlu0 %v259, 126
        %v300 = vpop.permute.xlu0 %299
        %301 = vrot.lane.b32.xlu0 %v260, 126
        %v302 = vpop.permute.xlu0 %301
        %303 = vrot.lane.b32.xlu0 %v261, 126
        %v304 = vpop.permute.xlu0 %303
        %vm305 = vcmp.lt.s32.totalorder %v279, 126
        %v306 = vsel %vm305, %v302, %v304
        %v307 = vsel %vm305, %v300, %v302
        %v308 = vsel %vm305, %v298, %v300
        %v309 = vsel %vm305, %v296, %v298
        %v310 = vsel %vm305, %v294, %v296
        %v311 = vsel %vm305, %v292, %v294
        %v312 = vsel %vm305, %v290, %v292
        %v313 = vsel %vm305, %v304, %v290
        %314 = vrot.lane.b32.xlu0 %v254, 96
        %v315 = vpop.permute.xlu0 %314
        %316 = vrot.lane.b32.xlu0 %v255, 96
        %v317 = vpop.permute.xlu0 %316
        %318 = vrot.lane.b32.xlu0 %v256, 96
        %v319 = vpop.permute.xlu0 %318
        %320 = vrot.lane.b32.xlu0 %v257, 96
        %v321 = vpop.permute.xlu0 %320
        %322 = vrot.lane.b32.xlu0 %v258, 96
        %v323 = vpop.permute.xlu0 %322
        %324 = vrot.lane.b32.xlu0 %v259, 96
        %v325 = vpop.permute.xlu0 %324
        %326 = vrot.lane.b32.xlu0 %v260, 96
        %v327 = vpop.permute.xlu0 %326
        %328 = vrot.lane.b32.xlu0 %v261, 96
        %v329 = vpop.permute.xlu0 %328
        %vm330 = vcmp.lt.s32.totalorder %v279, 96
        %v331 = vsel %vm330, %v327, %v329
        %v332 = vsel %vm330, %v325, %v327
        %v333 = vsel %vm330, %v323, %v325
        %v334 = vsel %vm330, %v321, %v323
        %v335 = vsel %vm330, %v319, %v321
        %v336 = vsel %vm330, %v317, %v319
        %v337 = vsel %vm330, %v315, %v317
        %v338 = vsel %vm330, %v329, %v315
        %339 = vrot.lane.b32.xlu0 %v254, 95
        %v340 = vpop.permute.xlu0 %339
        %341 = vrot.lane.b32.xlu0 %v255, 95
        %v342 = vpop.permute.xlu0 %341
        %343 = vrot.lane.b32.xlu0 %v256, 95
        %v344 = vpop.permute.xlu0 %343
        %345 = vrot.lane.b32.xlu0 %v257, 95
        %v346 = vpop.permute.xlu0 %345
        %347 = vrot.lane.b32.xlu0 %v258, 95
        %v348 = vpop.permute.xlu0 %347
        %349 = vrot.lane.b32.xlu0 %v259, 95
        %v350 = vpop.permute.xlu0 %349
        %351 = vrot.lane.b32.xlu0 %v260, 95
        %v352 = vpop.permute.xlu0 %351
        %353 = vrot.lane.b32.xlu0 %v261, 95
        %v354 = vpop.permute.xlu0 %353
        %vm355 = vcmp.lt.s32.totalorder %v279, 95
        %v356 = vsel %vm355, %v352, %v354
        %v357 = vsel %vm355, %v350, %v352
        %v358 = vsel %vm355, %v348, %v350
        %v359 = vsel %vm355, %v346, %v348
        %v360 = vsel %vm355, %v344, %v346
        %v361 = vsel %vm355, %v342, %v344
        %v362 = vsel %vm355, %v340, %v342
        %v363 = vsel %vm355, %v354, %v340
        %364 = vrot.lane.b32.xlu0 %v254, 94
        %v365 = vpop.permute.xlu0 %364
        %366 = vrot.lane.b32.xlu0 %v255, 94
        %v367 = vpop.permute.xlu0 %366
        %368 = vrot.lane.b32.xlu0 %v256, 94
        %v369 = vpop.permute.xlu0 %368
        %370 = vrot.lane.b32.xlu0 %v257, 94
        %v371 = vpop.permute.xlu0 %370
        %372 = vrot.lane.b32.xlu0 %v258, 94
        %v373 = vpop.permute.xlu0 %372
        %374 = vrot.lane.b32.xlu0 %v259, 94
        %v375 = vpop.permute.xlu0 %374
        %376 = vrot.lane.b32.xlu0 %v260, 94
        %v377 = vpop.permute.xlu0 %376
        %378 = vrot.lane.b32.xlu0 %v261, 94
        %v379 = vpop.permute.xlu0 %378
        %vm380 = vcmp.lt.s32.totalorder %v279, 94
        %v381 = vsel %vm380, %v377, %v379
        %v382 = vsel %vm380, %v375, %v377
        %v383 = vsel %vm380, %v373, %v375
        %v384 = vsel %vm380, %v371, %v373
        %v385 = vsel %vm380, %v369, %v371
        %v386 = vsel %vm380, %v367, %v369
        %v387 = vsel %vm380, %v365, %v367
        %v388 = vsel %vm380, %v379, %v365
        %389 = vrot.lane.b32.xlu0 %v254, 64
        %v390 = vpop.permute.xlu0 %389
        %391 = vrot.lane.b32.xlu0 %v255, 64
        %v392 = vpop.permute.xlu0 %391
        %393 = vrot.lane.b32.xlu0 %v256, 64
        %v394 = vpop.permute.xlu0 %393
        %395 = vrot.lane.b32.xlu0 %v257, 64
        %v396 = vpop.permute.xlu0 %395
        %397 = vrot.lane.b32.xlu0 %v258, 64
        %v398 = vpop.permute.xlu0 %397
        %399 = vrot.lane.b32.xlu0 %v259, 64
        %v400 = vpop.permute.xlu0 %399
        %401 = vrot.lane.b32.xlu0 %v260, 64
        %v402 = vpop.permute.xlu0 %401
        %403 = vrot.lane.b32.xlu0 %v261, 64
        %v404 = vpop.permute.xlu0 %403
        %vm405 = vcmp.lt.s32.totalorder %v279, 64
        %v406 = vsel %vm405, %v402, %v404
        %v407 = vsel %vm405, %v400, %v402
        %v408 = vsel %vm405, %v398, %v400
        %v409 = vsel %vm405, %v396, %v398
        %v410 = vsel %vm405, %v394, %v396
        %v411 = vsel %vm405, %v392, %v394
        %v412 = vsel %vm405, %v390, %v392
        %v413 = vsel %vm405, %v404, %v390
        %414 = vrot.lane.b32.xlu0 %v254, 63
        %v415 = vpop.permute.xlu0 %414
        %416 = vrot.lane.b32.xlu0 %v255, 63
        %v417 = vpop.permute.xlu0 %416
        %418 = vrot.lane.b32.xlu0 %v256, 63
        %v419 = vpop.permute.xlu0 %418
        %420 = vrot.lane.b32.xlu0 %v257, 63
        %v421 = vpop.permute.xlu0 %420
        %422 = vrot.lane.b32.xlu0 %v258, 63
        %v423 = vpop.permute.xlu0 %422
        %424 = vrot.lane.b32.xlu0 %v259, 63
        %v425 = vpop.permute.xlu0 %424
        %426 = vrot.lane.b32.xlu0 %v260, 63
        %v427 = vpop.permute.xlu0 %426
        %428 = vrot.lane.b32.xlu0 %v261, 63
        %v429 = vpop.permute.xlu0 %428
        %vm430 = vcmp.lt.s32.totalorder %v279, 63
        %v431 = vsel %vm430, %v427, %v429
        %v432 = vsel %vm430, %v425, %v427
        %v433 = vsel %vm430, %v423, %v425
        %v434 = vsel %vm430, %v421, %v423
        %v435 = vsel %vm430, %v419, %v421
        %v436 = vsel %vm430, %v417, %v419
        %v437 = vsel %vm430, %v415, %v417
        %v438 = vsel %vm430, %v429, %v415
        %439 = vrot.lane.b32.xlu0 %v254, 62
        %v440 = vpop.permute.xlu0 %439
        %441 = vrot.lane.b32.xlu0 %v255, 62
        %v442 = vpop.permute.xlu0 %441
        %443 = vrot.lane.b32.xlu0 %v256, 62
        %v444 = vpop.permute.xlu0 %443
        %445 = vrot.lane.b32.xlu0 %v257, 62
        %v446 = vpop.permute.xlu0 %445
        %447 = vrot.lane.b32.xlu0 %v258, 62
        %v448 = vpop.permute.xlu0 %447
        %449 = vrot.lane.b32.xlu0 %v259, 62
        %v450 = vpop.permute.xlu0 %449
        %451 = vrot.lane.b32.xlu0 %v260, 62
        %v452 = vpop.permute.xlu0 %451
        %453 = vrot.lane.b32.xlu0 %v261, 62
        %v454 = vpop.permute.xlu0 %453
        %vm455 = vcmp.lt.s32.totalorder %v279, 62
        %v456 = vsel %vm455, %v452, %v454
        %v457 = vsel %vm455, %v450, %v452
        %v458 = vsel %vm455, %v448, %v450
        %v459 = vsel %vm455, %v446, %v448
        %v460 = vsel %vm455, %v444, %v446
        %v461 = vsel %vm455, %v442, %v444
        %v462 = vsel %vm455, %v440, %v442
        %v463 = vsel %vm455, %v454, %v440
        %s464 = sld [smem:[#allocation3]]
        %v465 = vstv %s464
        %v466 = vmul.f32 %v465, %v254
        %v467 = vmul.f32 %v465, %v255
        %v468 = vmul.f32 %v465, %v256
        %v469 = vmul.f32 %v465, %v257
        %v470 = vmul.f32 %v465, %v258
        %v471 = vmul.f32 %v465, %v259
        %v472 = vmul.f32 %v465, %v260
        %v473 = vmul.f32 %v465, %v261
        %s474 = sld [smem:[#allocation6]]
        %v475 = vstv %s474
        %v476 = vadd.f32 %v466, %v475
        %v477 = vadd.f32 %v467, %v475
        %v478 = vadd.f32 %v468, %v475
        %v479 = vadd.f32 %v469, %v475
        %v480 = vadd.f32 %v470, %v475
        %v481 = vadd.f32 %v471, %v475
        %v482 = vadd.f32 %v472, %v475
        %v483 = vadd.f32 %v473, %v475
        %s484 = sld [smem:[#allocation3 + $0x1]]
        %v485 = vstv %s484
        %v486 = vmul.f32 %v485, %v287
        %v487 = vmul.f32 %v485, %v286
        %v488 = vmul.f32 %v485, %v285
        %v489 = vmul.f32 %v485, %v284
        %v490 = vmul.f32 %v485, %v283
        %v491 = vmul.f32 %v485, %v282
        %v492 = vmul.f32 %v485, %v281
        %v493 = vmul.f32 %v485, %v288
        %v494 = vadd.f32 %v476, %v486
        %v495 = vadd.f32 %v477, %v487
        %v496 = vadd.f32 %v478, %v488
        %v497 = vadd.f32 %v479, %v489
        %v498 = vadd.f32 %v480, %v490
        %v499 = vadd.f32 %v481, %v491
        %v500 = vadd.f32 %v482, %v492
        %v501 = vadd.f32 %v483, %v493
        %s502 = sld [smem:[#allocation3 + $0x2]]
        %v503 = vstv %s502
        %v504 = vmul.f32 %v503, %v312
        %v505 = vmul.f32 %v503, %v311
        %v506 = vmul.f32 %v503, %v310
        %v507 = vmul.f32 %v503, %v309
        %v508 = vmul.f32 %v503, %v308
        %v509 = vmul.f32 %v503, %v307
        %v510 = vmul.f32 %v503, %v306
        %v511 = vmul.f32 %v503, %v313
        %v512 = vadd.f32 %v494, %v504
        %v513 = vadd.f32 %v495, %v505
        %v514 = vadd.f32 %v496, %v506
        %v515 = vadd.f32 %v497, %v507
        %v516 = vadd.f32 %v498, %v508
        %v517 = vadd.f32 %v499, %v509
        %v518 = vadd.f32 %v500, %v510
        %v519 = vadd.f32 %v501, %v511
        %s520 = sld [smem:[#allocation3 + $0x3]]
        %v521 = vstv %s520
        %v522 = vmul.f32 %v521, %v337
        %v523 = vmul.f32 %v521, %v336
        %v524 = vmul.f32 %v521, %v335
        %v525 = vmul.f32 %v521, %v334
        %v526 = vmul.f32 %v521, %v333
        %v527 = vmul.f32 %v521, %v332
        %v528 = vmul.f32 %v521, %v331
        %v529 = vmul.f32 %v521, %v338
        %v530 = vadd.f32 %v512, %v522
        %v531 = vadd.f32 %v513, %v523
        %v532 = vadd.f32 %v514, %v524
        %v533 = vadd.f32 %v515, %v525
        %v534 = vadd.f32 %v516, %v526
        %v535 = vadd.f32 %v517, %v527
        %v536 = vadd.f32 %v518, %v528
        %v537 = vadd.f32 %v519, %v529
        %s538 = sld [smem:[#allocation3 + $0x4]]
        %v539 = vstv %s538
        %v540 = vmul.f32 %v539, %v362
        %v541 = vmul.f32 %v539, %v361
        %v542 = vmul.f32 %v539, %v360
        %v543 = vmul.f32 %v539, %v359
        %v544 = vmul.f32 %v539, %v358
        %v545 = vmul.f32 %v539, %v357
        %v546 = vmul.f32 %v539, %v356
        %v547 = vmul.f32 %v539, %v363
        %v548 = vadd.f32 %v530, %v540
        %v549 = vadd.f32 %v531, %v541
        %v550 = vadd.f32 %v532, %v542
        %v551 = vadd.f32 %v533, %v543
        %v552 = vadd.f32 %v534, %v544
        %v553 = vadd.f32 %v535, %v545
        %v554 = vadd.f32 %v536, %v546
        %v555 = vadd.f32 %v537, %v547
        %s556 = sld [smem:[#allocation3 + $0x5]]
        %v557 = vstv %s556
        %v558 = vmul.f32 %v557, %v387
        %v559 = vmul.f32 %v557, %v386
        %v560 = vmul.f32 %v557, %v385
        %v561 = vmul.f32 %v557, %v384
        %v562 = vmul.f32 %v557, %v383
        %v563 = vmul.f32 %v557, %v382
        %v564 = vmul.f32 %v557, %v381
        %v565 = vmul.f32 %v557, %v388
        %v566 = vadd.f32 %v548, %v558
        %v567 = vadd.f32 %v549, %v559
        %v568 = vadd.f32 %v550, %v560
        %v569 = vadd.f32 %v551, %v561
        %v570 = vadd.f32 %v552, %v562
        %v571 = vadd.f32 %v553, %v563
        %v572 = vadd.f32 %v554, %v564
        %v573 = vadd.f32 %v555, %v565
        %s574 = sld [smem:[#allocation3 + $0x6]]
        %v575 = vstv %s574
        %v576 = vmul.f32 %v575, %v412
        %v577 = vmul.f32 %v575, %v411
        %v578 = vmul.f32 %v575, %v410
        %v579 = vmul.f32 %v575, %v409
        %v580 = vmul.f32 %v575, %v408
        %v581 = vmul.f32 %v575, %v407
        %v582 = vmul.f32 %v575, %v406
        %v583 = vmul.f32 %v575, %v413
        %v584 = vadd.f32 %v566, %v576
        %v585 = vadd.f32 %v567, %v577
        %v586 = vadd.f32 %v568, %v578
        %v587 = vadd.f32 %v569, %v579
        %v588 = vadd.f32 %v570, %v580
        %v589 = vadd.f32 %v571, %v581
        %v590 = vadd.f32 %v572, %v582
        %v591 = vadd.f32 %v573, %v583
        %s592 = sld [smem:[#allocation3 + $0x7]]
        %v593 = vstv %s592
        %v594 = vmul.f32 %v593, %v437
        %v595 = vmul.f32 %v593, %v436
        %v596 = vmul.f32 %v593, %v435
        %v597 = vmul.f32 %v593, %v434
        %v598 = vmul.f32 %v593, %v433
        %v599 = vmul.f32 %v593, %v432
        %v600 = vmul.f32 %v593, %v431
        %v601 = vmul.f32 %v593, %v438
        %v602 = vadd.f32 %v584, %v594
        %v603 = vadd.f32 %v585, %v595
        %v604 = vadd.f32 %v586, %v596
        %v605 = vadd.f32 %v587, %v597
        %v606 = vadd.f32 %v588, %v598
        %v607 = vadd.f32 %v589, %v599
        %v608 = vadd.f32 %v590, %v600
        %v609 = vadd.f32 %v591, %v601
        %s610 = sld [smem:[#allocation3 + $0x8]]
        %v611 = vstv %s610
        %v612 = vmul.f32 %v611, %v462
        %v613 = vmul.f32 %v611, %v461
        %v614 = vmul.f32 %v611, %v460
        %v615 = vmul.f32 %v611, %v459
        %v616 = vmul.f32 %v611, %v458
        %v617 = vmul.f32 %v611, %v457
        %v618 = vmul.f32 %v611, %v456
        %v619 = vmul.f32 %v611, %v463
        %v620 = vadd.f32 %v602, %v612
        %v621 = vadd.f32 %v603, %v613
        %v622 = vadd.f32 %v604, %v614
        %v623 = vadd.f32 %v605, %v615
        %v624 = vadd.f32 %v606, %v616
        %v625 = vadd.f32 %v607, %v617
        %v626 = vadd.f32 %v608, %v618
        %v627 = vadd.f32 %v609, %v619
        %v628 = vmax.f32 %v620, 0.0
        %v629 = vmax.f32 %v621, 0.0
        %v630 = vmax.f32 %v622, 0.0
        %v631 = vmax.f32 %v623, 0.0
        %v632 = vmax.f32 %v624, 0.0
        %v633 = vmax.f32 %v625, 0.0
        %v634 = vmax.f32 %v626, 0.0
        %v635 = vmax.f32 %v627, 0.0
        %636 = vrot.lane.b32.xlu0 %v628, 127
        %v637 = vpop.permute.xlu0 %636
        %638 = vrot.lane.b32.xlu0 %v629, 127
        %v639 = vpop.permute.xlu0 %638
        %640 = vrot.lane.b32.xlu0 %v630, 127
        %v641 = vpop.permute.xlu0 %640
        %642 = vrot.lane.b32.xlu0 %v631, 127
        %v643 = vpop.permute.xlu0 %642
        %644 = vrot.lane.b32.xlu0 %v632, 127
        %v645 = vpop.permute.xlu0 %644
        %646 = vrot.lane.b32.xlu0 %v633, 127
        %v647 = vpop.permute.xlu0 %646
        %648 = vrot.lane.b32.xlu0 %v634, 127
        %v649 = vpop.permute.xlu0 %648
        %650 = vrot.lane.b32.xlu0 %v635, 127
        %v651 = vpop.permute.xlu0 %650
        %v652 = vsel %vm280, %v649, %v651
        %v653 = vsel %vm280, %v647, %v649
        %v654 = vsel %vm280, %v645, %v647
        %v655 = vsel %vm280, %v643, %v645
        %v656 = vsel %vm280, %v641, %v643
        %v657 = vsel %vm280, %v639, %v641
        %v658 = vsel %vm280, %v637, %v639
        %v659 = vsel %vm280, %v651, %v637
        %v660 = vmax.f32 %v628, %v658
        %v661 = vmax.f32 %v629, %v657
        %v662 = vmax.f32 %v630, %v656
        %v663 = vmax.f32 %v631, %v655
        %v664 = vmax.f32 %v632, %v654
        %v665 = vmax.f32 %v633, %v653
        %v666 = vmax.f32 %v634, %v652
        %v667 = vmax.f32 %v635, %v659
        %668 = vrot.lane.b32.xlu0 %v660, 96
        %v669 = vpop.permute.xlu0 %668
        %670 = vrot.lane.b32.xlu0 %v661, 96
        %v671 = vpop.permute.xlu0 %670
        %672 = vrot.lane.b32.xlu0 %v662, 96
        %v673 = vpop.permute.xlu0 %672
        %674 = vrot.lane.b32.xlu0 %v663, 96
        %v675 = vpop.permute.xlu0 %674
        %676 = vrot.lane.b32.xlu0 %v664, 96
        %v677 = vpop.permute.xlu0 %676
        %678 = vrot.lane.b32.xlu0 %v665, 96
        %v679 = vpop.permute.xlu0 %678
        %680 = vrot.lane.b32.xlu0 %v666, 96
        %v681 = vpop.permute.xlu0 %680
        %682 = vrot.lane.b32.xlu0 %v667, 96
        %v683 = vpop.permute.xlu0 %682
        %v684 = vsel %vm330, %v681, %v683
        %v685 = vsel %vm330, %v679, %v681
        %v686 = vsel %vm330, %v677, %v679
        %v687 = vsel %vm330, %v675, %v677
        %v688 = vsel %vm330, %v673, %v675
        %v689 = vsel %vm330, %v671, %v673
        %v690 = vsel %vm330, %v669, %v671
        %v691 = vsel %vm330, %v683, %v669
        %v692 = vmax.f32 %v660, %v690
        %v693 = vmax.f32 %v661, %v689
        %v694 = vmax.f32 %v662, %v688
        %v695 = vmax.f32 %v663, %v687
        %v696 = vmax.f32 %v664, %v686
        %v697 = vmax.f32 %v665, %v685
        %v698 = vmax.f32 %v666, %v684
        %v699 = vmax.f32 %v667, %v691
        %s700 = smul.addr %s251, 8
        %s701 = scalar_lea.vmem [#allocation2], %s700
        %702 = vst [vmem:[%s701] sm:$0xff] %v692
        %703 = vst [vmem:[%s701 + $0x8] sm:$0xff] %v693
        %704 = vst [vmem:[%s701 + $0x10] sm:$0xff] %v694
        %705 = vst [vmem:[%s701 + $0x18] sm:$0xff] %v695
        %706 = vst [vmem:[%s701 + $0x20] sm:$0xff] %v696
        %707 = vst [vmem:[%s701 + $0x28] sm:$0xff] %v697
        %708 = vst [vmem:[%s701 + $0x30] sm:$0xff] %v698
        %709 = vst [vmem:[%s701 + $0x38] sm:$0xff] %v699
        %s710 = sld [smem:[#allocation3 + $0x9]]
        %v711 = vstv %s710
        %v712 = vmul.f32 %v711, %v254
        %v713 = vmul.f32 %v711, %v255
        %v714 = vmul.f32 %v711, %v256
        %v715 = vmul.f32 %v711, %v257
        %v716 = vmul.f32 %v711, %v258
        %v717 = vmul.f32 %v711, %v259
        %v718 = vmul.f32 %v711, %v260
        %v719 = vmul.f32 %v711, %v261
        %s720 = sld [smem:[#allocation6 + $0x1]]
        %v721 = vstv %s720
        %v722 = vadd.f32 %v712, %v721
        %v723 = vadd.f32 %v713, %v721
        %v724 = vadd.f32 %v714, %v721
        %v725 = vadd.f32 %v715, %v721
        %v726 = vadd.f32 %v716, %v721
        %v727 = vadd.f32 %v717, %v721
        %v728 = vadd.f32 %v718, %v721
        %v729 = vadd.f32 %v719, %v721
        %s730 = sld [smem:[#allocation3 + $0xa]]
        %v731 = vstv %s730
        %v732 = vmul.f32 %v731, %v287
        %v733 = vmul.f32 %v731, %v286
        %v734 = vmul.f32 %v731, %v285
        %v735 = vmul.f32 %v731, %v284
        %v736 = vmul.f32 %v731, %v283
        %v737 = vmul.f32 %v731, %v282
        %v738 = vmul.f32 %v731, %v281
        %v739 = vmul.f32 %v731, %v288
        %v740 = vadd.f32 %v722, %v732
        %v741 = vadd.f32 %v723, %v733
        %v742 = vadd.f32 %v724, %v734
        %v743 = vadd.f32 %v725, %v735
        %v744 = vadd.f32 %v726, %v736
        %v745 = vadd.f32 %v727, %v737
        %v746 = vadd.f32 %v728, %v738
        %v747 = vadd.f32 %v729, %v739
        %s748 = sld [smem:[#allocation3 + $0xb]]
        %v749 = vstv %s748
        %v750 = vmul.f32 %v749, %v312
        %v751 = vmul.f32 %v749, %v311
        %v752 = vmul.f32 %v749, %v310
        %v753 = vmul.f32 %v749, %v309
        %v754 = vmul.f32 %v749, %v308
        %v755 = vmul.f32 %v749, %v307
        %v756 = vmul.f32 %v749, %v306
        %v757 = vmul.f32 %v749, %v313
        %v758 = vadd.f32 %v740, %v750
        %v759 = vadd.f32 %v741, %v751
        %v760 = vadd.f32 %v742, %v752
        %v761 = vadd.f32 %v743, %v753
        %v762 = vadd.f32 %v744, %v754
        %v763 = vadd.f32 %v745, %v755
        %v764 = vadd.f32 %v746, %v756
        %v765 = vadd.f32 %v747, %v757
        %s766 = sld [smem:[#allocation3 + $0xc]]
        %v767 = vstv %s766
        %v768 = vmul.f32 %v767, %v337
        %v769 = vmul.f32 %v767, %v336
        %v770 = vmul.f32 %v767, %v335
        %v771 = vmul.f32 %v767, %v334
        %v772 = vmul.f32 %v767, %v333
        %v773 = vmul.f32 %v767, %v332
        %v774 = vmul.f32 %v767, %v331
        %v775 = vmul.f32 %v767, %v338
        %v776 = vadd.f32 %v758, %v768
        %v777 = vadd.f32 %v759, %v769
        %v778 = vadd.f32 %v760, %v770
        %v779 = vadd.f32 %v761, %v771
        %v780 = vadd.f32 %v762, %v772
        %v781 = vadd.f32 %v763, %v773
        %v782 = vadd.f32 %v764, %v774
        %v783 = vadd.f32 %v765, %v775
        %s784 = sld [smem:[#allocation3 + $0xd]]
        %v785 = vstv %s784
        %v786 = vmul.f32 %v785, %v362
        %v787 = vmul.f32 %v785, %v361
        %v788 = vmul.f32 %v785, %v360
        %v789 = vmul.f32 %v785, %v359
        %v790 = vmul.f32 %v785, %v358
        %v791 = vmul.f32 %v785, %v357
        %v792 = vmul.f32 %v785, %v356
        %v793 = vmul.f32 %v785, %v363
        %v794 = vadd.f32 %v776, %v786
        %v795 = vadd.f32 %v777, %v787
        %v796 = vadd.f32 %v778, %v788
        %v797 = vadd.f32 %v779, %v789
        %v798 = vadd.f32 %v780, %v790
        %v799 = vadd.f32 %v781, %v791
        %v800 = vadd.f32 %v782, %v792
        %v801 = vadd.f32 %v783, %v793
        %s802 = sld [smem:[#allocation3 + $0xe]]
        %v803 = vstv %s802
        %v804 = vmul.f32 %v803, %v387
        %v805 = vmul.f32 %v803, %v386
        %v806 = vmul.f32 %v803, %v385
        %v807 = vmul.f32 %v803, %v384
        %v808 = vmul.f32 %v803, %v383
        %v809 = vmul.f32 %v803, %v382
        %v810 = vmul.f32 %v803, %v381
        %v811 = vmul.f32 %v803, %v388
        %v812 = vadd.f32 %v794, %v804
        %v813 = vadd.f32 %v795, %v805
        %v814 = vadd.f32 %v796, %v806
        %v815 = vadd.f32 %v797, %v807
        %v816 = vadd.f32 %v798, %v808
        %v817 = vadd.f32 %v799, %v809
        %v818 = vadd.f32 %v800, %v810
        %v819 = vadd.f32 %v801, %v811
        %s820 = sld [smem:[#allocation3 + $0xf]]
        %v821 = vstv %s820
        %v822 = vmul.f32 %v821, %v412
        %v823 = vmul.f32 %v821, %v411
        %v824 = vmul.f32 %v821, %v410
        %v825 = vmul.f32 %v821, %v409
        %v826 = vmul.f32 %v821, %v408
        %v827 = vmul.f32 %v821, %v407
        %v828 = vmul.f32 %v821, %v406
        %v829 = vmul.f32 %v821, %v413
        %v830 = vadd.f32 %v812, %v822
        %v831 = vadd.f32 %v813, %v823
        %v832 = vadd.f32 %v814, %v824
        %v833 = vadd.f32 %v815, %v825
        %v834 = vadd.f32 %v816, %v826
        %v835 = vadd.f32 %v817, %v827
        %v836 = vadd.f32 %v818, %v828
        %v837 = vadd.f32 %v819, %v829
        %s838 = sld [smem:[#allocation3 + $0x10]]
        %v839 = vstv %s838
        %v840 = vmul.f32 %v839, %v437
        %v841 = vmul.f32 %v839, %v436
        %v842 = vmul.f32 %v839, %v435
        %v843 = vmul.f32 %v839, %v434
        %v844 = vmul.f32 %v839, %v433
        %v845 = vmul.f32 %v839, %v432
        %v846 = vmul.f32 %v839, %v431
        %v847 = vmul.f32 %v839, %v438
        %v848 = vadd.f32 %v830, %v840
        %v849 = vadd.f32 %v831, %v841
        %v850 = vadd.f32 %v832, %v842
        %v851 = vadd.f32 %v833, %v843
        %v852 = vadd.f32 %v834, %v844
        %v853 = vadd.f32 %v835, %v845
        %v854 = vadd.f32 %v836, %v846
        %v855 = vadd.f32 %v837, %v847
        %s856 = sld [smem:[#allocation3 + $0x11]]
        %v857 = vstv %s856
        %v858 = vmul.f32 %v857, %v462
        %v859 = vmul.f32 %v857, %v461
        %v860 = vmul.f32 %v857, %v460
        %v861 = vmul.f32 %v857, %v459
        %v862 = vmul.f32 %v857, %v458
        %v863 = vmul.f32 %v857, %v457
        %v864 = vmul.f32 %v857, %v456
        %v865 = vmul.f32 %v857, %v463
        %v866 = vadd.f32 %v848, %v858
        %v867 = vadd.f32 %v849, %v859
        %v868 = vadd.f32 %v850, %v860
        %v869 = vadd.f32 %v851, %v861
        %v870 = vadd.f32 %v852, %v862
        %v871 = vadd.f32 %v853, %v863
        %v872 = vadd.f32 %v854, %v864
        %v873 = vadd.f32 %v855, %v865
        %v874 = vmax.f32 %v866, 0.0
        %v875 = vmax.f32 %v867, 0.0
        %v876 = vmax.f32 %v868, 0.0
        %v877 = vmax.f32 %v869, 0.0
        %v878 = vmax.f32 %v870, 0.0
        %v879 = vmax.f32 %v871, 0.0
        %v880 = vmax.f32 %v872, 0.0
        %v881 = vmax.f32 %v873, 0.0
        %882 = vrot.lane.b32.xlu0 %v874, 127
        %v883 = vpop.permute.xlu0 %882
        %884 = vrot.lane.b32.xlu0 %v875, 127
        %v885 = vpop.permute.xlu0 %884
        %886 = vrot.lane.b32.xlu0 %v876, 127
        %v887 = vpop.permute.xlu0 %886
        %888 = vrot.lane.b32.xlu0 %v877, 127
        %v889 = vpop.permute.xlu0 %888
        %890 = vrot.lane.b32.xlu0 %v878, 127
        %v891 = vpop.permute.xlu0 %890
        %892 = vrot.lane.b32.xlu0 %v879, 127
        %v893 = vpop.permute.xlu0 %892
        %894 = vrot.lane.b32.xlu0 %v880, 127
        %v895 = vpop.permute.xlu0 %894
        %896 = vrot.lane.b32.xlu0 %v881, 127
        %v897 = vpop.permute.xlu0 %896
        %v898 = vsel %vm280, %v895, %v897
        %v899 = vsel %vm280, %v893, %v895
        %v900 = vsel %vm280, %v891, %v893
        %v901 = vsel %vm280, %v889, %v891
        %v902 = vsel %vm280, %v887, %v889
        %v903 = vsel %vm280, %v885, %v887
        %v904 = vsel %vm280, %v883, %v885
        %v905 = vsel %vm280, %v897, %v883
        %v906 = vmax.f32 %v874, %v904
        %v907 = vmax.f32 %v875, %v903
        %v908 = vmax.f32 %v876, %v902
        %v909 = vmax.f32 %v877, %v901
        %v910 = vmax.f32 %v878, %v900
        %v911 = vmax.f32 %v879, %v899
        %v912 = vmax.f32 %v880, %v898
        %v913 = vmax.f32 %v881, %v905
        %914 = vrot.lane.b32.xlu0 %v906, 96
        %v915 = vpop.permute.xlu0 %914
        %916 = vrot.lane.b32.xlu0 %v907, 96
        %v917 = vpop.permute.xlu0 %916
        %918 = vrot.lane.b32.xlu0 %v908, 96
        %v919 = vpop.permute.xlu0 %918
        %920 = vrot.lane.b32.xlu0 %v909, 96
        %v921 = vpop.permute.xlu0 %920
        %922 = vrot.lane.b32.xlu0 %v910, 96
        %v923 = vpop.permute.xlu0 %922
        %924 = vrot.lane.b32.xlu0 %v911, 96
        %v925 = vpop.permute.xlu0 %924
        %926 = vrot.lane.b32.xlu0 %v912, 96
        %v927 = vpop.permute.xlu0 %926
        %928 = vrot.lane.b32.xlu0 %v913, 96
        %v929 = vpop.permute.xlu0 %928
        %v930 = vsel %vm330, %v927, %v929
        %v931 = vsel %vm330, %v925, %v927
        %v932 = vsel %vm330, %v923, %v925
        %v933 = vsel %vm330, %v921, %v923
        %v934 = vsel %vm330, %v919, %v921
        %v935 = vsel %vm330, %v917, %v919
        %v936 = vsel %vm330, %v915, %v917
        %v937 = vsel %vm330, %v929, %v915
        %v938 = vmax.f32 %v906, %v936
        %v939 = vmax.f32 %v907, %v935
        %v940 = vmax.f32 %v908, %v934
        %v941 = vmax.f32 %v909, %v933
        %v942 = vmax.f32 %v910, %v932
        %v943 = vmax.f32 %v911, %v931
        %v944 = vmax.f32 %v912, %v930
        %v945 = vmax.f32 %v913, %v937
        %s946 = sadd.s32 %s251, 8
        %s947 = smul.addr %s946, 8
        %s948 = scalar_lea.vmem [#allocation2], %s947
        %949 = vst [vmem:[%s948] sm:$0xff] %v938
        %950 = vst [vmem:[%s948 + $0x8] sm:$0xff] %v939
        %951 = vst [vmem:[%s948 + $0x10] sm:$0xff] %v940
        %952 = vst [vmem:[%s948 + $0x18] sm:$0xff] %v941
        %953 = vst [vmem:[%s948 + $0x20] sm:$0xff] %v942
        %954 = vst [vmem:[%s948 + $0x28] sm:$0xff] %v943
        %955 = vst [vmem:[%s948 + $0x30] sm:$0xff] %v944
        %956 = vst [vmem:[%s948 + $0x38] sm:$0xff] %v945
        %s957 = sld [smem:[#allocation3 + $0x12]]
        %v958 = vstv %s957
        %v959 = vmul.f32 %v958, %v254
        %v960 = vmul.f32 %v958, %v255
        %v961 = vmul.f32 %v958, %v256
        %v962 = vmul.f32 %v958, %v257
        %v963 = vmul.f32 %v958, %v258
        %v964 = vmul.f32 %v958, %v259
        %v965 = vmul.f32 %v958, %v260
        %v966 = vmul.f32 %v958, %v261
        %s967 = sld [smem:[#allocation6 + $0x2]]
        %v968 = vstv %s967
        %v969 = vadd.f32 %v959, %v968
        %v970 = vadd.f32 %v960, %v968
        %v971 = vadd.f32 %v961, %v968
        %v972 = vadd.f32 %v962, %v968
        %v973 = vadd.f32 %v963, %v968
        %v974 = vadd.f32 %v964, %v968
        %v975 = vadd.f32 %v965, %v968
        %v976 = vadd.f32 %v966, %v968
        %s977 = sld [smem:[#allocation3 + $0x13]]
        %v978 = vstv %s977
        %v979 = vmul.f32 %v978, %v287
        %v980 = vmul.f32 %v978, %v286
        %v981 = vmul.f32 %v978, %v285
        %v982 = vmul.f32 %v978, %v284
        %v983 = vmul.f32 %v978, %v283
        %v984 = vmul.f32 %v978, %v282
        %v985 = vmul.f32 %v978, %v281
        %v986 = vmul.f32 %v978, %v288
        %v987 = vadd.f32 %v969, %v979
        %v988 = vadd.f32 %v970, %v980
        %v989 = vadd.f32 %v971, %v981
        %v990 = vadd.f32 %v972, %v982
        %v991 = vadd.f32 %v973, %v983
        %v992 = vadd.f32 %v974, %v984
        %v993 = vadd.f32 %v975, %v985
        %v994 = vadd.f32 %v976, %v986
        %s995 = sld [smem:[#allocation3 + $0x14]]
        %v996 = vstv %s995
        %v997 = vmul.f32 %v996, %v312
        %v998 = vmul.f32 %v996, %v311
        %v999 = vmul.f32 %v996, %v310
        %v1000 = vmul.f32 %v996, %v309
        %v1001 = vmul.f32 %v996, %v308
        %v1002 = vmul.f32 %v996, %v307
        %v1003 = vmul.f32 %v996, %v306
        %v1004 = vmul.f32 %v996, %v313
        %v1005 = vadd.f32 %v987, %v997
        %v1006 = vadd.f32 %v988, %v998
        %v1007 = vadd.f32 %v989, %v999
        %v1008 = vadd.f32 %v990, %v1000
        %v1009 = vadd.f32 %v991, %v1001
        %v1010 = vadd.f32 %v992, %v1002
        %v1011 = vadd.f32 %v993, %v1003
        %v1012 = vadd.f32 %v994, %v1004
        %s1013 = sld [smem:[#allocation3 + $0x15]]
        %v1014 = vstv %s1013
        %v1015 = vmul.f32 %v1014, %v337
        %v1016 = vmul.f32 %v1014, %v336
        %v1017 = vmul.f32 %v1014, %v335
        %v1018 = vmul.f32 %v1014, %v334
        %v1019 = vmul.f32 %v1014, %v333
        %v1020 = vmul.f32 %v1014, %v332
        %v1021 = vmul.f32 %v1014, %v331
        %v1022 = vmul.f32 %v1014, %v338
        %v1023 = vadd.f32 %v1005, %v1015
        %v1024 = vadd.f32 %v1006, %v1016
        %v1025 = vadd.f32 %v1007, %v1017
        %v1026 = vadd.f32 %v1008, %v1018
        %v1027 = vadd.f32 %v1009, %v1019
        %v1028 = vadd.f32 %v1010, %v1020
        %v1029 = vadd.f32 %v1011, %v1021
        %v1030 = vadd.f32 %v1012, %v1022
        %s1031 = sld [smem:[#allocation3 + $0x16]]
        %v1032 = vstv %s1031
        %v1033 = vmul.f32 %v1032, %v362
        %v1034 = vmul.f32 %v1032, %v361
        %v1035 = vmul.f32 %v1032, %v360
        %v1036 = vmul.f32 %v1032, %v359
        %v1037 = vmul.f32 %v1032, %v358
        %v1038 = vmul.f32 %v1032, %v357
        %v1039 = vmul.f32 %v1032, %v356
        %v1040 = vmul.f32 %v1032, %v363
        %v1041 = vadd.f32 %v1023, %v1033
        %v1042 = vadd.f32 %v1024, %v1034
        %v1043 = vadd.f32 %v1025, %v1035
        %v1044 = vadd.f32 %v1026, %v1036
        %v1045 = vadd.f32 %v1027, %v1037
        %v1046 = vadd.f32 %v1028, %v1038
        %v1047 = vadd.f32 %v1029, %v1039
        %v1048 = vadd.f32 %v1030, %v1040
        %s1049 = sld [smem:[#allocation3 + $0x17]]
        %v1050 = vstv %s1049
        %v1051 = vmul.f32 %v1050, %v387
        %v1052 = vmul.f32 %v1050, %v386
        %v1053 = vmul.f32 %v1050, %v385
        %v1054 = vmul.f32 %v1050, %v384
        %v1055 = vmul.f32 %v1050, %v383
        %v1056 = vmul.f32 %v1050, %v382
        %v1057 = vmul.f32 %v1050, %v381
        %v1058 = vmul.f32 %v1050, %v388
        %v1059 = vadd.f32 %v1041, %v1051
        %v1060 = vadd.f32 %v1042, %v1052
        %v1061 = vadd.f32 %v1043, %v1053
        %v1062 = vadd.f32 %v1044, %v1054
        %v1063 = vadd.f32 %v1045, %v1055
        %v1064 = vadd.f32 %v1046, %v1056
        %v1065 = vadd.f32 %v1047, %v1057
        %v1066 = vadd.f32 %v1048, %v1058
        %s1067 = sld [smem:[#allocation3 + $0x18]]
        %v1068 = vstv %s1067
        %v1069 = vmul.f32 %v1068, %v412
        %v1070 = vmul.f32 %v1068, %v411
        %v1071 = vmul.f32 %v1068, %v410
        %v1072 = vmul.f32 %v1068, %v409
        %v1073 = vmul.f32 %v1068, %v408
        %v1074 = vmul.f32 %v1068, %v407
        %v1075 = vmul.f32 %v1068, %v406
        %v1076 = vmul.f32 %v1068, %v413
        %v1077 = vadd.f32 %v1059, %v1069
        %v1078 = vadd.f32 %v1060, %v1070
        %v1079 = vadd.f32 %v1061, %v1071
        %v1080 = vadd.f32 %v1062, %v1072
        %v1081 = vadd.f32 %v1063, %v1073
        %v1082 = vadd.f32 %v1064, %v1074
        %v1083 = vadd.f32 %v1065, %v1075
        %v1084 = vadd.f32 %v1066, %v1076
        %s1085 = sld [smem:[#allocation3 + $0x19]]
        %v1086 = vstv %s1085
        %v1087 = vmul.f32 %v1086, %v437
        %v1088 = vmul.f32 %v1086, %v436
        %v1089 = vmul.f32 %v1086, %v435
        %v1090 = vmul.f32 %v1086, %v434
        %v1091 = vmul.f32 %v1086, %v433
        %v1092 = vmul.f32 %v1086, %v432
        %v1093 = vmul.f32 %v1086, %v431
        %v1094 = vmul.f32 %v1086, %v438
        %v1095 = vadd.f32 %v1077, %v1087
        %v1096 = vadd.f32 %v1078, %v1088
        %v1097 = vadd.f32 %v1079, %v1089
        %v1098 = vadd.f32 %v1080, %v1090
        %v1099 = vadd.f32 %v1081, %v1091
        %v1100 = vadd.f32 %v1082, %v1092
        %v1101 = vadd.f32 %v1083, %v1093
        %v1102 = vadd.f32 %v1084, %v1094
        %s1103 = sld [smem:[#allocation3 + $0x1a]]
        %v1104 = vstv %s1103
        %v1105 = vmul.f32 %v1104, %v462
        %v1106 = vmul.f32 %v1104, %v461
        %v1107 = vmul.f32 %v1104, %v460
        %v1108 = vmul.f32 %v1104, %v459
        %v1109 = vmul.f32 %v1104, %v458
        %v1110 = vmul.f32 %v1104, %v457
        %v1111 = vmul.f32 %v1104, %v456
        %v1112 = vmul.f32 %v1104, %v463
        %v1113 = vadd.f32 %v1095, %v1105
        %v1114 = vadd.f32 %v1096, %v1106
        %v1115 = vadd.f32 %v1097, %v1107
        %v1116 = vadd.f32 %v1098, %v1108
        %v1117 = vadd.f32 %v1099, %v1109
        %v1118 = vadd.f32 %v1100, %v1110
        %v1119 = vadd.f32 %v1101, %v1111
        %v1120 = vadd.f32 %v1102, %v1112
        %v1121 = vmax.f32 %v1113, 0.0
        %v1122 = vmax.f32 %v1114, 0.0
        %v1123 = vmax.f32 %v1115, 0.0
        %v1124 = vmax.f32 %v1116, 0.0
        %v1125 = vmax.f32 %v1117, 0.0
        %v1126 = vmax.f32 %v1118, 0.0
        %v1127 = vmax.f32 %v1119, 0.0
        %v1128 = vmax.f32 %v1120, 0.0
        %1129 = vrot.lane.b32.xlu0 %v1121, 127
        %v1130 = vpop.permute.xlu0 %1129
        %1131 = vrot.lane.b32.xlu0 %v1122, 127
        %v1132 = vpop.permute.xlu0 %1131
        %1133 = vrot.lane.b32.xlu0 %v1123, 127
        %v1134 = vpop.permute.xlu0 %1133
        %1135 = vrot.lane.b32.xlu0 %v1124, 127
        %v1136 = vpop.permute.xlu0 %1135
        %1137 = vrot.lane.b32.xlu0 %v1125, 127
        %v1138 = vpop.permute.xlu0 %1137
        %1139 = vrot.lane.b32.xlu0 %v1126, 127
        %v1140 = vpop.permute.xlu0 %1139
        %1141 = vrot.lane.b32.xlu0 %v1127, 127
        %v1142 = vpop.permute.xlu0 %1141
        %1143 = vrot.lane.b32.xlu0 %v1128, 127
        %v1144 = vpop.permute.xlu0 %1143
        %v1145 = vsel %vm280, %v1142, %v1144
        %v1146 = vsel %vm280, %v1140, %v1142
        %v1147 = vsel %vm280, %v1138, %v1140
        %v1148 = vsel %vm280, %v1136, %v1138
        %v1149 = vsel %vm280, %v1134, %v1136
        %v1150 = vsel %vm280, %v1132, %v1134
        %v1151 = vsel %vm280, %v1130, %v1132
        %v1152 = vsel %vm280, %v1144, %v1130
        %v1153 = vmax.f32 %v1121, %v1151
        %v1154 = vmax.f32 %v1122, %v1150
        %v1155 = vmax.f32 %v1123, %v1149
        %v1156 = vmax.f32 %v1124, %v1148
        %v1157 = vmax.f32 %v1125, %v1147
        %v1158 = vmax.f32 %v1126, %v1146
        %v1159 = vmax.f32 %v1127, %v1145
        %v1160 = vmax.f32 %v1128, %v1152
        %1161 = vrot.lane.b32.xlu0 %v1153, 96
        %v1162 = vpop.permute.xlu0 %1161
        %1163 = vrot.lane.b32.xlu0 %v1154, 96
        %v1164 = vpop.permute.xlu0 %1163
        %1165 = vrot.lane.b32.xlu0 %v1155, 96
        %v1166 = vpop.permute.xlu0 %1165
        %1167 = vrot.lane.b32.xlu0 %v1156, 96
        %v1168 = vpop.permute.xlu0 %1167
        %1169 = vrot.lane.b32.xlu0 %v1157, 96
        %v1170 = vpop.permute.xlu0 %1169
        %1171 = vrot.lane.b32.xlu0 %v1158, 96
        %v1172 = vpop.permute.xlu0 %1171
        %1173 = vrot.lane.b32.xlu0 %v1159, 96
        %v1174 = vpop.permute.xlu0 %1173
        %1175 = vrot.lane.b32.xlu0 %v1160, 96
        %v1176 = vpop.permute.xlu0 %1175
        %v1177 = vsel %vm330, %v1174, %v1176
        %v1178 = vsel %vm330, %v1172, %v1174
        %v1179 = vsel %vm330, %v1170, %v1172
        %v1180 = vsel %vm330, %v1168, %v1170
        %v1181 = vsel %vm330, %v1166, %v1168
        %v1182 = vsel %vm330, %v1164, %v1166
        %v1183 = vsel %vm330, %v1162, %v1164
        %v1184 = vsel %vm330, %v1176, %v1162
        %v1185 = vmax.f32 %v1153, %v1183
        %v1186 = vmax.f32 %v1154, %v1182
        %v1187 = vmax.f32 %v1155, %v1181
        %v1188 = vmax.f32 %v1156, %v1180
        %v1189 = vmax.f32 %v1157, %v1179
        %v1190 = vmax.f32 %v1158, %v1178
        %v1191 = vmax.f32 %v1159, %v1177
        %v1192 = vmax.f32 %v1160, %v1184
        %s1193 = sadd.s32 %s251, 16
        %s1194 = smul.addr %s1193, 8
        %s1195 = scalar_lea.vmem [#allocation2], %s1194
        %1196 = vst [vmem:[%s1195] sm:$0xff] %v1185
        %1197 = vst [vmem:[%s1195 + $0x8] sm:$0xff] %v1186
        %1198 = vst [vmem:[%s1195 + $0x10] sm:$0xff] %v1187
        %1199 = vst [vmem:[%s1195 + $0x18] sm:$0xff] %v1188
        %1200 = vst [vmem:[%s1195 + $0x20] sm:$0xff] %v1189
        %1201 = vst [vmem:[%s1195 + $0x28] sm:$0xff] %v1190
        %1202 = vst [vmem:[%s1195 + $0x30] sm:$0xff] %v1191
        %1203 = vst [vmem:[%s1195 + $0x38] sm:$0xff] %v1192
        %s1204 = sld [smem:[#allocation3 + $0x1b]]
        %v1205 = vstv %s1204
        %v1206 = vmul.f32 %v1205, %v254
        %v1207 = vmul.f32 %v1205, %v255
        %v1208 = vmul.f32 %v1205, %v256
        %v1209 = vmul.f32 %v1205, %v257
        %v1210 = vmul.f32 %v1205, %v258
        %v1211 = vmul.f32 %v1205, %v259
        %v1212 = vmul.f32 %v1205, %v260
        %v1213 = vmul.f32 %v1205, %v261
        %s1214 = sld [smem:[#allocation6 + $0x3]]
        %v1215 = vstv %s1214
        %v1216 = vadd.f32 %v1206, %v1215
        %v1217 = vadd.f32 %v1207, %v1215
        %v1218 = vadd.f32 %v1208, %v1215
        %v1219 = vadd.f32 %v1209, %v1215
        %v1220 = vadd.f32 %v1210, %v1215
        %v1221 = vadd.f32 %v1211, %v1215
        %v1222 = vadd.f32 %v1212, %v1215
        %v1223 = vadd.f32 %v1213, %v1215
        %s1224 = sld [smem:[#allocation3 + $0x1c]]
        %v1225 = vstv %s1224
        %v1226 = vmul.f32 %v1225, %v287
        %v1227 = vmul.f32 %v1225, %v286
        %v1228 = vmul.f32 %v1225, %v285
        %v1229 = vmul.f32 %v1225, %v284
        %v1230 = vmul.f32 %v1225, %v283
        %v1231 = vmul.f32 %v1225, %v282
        %v1232 = vmul.f32 %v1225, %v281
        %v1233 = vmul.f32 %v1225, %v288
        %v1234 = vadd.f32 %v1216, %v1226
        %v1235 = vadd.f32 %v1217, %v1227
        %v1236 = vadd.f32 %v1218, %v1228
        %v1237 = vadd.f32 %v1219, %v1229
        %v1238 = vadd.f32 %v1220, %v1230
        %v1239 = vadd.f32 %v1221, %v1231
        %v1240 = vadd.f32 %v1222, %v1232
        %v1241 = vadd.f32 %v1223, %v1233
        %s1242 = sld [smem:[#allocation3 + $0x1d]]
        %v1243 = vstv %s1242
        %v1244 = vmul.f32 %v1243, %v312
        %v1245 = vmul.f32 %v1243, %v311
        %v1246 = vmul.f32 %v1243, %v310
        %v1247 = vmul.f32 %v1243, %v309
        %v1248 = vmul.f32 %v1243, %v308
        %v1249 = vmul.f32 %v1243, %v307
        %v1250 = vmul.f32 %v1243, %v306
        %v1251 = vmul.f32 %v1243, %v313
        %v1252 = vadd.f32 %v1234, %v1244
        %v1253 = vadd.f32 %v1235, %v1245
        %v1254 = vadd.f32 %v1236, %v1246
        %v1255 = vadd.f32 %v1237, %v1247
        %v1256 = vadd.f32 %v1238, %v1248
        %v1257 = vadd.f32 %v1239, %v1249
        %v1258 = vadd.f32 %v1240, %v1250
        %v1259 = vadd.f32 %v1241, %v1251
        %s1260 = sld [smem:[#allocation3 + $0x1e]]
        %v1261 = vstv %s1260
        %v1262 = vmul.f32 %v1261, %v337
        %v1263 = vmul.f32 %v1261, %v336
        %v1264 = vmul.f32 %v1261, %v335
        %v1265 = vmul.f32 %v1261, %v334
        %v1266 = vmul.f32 %v1261, %v333
        %v1267 = vmul.f32 %v1261, %v332
        %v1268 = vmul.f32 %v1261, %v331
        %v1269 = vmul.f32 %v1261, %v338
        %v1270 = vadd.f32 %v1252, %v1262
        %v1271 = vadd.f32 %v1253, %v1263
        %v1272 = vadd.f32 %v1254, %v1264
        %v1273 = vadd.f32 %v1255, %v1265
        %v1274 = vadd.f32 %v1256, %v1266
        %v1275 = vadd.f32 %v1257, %v1267
        %v1276 = vadd.f32 %v1258, %v1268
        %v1277 = vadd.f32 %v1259, %v1269
        %s1278 = sld [smem:[#allocation3 + $0x1f]]
        %v1279 = vstv %s1278
        %v1280 = vmul.f32 %v1279, %v362
        %v1281 = vmul.f32 %v1279, %v361
        %v1282 = vmul.f32 %v1279, %v360
        %v1283 = vmul.f32 %v1279, %v359
        %v1284 = vmul.f32 %v1279, %v358
        %v1285 = vmul.f32 %v1279, %v357
        %v1286 = vmul.f32 %v1279, %v356
        %v1287 = vmul.f32 %v1279, %v363
        %v1288 = vadd.f32 %v1270, %v1280
        %v1289 = vadd.f32 %v1271, %v1281
        %v1290 = vadd.f32 %v1272, %v1282
        %v1291 = vadd.f32 %v1273, %v1283
        %v1292 = vadd.f32 %v1274, %v1284
        %v1293 = vadd.f32 %v1275, %v1285
        %v1294 = vadd.f32 %v1276, %v1286
        %v1295 = vadd.f32 %v1277, %v1287
        %s1296 = sld [smem:[#allocation3 + $0x20]]
        %v1297 = vstv %s1296
        %v1298 = vmul.f32 %v1297, %v387
        %v1299 = vmul.f32 %v1297, %v386
        %v1300 = vmul.f32 %v1297, %v385
        %v1301 = vmul.f32 %v1297, %v384
        %v1302 = vmul.f32 %v1297, %v383
        %v1303 = vmul.f32 %v1297, %v382
        %v1304 = vmul.f32 %v1297, %v381
        %v1305 = vmul.f32 %v1297, %v388
        %v1306 = vadd.f32 %v1288, %v1298
        %v1307 = vadd.f32 %v1289, %v1299
        %v1308 = vadd.f32 %v1290, %v1300
        %v1309 = vadd.f32 %v1291, %v1301
        %v1310 = vadd.f32 %v1292, %v1302
        %v1311 = vadd.f32 %v1293, %v1303
        %v1312 = vadd.f32 %v1294, %v1304
        %v1313 = vadd.f32 %v1295, %v1305
        %s1314 = sld [smem:[#allocation3 + $0x21]]
        %v1315 = vstv %s1314
        %v1316 = vmul.f32 %v1315, %v412
        %v1317 = vmul.f32 %v1315, %v411
        %v1318 = vmul.f32 %v1315, %v410
        %v1319 = vmul.f32 %v1315, %v409
        %v1320 = vmul.f32 %v1315, %v408
        %v1321 = vmul.f32 %v1315, %v407
        %v1322 = vmul.f32 %v1315, %v406
        %v1323 = vmul.f32 %v1315, %v413
        %v1324 = vadd.f32 %v1306, %v1316
        %v1325 = vadd.f32 %v1307, %v1317
        %v1326 = vadd.f32 %v1308, %v1318
        %v1327 = vadd.f32 %v1309, %v1319
        %v1328 = vadd.f32 %v1310, %v1320
        %v1329 = vadd.f32 %v1311, %v1321
        %v1330 = vadd.f32 %v1312, %v1322
        %v1331 = vadd.f32 %v1313, %v1323
        %s1332 = sld [smem:[#allocation3 + $0x22]]
        %v1333 = vstv %s1332
        %v1334 = vmul.f32 %v1333, %v437
        %v1335 = vmul.f32 %v1333, %v436
        %v1336 = vmul.f32 %v1333, %v435
        %v1337 = vmul.f32 %v1333, %v434
        %v1338 = vmul.f32 %v1333, %v433
        %v1339 = vmul.f32 %v1333, %v432
        %v1340 = vmul.f32 %v1333, %v431
        %v1341 = vmul.f32 %v1333, %v438
        %v1342 = vadd.f32 %v1324, %v1334
        %v1343 = vadd.f32 %v1325, %v1335
        %v1344 = vadd.f32 %v1326, %v1336
        %v1345 = vadd.f32 %v1327, %v1337
        %v1346 = vadd.f32 %v1328, %v1338
        %v1347 = vadd.f32 %v1329, %v1339
        %v1348 = vadd.f32 %v1330, %v1340
        %v1349 = vadd.f32 %v1331, %v1341
        %s1350 = sld [smem:[#allocation3 + $0x23]]
        %v1351 = vstv %s1350
        %v1352 = vmul.f32 %v1351, %v462
        %v1353 = vmul.f32 %v1351, %v461
        %v1354 = vmul.f32 %v1351, %v460
        %v1355 = vmul.f32 %v1351, %v459
        %v1356 = vmul.f32 %v1351, %v458
        %v1357 = vmul.f32 %v1351, %v457
        %v1358 = vmul.f32 %v1351, %v456
        %v1359 = vmul.f32 %v1351, %v463
        %v1360 = vadd.f32 %v1342, %v1352
        %v1361 = vadd.f32 %v1343, %v1353
        %v1362 = vadd.f32 %v1344, %v1354
        %v1363 = vadd.f32 %v1345, %v1355
        %v1364 = vadd.f32 %v1346, %v1356
        %v1365 = vadd.f32 %v1347, %v1357
        %v1366 = vadd.f32 %v1348, %v1358
        %v1367 = vadd.f32 %v1349, %v1359
        %v1368 = vmax.f32 %v1360, 0.0
        %v1369 = vmax.f32 %v1361, 0.0
        %v1370 = vmax.f32 %v1362, 0.0
        %v1371 = vmax.f32 %v1363, 0.0
        %v1372 = vmax.f32 %v1364, 0.0
        %v1373 = vmax.f32 %v1365, 0.0
        %v1374 = vmax.f32 %v1366, 0.0
        %v1375 = vmax.f32 %v1367, 0.0
        %1376 = vrot.lane.b32.xlu0 %v1368, 127
        %v1377 = vpop.permute.xlu0 %1376
        %1378 = vrot.lane.b32.xlu0 %v1369, 127
        %v1379 = vpop.permute.xlu0 %1378
        %1380 = vrot.lane.b32.xlu0 %v1370, 127
        %v1381 = vpop.permute.xlu0 %1380
        %1382 = vrot.lane.b32.xlu0 %v1371, 127
        %v1383 = vpop.permute.xlu0 %1382
        %1384 = vrot.lane.b32.xlu0 %v1372, 127
        %v1385 = vpop.permute.xlu0 %1384
        %1386 = vrot.lane.b32.xlu0 %v1373, 127
        %v1387 = vpop.permute.xlu0 %1386
        %1388 = vrot.lane.b32.xlu0 %v1374, 127
        %v1389 = vpop.permute.xlu0 %1388
        %1390 = vrot.lane.b32.xlu0 %v1375, 127
        %v1391 = vpop.permute.xlu0 %1390
        %v1392 = vsel %vm280, %v1389, %v1391
        %v1393 = vsel %vm280, %v1387, %v1389
        %v1394 = vsel %vm280, %v1385, %v1387
        %v1395 = vsel %vm280, %v1383, %v1385
        %v1396 = vsel %vm280, %v1381, %v1383
        %v1397 = vsel %vm280, %v1379, %v1381
        %v1398 = vsel %vm280, %v1377, %v1379
        %v1399 = vsel %vm280, %v1391, %v1377
        %v1400 = vmax.f32 %v1368, %v1398
        %v1401 = vmax.f32 %v1369, %v1397
        %v1402 = vmax.f32 %v1370, %v1396
        %v1403 = vmax.f32 %v1371, %v1395
        %v1404 = vmax.f32 %v1372, %v1394
        %v1405 = vmax.f32 %v1373, %v1393
        %v1406 = vmax.f32 %v1374, %v1392
        %v1407 = vmax.f32 %v1375, %v1399
        %1408 = vrot.lane.b32.xlu0 %v1400, 96
        %v1409 = vpop.permute.xlu0 %1408
        %1410 = vrot.lane.b32.xlu0 %v1401, 96
        %v1411 = vpop.permute.xlu0 %1410
        %1412 = vrot.lane.b32.xlu0 %v1402, 96
        %v1413 = vpop.permute.xlu0 %1412
        %1414 = vrot.lane.b32.xlu0 %v1403, 96
        %v1415 = vpop.permute.xlu0 %1414
        %1416 = vrot.lane.b32.xlu0 %v1404, 96
        %v1417 = vpop.permute.xlu0 %1416
        %1418 = vrot.lane.b32.xlu0 %v1405, 96
        %v1419 = vpop.permute.xlu0 %1418
        %1420 = vrot.lane.b32.xlu0 %v1406, 96
        %v1421 = vpop.permute.xlu0 %1420
        %1422 = vrot.lane.b32.xlu0 %v1407, 96
        %v1423 = vpop.permute.xlu0 %1422
        %v1424 = vsel %vm330, %v1421, %v1423
        %v1425 = vsel %vm330, %v1419, %v1421
        %v1426 = vsel %vm330, %v1417, %v1419
        %v1427 = vsel %vm330, %v1415, %v1417
        %v1428 = vsel %vm330, %v1413, %v1415
        %v1429 = vsel %vm330, %v1411, %v1413
        %v1430 = vsel %vm330, %v1409, %v1411
        %v1431 = vsel %vm330, %v1423, %v1409
        %v1432 = vmax.f32 %v1400, %v1430
        %v1433 = vmax.f32 %v1401, %v1429
        %v1434 = vmax.f32 %v1402, %v1428
        %v1435 = vmax.f32 %v1403, %v1427
        %v1436 = vmax.f32 %v1404, %v1426
        %v1437 = vmax.f32 %v1405, %v1425
        %v1438 = vmax.f32 %v1406, %v1424
        %v1439 = vmax.f32 %v1407, %v1431
        %s1440 = sadd.s32 %s251, 24
        %s1441 = smul.addr %s1440, 8
        %s1442 = scalar_lea.vmem [#allocation2], %s1441
        %1443 = vst [vmem:[%s1442] sm:$0xff] %v1432
        %1444 = vst [vmem:[%s1442 + $0x8] sm:$0xff] %v1433
        %1445 = vst [vmem:[%s1442 + $0x10] sm:$0xff] %v1434
        %1446 = vst [vmem:[%s1442 + $0x18] sm:$0xff] %v1435
        %1447 = vst [vmem:[%s1442 + $0x20] sm:$0xff] %v1436
        %1448 = vst [vmem:[%s1442 + $0x28] sm:$0xff] %v1437
        %1449 = vst [vmem:[%s1442 + $0x30] sm:$0xff] %v1438
        %1450 = vst [vmem:[%s1442 + $0x38] sm:$0xff] %v1439
        %s1451 = sld [smem:[#allocation3 + $0x24]]
        %v1452 = vstv %s1451
        %v1453 = vmul.f32 %v1452, %v254
        %v1454 = vmul.f32 %v1452, %v255
        %v1455 = vmul.f32 %v1452, %v256
        %v1456 = vmul.f32 %v1452, %v257
        %v1457 = vmul.f32 %v1452, %v258
        %v1458 = vmul.f32 %v1452, %v259
        %v1459 = vmul.f32 %v1452, %v260
        %v1460 = vmul.f32 %v1452, %v261
        %s1461 = sld [smem:[#allocation6 + $0x4]]
        %v1462 = vstv %s1461
        %v1463 = vadd.f32 %v1453, %v1462
        %v1464 = vadd.f32 %v1454, %v1462
        %v1465 = vadd.f32 %v1455, %v1462
        %v1466 = vadd.f32 %v1456, %v1462
        %v1467 = vadd.f32 %v1457, %v1462
        %v1468 = vadd.f32 %v1458, %v1462
        %v1469 = vadd.f32 %v1459, %v1462
        %v1470 = vadd.f32 %v1460, %v1462
        %s1471 = sld [smem:[#allocation3 + $0x25]]
        %v1472 = vstv %s1471
        %v1473 = vmul.f32 %v1472, %v287
        %v1474 = vmul.f32 %v1472, %v286
        %v1475 = vmul.f32 %v1472, %v285
        %v1476 = vmul.f32 %v1472, %v284
        %v1477 = vmul.f32 %v1472, %v283
        %v1478 = vmul.f32 %v1472, %v282
        %v1479 = vmul.f32 %v1472, %v281
        %v1480 = vmul.f32 %v1472, %v288
        %v1481 = vadd.f32 %v1463, %v1473
        %v1482 = vadd.f32 %v1464, %v1474
        %v1483 = vadd.f32 %v1465, %v1475
        %v1484 = vadd.f32 %v1466, %v1476
        %v1485 = vadd.f32 %v1467, %v1477
        %v1486 = vadd.f32 %v1468, %v1478
        %v1487 = vadd.f32 %v1469, %v1479
        %v1488 = vadd.f32 %v1470, %v1480
        %s1489 = sld [smem:[#allocation3 + $0x26]]
        %v1490 = vstv %s1489
        %v1491 = vmul.f32 %v1490, %v312
        %v1492 = vmul.f32 %v1490, %v311
        %v1493 = vmul.f32 %v1490, %v310
        %v1494 = vmul.f32 %v1490, %v309
        %v1495 = vmul.f32 %v1490, %v308
        %v1496 = vmul.f32 %v1490, %v307
        %v1497 = vmul.f32 %v1490, %v306
        %v1498 = vmul.f32 %v1490, %v313
        %v1499 = vadd.f32 %v1481, %v1491
        %v1500 = vadd.f32 %v1482, %v1492
        %v1501 = vadd.f32 %v1483, %v1493
        %v1502 = vadd.f32 %v1484, %v1494
        %v1503 = vadd.f32 %v1485, %v1495
        %v1504 = vadd.f32 %v1486, %v1496
        %v1505 = vadd.f32 %v1487, %v1497
        %v1506 = vadd.f32 %v1488, %v1498
        %s1507 = sld [smem:[#allocation3 + $0x27]]
        %v1508 = vstv %s1507
        %v1509 = vmul.f32 %v1508, %v337
        %v1510 = vmul.f32 %v1508, %v336
        %v1511 = vmul.f32 %v1508, %v335
        %v1512 = vmul.f32 %v1508, %v334
        %v1513 = vmul.f32 %v1508, %v333
        %v1514 = vmul.f32 %v1508, %v332
        %v1515 = vmul.f32 %v1508, %v331
        %v1516 = vmul.f32 %v1508, %v338
        %v1517 = vadd.f32 %v1499, %v1509
        %v1518 = vadd.f32 %v1500, %v1510
        %v1519 = vadd.f32 %v1501, %v1511
        %v1520 = vadd.f32 %v1502, %v1512
        %v1521 = vadd.f32 %v1503, %v1513
        %v1522 = vadd.f32 %v1504, %v1514
        %v1523 = vadd.f32 %v1505, %v1515
        %v1524 = vadd.f32 %v1506, %v1516
        %s1525 = sld [smem:[#allocation3 + $0x28]]
        %v1526 = vstv %s1525
        %v1527 = vmul.f32 %v1526, %v362
        %v1528 = vmul.f32 %v1526, %v361
        %v1529 = vmul.f32 %v1526, %v360
        %v1530 = vmul.f32 %v1526, %v359
        %v1531 = vmul.f32 %v1526, %v358
        %v1532 = vmul.f32 %v1526, %v357
        %v1533 = vmul.f32 %v1526, %v356
        %v1534 = vmul.f32 %v1526, %v363
        %v1535 = vadd.f32 %v1517, %v1527
        %v1536 = vadd.f32 %v1518, %v1528
        %v1537 = vadd.f32 %v1519, %v1529
        %v1538 = vadd.f32 %v1520, %v1530
        %v1539 = vadd.f32 %v1521, %v1531
        %v1540 = vadd.f32 %v1522, %v1532
        %v1541 = vadd.f32 %v1523, %v1533
        %v1542 = vadd.f32 %v1524, %v1534
        %s1543 = sld [smem:[#allocation3 + $0x29]]
        %v1544 = vstv %s1543
        %v1545 = vmul.f32 %v1544, %v387
        %v1546 = vmul.f32 %v1544, %v386
        %v1547 = vmul.f32 %v1544, %v385
        %v1548 = vmul.f32 %v1544, %v384
        %v1549 = vmul.f32 %v1544, %v383
        %v1550 = vmul.f32 %v1544, %v382
        %v1551 = vmul.f32 %v1544, %v381
        %v1552 = vmul.f32 %v1544, %v388
        %v1553 = vadd.f32 %v1535, %v1545
        %v1554 = vadd.f32 %v1536, %v1546
        %v1555 = vadd.f32 %v1537, %v1547
        %v1556 = vadd.f32 %v1538, %v1548
        %v1557 = vadd.f32 %v1539, %v1549
        %v1558 = vadd.f32 %v1540, %v1550
        %v1559 = vadd.f32 %v1541, %v1551
        %v1560 = vadd.f32 %v1542, %v1552
        %s1561 = sld [smem:[#allocation3 + $0x2a]]
        %v1562 = vstv %s1561
        %v1563 = vmul.f32 %v1562, %v412
        %v1564 = vmul.f32 %v1562, %v411
        %v1565 = vmul.f32 %v1562, %v410
        %v1566 = vmul.f32 %v1562, %v409
        %v1567 = vmul.f32 %v1562, %v408
        %v1568 = vmul.f32 %v1562, %v407
        %v1569 = vmul.f32 %v1562, %v406
        %v1570 = vmul.f32 %v1562, %v413
        %v1571 = vadd.f32 %v1553, %v1563
        %v1572 = vadd.f32 %v1554, %v1564
        %v1573 = vadd.f32 %v1555, %v1565
        %v1574 = vadd.f32 %v1556, %v1566
        %v1575 = vadd.f32 %v1557, %v1567
        %v1576 = vadd.f32 %v1558, %v1568
        %v1577 = vadd.f32 %v1559, %v1569
        %v1578 = vadd.f32 %v1560, %v1570
        %s1579 = sld [smem:[#allocation3 + $0x2b]]
        %v1580 = vstv %s1579
        %v1581 = vmul.f32 %v1580, %v437
        %v1582 = vmul.f32 %v1580, %v436
        %v1583 = vmul.f32 %v1580, %v435
        %v1584 = vmul.f32 %v1580, %v434
        %v1585 = vmul.f32 %v1580, %v433
        %v1586 = vmul.f32 %v1580, %v432
        %v1587 = vmul.f32 %v1580, %v431
        %v1588 = vmul.f32 %v1580, %v438
        %v1589 = vadd.f32 %v1571, %v1581
        %v1590 = vadd.f32 %v1572, %v1582
        %v1591 = vadd.f32 %v1573, %v1583
        %v1592 = vadd.f32 %v1574, %v1584
        %v1593 = vadd.f32 %v1575, %v1585
        %v1594 = vadd.f32 %v1576, %v1586
        %v1595 = vadd.f32 %v1577, %v1587
        %v1596 = vadd.f32 %v1578, %v1588
        %s1597 = sld [smem:[#allocation3 + $0x2c]]
        %v1598 = vstv %s1597
        %v1599 = vmul.f32 %v1598, %v462
        %v1600 = vmul.f32 %v1598, %v461
        %v1601 = vmul.f32 %v1598, %v460
        %v1602 = vmul.f32 %v1598, %v459
        %v1603 = vmul.f32 %v1598, %v458
        %v1604 = vmul.f32 %v1598, %v457
        %v1605 = vmul.f32 %v1598, %v456
        %v1606 = vmul.f32 %v1598, %v463
        %v1607 = vadd.f32 %v1589, %v1599
        %v1608 = vadd.f32 %v1590, %v1600
        %v1609 = vadd.f32 %v1591, %v1601
        %v1610 = vadd.f32 %v1592, %v1602
        %v1611 = vadd.f32 %v1593, %v1603
        %v1612 = vadd.f32 %v1594, %v1604
        %v1613 = vadd.f32 %v1595, %v1605
        %v1614 = vadd.f32 %v1596, %v1606
        %v1615 = vmax.f32 %v1607, 0.0
        %v1616 = vmax.f32 %v1608, 0.0
        %v1617 = vmax.f32 %v1609, 0.0
        %v1618 = vmax.f32 %v1610, 0.0
        %v1619 = vmax.f32 %v1611, 0.0
        %v1620 = vmax.f32 %v1612, 0.0
        %v1621 = vmax.f32 %v1613, 0.0
        %v1622 = vmax.f32 %v1614, 0.0
        %1623 = vrot.lane.b32.xlu0 %v1615, 127
        %v1624 = vpop.permute.xlu0 %1623
        %1625 = vrot.lane.b32.xlu0 %v1616, 127
        %v1626 = vpop.permute.xlu0 %1625
        %1627 = vrot.lane.b32.xlu0 %v1617, 127
        %v1628 = vpop.permute.xlu0 %1627
        %1629 = vrot.lane.b32.xlu0 %v1618, 127
        %v1630 = vpop.permute.xlu0 %1629
        %1631 = vrot.lane.b32.xlu0 %v1619, 127
        %v1632 = vpop.permute.xlu0 %1631
        %1633 = vrot.lane.b32.xlu0 %v1620, 127
        %v1634 = vpop.permute.xlu0 %1633
        %1635 = vrot.lane.b32.xlu0 %v1621, 127
        %v1636 = vpop.permute.xlu0 %1635
        %1637 = vrot.lane.b32.xlu0 %v1622, 127
        %v1638 = vpop.permute.xlu0 %1637
        %v1639 = vsel %vm280, %v1636, %v1638
        %v1640 = vsel %vm280, %v1634, %v1636
        %v1641 = vsel %vm280, %v1632, %v1634
        %v1642 = vsel %vm280, %v1630, %v1632
        %v1643 = vsel %vm280, %v1628, %v1630
        %v1644 = vsel %vm280, %v1626, %v1628
        %v1645 = vsel %vm280, %v1624, %v1626
        %v1646 = vsel %vm280, %v1638, %v1624
        %v1647 = vmax.f32 %v1615, %v1645
        %v1648 = vmax.f32 %v1616, %v1644
        %v1649 = vmax.f32 %v1617, %v1643
        %v1650 = vmax.f32 %v1618, %v1642
        %v1651 = vmax.f32 %v1619, %v1641
        %v1652 = vmax.f32 %v1620, %v1640
        %v1653 = vmax.f32 %v1621, %v1639
        %v1654 = vmax.f32 %v1622, %v1646
        %1655 = vrot.lane.b32.xlu0 %v1647, 96
        %v1656 = vpop.permute.xlu0 %1655
        %1657 = vrot.lane.b32.xlu0 %v1648, 96
        %v1658 = vpop.permute.xlu0 %1657
        %1659 = vrot.lane.b32.xlu0 %v1649, 96
        %v1660 = vpop.permute.xlu0 %1659
        %1661 = vrot.lane.b32.xlu0 %v1650, 96
        %v1662 = vpop.permute.xlu0 %1661
        %1663 = vrot.lane.b32.xlu0 %v1651, 96
        %v1664 = vpop.permute.xlu0 %1663
        %1665 = vrot.lane.b32.xlu0 %v1652, 96
        %v1666 = vpop.permute.xlu0 %1665
        %1667 = vrot.lane.b32.xlu0 %v1653, 96
        %v1668 = vpop.permute.xlu0 %1667
        %1669 = vrot.lane.b32.xlu0 %v1654, 96
        %v1670 = vpop.permute.xlu0 %1669
        %v1671 = vsel %vm330, %v1668, %v1670
        %v1672 = vsel %vm330, %v1666, %v1668
        %v1673 = vsel %vm330, %v1664, %v1666
        %v1674 = vsel %vm330, %v1662, %v1664
        %v1675 = vsel %vm330, %v1660, %v1662
        %v1676 = vsel %vm330, %v1658, %v1660
        %v1677 = vsel %vm330, %v1656, %v1658
        %v1678 = vsel %vm330, %v1670, %v1656
        %v1679 = vmax.f32 %v1647, %v1677
        %v1680 = vmax.f32 %v1648, %v1676
        %v1681 = vmax.f32 %v1649, %v1675
        %v1682 = vmax.f32 %v1650, %v1674
        %v1683 = vmax.f32 %v1651, %v1673
        %v1684 = vmax.f32 %v1652, %v1672
        %v1685 = vmax.f32 %v1653, %v1671
        %v1686 = vmax.f32 %v1654, %v1678
        %s1687 = sadd.s32 %s251, 32
        %s1688 = smul.addr %s1687, 8
        %s1689 = scalar_lea.vmem [#allocation2], %s1688
        %1690 = vst [vmem:[%s1689] sm:$0xff] %v1679
        %1691 = vst [vmem:[%s1689 + $0x8] sm:$0xff] %v1680
        %1692 = vst [vmem:[%s1689 + $0x10] sm:$0xff] %v1681
        %1693 = vst [vmem:[%s1689 + $0x18] sm:$0xff] %v1682
        %1694 = vst [vmem:[%s1689 + $0x20] sm:$0xff] %v1683
        %1695 = vst [vmem:[%s1689 + $0x28] sm:$0xff] %v1684
        %1696 = vst [vmem:[%s1689 + $0x30] sm:$0xff] %v1685
        %1697 = vst [vmem:[%s1689 + $0x38] sm:$0xff] %v1686
        %s1698 = sld [smem:[#allocation3 + $0x2d]]
        %v1699 = vstv %s1698
        %v1700 = vmul.f32 %v1699, %v254
        %v1701 = vmul.f32 %v1699, %v255
        %v1702 = vmul.f32 %v1699, %v256
        %v1703 = vmul.f32 %v1699, %v257
        %v1704 = vmul.f32 %v1699, %v258
        %v1705 = vmul.f32 %v1699, %v259
        %v1706 = vmul.f32 %v1699, %v260
        %v1707 = vmul.f32 %v1699, %v261
        %s1708 = sld [smem:[#allocation6 + $0x5]]
        %v1709 = vstv %s1708
        %v1710 = vadd.f32 %v1700, %v1709
        %v1711 = vadd.f32 %v1701, %v1709
        %v1712 = vadd.f32 %v1702, %v1709
        %v1713 = vadd.f32 %v1703, %v1709
        %v1714 = vadd.f32 %v1704, %v1709
        %v1715 = vadd.f32 %v1705, %v1709
        %v1716 = vadd.f32 %v1706, %v1709
        %v1717 = vadd.f32 %v1707, %v1709
        %s1718 = sld [smem:[#allocation3 + $0x2e]]
        %v1719 = vstv %s1718
        %v1720 = vmul.f32 %v1719, %v287
        %v1721 = vmul.f32 %v1719, %v286
        %v1722 = vmul.f32 %v1719, %v285
        %v1723 = vmul.f32 %v1719, %v284
        %v1724 = vmul.f32 %v1719, %v283
        %v1725 = vmul.f32 %v1719, %v282
        %v1726 = vmul.f32 %v1719, %v281
        %v1727 = vmul.f32 %v1719, %v288
        %v1728 = vadd.f32 %v1710, %v1720
        %v1729 = vadd.f32 %v1711, %v1721
        %v1730 = vadd.f32 %v1712, %v1722
        %v1731 = vadd.f32 %v1713, %v1723
        %v1732 = vadd.f32 %v1714, %v1724
        %v1733 = vadd.f32 %v1715, %v1725
        %v1734 = vadd.f32 %v1716, %v1726
        %v1735 = vadd.f32 %v1717, %v1727
        %s1736 = sld [smem:[#allocation3 + $0x2f]]
        %v1737 = vstv %s1736
        %v1738 = vmul.f32 %v1737, %v312
        %v1739 = vmul.f32 %v1737, %v311
        %v1740 = vmul.f32 %v1737, %v310
        %v1741 = vmul.f32 %v1737, %v309
        %v1742 = vmul.f32 %v1737, %v308
        %v1743 = vmul.f32 %v1737, %v307
        %v1744 = vmul.f32 %v1737, %v306
        %v1745 = vmul.f32 %v1737, %v313
        %v1746 = vadd.f32 %v1728, %v1738
        %v1747 = vadd.f32 %v1729, %v1739
        %v1748 = vadd.f32 %v1730, %v1740
        %v1749 = vadd.f32 %v1731, %v1741
        %v1750 = vadd.f32 %v1732, %v1742
        %v1751 = vadd.f32 %v1733, %v1743
        %v1752 = vadd.f32 %v1734, %v1744
        %v1753 = vadd.f32 %v1735, %v1745
        %s1754 = sld [smem:[#allocation3 + $0x30]]
        %v1755 = vstv %s1754
        %v1756 = vmul.f32 %v1755, %v337
        %v1757 = vmul.f32 %v1755, %v336
        %v1758 = vmul.f32 %v1755, %v335
        %v1759 = vmul.f32 %v1755, %v334
        %v1760 = vmul.f32 %v1755, %v333
        %v1761 = vmul.f32 %v1755, %v332
        %v1762 = vmul.f32 %v1755, %v331
        %v1763 = vmul.f32 %v1755, %v338
        %v1764 = vadd.f32 %v1746, %v1756
        %v1765 = vadd.f32 %v1747, %v1757
        %v1766 = vadd.f32 %v1748, %v1758
        %v1767 = vadd.f32 %v1749, %v1759
        %v1768 = vadd.f32 %v1750, %v1760
        %v1769 = vadd.f32 %v1751, %v1761
        %v1770 = vadd.f32 %v1752, %v1762
        %v1771 = vadd.f32 %v1753, %v1763
        %s1772 = sld [smem:[#allocation3 + $0x31]]
        %v1773 = vstv %s1772
        %v1774 = vmul.f32 %v1773, %v362
        %v1775 = vmul.f32 %v1773, %v361
        %v1776 = vmul.f32 %v1773, %v360
        %v1777 = vmul.f32 %v1773, %v359
        %v1778 = vmul.f32 %v1773, %v358
        %v1779 = vmul.f32 %v1773, %v357
        %v1780 = vmul.f32 %v1773, %v356
        %v1781 = vmul.f32 %v1773, %v363
        %v1782 = vadd.f32 %v1764, %v1774
        %v1783 = vadd.f32 %v1765, %v1775
        %v1784 = vadd.f32 %v1766, %v1776
        %v1785 = vadd.f32 %v1767, %v1777
        %v1786 = vadd.f32 %v1768, %v1778
        %v1787 = vadd.f32 %v1769, %v1779
        %v1788 = vadd.f32 %v1770, %v1780
        %v1789 = vadd.f32 %v1771, %v1781
        %s1790 = sld [smem:[#allocation3 + $0x32]]
        %v1791 = vstv %s1790
        %v1792 = vmul.f32 %v1791, %v387
        %v1793 = vmul.f32 %v1791, %v386
        %v1794 = vmul.f32 %v1791, %v385
        %v1795 = vmul.f32 %v1791, %v384
        %v1796 = vmul.f32 %v1791, %v383
        %v1797 = vmul.f32 %v1791, %v382
        %v1798 = vmul.f32 %v1791, %v381
        %v1799 = vmul.f32 %v1791, %v388
        %v1800 = vadd.f32 %v1782, %v1792
        %v1801 = vadd.f32 %v1783, %v1793
        %v1802 = vadd.f32 %v1784, %v1794
        %v1803 = vadd.f32 %v1785, %v1795
        %v1804 = vadd.f32 %v1786, %v1796
        %v1805 = vadd.f32 %v1787, %v1797
        %v1806 = vadd.f32 %v1788, %v1798
        %v1807 = vadd.f32 %v1789, %v1799
        %s1808 = sld [smem:[#allocation3 + $0x33]]
        %v1809 = vstv %s1808
        %v1810 = vmul.f32 %v1809, %v412
        %v1811 = vmul.f32 %v1809, %v411
        %v1812 = vmul.f32 %v1809, %v410
        %v1813 = vmul.f32 %v1809, %v409
        %v1814 = vmul.f32 %v1809, %v408
        %v1815 = vmul.f32 %v1809, %v407
        %v1816 = vmul.f32 %v1809, %v406
        %v1817 = vmul.f32 %v1809, %v413
        %v1818 = vadd.f32 %v1800, %v1810
        %v1819 = vadd.f32 %v1801, %v1811
        %v1820 = vadd.f32 %v1802, %v1812
        %v1821 = vadd.f32 %v1803, %v1813
        %v1822 = vadd.f32 %v1804, %v1814
        %v1823 = vadd.f32 %v1805, %v1815
        %v1824 = vadd.f32 %v1806, %v1816
        %v1825 = vadd.f32 %v1807, %v1817
        %s1826 = sld [smem:[#allocation3 + $0x34]]
        %v1827 = vstv %s1826
        %v1828 = vmul.f32 %v1827, %v437
        %v1829 = vmul.f32 %v1827, %v436
        %v1830 = vmul.f32 %v1827, %v435
        %v1831 = vmul.f32 %v1827, %v434
        %v1832 = vmul.f32 %v1827, %v433
        %v1833 = vmul.f32 %v1827, %v432
        %v1834 = vmul.f32 %v1827, %v431
        %v1835 = vmul.f32 %v1827, %v438
        %v1836 = vadd.f32 %v1818, %v1828
        %v1837 = vadd.f32 %v1819, %v1829
        %v1838 = vadd.f32 %v1820, %v1830
        %v1839 = vadd.f32 %v1821, %v1831
        %v1840 = vadd.f32 %v1822, %v1832
        %v1841 = vadd.f32 %v1823, %v1833
        %v1842 = vadd.f32 %v1824, %v1834
        %v1843 = vadd.f32 %v1825, %v1835
        %s1844 = sld [smem:[#allocation3 + $0x35]]
        %v1845 = vstv %s1844
        %v1846 = vmul.f32 %v1845, %v462
        %v1847 = vmul.f32 %v1845, %v461
        %v1848 = vmul.f32 %v1845, %v460
        %v1849 = vmul.f32 %v1845, %v459
        %v1850 = vmul.f32 %v1845, %v458
        %v1851 = vmul.f32 %v1845, %v457
        %v1852 = vmul.f32 %v1845, %v456
        %v1853 = vmul.f32 %v1845, %v463
        %v1854 = vadd.f32 %v1836, %v1846
        %v1855 = vadd.f32 %v1837, %v1847
        %v1856 = vadd.f32 %v1838, %v1848
        %v1857 = vadd.f32 %v1839, %v1849
        %v1858 = vadd.f32 %v1840, %v1850
        %v1859 = vadd.f32 %v1841, %v1851
        %v1860 = vadd.f32 %v1842, %v1852
        %v1861 = vadd.f32 %v1843, %v1853
        %v1862 = vmax.f32 %v1854, 0.0
        %v1863 = vmax.f32 %v1855, 0.0
        %v1864 = vmax.f32 %v1856, 0.0
        %v1865 = vmax.f32 %v1857, 0.0
        %v1866 = vmax.f32 %v1858, 0.0
        %v1867 = vmax.f32 %v1859, 0.0
        %v1868 = vmax.f32 %v1860, 0.0
        %v1869 = vmax.f32 %v1861, 0.0
        %1870 = vrot.lane.b32.xlu0 %v1862, 127
        %v1871 = vpop.permute.xlu0 %1870
        %1872 = vrot.lane.b32.xlu0 %v1863, 127
        %v1873 = vpop.permute.xlu0 %1872
        %1874 = vrot.lane.b32.xlu0 %v1864, 127
        %v1875 = vpop.permute.xlu0 %1874
        %1876 = vrot.lane.b32.xlu0 %v1865, 127
        %v1877 = vpop.permute.xlu0 %1876
        %1878 = vrot.lane.b32.xlu0 %v1866, 127
        %v1879 = vpop.permute.xlu0 %1878
        %1880 = vrot.lane.b32.xlu0 %v1867, 127
        %v1881 = vpop.permute.xlu0 %1880
        %1882 = vrot.lane.b32.xlu0 %v1868, 127
        %v1883 = vpop.permute.xlu0 %1882
        %1884 = vrot.lane.b32.xlu0 %v1869, 127
        %v1885 = vpop.permute.xlu0 %1884
        %v1886 = vsel %vm280, %v1883, %v1885
        %v1887 = vsel %vm280, %v1881, %v1883
        %v1888 = vsel %vm280, %v1879, %v1881
        %v1889 = vsel %vm280, %v1877, %v1879
        %v1890 = vsel %vm280, %v1875, %v1877
        %v1891 = vsel %vm280, %v1873, %v1875
        %v1892 = vsel %vm280, %v1871, %v1873
        %v1893 = vsel %vm280, %v1885, %v1871
        %v1894 = vmax.f32 %v1862, %v1892
        %v1895 = vmax.f32 %v1863, %v1891
        %v1896 = vmax.f32 %v1864, %v1890
        %v1897 = vmax.f32 %v1865, %v1889
        %v1898 = vmax.f32 %v1866, %v1888
        %v1899 = vmax.f32 %v1867, %v1887
        %v1900 = vmax.f32 %v1868, %v1886
        %v1901 = vmax.f32 %v1869, %v1893
        %1902 = vrot.lane.b32.xlu0 %v1894, 96
        %v1903 = vpop.permute.xlu0 %1902
        %1904 = vrot.lane.b32.xlu0 %v1895, 96
        %v1905 = vpop.permute.xlu0 %1904
        %1906 = vrot.lane.b32.xlu0 %v1896, 96
        %v1907 = vpop.permute.xlu0 %1906
        %1908 = vrot.lane.b32.xlu0 %v1897, 96
        %v1909 = vpop.permute.xlu0 %1908
        %1910 = vrot.lane.b32.xlu0 %v1898, 96
        %v1911 = vpop.permute.xlu0 %1910
        %1912 = vrot.lane.b32.xlu0 %v1899, 96
        %v1913 = vpop.permute.xlu0 %1912
        %1914 = vrot.lane.b32.xlu0 %v1900, 96
        %v1915 = vpop.permute.xlu0 %1914
        %1916 = vrot.lane.b32.xlu0 %v1901, 96
        %v1917 = vpop.permute.xlu0 %1916
        %v1918 = vsel %vm330, %v1915, %v1917
        %v1919 = vsel %vm330, %v1913, %v1915
        %v1920 = vsel %vm330, %v1911, %v1913
        %v1921 = vsel %vm330, %v1909, %v1911
        %v1922 = vsel %vm330, %v1907, %v1909
        %v1923 = vsel %vm330, %v1905, %v1907
        %v1924 = vsel %vm330, %v1903, %v1905
        %v1925 = vsel %vm330, %v1917, %v1903
        %v1926 = vmax.f32 %v1894, %v1924
        %v1927 = vmax.f32 %v1895, %v1923
        %v1928 = vmax.f32 %v1896, %v1922
        %v1929 = vmax.f32 %v1897, %v1921
        %v1930 = vmax.f32 %v1898, %v1920
        %v1931 = vmax.f32 %v1899, %v1919
        %v1932 = vmax.f32 %v1900, %v1918
        %v1933 = vmax.f32 %v1901, %v1925
        %s1934 = sadd.s32 %s251, 40
        %s1935 = smul.addr %s1934, 8
        %s1936 = scalar_lea.vmem [#allocation2], %s1935
        %1937 = vst [vmem:[%s1936] sm:$0xff] %v1926
        %1938 = vst [vmem:[%s1936 + $0x8] sm:$0xff] %v1927
        %1939 = vst [vmem:[%s1936 + $0x10] sm:$0xff] %v1928
        %1940 = vst [vmem:[%s1936 + $0x18] sm:$0xff] %v1929
        %1941 = vst [vmem:[%s1936 + $0x20] sm:$0xff] %v1930
        %1942 = vst [vmem:[%s1936 + $0x28] sm:$0xff] %v1931
        %1943 = vst [vmem:[%s1936 + $0x30] sm:$0xff] %v1932
        %1944 = vst [vmem:[%s1936 + $0x38] sm:$0xff] %v1933
        %s1945 = sld [smem:[#allocation3 + $0x36]]
        %v1946 = vstv %s1945
        %v1947 = vmul.f32 %v1946, %v254
        %v1948 = vmul.f32 %v1946, %v255
        %v1949 = vmul.f32 %v1946, %v256
        %v1950 = vmul.f32 %v1946, %v257
        %v1951 = vmul.f32 %v1946, %v258
        %v1952 = vmul.f32 %v1946, %v259
        %v1953 = vmul.f32 %v1946, %v260
        %v1954 = vmul.f32 %v1946, %v261
        %s1955 = sld [smem:[#allocation6 + $0x6]]
        %v1956 = vstv %s1955
        %v1957 = vadd.f32 %v1947, %v1956
        %v1958 = vadd.f32 %v1948, %v1956
        %v1959 = vadd.f32 %v1949, %v1956
        %v1960 = vadd.f32 %v1950, %v1956
        %v1961 = vadd.f32 %v1951, %v1956
        %v1962 = vadd.f32 %v1952, %v1956
        %v1963 = vadd.f32 %v1953, %v1956
        %v1964 = vadd.f32 %v1954, %v1956
        %s1965 = sld [smem:[#allocation3 + $0x37]]
        %v1966 = vstv %s1965
        %v1967 = vmul.f32 %v1966, %v287
        %v1968 = vmul.f32 %v1966, %v286
        %v1969 = vmul.f32 %v1966, %v285
        %v1970 = vmul.f32 %v1966, %v284
        %v1971 = vmul.f32 %v1966, %v283
        %v1972 = vmul.f32 %v1966, %v282
        %v1973 = vmul.f32 %v1966, %v281
        %v1974 = vmul.f32 %v1966, %v288
        %v1975 = vadd.f32 %v1957, %v1967
        %v1976 = vadd.f32 %v1958, %v1968
        %v1977 = vadd.f32 %v1959, %v1969
        %v1978 = vadd.f32 %v1960, %v1970
        %v1979 = vadd.f32 %v1961, %v1971
        %v1980 = vadd.f32 %v1962, %v1972
        %v1981 = vadd.f32 %v1963, %v1973
        %v1982 = vadd.f32 %v1964, %v1974
        %s1983 = sld [smem:[#allocation3 + $0x38]]
        %v1984 = vstv %s1983
        %v1985 = vmul.f32 %v1984, %v312
        %v1986 = vmul.f32 %v1984, %v311
        %v1987 = vmul.f32 %v1984, %v310
        %v1988 = vmul.f32 %v1984, %v309
        %v1989 = vmul.f32 %v1984, %v308
        %v1990 = vmul.f32 %v1984, %v307
        %v1991 = vmul.f32 %v1984, %v306
        %v1992 = vmul.f32 %v1984, %v313
        %v1993 = vadd.f32 %v1975, %v1985
        %v1994 = vadd.f32 %v1976, %v1986
        %v1995 = vadd.f32 %v1977, %v1987
        %v1996 = vadd.f32 %v1978, %v1988
        %v1997 = vadd.f32 %v1979, %v1989
        %v1998 = vadd.f32 %v1980, %v1990
        %v1999 = vadd.f32 %v1981, %v1991
        %v2000 = vadd.f32 %v1982, %v1992
        %s2001 = sld [smem:[#allocation3 + $0x39]]
        %v2002 = vstv %s2001
        %v2003 = vmul.f32 %v2002, %v337
        %v2004 = vmul.f32 %v2002, %v336
        %v2005 = vmul.f32 %v2002, %v335
        %v2006 = vmul.f32 %v2002, %v334
        %v2007 = vmul.f32 %v2002, %v333
        %v2008 = vmul.f32 %v2002, %v332
        %v2009 = vmul.f32 %v2002, %v331
        %v2010 = vmul.f32 %v2002, %v338
        %v2011 = vadd.f32 %v1993, %v2003
        %v2012 = vadd.f32 %v1994, %v2004
        %v2013 = vadd.f32 %v1995, %v2005
        %v2014 = vadd.f32 %v1996, %v2006
        %v2015 = vadd.f32 %v1997, %v2007
        %v2016 = vadd.f32 %v1998, %v2008
        %v2017 = vadd.f32 %v1999, %v2009
        %v2018 = vadd.f32 %v2000, %v2010
        %s2019 = sld [smem:[#allocation3 + $0x3a]]
        %v2020 = vstv %s2019
        %v2021 = vmul.f32 %v2020, %v362
        %v2022 = vmul.f32 %v2020, %v361
        %v2023 = vmul.f32 %v2020, %v360
        %v2024 = vmul.f32 %v2020, %v359
        %v2025 = vmul.f32 %v2020, %v358
        %v2026 = vmul.f32 %v2020, %v357
        %v2027 = vmul.f32 %v2020, %v356
        %v2028 = vmul.f32 %v2020, %v363
        %v2029 = vadd.f32 %v2011, %v2021
        %v2030 = vadd.f32 %v2012, %v2022
        %v2031 = vadd.f32 %v2013, %v2023
        %v2032 = vadd.f32 %v2014, %v2024
        %v2033 = vadd.f32 %v2015, %v2025
        %v2034 = vadd.f32 %v2016, %v2026
        %v2035 = vadd.f32 %v2017, %v2027
        %v2036 = vadd.f32 %v2018, %v2028
        %s2037 = sld [smem:[#allocation3 + $0x3b]]
        %v2038 = vstv %s2037
        %v2039 = vmul.f32 %v2038, %v387
        %v2040 = vmul.f32 %v2038, %v386
        %v2041 = vmul.f32 %v2038, %v385
        %v2042 = vmul.f32 %v2038, %v384
        %v2043 = vmul.f32 %v2038, %v383
        %v2044 = vmul.f32 %v2038, %v382
        %v2045 = vmul.f32 %v2038, %v381
        %v2046 = vmul.f32 %v2038, %v388
        %v2047 = vadd.f32 %v2029, %v2039
        %v2048 = vadd.f32 %v2030, %v2040
        %v2049 = vadd.f32 %v2031, %v2041
        %v2050 = vadd.f32 %v2032, %v2042
        %v2051 = vadd.f32 %v2033, %v2043
        %v2052 = vadd.f32 %v2034, %v2044
        %v2053 = vadd.f32 %v2035, %v2045
        %v2054 = vadd.f32 %v2036, %v2046
        %s2055 = sld [smem:[#allocation3 + $0x3c]]
        %v2056 = vstv %s2055
        %v2057 = vmul.f32 %v2056, %v412
        %v2058 = vmul.f32 %v2056, %v411
        %v2059 = vmul.f32 %v2056, %v410
        %v2060 = vmul.f32 %v2056, %v409
        %v2061 = vmul.f32 %v2056, %v408
        %v2062 = vmul.f32 %v2056, %v407
        %v2063 = vmul.f32 %v2056, %v406
        %v2064 = vmul.f32 %v2056, %v413
        %v2065 = vadd.f32 %v2047, %v2057
        %v2066 = vadd.f32 %v2048, %v2058
        %v2067 = vadd.f32 %v2049, %v2059
        %v2068 = vadd.f32 %v2050, %v2060
        %v2069 = vadd.f32 %v2051, %v2061
        %v2070 = vadd.f32 %v2052, %v2062
        %v2071 = vadd.f32 %v2053, %v2063
        %v2072 = vadd.f32 %v2054, %v2064
        %s2073 = sld [smem:[#allocation3 + $0x3d]]
        %v2074 = vstv %s2073
        %v2075 = vmul.f32 %v2074, %v437
        %v2076 = vmul.f32 %v2074, %v436
        %v2077 = vmul.f32 %v2074, %v435
        %v2078 = vmul.f32 %v2074, %v434
        %v2079 = vmul.f32 %v2074, %v433
        %v2080 = vmul.f32 %v2074, %v432
        %v2081 = vmul.f32 %v2074, %v431
        %v2082 = vmul.f32 %v2074, %v438
        %v2083 = vadd.f32 %v2065, %v2075
        %v2084 = vadd.f32 %v2066, %v2076
        %v2085 = vadd.f32 %v2067, %v2077
        %v2086 = vadd.f32 %v2068, %v2078
        %v2087 = vadd.f32 %v2069, %v2079
        %v2088 = vadd.f32 %v2070, %v2080
        %v2089 = vadd.f32 %v2071, %v2081
        %v2090 = vadd.f32 %v2072, %v2082
        %s2091 = sld [smem:[#allocation3 + $0x3e]]
        %v2092 = vstv %s2091
        %v2093 = vmul.f32 %v2092, %v462
        %v2094 = vmul.f32 %v2092, %v461
        %v2095 = vmul.f32 %v2092, %v460
        %v2096 = vmul.f32 %v2092, %v459
        %v2097 = vmul.f32 %v2092, %v458
        %v2098 = vmul.f32 %v2092, %v457
        %v2099 = vmul.f32 %v2092, %v456
        %v2100 = vmul.f32 %v2092, %v463
        %v2101 = vadd.f32 %v2083, %v2093
        %v2102 = vadd.f32 %v2084, %v2094
        %v2103 = vadd.f32 %v2085, %v2095
        %v2104 = vadd.f32 %v2086, %v2096
        %v2105 = vadd.f32 %v2087, %v2097
        %v2106 = vadd.f32 %v2088, %v2098
        %v2107 = vadd.f32 %v2089, %v2099
        %v2108 = vadd.f32 %v2090, %v2100
        %v2109 = vmax.f32 %v2101, 0.0
        %v2110 = vmax.f32 %v2102, 0.0
        %v2111 = vmax.f32 %v2103, 0.0
        %v2112 = vmax.f32 %v2104, 0.0
        %v2113 = vmax.f32 %v2105, 0.0
        %v2114 = vmax.f32 %v2106, 0.0
        %v2115 = vmax.f32 %v2107, 0.0
        %v2116 = vmax.f32 %v2108, 0.0
        %2117 = vrot.lane.b32.xlu0 %v2109, 127
        %v2118 = vpop.permute.xlu0 %2117
        %2119 = vrot.lane.b32.xlu0 %v2110, 127
        %v2120 = vpop.permute.xlu0 %2119
        %2121 = vrot.lane.b32.xlu0 %v2111, 127
        %v2122 = vpop.permute.xlu0 %2121
        %2123 = vrot.lane.b32.xlu0 %v2112, 127
        %v2124 = vpop.permute.xlu0 %2123
        %2125 = vrot.lane.b32.xlu0 %v2113, 127
        %v2126 = vpop.permute.xlu0 %2125
        %2127 = vrot.lane.b32.xlu0 %v2114, 127
        %v2128 = vpop.permute.xlu0 %2127
        %2129 = vrot.lane.b32.xlu0 %v2115, 127
        %v2130 = vpop.permute.xlu0 %2129
        %2131 = vrot.lane.b32.xlu0 %v2116, 127
        %v2132 = vpop.permute.xlu0 %2131
        %v2133 = vsel %vm280, %v2130, %v2132
        %v2134 = vsel %vm280, %v2128, %v2130
        %v2135 = vsel %vm280, %v2126, %v2128
        %v2136 = vsel %vm280, %v2124, %v2126
        %v2137 = vsel %vm280, %v2122, %v2124
        %v2138 = vsel %vm280, %v2120, %v2122
        %v2139 = vsel %vm280, %v2118, %v2120
        %v2140 = vsel %vm280, %v2132, %v2118
        %v2141 = vmax.f32 %v2109, %v2139
        %v2142 = vmax.f32 %v2110, %v2138
        %v2143 = vmax.f32 %v2111, %v2137
        %v2144 = vmax.f32 %v2112, %v2136
        %v2145 = vmax.f32 %v2113, %v2135
        %v2146 = vmax.f32 %v2114, %v2134
        %v2147 = vmax.f32 %v2115, %v2133
        %v2148 = vmax.f32 %v2116, %v2140
        %2149 = vrot.lane.b32.xlu0 %v2141, 96
        %v2150 = vpop.permute.xlu0 %2149
        %2151 = vrot.lane.b32.xlu0 %v2142, 96
        %v2152 = vpop.permute.xlu0 %2151
        %2153 = vrot.lane.b32.xlu0 %v2143, 96
        %v2154 = vpop.permute.xlu0 %2153
        %2155 = vrot.lane.b32.xlu0 %v2144, 96
        %v2156 = vpop.permute.xlu0 %2155
        %2157 = vrot.lane.b32.xlu0 %v2145, 96
        %v2158 = vpop.permute.xlu0 %2157
        %2159 = vrot.lane.b32.xlu0 %v2146, 96
        %v2160 = vpop.permute.xlu0 %2159
        %2161 = vrot.lane.b32.xlu0 %v2147, 96
        %v2162 = vpop.permute.xlu0 %2161
        %2163 = vrot.lane.b32.xlu0 %v2148, 96
        %v2164 = vpop.permute.xlu0 %2163
        %v2165 = vsel %vm330, %v2162, %v2164
        %v2166 = vsel %vm330, %v2160, %v2162
        %v2167 = vsel %vm330, %v2158, %v2160
        %v2168 = vsel %vm330, %v2156, %v2158
        %v2169 = vsel %vm330, %v2154, %v2156
        %v2170 = vsel %vm330, %v2152, %v2154
        %v2171 = vsel %vm330, %v2150, %v2152
        %v2172 = vsel %vm330, %v2164, %v2150
        %v2173 = vmax.f32 %v2141, %v2171
        %v2174 = vmax.f32 %v2142, %v2170
        %v2175 = vmax.f32 %v2143, %v2169
        %v2176 = vmax.f32 %v2144, %v2168
        %v2177 = vmax.f32 %v2145, %v2167
        %v2178 = vmax.f32 %v2146, %v2166
        %v2179 = vmax.f32 %v2147, %v2165
        %v2180 = vmax.f32 %v2148, %v2172
        %s2181 = sadd.s32 %s251, 48
        %s2182 = smul.addr %s2181, 8
        %s2183 = scalar_lea.vmem [#allocation2], %s2182
        %2184 = vst [vmem:[%s2183] sm:$0xff] %v2173
        %2185 = vst [vmem:[%s2183 + $0x8] sm:$0xff] %v2174
        %2186 = vst [vmem:[%s2183 + $0x10] sm:$0xff] %v2175
        %2187 = vst [vmem:[%s2183 + $0x18] sm:$0xff] %v2176
        %2188 = vst [vmem:[%s2183 + $0x20] sm:$0xff] %v2177
        %2189 = vst [vmem:[%s2183 + $0x28] sm:$0xff] %v2178
        %2190 = vst [vmem:[%s2183 + $0x30] sm:$0xff] %v2179
        %2191 = vst [vmem:[%s2183 + $0x38] sm:$0xff] %v2180
        %s2192 = sld [smem:[#allocation3 + $0x3f]]
        %v2193 = vstv %s2192
        %v2194 = vmul.f32 %v2193, %v254
        %v2195 = vmul.f32 %v2193, %v255
        %v2196 = vmul.f32 %v2193, %v256
        %v2197 = vmul.f32 %v2193, %v257
        %v2198 = vmul.f32 %v2193, %v258
        %v2199 = vmul.f32 %v2193, %v259
        %v2200 = vmul.f32 %v2193, %v260
        %v2201 = vmul.f32 %v2193, %v261
        %s2202 = sld [smem:[#allocation6 + $0x7]]
        %v2203 = vstv %s2202
        %v2204 = vadd.f32 %v2194, %v2203
        %v2205 = vadd.f32 %v2195, %v2203
        %v2206 = vadd.f32 %v2196, %v2203
        %v2207 = vadd.f32 %v2197, %v2203
        %v2208 = vadd.f32 %v2198, %v2203
        %v2209 = vadd.f32 %v2199, %v2203
        %v2210 = vadd.f32 %v2200, %v2203
        %v2211 = vadd.f32 %v2201, %v2203
        %s2212 = sld [smem:[#allocation3 + $0x40]]
        %v2213 = vstv %s2212
        %v2214 = vmul.f32 %v2213, %v287
        %v2215 = vmul.f32 %v2213, %v286
        %v2216 = vmul.f32 %v2213, %v285
        %v2217 = vmul.f32 %v2213, %v284
        %v2218 = vmul.f32 %v2213, %v283
        %v2219 = vmul.f32 %v2213, %v282
        %v2220 = vmul.f32 %v2213, %v281
        %v2221 = vmul.f32 %v2213, %v288
        %v2222 = vadd.f32 %v2204, %v2214
        %v2223 = vadd.f32 %v2205, %v2215
        %v2224 = vadd.f32 %v2206, %v2216
        %v2225 = vadd.f32 %v2207, %v2217
        %v2226 = vadd.f32 %v2208, %v2218
        %v2227 = vadd.f32 %v2209, %v2219
        %v2228 = vadd.f32 %v2210, %v2220
        %v2229 = vadd.f32 %v2211, %v2221
        %s2230 = sld [smem:[#allocation3 + $0x41]]
        %v2231 = vstv %s2230
        %v2232 = vmul.f32 %v2231, %v312
        %v2233 = vmul.f32 %v2231, %v311
        %v2234 = vmul.f32 %v2231, %v310
        %v2235 = vmul.f32 %v2231, %v309
        %v2236 = vmul.f32 %v2231, %v308
        %v2237 = vmul.f32 %v2231, %v307
        %v2238 = vmul.f32 %v2231, %v306
        %v2239 = vmul.f32 %v2231, %v313
        %v2240 = vadd.f32 %v2222, %v2232
        %v2241 = vadd.f32 %v2223, %v2233
        %v2242 = vadd.f32 %v2224, %v2234
        %v2243 = vadd.f32 %v2225, %v2235
        %v2244 = vadd.f32 %v2226, %v2236
        %v2245 = vadd.f32 %v2227, %v2237
        %v2246 = vadd.f32 %v2228, %v2238
        %v2247 = vadd.f32 %v2229, %v2239
        %s2248 = sld [smem:[#allocation3 + $0x42]]
        %v2249 = vstv %s2248
        %v2250 = vmul.f32 %v2249, %v337
        %v2251 = vmul.f32 %v2249, %v336
        %v2252 = vmul.f32 %v2249, %v335
        %v2253 = vmul.f32 %v2249, %v334
        %v2254 = vmul.f32 %v2249, %v333
        %v2255 = vmul.f32 %v2249, %v332
        %v2256 = vmul.f32 %v2249, %v331
        %v2257 = vmul.f32 %v2249, %v338
        %v2258 = vadd.f32 %v2240, %v2250
        %v2259 = vadd.f32 %v2241, %v2251
        %v2260 = vadd.f32 %v2242, %v2252
        %v2261 = vadd.f32 %v2243, %v2253
        %v2262 = vadd.f32 %v2244, %v2254
        %v2263 = vadd.f32 %v2245, %v2255
        %v2264 = vadd.f32 %v2246, %v2256
        %v2265 = vadd.f32 %v2247, %v2257
        %s2266 = sld [smem:[#allocation3 + $0x43]]
        %v2267 = vstv %s2266
        %v2268 = vmul.f32 %v2267, %v362
        %v2269 = vmul.f32 %v2267, %v361
        %v2270 = vmul.f32 %v2267, %v360
        %v2271 = vmul.f32 %v2267, %v359
        %v2272 = vmul.f32 %v2267, %v358
        %v2273 = vmul.f32 %v2267, %v357
        %v2274 = vmul.f32 %v2267, %v356
        %v2275 = vmul.f32 %v2267, %v363
        %v2276 = vadd.f32 %v2258, %v2268
        %v2277 = vadd.f32 %v2259, %v2269
        %v2278 = vadd.f32 %v2260, %v2270
        %v2279 = vadd.f32 %v2261, %v2271
        %v2280 = vadd.f32 %v2262, %v2272
        %v2281 = vadd.f32 %v2263, %v2273
        %v2282 = vadd.f32 %v2264, %v2274
        %v2283 = vadd.f32 %v2265, %v2275
        %s2284 = sld [smem:[#allocation3 + $0x44]]
        %v2285 = vstv %s2284
        %v2286 = vmul.f32 %v2285, %v387
        %v2287 = vmul.f32 %v2285, %v386
        %v2288 = vmul.f32 %v2285, %v385
        %v2289 = vmul.f32 %v2285, %v384
        %v2290 = vmul.f32 %v2285, %v383
        %v2291 = vmul.f32 %v2285, %v382
        %v2292 = vmul.f32 %v2285, %v381
        %v2293 = vmul.f32 %v2285, %v388
        %v2294 = vadd.f32 %v2276, %v2286
        %v2295 = vadd.f32 %v2277, %v2287
        %v2296 = vadd.f32 %v2278, %v2288
        %v2297 = vadd.f32 %v2279, %v2289
        %v2298 = vadd.f32 %v2280, %v2290
        %v2299 = vadd.f32 %v2281, %v2291
        %v2300 = vadd.f32 %v2282, %v2292
        %v2301 = vadd.f32 %v2283, %v2293
        %s2302 = sld [smem:[#allocation3 + $0x45]]
        %v2303 = vstv %s2302
        %v2304 = vmul.f32 %v2303, %v412
        %v2305 = vmul.f32 %v2303, %v411
        %v2306 = vmul.f32 %v2303, %v410
        %v2307 = vmul.f32 %v2303, %v409
        %v2308 = vmul.f32 %v2303, %v408
        %v2309 = vmul.f32 %v2303, %v407
        %v2310 = vmul.f32 %v2303, %v406
        %v2311 = vmul.f32 %v2303, %v413
        %v2312 = vadd.f32 %v2294, %v2304
        %v2313 = vadd.f32 %v2295, %v2305
        %v2314 = vadd.f32 %v2296, %v2306
        %v2315 = vadd.f32 %v2297, %v2307
        %v2316 = vadd.f32 %v2298, %v2308
        %v2317 = vadd.f32 %v2299, %v2309
        %v2318 = vadd.f32 %v2300, %v2310
        %v2319 = vadd.f32 %v2301, %v2311
        %s2320 = sld [smem:[#allocation3 + $0x46]]
        %v2321 = vstv %s2320
        %v2322 = vmul.f32 %v2321, %v437
        %v2323 = vmul.f32 %v2321, %v436
        %v2324 = vmul.f32 %v2321, %v435
        %v2325 = vmul.f32 %v2321, %v434
        %v2326 = vmul.f32 %v2321, %v433
        %v2327 = vmul.f32 %v2321, %v432
        %v2328 = vmul.f32 %v2321, %v431
        %v2329 = vmul.f32 %v2321, %v438
        %v2330 = vadd.f32 %v2312, %v2322
        %v2331 = vadd.f32 %v2313, %v2323
        %v2332 = vadd.f32 %v2314, %v2324
        %v2333 = vadd.f32 %v2315, %v2325
        %v2334 = vadd.f32 %v2316, %v2326
        %v2335 = vadd.f32 %v2317, %v2327
        %v2336 = vadd.f32 %v2318, %v2328
        %v2337 = vadd.f32 %v2319, %v2329
        %s2338 = sld [smem:[#allocation3 + $0x47]]
        %v2339 = vstv %s2338
        %v2340 = vmul.f32 %v2339, %v462
        %v2341 = vmul.f32 %v2339, %v461
        %v2342 = vmul.f32 %v2339, %v460
        %v2343 = vmul.f32 %v2339, %v459
        %v2344 = vmul.f32 %v2339, %v458
        %v2345 = vmul.f32 %v2339, %v457
        %v2346 = vmul.f32 %v2339, %v456
        %v2347 = vmul.f32 %v2339, %v463
        %v2348 = vadd.f32 %v2330, %v2340
        %v2349 = vadd.f32 %v2331, %v2341
        %v2350 = vadd.f32 %v2332, %v2342
        %v2351 = vadd.f32 %v2333, %v2343
        %v2352 = vadd.f32 %v2334, %v2344
        %v2353 = vadd.f32 %v2335, %v2345
        %v2354 = vadd.f32 %v2336, %v2346
        %v2355 = vadd.f32 %v2337, %v2347
        %v2356 = vmax.f32 %v2348, 0.0
        %v2357 = vmax.f32 %v2349, 0.0
        %v2358 = vmax.f32 %v2350, 0.0
        %v2359 = vmax.f32 %v2351, 0.0
        %v2360 = vmax.f32 %v2352, 0.0
        %v2361 = vmax.f32 %v2353, 0.0
        %v2362 = vmax.f32 %v2354, 0.0
        %v2363 = vmax.f32 %v2355, 0.0
        %2364 = vrot.lane.b32.xlu0 %v2356, 127
        %v2365 = vpop.permute.xlu0 %2364
        %2366 = vrot.lane.b32.xlu0 %v2357, 127
        %v2367 = vpop.permute.xlu0 %2366
        %2368 = vrot.lane.b32.xlu0 %v2358, 127
        %v2369 = vpop.permute.xlu0 %2368
        %2370 = vrot.lane.b32.xlu0 %v2359, 127
        %v2371 = vpop.permute.xlu0 %2370
        %2372 = vrot.lane.b32.xlu0 %v2360, 127
        %v2373 = vpop.permute.xlu0 %2372
        %2374 = vrot.lane.b32.xlu0 %v2361, 127
        %v2375 = vpop.permute.xlu0 %2374
        %2376 = vrot.lane.b32.xlu0 %v2362, 127
        %v2377 = vpop.permute.xlu0 %2376
        %2378 = vrot.lane.b32.xlu0 %v2363, 127
        %v2379 = vpop.permute.xlu0 %2378
        %v2380 = vsel %vm280, %v2377, %v2379
        %v2381 = vsel %vm280, %v2375, %v2377
        %v2382 = vsel %vm280, %v2373, %v2375
        %v2383 = vsel %vm280, %v2371, %v2373
        %v2384 = vsel %vm280, %v2369, %v2371
        %v2385 = vsel %vm280, %v2367, %v2369
        %v2386 = vsel %vm280, %v2365, %v2367
        %v2387 = vsel %vm280, %v2379, %v2365
        %v2388 = vmax.f32 %v2356, %v2386
        %v2389 = vmax.f32 %v2357, %v2385
        %v2390 = vmax.f32 %v2358, %v2384
        %v2391 = vmax.f32 %v2359, %v2383
        %v2392 = vmax.f32 %v2360, %v2382
        %v2393 = vmax.f32 %v2361, %v2381
        %v2394 = vmax.f32 %v2362, %v2380
        %v2395 = vmax.f32 %v2363, %v2387
        %2396 = vrot.lane.b32.xlu0 %v2388, 96
        %v2397 = vpop.permute.xlu0 %2396
        %2398 = vrot.lane.b32.xlu0 %v2389, 96
        %v2399 = vpop.permute.xlu0 %2398
        %2400 = vrot.lane.b32.xlu0 %v2390, 96
        %v2401 = vpop.permute.xlu0 %2400
        %2402 = vrot.lane.b32.xlu0 %v2391, 96
        %v2403 = vpop.permute.xlu0 %2402
        %2404 = vrot.lane.b32.xlu0 %v2392, 96
        %v2405 = vpop.permute.xlu0 %2404
        %2406 = vrot.lane.b32.xlu0 %v2393, 96
        %v2407 = vpop.permute.xlu0 %2406
        %2408 = vrot.lane.b32.xlu0 %v2394, 96
        %v2409 = vpop.permute.xlu0 %2408
        %2410 = vrot.lane.b32.xlu0 %v2395, 96
        %v2411 = vpop.permute.xlu0 %2410
        %v2412 = vsel %vm330, %v2409, %v2411
        %v2413 = vsel %vm330, %v2407, %v2409
        %v2414 = vsel %vm330, %v2405, %v2407
        %v2415 = vsel %vm330, %v2403, %v2405
        %v2416 = vsel %vm330, %v2401, %v2403
        %v2417 = vsel %vm330, %v2399, %v2401
        %v2418 = vsel %vm330, %v2397, %v2399
        %v2419 = vsel %vm330, %v2411, %v2397
        %v2420 = vmax.f32 %v2388, %v2418
        %v2421 = vmax.f32 %v2389, %v2417
        %v2422 = vmax.f32 %v2390, %v2416
        %v2423 = vmax.f32 %v2391, %v2415
        %v2424 = vmax.f32 %v2392, %v2414
        %v2425 = vmax.f32 %v2393, %v2413
        %v2426 = vmax.f32 %v2394, %v2412
        %v2427 = vmax.f32 %v2395, %v2419
        %s2428 = sadd.s32 %s251, 56
        %s2429 = smul.addr %s2428, 8
        %s2430 = scalar_lea.vmem [#allocation2], %s2429
        %2431 = vst [vmem:[%s2430] sm:$0xff] %v2420
        %2432 = vst [vmem:[%s2430 + $0x8] sm:$0xff] %v2421
        %2433 = vst [vmem:[%s2430 + $0x10] sm:$0xff] %v2422
        %2434 = vst [vmem:[%s2430 + $0x18] sm:$0xff] %v2423
        %2435 = vst [vmem:[%s2430 + $0x20] sm:$0xff] %v2424
        %2436 = vst [vmem:[%s2430 + $0x28] sm:$0xff] %v2425
        %2437 = vst [vmem:[%s2430 + $0x30] sm:$0xff] %v2426
        %2438 = vst [vmem:[%s2430 + $0x38] sm:$0xff] %v2427
        %s2439 = sld [smem:[#allocation3 + $0x48]]
        %v2440 = vstv %s2439
        %v2441 = vmul.f32 %v2440, %v254
        %v2442 = vmul.f32 %v2440, %v255
        %v2443 = vmul.f32 %v2440, %v256
        %v2444 = vmul.f32 %v2440, %v257
        %v2445 = vmul.f32 %v2440, %v258
        %v2446 = vmul.f32 %v2440, %v259
        %v2447 = vmul.f32 %v2440, %v260
        %v2448 = vmul.f32 %v2440, %v261
        %s2449 = sld [smem:[#allocation6 + $0x8]]
        %v2450 = vstv %s2449
        %v2451 = vadd.f32 %v2441, %v2450
        %v2452 = vadd.f32 %v2442, %v2450
        %v2453 = vadd.f32 %v2443, %v2450
        %v2454 = vadd.f32 %v2444, %v2450
        %v2455 = vadd.f32 %v2445, %v2450
        %v2456 = vadd.f32 %v2446, %v2450
        %v2457 = vadd.f32 %v2447, %v2450
        %v2458 = vadd.f32 %v2448, %v2450
        %s2459 = sld [smem:[#allocation3 + $0x49]]
        %v2460 = vstv %s2459
        %v2461 = vmul.f32 %v2460, %v287
        %v2462 = vmul.f32 %v2460, %v286
        %v2463 = vmul.f32 %v2460, %v285
        %v2464 = vmul.f32 %v2460, %v284
        %v2465 = vmul.f32 %v2460, %v283
        %v2466 = vmul.f32 %v2460, %v282
        %v2467 = vmul.f32 %v2460, %v281
        %v2468 = vmul.f32 %v2460, %v288
        %v2469 = vadd.f32 %v2451, %v2461
        %v2470 = vadd.f32 %v2452, %v2462
        %v2471 = vadd.f32 %v2453, %v2463
        %v2472 = vadd.f32 %v2454, %v2464
        %v2473 = vadd.f32 %v2455, %v2465
        %v2474 = vadd.f32 %v2456, %v2466
        %v2475 = vadd.f32 %v2457, %v2467
        %v2476 = vadd.f32 %v2458, %v2468
        %s2477 = sld [smem:[#allocation3 + $0x4a]]
        %v2478 = vstv %s2477
        %v2479 = vmul.f32 %v2478, %v312
        %v2480 = vmul.f32 %v2478, %v311
        %v2481 = vmul.f32 %v2478, %v310
        %v2482 = vmul.f32 %v2478, %v309
        %v2483 = vmul.f32 %v2478, %v308
        %v2484 = vmul.f32 %v2478, %v307
        %v2485 = vmul.f32 %v2478, %v306
        %v2486 = vmul.f32 %v2478, %v313
        %v2487 = vadd.f32 %v2469, %v2479
        %v2488 = vadd.f32 %v2470, %v2480
        %v2489 = vadd.f32 %v2471, %v2481
        %v2490 = vadd.f32 %v2472, %v2482
        %v2491 = vadd.f32 %v2473, %v2483
        %v2492 = vadd.f32 %v2474, %v2484
        %v2493 = vadd.f32 %v2475, %v2485
        %v2494 = vadd.f32 %v2476, %v2486
        %s2495 = sld [smem:[#allocation3 + $0x4b]]
        %v2496 = vstv %s2495
        %v2497 = vmul.f32 %v2496, %v337
        %v2498 = vmul.f32 %v2496, %v336
        %v2499 = vmul.f32 %v2496, %v335
        %v2500 = vmul.f32 %v2496, %v334
        %v2501 = vmul.f32 %v2496, %v333
        %v2502 = vmul.f32 %v2496, %v332
        %v2503 = vmul.f32 %v2496, %v331
        %v2504 = vmul.f32 %v2496, %v338
        %v2505 = vadd.f32 %v2487, %v2497
        %v2506 = vadd.f32 %v2488, %v2498
        %v2507 = vadd.f32 %v2489, %v2499
        %v2508 = vadd.f32 %v2490, %v2500
        %v2509 = vadd.f32 %v2491, %v2501
        %v2510 = vadd.f32 %v2492, %v2502
        %v2511 = vadd.f32 %v2493, %v2503
        %v2512 = vadd.f32 %v2494, %v2504
        %s2513 = sld [smem:[#allocation3 + $0x4c]]
        %v2514 = vstv %s2513
        %v2515 = vmul.f32 %v2514, %v362
        %v2516 = vmul.f32 %v2514, %v361
        %v2517 = vmul.f32 %v2514, %v360
        %v2518 = vmul.f32 %v2514, %v359
        %v2519 = vmul.f32 %v2514, %v358
        %v2520 = vmul.f32 %v2514, %v357
        %v2521 = vmul.f32 %v2514, %v356
        %v2522 = vmul.f32 %v2514, %v363
        %v2523 = vadd.f32 %v2505, %v2515
        %v2524 = vadd.f32 %v2506, %v2516
        %v2525 = vadd.f32 %v2507, %v2517
        %v2526 = vadd.f32 %v2508, %v2518
        %v2527 = vadd.f32 %v2509, %v2519
        %v2528 = vadd.f32 %v2510, %v2520
        %v2529 = vadd.f32 %v2511, %v2521
        %v2530 = vadd.f32 %v2512, %v2522
        %s2531 = sld [smem:[#allocation3 + $0x4d]]
        %v2532 = vstv %s2531
        %v2533 = vmul.f32 %v2532, %v387
        %v2534 = vmul.f32 %v2532, %v386
        %v2535 = vmul.f32 %v2532, %v385
        %v2536 = vmul.f32 %v2532, %v384
        %v2537 = vmul.f32 %v2532, %v383
        %v2538 = vmul.f32 %v2532, %v382
        %v2539 = vmul.f32 %v2532, %v381
        %v2540 = vmul.f32 %v2532, %v388
        %v2541 = vadd.f32 %v2523, %v2533
        %v2542 = vadd.f32 %v2524, %v2534
        %v2543 = vadd.f32 %v2525, %v2535
        %v2544 = vadd.f32 %v2526, %v2536
        %v2545 = vadd.f32 %v2527, %v2537
        %v2546 = vadd.f32 %v2528, %v2538
        %v2547 = vadd.f32 %v2529, %v2539
        %v2548 = vadd.f32 %v2530, %v2540
        %s2549 = sld [smem:[#allocation3 + $0x4e]]
        %v2550 = vstv %s2549
        %v2551 = vmul.f32 %v2550, %v412
        %v2552 = vmul.f32 %v2550, %v411
        %v2553 = vmul.f32 %v2550, %v410
        %v2554 = vmul.f32 %v2550, %v409
        %v2555 = vmul.f32 %v2550, %v408
        %v2556 = vmul.f32 %v2550, %v407
        %v2557 = vmul.f32 %v2550, %v406
        %v2558 = vmul.f32 %v2550, %v413
        %v2559 = vadd.f32 %v2541, %v2551
        %v2560 = vadd.f32 %v2542, %v2552
        %v2561 = vadd.f32 %v2543, %v2553
        %v2562 = vadd.f32 %v2544, %v2554
        %v2563 = vadd.f32 %v2545, %v2555
        %v2564 = vadd.f32 %v2546, %v2556
        %v2565 = vadd.f32 %v2547, %v2557
        %v2566 = vadd.f32 %v2548, %v2558
        %s2567 = sld [smem:[#allocation3 + $0x4f]]
        %v2568 = vstv %s2567
        %v2569 = vmul.f32 %v2568, %v437
        %v2570 = vmul.f32 %v2568, %v436
        %v2571 = vmul.f32 %v2568, %v435
        %v2572 = vmul.f32 %v2568, %v434
        %v2573 = vmul.f32 %v2568, %v433
        %v2574 = vmul.f32 %v2568, %v432
        %v2575 = vmul.f32 %v2568, %v431
        %v2576 = vmul.f32 %v2568, %v438
        %v2577 = vadd.f32 %v2559, %v2569
        %v2578 = vadd.f32 %v2560, %v2570
        %v2579 = vadd.f32 %v2561, %v2571
        %v2580 = vadd.f32 %v2562, %v2572
        %v2581 = vadd.f32 %v2563, %v2573
        %v2582 = vadd.f32 %v2564, %v2574
        %v2583 = vadd.f32 %v2565, %v2575
        %v2584 = vadd.f32 %v2566, %v2576
        %s2585 = sld [smem:[#allocation3 + $0x50]]
        %v2586 = vstv %s2585
        %v2587 = vmul.f32 %v2586, %v462
        %v2588 = vmul.f32 %v2586, %v461
        %v2589 = vmul.f32 %v2586, %v460
        %v2590 = vmul.f32 %v2586, %v459
        %v2591 = vmul.f32 %v2586, %v458
        %v2592 = vmul.f32 %v2586, %v457
        %v2593 = vmul.f32 %v2586, %v456
        %v2594 = vmul.f32 %v2586, %v463
        %v2595 = vadd.f32 %v2577, %v2587
        %v2596 = vadd.f32 %v2578, %v2588
        %v2597 = vadd.f32 %v2579, %v2589
        %v2598 = vadd.f32 %v2580, %v2590
        %v2599 = vadd.f32 %v2581, %v2591
        %v2600 = vadd.f32 %v2582, %v2592
        %v2601 = vadd.f32 %v2583, %v2593
        %v2602 = vadd.f32 %v2584, %v2594
        %v2603 = vmax.f32 %v2595, 0.0
        %v2604 = vmax.f32 %v2596, 0.0
        %v2605 = vmax.f32 %v2597, 0.0
        %v2606 = vmax.f32 %v2598, 0.0
        %v2607 = vmax.f32 %v2599, 0.0
        %v2608 = vmax.f32 %v2600, 0.0
        %v2609 = vmax.f32 %v2601, 0.0
        %v2610 = vmax.f32 %v2602, 0.0
        %2611 = vrot.lane.b32.xlu0 %v2603, 127
        %v2612 = vpop.permute.xlu0 %2611
        %2613 = vrot.lane.b32.xlu0 %v2604, 127
        %v2614 = vpop.permute.xlu0 %2613
        %2615 = vrot.lane.b32.xlu0 %v2605, 127
        %v2616 = vpop.permute.xlu0 %2615
        %2617 = vrot.lane.b32.xlu0 %v2606, 127
        %v2618 = vpop.permute.xlu0 %2617
        %2619 = vrot.lane.b32.xlu0 %v2607, 127
        %v2620 = vpop.permute.xlu0 %2619
        %2621 = vrot.lane.b32.xlu0 %v2608, 127
        %v2622 = vpop.permute.xlu0 %2621
        %2623 = vrot.lane.b32.xlu0 %v2609, 127
        %v2624 = vpop.permute.xlu0 %2623
        %2625 = vrot.lane.b32.xlu0 %v2610, 127
        %v2626 = vpop.permute.xlu0 %2625
        %v2627 = vsel %vm280, %v2624, %v2626
        %v2628 = vsel %vm280, %v2622, %v2624
        %v2629 = vsel %vm280, %v2620, %v2622
        %v2630 = vsel %vm280, %v2618, %v2620
        %v2631 = vsel %vm280, %v2616, %v2618
        %v2632 = vsel %vm280, %v2614, %v2616
        %v2633 = vsel %vm280, %v2612, %v2614
        %v2634 = vsel %vm280, %v2626, %v2612
        %v2635 = vmax.f32 %v2603, %v2633
        %v2636 = vmax.f32 %v2604, %v2632
        %v2637 = vmax.f32 %v2605, %v2631
        %v2638 = vmax.f32 %v2606, %v2630
        %v2639 = vmax.f32 %v2607, %v2629
        %v2640 = vmax.f32 %v2608, %v2628
        %v2641 = vmax.f32 %v2609, %v2627
        %v2642 = vmax.f32 %v2610, %v2634
        %2643 = vrot.lane.b32.xlu0 %v2635, 96
        %v2644 = vpop.permute.xlu0 %2643
        %2645 = vrot.lane.b32.xlu0 %v2636, 96
        %v2646 = vpop.permute.xlu0 %2645
        %2647 = vrot.lane.b32.xlu0 %v2637, 96
        %v2648 = vpop.permute.xlu0 %2647
        %2649 = vrot.lane.b32.xlu0 %v2638, 96
        %v2650 = vpop.permute.xlu0 %2649
        %2651 = vrot.lane.b32.xlu0 %v2639, 96
        %v2652 = vpop.permute.xlu0 %2651
        %2653 = vrot.lane.b32.xlu0 %v2640, 96
        %v2654 = vpop.permute.xlu0 %2653
        %2655 = vrot.lane.b32.xlu0 %v2641, 96
        %v2656 = vpop.permute.xlu0 %2655
        %2657 = vrot.lane.b32.xlu0 %v2642, 96
        %v2658 = vpop.permute.xlu0 %2657
        %v2659 = vsel %vm330, %v2656, %v2658
        %v2660 = vsel %vm330, %v2654, %v2656
        %v2661 = vsel %vm330, %v2652, %v2654
        %v2662 = vsel %vm330, %v2650, %v2652
        %v2663 = vsel %vm330, %v2648, %v2650
        %v2664 = vsel %vm330, %v2646, %v2648
        %v2665 = vsel %vm330, %v2644, %v2646
        %v2666 = vsel %vm330, %v2658, %v2644
        %v2667 = vmax.f32 %v2635, %v2665
        %v2668 = vmax.f32 %v2636, %v2664
        %v2669 = vmax.f32 %v2637, %v2663
        %v2670 = vmax.f32 %v2638, %v2662
        %v2671 = vmax.f32 %v2639, %v2661
        %v2672 = vmax.f32 %v2640, %v2660
        %v2673 = vmax.f32 %v2641, %v2659
        %v2674 = vmax.f32 %v2642, %v2666
        %s2675 = sadd.s32 %s251, 64
        %s2676 = smul.addr %s2675, 8
        %s2677 = scalar_lea.vmem [#allocation2], %s2676
        %2678 = vst [vmem:[%s2677] sm:$0xff] %v2667
        %2679 = vst [vmem:[%s2677 + $0x8] sm:$0xff] %v2668
        %2680 = vst [vmem:[%s2677 + $0x10] sm:$0xff] %v2669
        %2681 = vst [vmem:[%s2677 + $0x18] sm:$0xff] %v2670
        %2682 = vst [vmem:[%s2677 + $0x20] sm:$0xff] %v2671
        %2683 = vst [vmem:[%s2677 + $0x28] sm:$0xff] %v2672
        %2684 = vst [vmem:[%s2677 + $0x30] sm:$0xff] %v2673
        %2685 = vst [vmem:[%s2677 + $0x38] sm:$0xff] %v2674
        %s2686 = sld [smem:[#allocation3 + $0x51]]
        %v2687 = vstv %s2686
        %v2688 = vmul.f32 %v2687, %v254
        %v2689 = vmul.f32 %v2687, %v255
        %v2690 = vmul.f32 %v2687, %v256
        %v2691 = vmul.f32 %v2687, %v257
        %v2692 = vmul.f32 %v2687, %v258
        %v2693 = vmul.f32 %v2687, %v259
        %v2694 = vmul.f32 %v2687, %v260
        %v2695 = vmul.f32 %v2687, %v261
        %s2696 = sld [smem:[#allocation6 + $0x9]]
        %v2697 = vstv %s2696
        %v2698 = vadd.f32 %v2688, %v2697
        %v2699 = vadd.f32 %v2689, %v2697
        %v2700 = vadd.f32 %v2690, %v2697
        %v2701 = vadd.f32 %v2691, %v2697
        %v2702 = vadd.f32 %v2692, %v2697
        %v2703 = vadd.f32 %v2693, %v2697
        %v2704 = vadd.f32 %v2694, %v2697
        %v2705 = vadd.f32 %v2695, %v2697
        %s2706 = sld [smem:[#allocation3 + $0x52]]
        %v2707 = vstv %s2706
        %v2708 = vmul.f32 %v2707, %v287
        %v2709 = vmul.f32 %v2707, %v286
        %v2710 = vmul.f32 %v2707, %v285
        %v2711 = vmul.f32 %v2707, %v284
        %v2712 = vmul.f32 %v2707, %v283
        %v2713 = vmul.f32 %v2707, %v282
        %v2714 = vmul.f32 %v2707, %v281
        %v2715 = vmul.f32 %v2707, %v288
        %v2716 = vadd.f32 %v2698, %v2708
        %v2717 = vadd.f32 %v2699, %v2709
        %v2718 = vadd.f32 %v2700, %v2710
        %v2719 = vadd.f32 %v2701, %v2711
        %v2720 = vadd.f32 %v2702, %v2712
        %v2721 = vadd.f32 %v2703, %v2713
        %v2722 = vadd.f32 %v2704, %v2714
        %v2723 = vadd.f32 %v2705, %v2715
        %s2724 = sld [smem:[#allocation3 + $0x53]]
        %v2725 = vstv %s2724
        %v2726 = vmul.f32 %v2725, %v312
        %v2727 = vmul.f32 %v2725, %v311
        %v2728 = vmul.f32 %v2725, %v310
        %v2729 = vmul.f32 %v2725, %v309
        %v2730 = vmul.f32 %v2725, %v308
        %v2731 = vmul.f32 %v2725, %v307
        %v2732 = vmul.f32 %v2725, %v306
        %v2733 = vmul.f32 %v2725, %v313
        %v2734 = vadd.f32 %v2716, %v2726
        %v2735 = vadd.f32 %v2717, %v2727
        %v2736 = vadd.f32 %v2718, %v2728
        %v2737 = vadd.f32 %v2719, %v2729
        %v2738 = vadd.f32 %v2720, %v2730
        %v2739 = vadd.f32 %v2721, %v2731
        %v2740 = vadd.f32 %v2722, %v2732
        %v2741 = vadd.f32 %v2723, %v2733
        %s2742 = sld [smem:[#allocation3 + $0x54]]
        %v2743 = vstv %s2742
        %v2744 = vmul.f32 %v2743, %v337
        %v2745 = vmul.f32 %v2743, %v336
        %v2746 = vmul.f32 %v2743, %v335
        %v2747 = vmul.f32 %v2743, %v334
        %v2748 = vmul.f32 %v2743, %v333
        %v2749 = vmul.f32 %v2743, %v332
        %v2750 = vmul.f32 %v2743, %v331
        %v2751 = vmul.f32 %v2743, %v338
        %v2752 = vadd.f32 %v2734, %v2744
        %v2753 = vadd.f32 %v2735, %v2745
        %v2754 = vadd.f32 %v2736, %v2746
        %v2755 = vadd.f32 %v2737, %v2747
        %v2756 = vadd.f32 %v2738, %v2748
        %v2757 = vadd.f32 %v2739, %v2749
        %v2758 = vadd.f32 %v2740, %v2750
        %v2759 = vadd.f32 %v2741, %v2751
        %s2760 = sld [smem:[#allocation3 + $0x55]]
        %v2761 = vstv %s2760
        %v2762 = vmul.f32 %v2761, %v362
        %v2763 = vmul.f32 %v2761, %v361
        %v2764 = vmul.f32 %v2761, %v360
        %v2765 = vmul.f32 %v2761, %v359
        %v2766 = vmul.f32 %v2761, %v358
        %v2767 = vmul.f32 %v2761, %v357
        %v2768 = vmul.f32 %v2761, %v356
        %v2769 = vmul.f32 %v2761, %v363
        %v2770 = vadd.f32 %v2752, %v2762
        %v2771 = vadd.f32 %v2753, %v2763
        %v2772 = vadd.f32 %v2754, %v2764
        %v2773 = vadd.f32 %v2755, %v2765
        %v2774 = vadd.f32 %v2756, %v2766
        %v2775 = vadd.f32 %v2757, %v2767
        %v2776 = vadd.f32 %v2758, %v2768
        %v2777 = vadd.f32 %v2759, %v2769
        %s2778 = sld [smem:[#allocation3 + $0x56]]
        %v2779 = vstv %s2778
        %v2780 = vmul.f32 %v2779, %v387
        %v2781 = vmul.f32 %v2779, %v386
        %v2782 = vmul.f32 %v2779, %v385
        %v2783 = vmul.f32 %v2779, %v384
        %v2784 = vmul.f32 %v2779, %v383
        %v2785 = vmul.f32 %v2779, %v382
        %v2786 = vmul.f32 %v2779, %v381
        %v2787 = vmul.f32 %v2779, %v388
        %v2788 = vadd.f32 %v2770, %v2780
        %v2789 = vadd.f32 %v2771, %v2781
        %v2790 = vadd.f32 %v2772, %v2782
        %v2791 = vadd.f32 %v2773, %v2783
        %v2792 = vadd.f32 %v2774, %v2784
        %v2793 = vadd.f32 %v2775, %v2785
        %v2794 = vadd.f32 %v2776, %v2786
        %v2795 = vadd.f32 %v2777, %v2787
        %s2796 = sld [smem:[#allocation3 + $0x57]]
        %v2797 = vstv %s2796
        %v2798 = vmul.f32 %v2797, %v412
        %v2799 = vmul.f32 %v2797, %v411
        %v2800 = vmul.f32 %v2797, %v410
        %v2801 = vmul.f32 %v2797, %v409
        %v2802 = vmul.f32 %v2797, %v408
        %v2803 = vmul.f32 %v2797, %v407
        %v2804 = vmul.f32 %v2797, %v406
        %v2805 = vmul.f32 %v2797, %v413
        %v2806 = vadd.f32 %v2788, %v2798
        %v2807 = vadd.f32 %v2789, %v2799
        %v2808 = vadd.f32 %v2790, %v2800
        %v2809 = vadd.f32 %v2791, %v2801
        %v2810 = vadd.f32 %v2792, %v2802
        %v2811 = vadd.f32 %v2793, %v2803
        %v2812 = vadd.f32 %v2794, %v2804
        %v2813 = vadd.f32 %v2795, %v2805
        %s2814 = sld [smem:[#allocation3 + $0x58]]
        %v2815 = vstv %s2814
        %v2816 = vmul.f32 %v2815, %v437
        %v2817 = vmul.f32 %v2815, %v436
        %v2818 = vmul.f32 %v2815, %v435
        %v2819 = vmul.f32 %v2815, %v434
        %v2820 = vmul.f32 %v2815, %v433
        %v2821 = vmul.f32 %v2815, %v432
        %v2822 = vmul.f32 %v2815, %v431
        %v2823 = vmul.f32 %v2815, %v438
        %v2824 = vadd.f32 %v2806, %v2816
        %v2825 = vadd.f32 %v2807, %v2817
        %v2826 = vadd.f32 %v2808, %v2818
        %v2827 = vadd.f32 %v2809, %v2819
        %v2828 = vadd.f32 %v2810, %v2820
        %v2829 = vadd.f32 %v2811, %v2821
        %v2830 = vadd.f32 %v2812, %v2822
        %v2831 = vadd.f32 %v2813, %v2823
        %s2832 = sld [smem:[#allocation3 + $0x59]]
        %v2833 = vstv %s2832
        %v2834 = vmul.f32 %v2833, %v462
        %v2835 = vmul.f32 %v2833, %v461
        %v2836 = vmul.f32 %v2833, %v460
        %v2837 = vmul.f32 %v2833, %v459
        %v2838 = vmul.f32 %v2833, %v458
        %v2839 = vmul.f32 %v2833, %v457
        %v2840 = vmul.f32 %v2833, %v456
        %v2841 = vmul.f32 %v2833, %v463
        %v2842 = vadd.f32 %v2824, %v2834
        %v2843 = vadd.f32 %v2825, %v2835
        %v2844 = vadd.f32 %v2826, %v2836
        %v2845 = vadd.f32 %v2827, %v2837
        %v2846 = vadd.f32 %v2828, %v2838
        %v2847 = vadd.f32 %v2829, %v2839
        %v2848 = vadd.f32 %v2830, %v2840
        %v2849 = vadd.f32 %v2831, %v2841
        %v2850 = vmax.f32 %v2842, 0.0
        %v2851 = vmax.f32 %v2843, 0.0
        %v2852 = vmax.f32 %v2844, 0.0
        %v2853 = vmax.f32 %v2845, 0.0
        %v2854 = vmax.f32 %v2846, 0.0
        %v2855 = vmax.f32 %v2847, 0.0
        %v2856 = vmax.f32 %v2848, 0.0
        %v2857 = vmax.f32 %v2849, 0.0
        %2858 = vrot.lane.b32.xlu0 %v2850, 127
        %v2859 = vpop.permute.xlu0 %2858
        %2860 = vrot.lane.b32.xlu0 %v2851, 127
        %v2861 = vpop.permute.xlu0 %2860
        %2862 = vrot.lane.b32.xlu0 %v2852, 127
        %v2863 = vpop.permute.xlu0 %2862
        %2864 = vrot.lane.b32.xlu0 %v2853, 127
        %v2865 = vpop.permute.xlu0 %2864
        %2866 = vrot.lane.b32.xlu0 %v2854, 127
        %v2867 = vpop.permute.xlu0 %2866
        %2868 = vrot.lane.b32.xlu0 %v2855, 127
        %v2869 = vpop.permute.xlu0 %2868
        %2870 = vrot.lane.b32.xlu0 %v2856, 127
        %v2871 = vpop.permute.xlu0 %2870
        %2872 = vrot.lane.b32.xlu0 %v2857, 127
        %v2873 = vpop.permute.xlu0 %2872
        %v2874 = vsel %vm280, %v2871, %v2873
        %v2875 = vsel %vm280, %v2869, %v2871
        %v2876 = vsel %vm280, %v2867, %v2869
        %v2877 = vsel %vm280, %v2865, %v2867
        %v2878 = vsel %vm280, %v2863, %v2865
        %v2879 = vsel %vm280, %v2861, %v2863
        %v2880 = vsel %vm280, %v2859, %v2861
        %v2881 = vsel %vm280, %v2873, %v2859
        %v2882 = vmax.f32 %v2850, %v2880
        %v2883 = vmax.f32 %v2851, %v2879
        %v2884 = vmax.f32 %v2852, %v2878
        %v2885 = vmax.f32 %v2853, %v2877
        %v2886 = vmax.f32 %v2854, %v2876
        %v2887 = vmax.f32 %v2855, %v2875
        %v2888 = vmax.f32 %v2856, %v2874
        %v2889 = vmax.f32 %v2857, %v2881
        %2890 = vrot.lane.b32.xlu0 %v2882, 96
        %v2891 = vpop.permute.xlu0 %2890
        %2892 = vrot.lane.b32.xlu0 %v2883, 96
        %v2893 = vpop.permute.xlu0 %2892
        %2894 = vrot.lane.b32.xlu0 %v2884, 96
        %v2895 = vpop.permute.xlu0 %2894
        %2896 = vrot.lane.b32.xlu0 %v2885, 96
        %v2897 = vpop.permute.xlu0 %2896
        %2898 = vrot.lane.b32.xlu0 %v2886, 96
        %v2899 = vpop.permute.xlu0 %2898
        %2900 = vrot.lane.b32.xlu0 %v2887, 96
        %v2901 = vpop.permute.xlu0 %2900
        %2902 = vrot.lane.b32.xlu0 %v2888, 96
        %v2903 = vpop.permute.xlu0 %2902
        %2904 = vrot.lane.b32.xlu0 %v2889, 96
        %v2905 = vpop.permute.xlu0 %2904
        %v2906 = vsel %vm330, %v2903, %v2905
        %v2907 = vsel %vm330, %v2901, %v2903
        %v2908 = vsel %vm330, %v2899, %v2901
        %v2909 = vsel %vm330, %v2897, %v2899
        %v2910 = vsel %vm330, %v2895, %v2897
        %v2911 = vsel %vm330, %v2893, %v2895
        %v2912 = vsel %vm330, %v2891, %v2893
        %v2913 = vsel %vm330, %v2905, %v2891
        %v2914 = vmax.f32 %v2882, %v2912
        %v2915 = vmax.f32 %v2883, %v2911
        %v2916 = vmax.f32 %v2884, %v2910
        %v2917 = vmax.f32 %v2885, %v2909
        %v2918 = vmax.f32 %v2886, %v2908
        %v2919 = vmax.f32 %v2887, %v2907
        %v2920 = vmax.f32 %v2888, %v2906
        %v2921 = vmax.f32 %v2889, %v2913
        %s2922 = sadd.s32 %s251, 72
        %s2923 = smul.addr %s2922, 8
        %s2924 = scalar_lea.vmem [#allocation2], %s2923
        %2925 = vst [vmem:[%s2924] sm:$0xff] %v2914
        %2926 = vst [vmem:[%s2924 + $0x8] sm:$0xff] %v2915
        %2927 = vst [vmem:[%s2924 + $0x10] sm:$0xff] %v2916
        %2928 = vst [vmem:[%s2924 + $0x18] sm:$0xff] %v2917
        %2929 = vst [vmem:[%s2924 + $0x20] sm:$0xff] %v2918
        %2930 = vst [vmem:[%s2924 + $0x28] sm:$0xff] %v2919
        %2931 = vst [vmem:[%s2924 + $0x30] sm:$0xff] %v2920
        %2932 = vst [vmem:[%s2924 + $0x38] sm:$0xff] %v2921
        %v2933 = vld [vmem:[#allocation2] sm:$0xff]
        %v2934 = vld [vmem:[#allocation2 + $0x8] sm:$0xff]
        %v2935 = vld [vmem:[#allocation2 + $0x10] sm:$0xff]
        %v2936 = vld [vmem:[#allocation2 + $0x18] sm:$0xff]
        %v2937 = vld [vmem:[#allocation2 + $0x20] sm:$0xff]
        %v2938 = vld [vmem:[#allocation2 + $0x28] sm:$0xff]
        %v2939 = vld [vmem:[#allocation2 + $0x30] sm:$0xff]
        %v2940 = vld [vmem:[#allocation2 + $0x38] sm:$0xff]
        %v2941 = vpack.c.bf16 %v2933, %v2933
        %v2942 = vpack.c.bf16 %v2934, %v2934
        %v2943 = vpack.c.bf16 %v2935, %v2935
        %v2944 = vpack.c.bf16 %v2936, %v2936
        %v2945 = vpack.c.bf16 %v2937, %v2937
        %v2946 = vpack.c.bf16 %v2938, %v2938
        %v2947 = vpack.c.bf16 %v2939, %v2939
        %v2948 = vpack.c.bf16 %v2940, %v2940
        %v2949 = vld [vmem:[%s3] sm:$0xf]
        %v2950 = vld [vmem:[%s3 + $0x4] sm:$0xf]
        %v2951 = vld [vmem:[%s3 + $0x8] sm:$0xf]
        %v2952 = vld [vmem:[%s3 + $0xc] sm:$0xf]
        %v2953 = vld [vmem:[%s3 + $0x10] sm:$0xf]
        %v2954 = vld [vmem:[%s3 + $0x14] sm:$0xf]
        %v2955 = vld [vmem:[%s3 + $0x18] sm:$0xf]
        %v2956 = vld [vmem:[%s3 + $0x1c] sm:$0xf]
        %v2957 = vld [vmem:[%s3 + $0x20] sm:$0xf]
        %v2958 = vld [vmem:[%s3 + $0x24] sm:$0xf]
        %v2959 = vld [vmem:[%s3 + $0x28] sm:$0xf]
        %v2960 = vld [vmem:[%s3 + $0x2c] sm:$0xf]
        %v2961 = vld [vmem:[%s3 + $0x30] sm:$0xf]
        %v2962 = vld [vmem:[%s3 + $0x34] sm:$0xf]
        %v2963 = vld [vmem:[%s3 + $0x38] sm:$0xf]
        %v2964 = vld [vmem:[%s3 + $0x3c] sm:$0xf]
        %v2965 = vld [vmem:[%s3 + $0x40] sm:$0xf]
        %v2966 = vld [vmem:[%s3 + $0x44] sm:$0xf]
        %v2967 = vld [vmem:[%s3 + $0x48] sm:$0xf]
        %v2968 = vld [vmem:[%s3 + $0x4c] sm:$0xf]
        %v2969 = vld [vmem:[%s3 + $0x50] sm:$0xf]
        %v2970 = vld [vmem:[%s3 + $0x54] sm:$0xf]
        %v2971 = vld [vmem:[%s3 + $0x58] sm:$0xf]
        %v2972 = vld [vmem:[%s3 + $0x5c] sm:$0xf]
        %v2973 = vld [vmem:[%s3 + $0x60] sm:$0xf]
        %v2974 = vld [vmem:[%s3 + $0x64] sm:$0xf]
        %v2975 = vld [vmem:[%s3 + $0x68] sm:$0xf]
        %v2976 = vld [vmem:[%s3 + $0x6c] sm:$0xf]
        %v2977 = vld [vmem:[%s3 + $0x70] sm:$0xf]
        %v2978 = vld [vmem:[%s3 + $0x74] sm:$0xf]
        %v2979 = vld [vmem:[%s3 + $0x78] sm:$0xf]
        %v2980 = vld [vmem:[%s3 + $0x7c] sm:$0xf]
        %v2981 = vld [vmem:[%s3 + $0x80] sm:$0xf]
        %v2982 = vld [vmem:[%s3 + $0x84] sm:$0xf]
        %v2983 = vld [vmem:[%s3 + $0x88] sm:$0xf]
        %v2984 = vld [vmem:[%s3 + $0x8c] sm:$0xf]
        %v2985 = vld [vmem:[%s3 + $0x90] sm:$0xf]
        %v2986 = vld [vmem:[%s3 + $0x94] sm:$0xf]
        %v2987 = vld [vmem:[%s3 + $0x98] sm:$0xf]
        %v2988 = vld [vmem:[%s3 + $0x9c] sm:$0xf]
        %v2989 = vld [vmem:[%s3 + $0xa0] sm:$0xf]
        %v2990 = vld [vmem:[%s3 + $0xa4] sm:$0xf]
        %v2991 = vld [vmem:[%s3 + $0xa8] sm:$0xf]
        %v2992 = vld [vmem:[%s3 + $0xac] sm:$0xf]
        %v2993 = vld [vmem:[%s3 + $0xb0] sm:$0xf]
        %v2994 = vld [vmem:[%s3 + $0xb4] sm:$0xf]
        %v2995 = vld [vmem:[%s3 + $0xb8] sm:$0xf]
        %v2996 = vld [vmem:[%s3 + $0xbc] sm:$0xf]
        %v2997 = vld [vmem:[%s3 + $0xc0] sm:$0xf]
        %v2998 = vld [vmem:[%s3 + $0xc4] sm:$0xf]
        %v2999 = vld [vmem:[%s3 + $0xc8] sm:$0xf]
        %v3000 = vld [vmem:[%s3 + $0xcc] sm:$0xf]
        %v3001 = vld [vmem:[%s3 + $0xd0] sm:$0xf]
        %v3002 = vld [vmem:[%s3 + $0xd4] sm:$0xf]
        %v3003 = vld [vmem:[%s3 + $0xd8] sm:$0xf]
        %v3004 = vld [vmem:[%s3 + $0xdc] sm:$0xf]
        %v3005 = vld [vmem:[%s3 + $0xe0] sm:$0xf]
        %v3006 = vld [vmem:[%s3 + $0xe4] sm:$0xf]
        %v3007 = vld [vmem:[%s3 + $0xe8] sm:$0xf]
        %v3008 = vld [vmem:[%s3 + $0xec] sm:$0xf]
        %v3009 = vld [vmem:[%s3 + $0xf0] sm:$0xf]
        %v3010 = vld [vmem:[%s3 + $0xf4] sm:$0xf]
        %v3011 = vld [vmem:[%s3 + $0xf8] sm:$0xf]
        %v3012 = vld [vmem:[%s3 + $0xfc] sm:$0xf]
        %v3013 = vld [vmem:[%s3 + $0x100] sm:$0xf]
        %v3014 = vld [vmem:[%s3 + $0x104] sm:$0xf]
        %v3015 = vld [vmem:[%s3 + $0x108] sm:$0xf]
        %v3016 = vld [vmem:[%s3 + $0x10c] sm:$0xf]
        %v3017 = vld [vmem:[%s3 + $0x110] sm:$0xf]
        %v3018 = vld [vmem:[%s3 + $0x114] sm:$0xf]
        %v3019 = vld [vmem:[%s3 + $0x118] sm:$0xf]
        %v3020 = vld [vmem:[%s3 + $0x11c] sm:$0xf]
        %v3021 = vld [vmem:[%s3 + $0x120] sm:$0xf]
        %v3022 = vld [vmem:[%s3 + $0x124] sm:$0xf]
        %v3023 = vld [vmem:[%s3 + $0x128] sm:$0xf]
        %v3024 = vld [vmem:[%s3 + $0x12c] sm:$0xf]
        %v3025 = vld [vmem:[%s3 + $0x130] sm:$0xf]
        %v3026 = vld [vmem:[%s3 + $0x134] sm:$0xf]
        %v3027 = vld [vmem:[%s3 + $0x138] sm:$0xf]
        %v3028 = vld [vmem:[%s3 + $0x13c] sm:$0xf]
        %v3029 = vld [vmem:[%s3 + $0x140] sm:$0xf]
        %v3030 = vld [vmem:[%s3 + $0x144] sm:$0xf]
        %v3031 = vld [vmem:[%s3 + $0x148] sm:$0xf]
        %v3032 = vld [vmem:[%s3 + $0x14c] sm:$0xf]
        %v3033 = vld [vmem:[%s3 + $0x150] sm:$0xf]
        %v3034 = vld [vmem:[%s3 + $0x154] sm:$0xf]
        %v3035 = vld [vmem:[%s3 + $0x158] sm:$0xf]
        %v3036 = vld [vmem:[%s3 + $0x15c] sm:$0xf]
        %v3037 = vld [vmem:[%s3 + $0x160] sm:$0xf]
        %v3038 = vld [vmem:[%s3 + $0x164] sm:$0xf]
        %v3039 = vld [vmem:[%s3 + $0x168] sm:$0xf]
        %v3040 = vld [vmem:[%s3 + $0x16c] sm:$0xf]
        %v3041 = vld [vmem:[%s3 + $0x170] sm:$0xf]
        %v3042 = vld [vmem:[%s3 + $0x174] sm:$0xf]
        %v3043 = vld [vmem:[%s3 + $0x178] sm:$0xf]
        %v3044 = vld [vmem:[%s3 + $0x17c] sm:$0xf]
        %v3045 = vld [vmem:[%s3 + $0x180] sm:$0xf]
        %v3046 = vld [vmem:[%s3 + $0x184] sm:$0xf]
        %v3047 = vld [vmem:[%s3 + $0x188] sm:$0xf]
        %v3048 = vld [vmem:[%s3 + $0x18c] sm:$0xf]
        %v3049 = vld [vmem:[%s3 + $0x190] sm:$0xf]
        %v3050 = vld [vmem:[%s3 + $0x194] sm:$0xf]
        %v3051 = vld [vmem:[%s3 + $0x198] sm:$0xf]
        %v3052 = vld [vmem:[%s3 + $0x19c] sm:$0xf]
        %v3053 = vld [vmem:[%s3 + $0x1a0] sm:$0xf]
        %v3054 = vld [vmem:[%s3 + $0x1a4] sm:$0xf]
        %v3055 = vld [vmem:[%s3 + $0x1a8] sm:$0xf]
        %v3056 = vld [vmem:[%s3 + $0x1ac] sm:$0xf]
        %v3057 = vld [vmem:[%s3 + $0x1b0] sm:$0xf]
        %v3058 = vld [vmem:[%s3 + $0x1b4] sm:$0xf]
        %v3059 = vld [vmem:[%s3 + $0x1b8] sm:$0xf]
        %v3060 = vld [vmem:[%s3 + $0x1bc] sm:$0xf]
        %v3061 = vld [vmem:[%s3 + $0x1c0] sm:$0xf]
        %v3062 = vld [vmem:[%s3 + $0x1c4] sm:$0xf]
        %v3063 = vld [vmem:[%s3 + $0x1c8] sm:$0xf]
        %v3064 = vld [vmem:[%s3 + $0x1cc] sm:$0xf]
        %v3065 = vld [vmem:[%s3 + $0x1d0] sm:$0xf]
        %v3066 = vld [vmem:[%s3 + $0x1d4] sm:$0xf]
        %v3067 = vld [vmem:[%s3 + $0x1d8] sm:$0xf]
        %v3068 = vld [vmem:[%s3 + $0x1dc] sm:$0xf]
        %v3069 = vld [vmem:[%s3 + $0x1e0] sm:$0xf]
        %v3070 = vld [vmem:[%s3 + $0x1e4] sm:$0xf]
        %v3071 = vld [vmem:[%s3 + $0x1e8] sm:$0xf]
        %v3072 = vld [vmem:[%s3 + $0x1ec] sm:$0xf]
        %v3073 = vld [vmem:[%s3 + $0x1f0] sm:$0xf]
        %v3074 = vld [vmem:[%s3 + $0x1f4] sm:$0xf]
        %v3075 = vld [vmem:[%s3 + $0x1f8] sm:$0xf]
        %v3076 = vld [vmem:[%s3 + $0x1fc] sm:$0xf]
        %s3077 = scalar_lea.vmem [#allocation2], 64
        %v3078 = vld [vmem:[%s3077] sm:$0xff]
        %v3079 = vld [vmem:[%s3077 + $0x8] sm:$0xff]
        %v3080 = vld [vmem:[%s3077 + $0x10] sm:$0xff]
        %v3081 = vld [vmem:[%s3077 + $0x18] sm:$0xff]
        %v3082 = vld [vmem:[%s3077 + $0x20] sm:$0xff]
        %v3083 = vld [vmem:[%s3077 + $0x28] sm:$0xff]
        %v3084 = vld [vmem:[%s3077 + $0x30] sm:$0xff]
        %v3085 = vld [vmem:[%s3077 + $0x38] sm:$0xff]
        %v3086 = vpack.c.bf16 %v3078, %v3078
        %v3087 = vpack.c.bf16 %v3079, %v3079
        %v3088 = vpack.c.bf16 %v3080, %v3080
        %v3089 = vpack.c.bf16 %v3081, %v3081
        %v3090 = vpack.c.bf16 %v3082, %v3082
        %v3091 = vpack.c.bf16 %v3083, %v3083
        %v3092 = vpack.c.bf16 %v3084, %v3084
        %v3093 = vpack.c.bf16 %v3085, %v3085
        %s3094 = scalar_lea.vmem %s3, 512
        %v3095 = vld [vmem:[%s3094] sm:$0xf]
        %v3096 = vld [vmem:[%s3094 + $0x4] sm:$0xf]
        %v3097 = vld [vmem:[%s3094 + $0x8] sm:$0xf]
        %v3098 = vld [vmem:[%s3094 + $0xc] sm:$0xf]
        %v3099 = vld [vmem:[%s3094 + $0x10] sm:$0xf]
        %v3100 = vld [vmem:[%s3094 + $0x14] sm:$0xf]
        %v3101 = vld [vmem:[%s3094 + $0x18] sm:$0xf]
        %v3102 = vld [vmem:[%s3094 + $0x1c] sm:$0xf]
        %v3103 = vld [vmem:[%s3094 + $0x20] sm:$0xf]
        %v3104 = vld [vmem:[%s3094 + $0x24] sm:$0xf]
        %v3105 = vld [vmem:[%s3094 + $0x28] sm:$0xf]
        %v3106 = vld [vmem:[%s3094 + $0x2c] sm:$0xf]
        %v3107 = vld [vmem:[%s3094 + $0x30] sm:$0xf]
        %v3108 = vld [vmem:[%s3094 + $0x34] sm:$0xf]
        %v3109 = vld [vmem:[%s3094 + $0x38] sm:$0xf]
        %v3110 = vld [vmem:[%s3094 + $0x3c] sm:$0xf]
        %v3111 = vld [vmem:[%s3094 + $0x40] sm:$0xf]
        %v3112 = vld [vmem:[%s3094 + $0x44] sm:$0xf]
        %v3113 = vld [vmem:[%s3094 + $0x48] sm:$0xf]
        %v3114 = vld [vmem:[%s3094 + $0x4c] sm:$0xf]
        %v3115 = vld [vmem:[%s3094 + $0x50] sm:$0xf]
        %v3116 = vld [vmem:[%s3094 + $0x54] sm:$0xf]
        %v3117 = vld [vmem:[%s3094 + $0x58] sm:$0xf]
        %v3118 = vld [vmem:[%s3094 + $0x5c] sm:$0xf]
        %v3119 = vld [vmem:[%s3094 + $0x60] sm:$0xf]
        %v3120 = vld [vmem:[%s3094 + $0x64] sm:$0xf]
        %v3121 = vld [vmem:[%s3094 + $0x68] sm:$0xf]
        %v3122 = vld [vmem:[%s3094 + $0x6c] sm:$0xf]
        %v3123 = vld [vmem:[%s3094 + $0x70] sm:$0xf]
        %v3124 = vld [vmem:[%s3094 + $0x74] sm:$0xf]
        %v3125 = vld [vmem:[%s3094 + $0x78] sm:$0xf]
        %v3126 = vld [vmem:[%s3094 + $0x7c] sm:$0xf]
        %v3127 = vld [vmem:[%s3094 + $0x80] sm:$0xf]
        %v3128 = vld [vmem:[%s3094 + $0x84] sm:$0xf]
        %v3129 = vld [vmem:[%s3094 + $0x88] sm:$0xf]
        %v3130 = vld [vmem:[%s3094 + $0x8c] sm:$0xf]
        %v3131 = vld [vmem:[%s3094 + $0x90] sm:$0xf]
        %v3132 = vld [vmem:[%s3094 + $0x94] sm:$0xf]
        %v3133 = vld [vmem:[%s3094 + $0x98] sm:$0xf]
        %v3134 = vld [vmem:[%s3094 + $0x9c] sm:$0xf]
        %v3135 = vld [vmem:[%s3094 + $0xa0] sm:$0xf]
        %v3136 = vld [vmem:[%s3094 + $0xa4] sm:$0xf]
        %v3137 = vld [vmem:[%s3094 + $0xa8] sm:$0xf]
        %v3138 = vld [vmem:[%s3094 + $0xac] sm:$0xf]
        %v3139 = vld [vmem:[%s3094 + $0xb0] sm:$0xf]
        %v3140 = vld [vmem:[%s3094 + $0xb4] sm:$0xf]
        %v3141 = vld [vmem:[%s3094 + $0xb8] sm:$0xf]
        %v3142 = vld [vmem:[%s3094 + $0xbc] sm:$0xf]
        %v3143 = vld [vmem:[%s3094 + $0xc0] sm:$0xf]
        %v3144 = vld [vmem:[%s3094 + $0xc4] sm:$0xf]
        %v3145 = vld [vmem:[%s3094 + $0xc8] sm:$0xf]
        %v3146 = vld [vmem:[%s3094 + $0xcc] sm:$0xf]
        %v3147 = vld [vmem:[%s3094 + $0xd0] sm:$0xf]
        %v3148 = vld [vmem:[%s3094 + $0xd4] sm:$0xf]
        %v3149 = vld [vmem:[%s3094 + $0xd8] sm:$0xf]
        %v3150 = vld [vmem:[%s3094 + $0xdc] sm:$0xf]
        %v3151 = vld [vmem:[%s3094 + $0xe0] sm:$0xf]
        %v3152 = vld [vmem:[%s3094 + $0xe4] sm:$0xf]
        %v3153 = vld [vmem:[%s3094 + $0xe8] sm:$0xf]
        %v3154 = vld [vmem:[%s3094 + $0xec] sm:$0xf]
        %v3155 = vld [vmem:[%s3094 + $0xf0] sm:$0xf]
        %v3156 = vld [vmem:[%s3094 + $0xf4] sm:$0xf]
        %v3157 = vld [vmem:[%s3094 + $0xf8] sm:$0xf]
        %v3158 = vld [vmem:[%s3094 + $0xfc] sm:$0xf]
        %v3159 = vld [vmem:[%s3094 + $0x100] sm:$0xf]
        %v3160 = vld [vmem:[%s3094 + $0x104] sm:$0xf]
        %v3161 = vld [vmem:[%s3094 + $0x108] sm:$0xf]
        %v3162 = vld [vmem:[%s3094 + $0x10c] sm:$0xf]
        %v3163 = vld [vmem:[%s3094 + $0x110] sm:$0xf]
        %v3164 = vld [vmem:[%s3094 + $0x114] sm:$0xf]
        %v3165 = vld [vmem:[%s3094 + $0x118] sm:$0xf]
        %v3166 = vld [vmem:[%s3094 + $0x11c] sm:$0xf]
        %v3167 = vld [vmem:[%s3094 + $0x120] sm:$0xf]
        %v3168 = vld [vmem:[%s3094 + $0x124] sm:$0xf]
        %v3169 = vld [vmem:[%s3094 + $0x128] sm:$0xf]
        %v3170 = vld [vmem:[%s3094 + $0x12c] sm:$0xf]
        %v3171 = vld [vmem:[%s3094 + $0x130] sm:$0xf]
        %v3172 = vld [vmem:[%s3094 + $0x134] sm:$0xf]
        %v3173 = vld [vmem:[%s3094 + $0x138] sm:$0xf]
        %v3174 = vld [vmem:[%s3094 + $0x13c] sm:$0xf]
        %v3175 = vld [vmem:[%s3094 + $0x140] sm:$0xf]
        %v3176 = vld [vmem:[%s3094 + $0x144] sm:$0xf]
        %v3177 = vld [vmem:[%s3094 + $0x148] sm:$0xf]
        %v3178 = vld [vmem:[%s3094 + $0x14c] sm:$0xf]
        %v3179 = vld [vmem:[%s3094 + $0x150] sm:$0xf]
        %v3180 = vld [vmem:[%s3094 + $0x154] sm:$0xf]
        %v3181 = vld [vmem:[%s3094 + $0x158] sm:$0xf]
        %v3182 = vld [vmem:[%s3094 + $0x15c] sm:$0xf]
        %v3183 = vld [vmem:[%s3094 + $0x160] sm:$0xf]
        %v3184 = vld [vmem:[%s3094 + $0x164] sm:$0xf]
        %v3185 = vld [vmem:[%s3094 + $0x168] sm:$0xf]
        %v3186 = vld [vmem:[%s3094 + $0x16c] sm:$0xf]
        %v3187 = vld [vmem:[%s3094 + $0x170] sm:$0xf]
        %v3188 = vld [vmem:[%s3094 + $0x174] sm:$0xf]
        %v3189 = vld [vmem:[%s3094 + $0x178] sm:$0xf]
        %v3190 = vld [vmem:[%s3094 + $0x17c] sm:$0xf]
        %v3191 = vld [vmem:[%s3094 + $0x180] sm:$0xf]
        %v3192 = vld [vmem:[%s3094 + $0x184] sm:$0xf]
        %v3193 = vld [vmem:[%s3094 + $0x188] sm:$0xf]
        %v3194 = vld [vmem:[%s3094 + $0x18c] sm:$0xf]
        %v3195 = vld [vmem:[%s3094 + $0x190] sm:$0xf]
        %v3196 = vld [vmem:[%s3094 + $0x194] sm:$0xf]
        %v3197 = vld [vmem:[%s3094 + $0x198] sm:$0xf]
        %v3198 = vld [vmem:[%s3094 + $0x19c] sm:$0xf]
        %v3199 = vld [vmem:[%s3094 + $0x1a0] sm:$0xf]
        %v3200 = vld [vmem:[%s3094 + $0x1a4] sm:$0xf]
        %v3201 = vld [vmem:[%s3094 + $0x1a8] sm:$0xf]
        %v3202 = vld [vmem:[%s3094 + $0x1ac] sm:$0xf]
        %v3203 = vld [vmem:[%s3094 + $0x1b0] sm:$0xf]
        %v3204 = vld [vmem:[%s3094 + $0x1b4] sm:$0xf]
        %v3205 = vld [vmem:[%s3094 + $0x1b8] sm:$0xf]
        %v3206 = vld [vmem:[%s3094 + $0x1bc] sm:$0xf]
        %v3207 = vld [vmem:[%s3094 + $0x1c0] sm:$0xf]
        %v3208 = vld [vmem:[%s3094 + $0x1c4] sm:$0xf]
        %v3209 = vld [vmem:[%s3094 + $0x1c8] sm:$0xf]
        %v3210 = vld [vmem:[%s3094 + $0x1cc] sm:$0xf]
        %v3211 = vld [vmem:[%s3094 + $0x1d0] sm:$0xf]
        %v3212 = vld [vmem:[%s3094 + $0x1d4] sm:$0xf]
        %v3213 = vld [vmem:[%s3094 + $0x1d8] sm:$0xf]
        %v3214 = vld [vmem:[%s3094 + $0x1dc] sm:$0xf]
        %v3215 = vld [vmem:[%s3094 + $0x1e0] sm:$0xf]
        %v3216 = vld [vmem:[%s3094 + $0x1e4] sm:$0xf]
        %v3217 = vld [vmem:[%s3094 + $0x1e8] sm:$0xf]
        %v3218 = vld [vmem:[%s3094 + $0x1ec] sm:$0xf]
        %v3219 = vld [vmem:[%s3094 + $0x1f0] sm:$0xf]
        %v3220 = vld [vmem:[%s3094 + $0x1f4] sm:$0xf]
        %v3221 = vld [vmem:[%s3094 + $0x1f8] sm:$0xf]
        %v3222 = vld [vmem:[%s3094 + $0x1fc] sm:$0xf]
        %v3351 = vunpack.c.l.b16 %v3095
        %v3352 = vunpack.c.l.b16 %v3096
        %v3353 = vunpack.c.l.b16 %v3097
        %v3354 = vunpack.c.l.b16 %v3098
        %v3355 = vunpack.c.l.b16 %v3099
        %v3356 = vunpack.c.l.b16 %v3100
        %v3357 = vunpack.c.l.b16 %v3101
        %v3358 = vunpack.c.l.b16 %v3102
        %v3359 = vunpack.c.l.b16 %v3103
        %v3360 = vunpack.c.l.b16 %v3104
        %v3361 = vunpack.c.l.b16 %v3105
        %v3362 = vunpack.c.l.b16 %v3106
        %v3363 = vunpack.c.l.b16 %v3107
        %v3364 = vunpack.c.l.b16 %v3108
        %v3365 = vunpack.c.l.b16 %v3109
        %v3366 = vunpack.c.l.b16 %v3110
        %v3367 = vunpack.c.l.b16 %v3111
        %v3368 = vunpack.c.l.b16 %v3112
        %v3369 = vunpack.c.l.b16 %v3113
        %v3370 = vunpack.c.l.b16 %v3114
        %v3371 = vunpack.c.l.b16 %v3115
        %v3372 = vunpack.c.l.b16 %v3116
        %v3373 = vunpack.c.l.b16 %v3117
        %v3374 = vunpack.c.l.b16 %v3118
        %v3375 = vunpack.c.l.b16 %v3119
        %v3376 = vunpack.c.l.b16 %v3120
        %v3377 = vunpack.c.l.b16 %v3121
        %v3378 = vunpack.c.l.b16 %v3122
        %v3379 = vunpack.c.l.b16 %v3123
        %v3380 = vunpack.c.l.b16 %v3124
        %v3381 = vunpack.c.l.b16 %v3125
        %v3382 = vunpack.c.l.b16 %v3126
        %v3383 = vunpack.c.l.b16 %v3127
        %v3384 = vunpack.c.l.b16 %v3128
        %v3385 = vunpack.c.l.b16 %v3129
        %v3386 = vunpack.c.l.b16 %v3130
        %v3387 = vunpack.c.l.b16 %v3131
        %v3388 = vunpack.c.l.b16 %v3132
        %v3389 = vunpack.c.l.b16 %v3133
        %v3390 = vunpack.c.l.b16 %v3134
        %v3391 = vunpack.c.l.b16 %v3135
        %v3392 = vunpack.c.l.b16 %v3136
        %v3393 = vunpack.c.l.b16 %v3137
        %v3394 = vunpack.c.l.b16 %v3138
        %v3395 = vunpack.c.l.b16 %v3139
        %v3396 = vunpack.c.l.b16 %v3140
        %v3397 = vunpack.c.l.b16 %v3141
        %v3398 = vunpack.c.l.b16 %v3142
        %v3399 = vunpack.c.l.b16 %v3143
        %v3400 = vunpack.c.l.b16 %v3144
        %v3401 = vunpack.c.l.b16 %v3145
        %v3402 = vunpack.c.l.b16 %v3146
        %v3403 = vunpack.c.l.b16 %v3147
        %v3404 = vunpack.c.l.b16 %v3148
        %v3405 = vunpack.c.l.b16 %v3149
        %v3406 = vunpack.c.l.b16 %v3150
        %v3407 = vunpack.c.l.b16 %v3151
        %v3408 = vunpack.c.l.b16 %v3152
        %v3409 = vunpack.c.l.b16 %v3153
        %v3410 = vunpack.c.l.b16 %v3154
        %v3411 = vunpack.c.l.b16 %v3155
        %v3412 = vunpack.c.l.b16 %v3156
        %v3413 = vunpack.c.l.b16 %v3157
        %v3414 = vunpack.c.l.b16 %v3158
        %v3415 = vunpack.c.l.b16 %v3159
        %v3416 = vunpack.c.l.b16 %v3160
        %v3417 = vunpack.c.l.b16 %v3161
        %v3418 = vunpack.c.l.b16 %v3162
        %v3419 = vunpack.c.l.b16 %v3163
        %v3420 = vunpack.c.l.b16 %v3164
        %v3421 = vunpack.c.l.b16 %v3165
        %v3422 = vunpack.c.l.b16 %v3166
        %v3423 = vunpack.c.l.b16 %v3167
        %v3424 = vunpack.c.l.b16 %v3168
        %v3425 = vunpack.c.l.b16 %v3169
        %v3426 = vunpack.c.l.b16 %v3170
        %v3427 = vunpack.c.l.b16 %v3171
        %v3428 = vunpack.c.l.b16 %v3172
        %v3429 = vunpack.c.l.b16 %v3173
        %v3430 = vunpack.c.l.b16 %v3174
        %v3431 = vunpack.c.l.b16 %v3175
        %v3432 = vunpack.c.l.b16 %v3176
        %v3433 = vunpack.c.l.b16 %v3177
        %v3434 = vunpack.c.l.b16 %v3178
        %v3435 = vunpack.c.l.b16 %v3179
        %v3436 = vunpack.c.l.b16 %v3180
        %v3437 = vunpack.c.l.b16 %v3181
        %v3438 = vunpack.c.l.b16 %v3182
        %v3439 = vunpack.c.l.b16 %v3183
        %v3440 = vunpack.c.l.b16 %v3184
        %v3441 = vunpack.c.l.b16 %v3185
        %v3442 = vunpack.c.l.b16 %v3186
        %v3443 = vunpack.c.l.b16 %v3187
        %v3444 = vunpack.c.l.b16 %v3188
        %v3445 = vunpack.c.l.b16 %v3189
        %v3446 = vunpack.c.l.b16 %v3190
        %v3447 = vunpack.c.l.b16 %v3191
        %v3448 = vunpack.c.l.b16 %v3192
        %v3449 = vunpack.c.l.b16 %v3193
        %v3450 = vunpack.c.l.b16 %v3194
        %v3451 = vunpack.c.l.b16 %v3195
        %v3452 = vunpack.c.l.b16 %v3196
        %v3453 = vunpack.c.l.b16 %v3197
        %v3454 = vunpack.c.l.b16 %v3198
        %v3455 = vunpack.c.l.b16 %v3199
        %v3456 = vunpack.c.l.b16 %v3200
        %v3457 = vunpack.c.l.b16 %v3201
        %v3458 = vunpack.c.l.b16 %v3202
        %v3459 = vunpack.c.l.b16 %v3203
        %v3460 = vunpack.c.l.b16 %v3204
        %v3461 = vunpack.c.l.b16 %v3205
        %v3462 = vunpack.c.l.b16 %v3206
        %v3463 = vunpack.c.l.b16 %v3207
        %v3464 = vunpack.c.l.b16 %v3208
        %v3465 = vunpack.c.l.b16 %v3209
        %v3466 = vunpack.c.l.b16 %v3210
        %v3467 = vunpack.c.l.b16 %v3211
        %v3468 = vunpack.c.l.b16 %v3212
        %v3469 = vunpack.c.l.b16 %v3213
        %v3470 = vunpack.c.l.b16 %v3214
        %v3471 = vunpack.c.l.b16 %v3215
        %v3472 = vunpack.c.l.b16 %v3216
        %v3473 = vunpack.c.l.b16 %v3217
        %v3474 = vunpack.c.l.b16 %v3218
        %v3475 = vunpack.c.l.b16 %v3219
        %v3476 = vunpack.c.l.b16 %v3220
        %v3477 = vunpack.c.l.b16 %v3221
        %v3478 = vunpack.c.l.b16 %v3222
        %v3479 = vpack.c.b16 %v3352, %v3351
        %v3480 = vpack.c.b16 %v3354, %v3353
        %v3481 = vpack.c.b16 %v3356, %v3355
        %v3482 = vpack.c.b16 %v3358, %v3357
        %v3483 = vpack.c.b16 %v3360, %v3359
        %v3484 = vpack.c.b16 %v3362, %v3361
        %v3485 = vpack.c.b16 %v3364, %v3363
        %v3486 = vpack.c.b16 %v3366, %v3365
        %v3487 = vpack.c.b16 %v3368, %v3367
        %v3488 = vpack.c.b16 %v3370, %v3369
        %v3489 = vpack.c.b16 %v3372, %v3371
        %v3490 = vpack.c.b16 %v3374, %v3373
        %v3491 = vpack.c.b16 %v3376, %v3375
        %v3492 = vpack.c.b16 %v3378, %v3377
        %v3493 = vpack.c.b16 %v3380, %v3379
        %v3494 = vpack.c.b16 %v3382, %v3381
        %v3495 = vpack.c.b16 %v3384, %v3383
        %v3496 = vpack.c.b16 %v3386, %v3385
        %v3497 = vpack.c.b16 %v3388, %v3387
        %v3498 = vpack.c.b16 %v3390, %v3389
        %v3499 = vpack.c.b16 %v3392, %v3391
        %v3500 = vpack.c.b16 %v3394, %v3393
        %v3501 = vpack.c.b16 %v3396, %v3395
        %v3502 = vpack.c.b16 %v3398, %v3397
        %v3503 = vpack.c.b16 %v3400, %v3399
        %v3504 = vpack.c.b16 %v3402, %v3401
        %v3505 = vpack.c.b16 %v3404, %v3403
        %v3506 = vpack.c.b16 %v3406, %v3405
        %v3507 = vpack.c.b16 %v3408, %v3407
        %v3508 = vpack.c.b16 %v3410, %v3409
        %v3509 = vpack.c.b16 %v3412, %v3411
        %v3510 = vpack.c.b16 %v3414, %v3413
        %v3511 = vpack.c.b16 %v3416, %v3415
        %v3512 = vpack.c.b16 %v3418, %v3417
        %v3513 = vpack.c.b16 %v3420, %v3419
        %v3514 = vpack.c.b16 %v3422, %v3421
        %v3515 = vpack.c.b16 %v3424, %v3423
        %v3516 = vpack.c.b16 %v3426, %v3425
        %v3517 = vpack.c.b16 %v3428, %v3427
        %v3518 = vpack.c.b16 %v3430, %v3429
        %v3519 = vpack.c.b16 %v3432, %v3431
        %v3520 = vpack.c.b16 %v3434, %v3433
        %v3521 = vpack.c.b16 %v3436, %v3435
        %v3522 = vpack.c.b16 %v3438, %v3437
        %v3523 = vpack.c.b16 %v3440, %v3439
        %v3524 = vpack.c.b16 %v3442, %v3441
        %v3525 = vpack.c.b16 %v3444, %v3443
        %v3526 = vpack.c.b16 %v3446, %v3445
        %v3527 = vpack.c.b16 %v3448, %v3447
        %v3528 = vpack.c.b16 %v3450, %v3449
        %v3529 = vpack.c.b16 %v3452, %v3451
        %v3530 = vpack.c.b16 %v3454, %v3453
        %v3531 = vpack.c.b16 %v3456, %v3455
        %v3532 = vpack.c.b16 %v3458, %v3457
        %v3533 = vpack.c.b16 %v3460, %v3459
        %v3534 = vpack.c.b16 %v3462, %v3461
        %v3535 = vpack.c.b16 %v3464, %v3463
        %v3536 = vpack.c.b16 %v3466, %v3465
        %v3537 = vpack.c.b16 %v3468, %v3467
        %v3538 = vpack.c.b16 %v3470, %v3469
        %v3539 = vpack.c.b16 %v3472, %v3471
        %v3540 = vpack.c.b16 %v3474, %v3473
        %v3541 = vpack.c.b16 %v3476, %v3475
        %v3542 = vpack.c.b16 %v3478, %v3477
        %3607 = vmatprep.subr.bf16.mxu0 0
        %3608 = vmatpush1.bf16.msra.mxu0 %v3479
        %3609 = vmatprep.subr.bf16.mxu0 0
        %3610 = vmatpush1.bf16.msra.mxu0 %v3480
        %3611 = vmatprep.subr.bf16.mxu0 0
        %3612 = vmatpush1.bf16.msra.mxu0 %v3481
        %3613 = vmatprep.subr.bf16.mxu0 0
        %3614 = vmatpush1.bf16.msra.mxu0 %v3482
        %3615 = vmatprep.subr.bf16.mxu0 0
        %3616 = vmatpush1.bf16.msra.mxu0 %v3483
        %3617 = vmatprep.subr.bf16.mxu0 0
        %3618 = vmatpush1.bf16.msra.mxu0 %v3484
        %3619 = vmatprep.subr.bf16.mxu0 0
        %3620 = vmatpush1.bf16.msra.mxu0 %v3485
        %3621 = vmatprep.subr.bf16.mxu0 0
        %3622 = vmatpush1.bf16.msra.mxu0 %v3486
        %3623 = vmatprep.subr.bf16.mxu0 0
        %3624 = vmatpush1.bf16.msra.mxu0 %v3487
        %3625 = vmatprep.subr.bf16.mxu0 0
        %3626 = vmatpush1.bf16.msra.mxu0 %v3488
        %3627 = vmatprep.subr.bf16.mxu0 0
        %3628 = vmatpush1.bf16.msra.mxu0 %v3489
        %3629 = vmatprep.subr.bf16.mxu0 0
        %3630 = vmatpush1.bf16.msra.mxu0 %v3490
        %3631 = vmatprep.subr.bf16.mxu0 0
        %3632 = vmatpush1.bf16.msra.mxu0 %v3491
        %3633 = vmatprep.subr.bf16.mxu0 0
        %3634 = vmatpush1.bf16.msra.mxu0 %v3492
        %3635 = vmatprep.subr.bf16.mxu0 0
        %3636 = vmatpush1.bf16.msra.mxu0 %v3493
        %3637 = vmatprep.subr.bf16.mxu0 0
        %3638 = vmatpush1.bf16.msra.mxu0 %v3494
        %3639 = vmatprep.mubr.bf16.mxu0 %v3087
        %3640 = vmatmul.mubr.bf16.gmra.mrb[0].mxu0 %v3086
        %v3641 = vpop.f32.mrb[0].mxu0
        %v3642 = vadd.f32 0.0, %v3641
        %v3643 = vpop.f32.mrb[0].mxu0
        %v3644 = vpop.f32.mrb[0].mxu0
        %v3645 = vpop.f32.mrb[0].mxu0
        %3646 = vdwg.mxu0
        %3647 = vmatprep.subr.bf16.mxu0 0
        %3648 = vmatpush1.bf16.msra.mxu0 %v3495
        %3649 = vmatprep.subr.bf16.mxu0 0
        %3650 = vmatpush1.bf16.msra.mxu0 %v3496
        %3651 = vmatprep.subr.bf16.mxu0 0
        %3652 = vmatpush1.bf16.msra.mxu0 %v3497
        %3653 = vmatprep.subr.bf16.mxu0 0
        %3654 = vmatpush1.bf16.msra.mxu0 %v3498
        %3655 = vmatprep.subr.bf16.mxu0 0
        %3656 = vmatpush1.bf16.msra.mxu0 %v3499
        %3657 = vmatprep.subr.bf16.mxu0 0
        %3658 = vmatpush1.bf16.msra.mxu0 %v3500
        %3659 = vmatprep.subr.bf16.mxu0 0
        %3660 = vmatpush1.bf16.msra.mxu0 %v3501
        %3661 = vmatprep.subr.bf16.mxu0 0
        %3662 = vmatpush1.bf16.msra.mxu0 %v3502
        %3663 = vmatprep.subr.bf16.mxu0 0
        %3664 = vmatpush1.bf16.msra.mxu0 %v3503
        %3665 = vmatprep.subr.bf16.mxu0 0
        %3666 = vmatpush1.bf16.msra.mxu0 %v3504
        %3667 = vmatprep.subr.bf16.mxu0 0
        %3668 = vmatpush1.bf16.msra.mxu0 %v3505
        %3669 = vmatprep.subr.bf16.mxu0 0
        %3670 = vmatpush1.bf16.msra.mxu0 %v3506
        %3671 = vmatprep.subr.bf16.mxu0 0
        %3672 = vmatpush1.bf16.msra.mxu0 %v3507
        %3673 = vmatprep.subr.bf16.mxu0 0
        %3674 = vmatpush1.bf16.msra.mxu0 %v3508
        %3675 = vmatprep.subr.bf16.mxu0 0
        %3676 = vmatpush1.bf16.msra.mxu0 %v3509
        %3677 = vmatprep.subr.bf16.mxu0 0
        %3678 = vmatpush1.bf16.msra.mxu0 %v3510
        %3679 = vmatprep.mubr.bf16.mxu0 %v3089
        %3680 = vmatmul.mubr.bf16.gmra.mrb[0].mxu0 %v3088
        %v3681 = vpop.f32.mrb[0].mxu0
        %v3682 = vadd.f32 %v3642, %v3681
        %v3683 = vpop.f32.mrb[0].mxu0
        %v3684 = vpop.f32.mrb[0].mxu0
        %v3685 = vpop.f32.mrb[0].mxu0
        %3686 = vdwg.mxu0
        %3687 = vmatprep.subr.bf16.mxu0 0
        %3688 = vmatpush1.bf16.msra.mxu0 %v3511
        %3689 = vmatprep.subr.bf16.mxu0 0
        %3690 = vmatpush1.bf16.msra.mxu0 %v3512
        %3691 = vmatprep.subr.bf16.mxu0 0
        %3692 = vmatpush1.bf16.msra.mxu0 %v3513
        %3693 = vmatprep.subr.bf16.mxu0 0
        %3694 = vmatpush1.bf16.msra.mxu0 %v3514
        %3695 = vmatprep.subr.bf16.mxu0 0
        %3696 = vmatpush1.bf16.msra.mxu0 %v3515
        %3697 = vmatprep.subr.bf16.mxu0 0
        %3698 = vmatpush1.bf16.msra.mxu0 %v3516
        %3699 = vmatprep.subr.bf16.mxu0 0
        %3700 = vmatpush1.bf16.msra.mxu0 %v3517
        %3701 = vmatprep.subr.bf16.mxu0 0
        %3702 = vmatpush1.bf16.msra.mxu0 %v3518
        %3703 = vmatprep.subr.bf16.mxu0 0
        %3704 = vmatpush1.bf16.msra.mxu0 %v3519
        %3705 = vmatprep.subr.bf16.mxu0 0
        %3706 = vmatpush1.bf16.msra.mxu0 %v3520
        %3707 = vmatprep.subr.bf16.mxu0 0
        %3708 = vmatpush1.bf16.msra.mxu0 %v3521
        %3709 = vmatprep.subr.bf16.mxu0 0
        %3710 = vmatpush1.bf16.msra.mxu0 %v3522
        %3711 = vmatprep.subr.bf16.mxu0 0
        %3712 = vmatpush1.bf16.msra.mxu0 %v3523
        %3713 = vmatprep.subr.bf16.mxu0 0
        %3714 = vmatpush1.bf16.msra.mxu0 %v3524
        %3715 = vmatprep.subr.bf16.mxu0 0
        %3716 = vmatpush1.bf16.msra.mxu0 %v3525
        %3717 = vmatprep.subr.bf16.mxu0 0
        %3718 = vmatpush1.bf16.msra.mxu0 %v3526
        %3719 = vmatprep.mubr.bf16.mxu0 %v3091
        %3720 = vmatmul.mubr.bf16.gmra.mrb[0].mxu0 %v3090
        %v3721 = vpop.f32.mrb[0].mxu0
        %v3722 = vadd.f32 %v3682, %v3721
        %v3723 = vpop.f32.mrb[0].mxu0
        %v3724 = vpop.f32.mrb[0].mxu0
        %v3725 = vpop.f32.mrb[0].mxu0
        %3726 = vdwg.mxu0
        %3727 = vmatprep.subr.bf16.mxu0 0
        %3728 = vmatpush1.bf16.msra.mxu0 %v3527
        %3729 = vmatprep.subr.bf16.mxu0 0
        %3730 = vmatpush1.bf16.msra.mxu0 %v3528
        %3731 = vmatprep.subr.bf16.mxu0 0
        %3732 = vmatpush1.bf16.msra.mxu0 %v3529
        %3733 = vmatprep.subr.bf16.mxu0 0
        %3734 = vmatpush1.bf16.msra.mxu0 %v3530
        %3735 = vmatprep.subr.bf16.mxu0 0
        %3736 = vmatpush1.bf16.msra.mxu0 %v3531
        %3737 = vmatprep.subr.bf16.mxu0 0
        %3738 = vmatpush1.bf16.msra.mxu0 %v3532
        %3739 = vmatprep.subr.bf16.mxu0 0
        %3740 = vmatpush1.bf16.msra.mxu0 %v3533
        %3741 = vmatprep.subr.bf16.mxu0 0
        %3742 = vmatpush1.bf16.msra.mxu0 %v3534
        %3743 = vmatprep.subr.bf16.mxu0 0
        %3744 = vmatpush1.bf16.msra.mxu0 %v3535
        %3745 = vmatprep.subr.bf16.mxu0 0
        %3746 = vmatpush1.bf16.msra.mxu0 %v3536
        %3747 = vmatprep.subr.bf16.mxu0 0
        %3748 = vmatpush1.bf16.msra.mxu0 %v3537
        %3749 = vmatprep.subr.bf16.mxu0 0
        %3750 = vmatpush1.bf16.msra.mxu0 %v3538
        %3751 = vmatprep.subr.bf16.mxu0 0
        %3752 = vmatpush1.bf16.msra.mxu0 %v3539
        %3753 = vmatprep.subr.bf16.mxu0 0
        %3754 = vmatpush1.bf16.msra.mxu0 %v3540
        %3755 = vmatprep.subr.bf16.mxu0 0
        %3756 = vmatpush1.bf16.msra.mxu0 %v3541
        %3757 = vmatprep.subr.bf16.mxu0 0
        %3758 = vmatpush1.bf16.msra.mxu0 %v3542
        %3759 = vmatprep.mubr.bf16.mxu0 %v3093
        %3760 = vmatmul.mubr.bf16.gmra.mrb[0].mxu0 %v3092
        %v3761 = vpop.f32.mrb[0].mxu0
        %v3762 = vadd.f32 %v3722, %v3761
        %v3763 = vpop.f32.mrb[0].mxu0
        %v3764 = vpop.f32.mrb[0].mxu0
        %v3765 = vpop.f32.mrb[0].mxu0
        %3766 = vdwg.mxu0
        %v3895 = vunpack.c.l.b16 %v2949
        %v3896 = vunpack.c.l.b16 %v2950
        %v3897 = vunpack.c.l.b16 %v2951
        %v3898 = vunpack.c.l.b16 %v2952
        %v3899 = vunpack.c.l.b16 %v2953
        %v3900 = vunpack.c.l.b16 %v2954
        %v3901 = vunpack.c.l.b16 %v2955
        %v3902 = vunpack.c.l.b16 %v2956
        %v3903 = vunpack.c.l.b16 %v2957
        %v3904 = vunpack.c.l.b16 %v2958
        %v3905 = vunpack.c.l.b16 %v2959
        %v3906 = vunpack.c.l.b16 %v2960
        %v3907 = vunpack.c.l.b16 %v2961
        %v3908 = vunpack.c.l.b16 %v2962
        %v3909 = vunpack.c.l.b16 %v2963
        %v3910 = vunpack.c.l.b16 %v2964
        %v3911 = vunpack.c.l.b16 %v2965
        %v3912 = vunpack.c.l.b16 %v2966
        %v3913 = vunpack.c.l.b16 %v2967
        %v3914 = vunpack.c.l.b16 %v2968
        %v3915 = vunpack.c.l.b16 %v2969
        %v3916 = vunpack.c.l.b16 %v2970
        %v3917 = vunpack.c.l.b16 %v2971
        %v3918 = vunpack.c.l.b16 %v2972
        %v3919 = vunpack.c.l.b16 %v2973
        %v3920 = vunpack.c.l.b16 %v2974
        %v3921 = vunpack.c.l.b16 %v2975
        %v3922 = vunpack.c.l.b16 %v2976
        %v3923 = vunpack.c.l.b16 %v2977
        %v3924 = vunpack.c.l.b16 %v2978
        %v3925 = vunpack.c.l.b16 %v2979
        %v3926 = vunpack.c.l.b16 %v2980
        %v3927 = vunpack.c.l.b16 %v2981
        %v3928 = vunpack.c.l.b16 %v2982
        %v3929 = vunpack.c.l.b16 %v2983
        %v3930 = vunpack.c.l.b16 %v2984
        %v3931 = vunpack.c.l.b16 %v2985
        %v3932 = vunpack.c.l.b16 %v2986
        %v3933 = vunpack.c.l.b16 %v2987
        %v3934 = vunpack.c.l.b16 %v2988
        %v3935 = vunpack.c.l.b16 %v2989
        %v3936 = vunpack.c.l.b16 %v2990
        %v3937 = vunpack.c.l.b16 %v2991
        %v3938 = vunpack.c.l.b16 %v2992
        %v3939 = vunpack.c.l.b16 %v2993
        %v3940 = vunpack.c.l.b16 %v2994
        %v3941 = vunpack.c.l.b16 %v2995
        %v3942 = vunpack.c.l.b16 %v2996
        %v3943 = vunpack.c.l.b16 %v2997
        %v3944 = vunpack.c.l.b16 %v2998
        %v3945 = vunpack.c.l.b16 %v2999
        %v3946 = vunpack.c.l.b16 %v3000
        %v3947 = vunpack.c.l.b16 %v3001
        %v3948 = vunpack.c.l.b16 %v3002
        %v3949 = vunpack.c.l.b16 %v3003
        %v3950 = vunpack.c.l.b16 %v3004
        %v3951 = vunpack.c.l.b16 %v3005
        %v3952 = vunpack.c.l.b16 %v3006
        %v3953 = vunpack.c.l.b16 %v3007
        %v3954 = vunpack.c.l.b16 %v3008
        %v3955 = vunpack.c.l.b16 %v3009
        %v3956 = vunpack.c.l.b16 %v3010
        %v3957 = vunpack.c.l.b16 %v3011
        %v3958 = vunpack.c.l.b16 %v3012
        %v3959 = vunpack.c.l.b16 %v3013
        %v3960 = vunpack.c.l.b16 %v3014
        %v3961 = vunpack.c.l.b16 %v3015
        %v3962 = vunpack.c.l.b16 %v3016
        %v3963 = vunpack.c.l.b16 %v3017
        %v3964 = vunpack.c.l.b16 %v3018
        %v3965 = vunpack.c.l.b16 %v3019
        %v3966 = vunpack.c.l.b16 %v3020
        %v3967 = vunpack.c.l.b16 %v3021
        %v3968 = vunpack.c.l.b16 %v3022
        %v3969 = vunpack.c.l.b16 %v3023
        %v3970 = vunpack.c.l.b16 %v3024
        %v3971 = vunpack.c.l.b16 %v3025
        %v3972 = vunpack.c.l.b16 %v3026
        %v3973 = vunpack.c.l.b16 %v3027
        %v3974 = vunpack.c.l.b16 %v3028
        %v3975 = vunpack.c.l.b16 %v3029
        %v3976 = vunpack.c.l.b16 %v3030
        %v3977 = vunpack.c.l.b16 %v3031
        %v3978 = vunpack.c.l.b16 %v3032
        %v3979 = vunpack.c.l.b16 %v3033
        %v3980 = vunpack.c.l.b16 %v3034
        %v3981 = vunpack.c.l.b16 %v3035
        %v3982 = vunpack.c.l.b16 %v3036
        %v3983 = vunpack.c.l.b16 %v3037
        %v3984 = vunpack.c.l.b16 %v3038
        %v3985 = vunpack.c.l.b16 %v3039
        %v3986 = vunpack.c.l.b16 %v3040
        %v3987 = vunpack.c.l.b16 %v3041
        %v3988 = vunpack.c.l.b16 %v3042
        %v3989 = vunpack.c.l.b16 %v3043
        %v3990 = vunpack.c.l.b16 %v3044
        %v3991 = vunpack.c.l.b16 %v3045
        %v3992 = vunpack.c.l.b16 %v3046
        %v3993 = vunpack.c.l.b16 %v3047
        %v3994 = vunpack.c.l.b16 %v3048
        %v3995 = vunpack.c.l.b16 %v3049
        %v3996 = vunpack.c.l.b16 %v3050
        %v3997 = vunpack.c.l.b16 %v3051
        %v3998 = vunpack.c.l.b16 %v3052
        %v3999 = vunpack.c.l.b16 %v3053
        %v4000 = vunpack.c.l.b16 %v3054
        %v4001 = vunpack.c.l.b16 %v3055
        %v4002 = vunpack.c.l.b16 %v3056
        %v4003 = vunpack.c.l.b16 %v3057
        %v4004 = vunpack.c.l.b16 %v3058
        %v4005 = vunpack.c.l.b16 %v3059
        %v4006 = vunpack.c.l.b16 %v3060
        %v4007 = vunpack.c.l.b16 %v3061
        %v4008 = vunpack.c.l.b16 %v3062
        %v4009 = vunpack.c.l.b16 %v3063
        %v4010 = vunpack.c.l.b16 %v3064
        %v4011 = vunpack.c.l.b16 %v3065
        %v4012 = vunpack.c.l.b16 %v3066
        %v4013 = vunpack.c.l.b16 %v3067
        %v4014 = vunpack.c.l.b16 %v3068
        %v4015 = vunpack.c.l.b16 %v3069
        %v4016 = vunpack.c.l.b16 %v3070
        %v4017 = vunpack.c.l.b16 %v3071
        %v4018 = vunpack.c.l.b16 %v3072
        %v4019 = vunpack.c.l.b16 %v3073
        %v4020 = vunpack.c.l.b16 %v3074
        %v4021 = vunpack.c.l.b16 %v3075
        %v4022 = vunpack.c.l.b16 %v3076
        %v4023 = vpack.c.b16 %v3896, %v3895
        %v4024 = vpack.c.b16 %v3898, %v3897
        %v4025 = vpack.c.b16 %v3900, %v3899
        %v4026 = vpack.c.b16 %v3902, %v3901
        %v4027 = vpack.c.b16 %v3904, %v3903
        %v4028 = vpack.c.b16 %v3906, %v3905
        %v4029 = vpack.c.b16 %v3908, %v3907
        %v4030 = vpack.c.b16 %v3910, %v3909
        %v4031 = vpack.c.b16 %v3912, %v3911
        %v4032 = vpack.c.b16 %v3914, %v3913
        %v4033 = vpack.c.b16 %v3916, %v3915
        %v4034 = vpack.c.b16 %v3918, %v3917
        %v4035 = vpack.c.b16 %v3920, %v3919
        %v4036 = vpack.c.b16 %v3922, %v3921
        %v4037 = vpack.c.b16 %v3924, %v3923
        %v4038 = vpack.c.b16 %v3926, %v3925
        %v4039 = vpack.c.b16 %v3928, %v3927
        %v4040 = vpack.c.b16 %v3930, %v3929
        %v4041 = vpack.c.b16 %v3932, %v3931
        %v4042 = vpack.c.b16 %v3934, %v3933
        %v4043 = vpack.c.b16 %v3936, %v3935
        %v4044 = vpack.c.b16 %v3938, %v3937
        %v4045 = vpack.c.b16 %v3940, %v3939
        %v4046 = vpack.c.b16 %v3942, %v3941
        %v4047 = vpack.c.b16 %v3944, %v3943
        %v4048 = vpack.c.b16 %v3946, %v3945
        %v4049 = vpack.c.b16 %v3948, %v3947
        %v4050 = vpack.c.b16 %v3950, %v3949
        %v4051 = vpack.c.b16 %v3952, %v3951
        %v4052 = vpack.c.b16 %v3954, %v3953
        %v4053 = vpack.c.b16 %v3956, %v3955
        %v4054 = vpack.c.b16 %v3958, %v3957
        %v4055 = vpack.c.b16 %v3960, %v3959
        %v4056 = vpack.c.b16 %v3962, %v3961
        %v4057 = vpack.c.b16 %v3964, %v3963
        %v4058 = vpack.c.b16 %v3966, %v3965
        %v4059 = vpack.c.b16 %v3968, %v3967
        %v4060 = vpack.c.b16 %v3970, %v3969
        %v4061 = vpack.c.b16 %v3972, %v3971
        %v4062 = vpack.c.b16 %v3974, %v3973
        %v4063 = vpack.c.b16 %v3976, %v3975
        %v4064 = vpack.c.b16 %v3978, %v3977
        %v4065 = vpack.c.b16 %v3980, %v3979
        %v4066 = vpack.c.b16 %v3982, %v3981
        %v4067 = vpack.c.b16 %v3984, %v3983
        %v4068 = vpack.c.b16 %v3986, %v3985
        %v4069 = vpack.c.b16 %v3988, %v3987
        %v4070 = vpack.c.b16 %v3990, %v3989
        %v4071 = vpack.c.b16 %v3992, %v3991
        %v4072 = vpack.c.b16 %v3994, %v3993
        %v4073 = vpack.c.b16 %v3996, %v3995
        %v4074 = vpack.c.b16 %v3998, %v3997
        %v4075 = vpack.c.b16 %v4000, %v3999
        %v4076 = vpack.c.b16 %v4002, %v4001
        %v4077 = vpack.c.b16 %v4004, %v4003
        %v4078 = vpack.c.b16 %v4006, %v4005
        %v4079 = vpack.c.b16 %v4008, %v4007
        %v4080 = vpack.c.b16 %v4010, %v4009
        %v4081 = vpack.c.b16 %v4012, %v4011
        %v4082 = vpack.c.b16 %v4014, %v4013
        %v4083 = vpack.c.b16 %v4016, %v4015
        %v4084 = vpack.c.b16 %v4018, %v4017
        %v4085 = vpack.c.b16 %v4020, %v4019
        %v4086 = vpack.c.b16 %v4022, %v4021
        %4151 = vmatprep.subr.bf16.mxu0 0
        %4152 = vmatpush1.bf16.msra.mxu0 %v4023
        %4153 = vmatprep.subr.bf16.mxu0 0
        %4154 = vmatpush1.bf16.msra.mxu0 %v4024
        %4155 = vmatprep.subr.bf16.mxu0 0
        %4156 = vmatpush1.bf16.msra.mxu0 %v4025
        %4157 = vmatprep.subr.bf16.mxu0 0
        %4158 = vmatpush1.bf16.msra.mxu0 %v4026
        %4159 = vmatprep.subr.bf16.mxu0 0
        %4160 = vmatpush1.bf16.msra.mxu0 %v4027
        %4161 = vmatprep.subr.bf16.mxu0 0
        %4162 = vmatpush1.bf16.msra.mxu0 %v4028
        %4163 = vmatprep.subr.bf16.mxu0 0
        %4164 = vmatpush1.bf16.msra.mxu0 %v4029
        %4165 = vmatprep.subr.bf16.mxu0 0
        %4166 = vmatpush1.bf16.msra.mxu0 %v4030
        %4167 = vmatprep.subr.bf16.mxu0 0
        %4168 = vmatpush1.bf16.msra.mxu0 %v4031
        %4169 = vmatprep.subr.bf16.mxu0 0
        %4170 = vmatpush1.bf16.msra.mxu0 %v4032
        %4171 = vmatprep.subr.bf16.mxu0 0
        %4172 = vmatpush1.bf16.msra.mxu0 %v4033
        %4173 = vmatprep.subr.bf16.mxu0 0
        %4174 = vmatpush1.bf16.msra.mxu0 %v4034
        %4175 = vmatprep.subr.bf16.mxu0 0
        %4176 = vmatpush1.bf16.msra.mxu0 %v4035
        %4177 = vmatprep.subr.bf16.mxu0 0
        %4178 = vmatpush1.bf16.msra.mxu0 %v4036
        %4179 = vmatprep.subr.bf16.mxu0 0
        %4180 = vmatpush1.bf16.msra.mxu0 %v4037
        %4181 = vmatprep.subr.bf16.mxu0 0
        %4182 = vmatpush1.bf16.msra.mxu0 %v4038
        %4183 = vmatprep.mubr.bf16.mxu0 %v2942
        %4184 = vmatmul.mubr.bf16.gmra.mrb[0].mxu0 %v2941
        %v4185 = vpop.f32.mrb[0].mxu0
        %v4186 = vadd.f32 %v3762, %v4185
        %v4187 = vpop.f32.mrb[0].mxu0
        %v4188 = vpop.f32.mrb[0].mxu0
        %v4189 = vpop.f32.mrb[0].mxu0
        %4190 = vdwg.mxu0
        %4191 = vmatprep.subr.bf16.mxu0 0
        %4192 = vmatpush1.bf16.msra.mxu0 %v4039
        %4193 = vmatprep.subr.bf16.mxu0 0
        %4194 = vmatpush1.bf16.msra.mxu0 %v4040
        %4195 = vmatprep.subr.bf16.mxu0 0
        %4196 = vmatpush1.bf16.msra.mxu0 %v4041
        %4197 = vmatprep.subr.bf16.mxu0 0
        %4198 = vmatpush1.bf16.msra.mxu0 %v4042
        %4199 = vmatprep.subr.bf16.mxu0 0
        %4200 = vmatpush1.bf16.msra.mxu0 %v4043
        %4201 = vmatprep.subr.bf16.mxu0 0
        %4202 = vmatpush1.bf16.msra.mxu0 %v4044
        %4203 = vmatprep.subr.bf16.mxu0 0
        %4204 = vmatpush1.bf16.msra.mxu0 %v4045
        %4205 = vmatprep.subr.bf16.mxu0 0
        %4206 = vmatpush1.bf16.msra.mxu0 %v4046
        %4207 = vmatprep.subr.bf16.mxu0 0
        %4208 = vmatpush1.bf16.msra.mxu0 %v4047
        %4209 = vmatprep.subr.bf16.mxu0 0
        %4210 = vmatpush1.bf16.msra.mxu0 %v4048
        %4211 = vmatprep.subr.bf16.mxu0 0
        %4212 = vmatpush1.bf16.msra.mxu0 %v4049
        %4213 = vmatprep.subr.bf16.mxu0 0
        %4214 = vmatpush1.bf16.msra.mxu0 %v4050
        %4215 = vmatprep.subr.bf16.mxu0 0
        %4216 = vmatpush1.bf16.msra.mxu0 %v4051
        %4217 = vmatprep.subr.bf16.mxu0 0
        %4218 = vmatpush1.bf16.msra.mxu0 %v4052
        %4219 = vmatprep.subr.bf16.mxu0 0
        %4220 = vmatpush1.bf16.msra.mxu0 %v4053
        %4221 = vmatprep.subr.bf16.mxu0 0
        %4222 = vmatpush1.bf16.msra.mxu0 %v4054
        %4223 = vmatprep.mubr.bf16.mxu0 %v2944
        %4224 = vmatmul.mubr.bf16.gmra.mrb[0].mxu0 %v2943
        %v4225 = vpop.f32.mrb[0].mxu0
        %v4226 = vadd.f32 %v4186, %v4225
        %v4227 = vpop.f32.mrb[0].mxu0
        %v4228 = vpop.f32.mrb[0].mxu0
        %v4229 = vpop.f32.mrb[0].mxu0
        %4230 = vdwg.mxu0
        %4231 = vmatprep.subr.bf16.mxu0 0
        %4232 = vmatpush1.bf16.msra.mxu0 %v4055
        %4233 = vmatprep.subr.bf16.mxu0 0
        %4234 = vmatpush1.bf16.msra.mxu0 %v4056
        %4235 = vmatprep.subr.bf16.mxu0 0
        %4236 = vmatpush1.bf16.msra.mxu0 %v4057
        %4237 = vmatprep.subr.bf16.mxu0 0
        %4238 = vmatpush1.bf16.msra.mxu0 %v4058
        %4239 = vmatprep.subr.bf16.mxu0 0
        %4240 = vmatpush1.bf16.msra.mxu0 %v4059
        %4241 = vmatprep.subr.bf16.mxu0 0
        %4242 = vmatpush1.bf16.msra.mxu0 %v4060
        %4243 = vmatprep.subr.bf16.mxu0 0
        %4244 = vmatpush1.bf16.msra.mxu0 %v4061
        %4245 = vmatprep.subr.bf16.mxu0 0
        %4246 = vmatpush1.bf16.msra.mxu0 %v4062
        %4247 = vmatprep.subr.bf16.mxu0 0
        %4248 = vmatpush1.bf16.msra.mxu0 %v4063
        %4249 = vmatprep.subr.bf16.mxu0 0
        %4250 = vmatpush1.bf16.msra.mxu0 %v4064
        %4251 = vmatprep.subr.bf16.mxu0 0
        %4252 = vmatpush1.bf16.msra.mxu0 %v4065
        %4253 = vmatprep.subr.bf16.mxu0 0
        %4254 = vmatpush1.bf16.msra.mxu0 %v4066
        %4255 = vmatprep.subr.bf16.mxu0 0
        %4256 = vmatpush1.bf16.msra.mxu0 %v4067
        %4257 = vmatprep.subr.bf16.mxu0 0
        %4258 = vmatpush1.bf16.msra.mxu0 %v4068
        %4259 = vmatprep.subr.bf16.mxu0 0
        %4260 = vmatpush1.bf16.msra.mxu0 %v4069
        %4261 = vmatprep.subr.bf16.mxu0 0
        %4262 = vmatpush1.bf16.msra.mxu0 %v4070
        %4263 = vmatprep.mubr.bf16.mxu0 %v2946
        %4264 = vmatmul.mubr.bf16.gmra.mrb[0].mxu0 %v2945
        %v4265 = vpop.f32.mrb[0].mxu0
        %v4266 = vadd.f32 %v4226, %v4265
        %v4267 = vpop.f32.mrb[0].mxu0
        %v4268 = vpop.f32.mrb[0].mxu0
        %v4269 = vpop.f32.mrb[0].mxu0
        %4270 = vdwg.mxu0
        %4271 = vmatprep.subr.bf16.mxu0 0
        %4272 = vmatpush1.bf16.msra.mxu0 %v4071
        %4273 = vmatprep.subr.bf16.mxu0 0
        %4274 = vmatpush1.bf16.msra.mxu0 %v4072
        %4275 = vmatprep.subr.bf16.mxu0 0
        %4276 = vmatpush1.bf16.msra.mxu0 %v4073
        %4277 = vmatprep.subr.bf16.mxu0 0
        %4278 = vmatpush1.bf16.msra.mxu0 %v4074
        %4279 = vmatprep.subr.bf16.mxu0 0
        %4280 = vmatpush1.bf16.msra.mxu0 %v4075
        %4281 = vmatprep.subr.bf16.mxu0 0
        %4282 = vmatpush1.bf16.msra.mxu0 %v4076
        %4283 = vmatprep.subr.bf16.mxu0 0
        %4284 = vmatpush1.bf16.msra.mxu0 %v4077
        %4285 = vmatprep.subr.bf16.mxu0 0
        %4286 = vmatpush1.bf16.msra.mxu0 %v4078
        %4287 = vmatprep.subr.bf16.mxu0 0
        %4288 = vmatpush1.bf16.msra.mxu0 %v4079
        %4289 = vmatprep.subr.bf16.mxu0 0
        %4290 = vmatpush1.bf16.msra.mxu0 %v4080
        %4291 = vmatprep.subr.bf16.mxu0 0
        %4292 = vmatpush1.bf16.msra.mxu0 %v4081
        %4293 = vmatprep.subr.bf16.mxu0 0
        %4294 = vmatpush1.bf16.msra.mxu0 %v4082
        %4295 = vmatprep.subr.bf16.mxu0 0
        %4296 = vmatpush1.bf16.msra.mxu0 %v4083
        %4297 = vmatprep.subr.bf16.mxu0 0
        %4298 = vmatpush1.bf16.msra.mxu0 %v4084
        %4299 = vmatprep.subr.bf16.mxu0 0
        %4300 = vmatpush1.bf16.msra.mxu0 %v4085
        %4301 = vmatprep.subr.bf16.mxu0 0
        %4302 = vmatpush1.bf16.msra.mxu0 %v4086
        %4303 = vmatprep.mubr.bf16.mxu0 %v2948
        %4304 = vmatmul.mubr.bf16.gmra.mrb[0].mxu0 %v2947
        %v4305 = vpop.f32.mrb[0].mxu0
        %v4306 = vadd.f32 %v4266, %v4305
        %v4307 = vpop.f32.mrb[0].mxu0
        %v4308 = vpop.f32.mrb[0].mxu0
        %v4309 = vpop.f32.mrb[0].mxu0
        %4310 = vdwg.mxu0
        %s4311 = scalar_lea.vmem [#allocation2], 128
        %v4312 = vld [vmem:[%s4311] sm:$0xff]
        %v4313 = vld [vmem:[%s4311 + $0x8] sm:$0xff]
        %v4314 = vld [vmem:[%s4311 + $0x10] sm:$0xff]
        %v4315 = vld [vmem:[%s4311 + $0x18] sm:$0xff]
        %v4316 = vld [vmem:[%s4311 + $0x20] sm:$0xff]
        %v4317 = vld [vmem:[%s4311 + $0x28] sm:$0xff]
        %v4318 = vld [vmem:[%s4311 + $0x30] sm:$0xff]
        %v4319 = vld [vmem:[%s4311 + $0x38] sm:$0xff]
        %v4320 = vpack.c.bf16 %v4312, %v4312
        %v4321 = vpack.c.bf16 %v4313, %v4313
        %v4322 = vpack.c.bf16 %v4314, %v4314
        %v4323 = vpack.c.bf16 %v4315, %v4315
        %v4324 = vpack.c.bf16 %v4316, %v4316
        %v4325 = vpack.c.bf16 %v4317, %v4317
        %v4326 = vpack.c.bf16 %v4318, %v4318
        %v4327 = vpack.c.bf16 %v4319, %v4319
        %s4328 = scalar_lea.vmem %s3, 1024
        %v4329 = vld [vmem:[%s4328] sm:$0xf]
        %v4330 = vld [vmem:[%s4328 + $0x4] sm:$0xf]
        %v4331 = vld [vmem:[%s4328 + $0x8] sm:$0xf]
        %v4332 = vld [vmem:[%s4328 + $0xc] sm:$0xf]
        %v4333 = vld [vmem:[%s4328 + $0x10] sm:$0xf]
        %v4334 = vld [vmem:[%s4328 + $0x14] sm:$0xf]
        %v4335 = vld [vmem:[%s4328 + $0x18] sm:$0xf]
        %v4336 = vld [vmem:[%s4328 + $0x1c] sm:$0xf]
        %v4337 = vld [vmem:[%s4328 + $0x20] sm:$0xf]
        %v4338 = vld [vmem:[%s4328 + $0x24] sm:$0xf]
        %v4339 = vld [vmem:[%s4328 + $0x28] sm:$0xf]
        %v4340 = vld [vmem:[%s4328 + $0x2c] sm:$0xf]
        %v4341 = vld [vmem:[%s4328 + $0x30] sm:$0xf]
        %v4342 = vld [vmem:[%s4328 + $0x34] sm:$0xf]
        %v4343 = vld [vmem:[%s4328 + $0x38] sm:$0xf]
        %v4344 = vld [vmem:[%s4328 + $0x3c] sm:$0xf]
        %v4345 = vld [vmem:[%s4328 + $0x40] sm:$0xf]
        %v4346 = vld [vmem:[%s4328 + $0x44] sm:$0xf]
        %v4347 = vld [vmem:[%s4328 + $0x48] sm:$0xf]
        %v4348 = vld [vmem:[%s4328 + $0x4c] sm:$0xf]
        %v4349 = vld [vmem:[%s4328 + $0x50] sm:$0xf]
        %v4350 = vld [vmem:[%s4328 + $0x54] sm:$0xf]
        %v4351 = vld [vmem:[%s4328 + $0x58] sm:$0xf]
        %v4352 = vld [vmem:[%s4328 + $0x5c] sm:$0xf]
        %v4353 = vld [vmem:[%s4328 + $0x60] sm:$0xf]
        %v4354 = vld [vmem:[%s4328 + $0x64] sm:$0xf]
        %v4355 = vld [vmem:[%s4328 + $0x68] sm:$0xf]
        %v4356 = vld [vmem:[%s4328 + $0x6c] sm:$0xf]
        %v4357 = vld [vmem:[%s4328 + $0x70] sm:$0xf]
        %v4358 = vld [vmem:[%s4328 + $0x74] sm:$0xf]
        %v4359 = vld [vmem:[%s4328 + $0x78] sm:$0xf]
        %v4360 = vld [vmem:[%s4328 + $0x7c] sm:$0xf]
        %v4361 = vld [vmem:[%s4328 + $0x80] sm:$0xf]
        %v4362 = vld [vmem:[%s4328 + $0x84] sm:$0xf]
        %v4363 = vld [vmem:[%s4328 + $0x88] sm:$0xf]
        %v4364 = vld [vmem:[%s4328 + $0x8c] sm:$0xf]
        %v4365 = vld [vmem:[%s4328 + $0x90] sm:$0xf]
        %v4366 = vld [vmem:[%s4328 + $0x94] sm:$0xf]
        %v4367 = vld [vmem:[%s4328 + $0x98] sm:$0xf]
        %v4368 = vld [vmem:[%s4328 + $0x9c] sm:$0xf]
        %v4369 = vld [vmem:[%s4328 + $0xa0] sm:$0xf]
        %v4370 = vld [vmem:[%s4328 + $0xa4] sm:$0xf]
        %v4371 = vld [vmem:[%s4328 + $0xa8] sm:$0xf]
        %v4372 = vld [vmem:[%s4328 + $0xac] sm:$0xf]
        %v4373 = vld [vmem:[%s4328 + $0xb0] sm:$0xf]
        %v4374 = vld [vmem:[%s4328 + $0xb4] sm:$0xf]
        %v4375 = vld [vmem:[%s4328 + $0xb8] sm:$0xf]
        %v4376 = vld [vmem:[%s4328 + $0xbc] sm:$0xf]
        %v4377 = vld [vmem:[%s4328 + $0xc0] sm:$0xf]
        %v4378 = vld [vmem:[%s4328 + $0xc4] sm:$0xf]
        %v4379 = vld [vmem:[%s4328 + $0xc8] sm:$0xf]
        %v4380 = vld [vmem:[%s4328 + $0xcc] sm:$0xf]
        %v4381 = vld [vmem:[%s4328 + $0xd0] sm:$0xf]
        %v4382 = vld [vmem:[%s4328 + $0xd4] sm:$0xf]
        %v4383 = vld [vmem:[%s4328 + $0xd8] sm:$0xf]
        %v4384 = vld [vmem:[%s4328 + $0xdc] sm:$0xf]
        %v4385 = vld [vmem:[%s4328 + $0xe0] sm:$0xf]
        %v4386 = vld [vmem:[%s4328 + $0xe4] sm:$0xf]
        %v4387 = vld [vmem:[%s4328 + $0xe8] sm:$0xf]
        %v4388 = vld [vmem:[%s4328 + $0xec] sm:$0xf]
        %v4389 = vld [vmem:[%s4328 + $0xf0] sm:$0xf]
        %v4390 = vld [vmem:[%s4328 + $0xf4] sm:$0xf]
        %v4391 = vld [vmem:[%s4328 + $0xf8] sm:$0xf]
        %v4392 = vld [vmem:[%s4328 + $0xfc] sm:$0xf]
        %v4393 = vld [vmem:[%s4328 + $0x100] sm:$0xf]
        %v4394 = vld [vmem:[%s4328 + $0x104] sm:$0xf]
        %v4395 = vld [vmem:[%s4328 + $0x108] sm:$0xf]
        %v4396 = vld [vmem:[%s4328 + $0x10c] sm:$0xf]
        %v4397 = vld [vmem:[%s4328 + $0x110] sm:$0xf]
        %v4398 = vld [vmem:[%s4328 + $0x114] sm:$0xf]
        %v4399 = vld [vmem:[%s4328 + $0x118] sm:$0xf]
        %v4400 = vld [vmem:[%s4328 + $0x11c] sm:$0xf]
        %v4401 = vld [vmem:[%s4328 + $0x120] sm:$0xf]
        %v4402 = vld [vmem:[%s4328 + $0x124] sm:$0xf]
        %v4403 = vld [vmem:[%s4328 + $0x128] sm:$0xf]
        %v4404 = vld [vmem:[%s4328 + $0x12c] sm:$0xf]
        %v4405 = vld [vmem:[%s4328 + $0x130] sm:$0xf]
        %v4406 = vld [vmem:[%s4328 + $0x134] sm:$0xf]
        %v4407 = vld [vmem:[%s4328 + $0x138] sm:$0xf]
        %v4408 = vld [vmem:[%s4328 + $0x13c] sm:$0xf]
        %v4409 = vld [vmem:[%s4328 + $0x140] sm:$0xf]
        %v4410 = vld [vmem:[%s4328 + $0x144] sm:$0xf]
        %v4411 = vld [vmem:[%s4328 + $0x148] sm:$0xf]
        %v4412 = vld [vmem:[%s4328 + $0x14c] sm:$0xf]
        %v4413 = vld [vmem:[%s4328 + $0x150] sm:$0xf]
        %v4414 = vld [vmem:[%s4328 + $0x154] sm:$0xf]
        %v4415 = vld [vmem:[%s4328 + $0x158] sm:$0xf]
        %v4416 = vld [vmem:[%s4328 + $0x15c] sm:$0xf]
        %v4417 = vld [vmem:[%s4328 + $0x160] sm:$0xf]
        %v4418 = vld [vmem:[%s4328 + $0x164] sm:$0xf]
        %v4419 = vld [vmem:[%s4328 + $0x168] sm:$0xf]
        %v4420 = vld [vmem:[%s4328 + $0x16c] sm:$0xf]
        %v4421 = vld [vmem:[%s4328 + $0x170] sm:$0xf]
        %v4422 = vld [vmem:[%s4328 + $0x174] sm:$0xf]
        %v4423 = vld [vmem:[%s4328 + $0x178] sm:$0xf]
        %v4424 = vld [vmem:[%s4328 + $0x17c] sm:$0xf]
        %v4425 = vld [vmem:[%s4328 + $0x180] sm:$0xf]
        %v4426 = vld [vmem:[%s4328 + $0x184] sm:$0xf]
        %v4427 = vld [vmem:[%s4328 + $0x188] sm:$0xf]
        %v4428 = vld [vmem:[%s4328 + $0x18c] sm:$0xf]
        %v4429 = vld [vmem:[%s4328 + $0x190] sm:$0xf]
        %v4430 = vld [vmem:[%s4328 + $0x194] sm:$0xf]
        %v4431 = vld [vmem:[%s4328 + $0x198] sm:$0xf]
        %v4432 = vld [vmem:[%s4328 + $0x19c] sm:$0xf]
        %v4433 = vld [vmem:[%s4328 + $0x1a0] sm:$0xf]
        %v4434 = vld [vmem:[%s4328 + $0x1a4] sm:$0xf]
        %v4435 = vld [vmem:[%s4328 + $0x1a8] sm:$0xf]
        %v4436 = vld [vmem:[%s4328 + $0x1ac] sm:$0xf]
        %v4437 = vld [vmem:[%s4328 + $0x1b0] sm:$0xf]
        %v4438 = vld [vmem:[%s4328 + $0x1b4] sm:$0xf]
        %v4439 = vld [vmem:[%s4328 + $0x1b8] sm:$0xf]
        %v4440 = vld [vmem:[%s4328 + $0x1bc] sm:$0xf]
        %v4441 = vld [vmem:[%s4328 + $0x1c0] sm:$0xf]
        %v4442 = vld [vmem:[%s4328 + $0x1c4] sm:$0xf]
        %v4443 = vld [vmem:[%s4328 + $0x1c8] sm:$0xf]
        %v4444 = vld [vmem:[%s4328 + $0x1cc] sm:$0xf]
        %v4445 = vld [vmem:[%s4328 + $0x1d0] sm:$0xf]
        %v4446 = vld [vmem:[%s4328 + $0x1d4] sm:$0xf]
        %v4447 = vld [vmem:[%s4328 + $0x1d8] sm:$0xf]
        %v4448 = vld [vmem:[%s4328 + $0x1dc] sm:$0xf]
        %v4449 = vld [vmem:[%s4328 + $0x1e0] sm:$0xf]
        %v4450 = vld [vmem:[%s4328 + $0x1e4] sm:$0xf]
        %v4451 = vld [vmem:[%s4328 + $0x1e8] sm:$0xf]
        %v4452 = vld [vmem:[%s4328 + $0x1ec] sm:$0xf]
        %v4453 = vld [vmem:[%s4328 + $0x1f0] sm:$0xf]
        %v4454 = vld [vmem:[%s4328 + $0x1f4] sm:$0xf]
        %v4455 = vld [vmem:[%s4328 + $0x1f8] sm:$0xf]
        %v4456 = vld [vmem:[%s4328 + $0x1fc] sm:$0xf]
        %v4585 = vunpack.c.l.b16 %v4329
        %v4586 = vunpack.c.l.b16 %v4330
        %v4587 = vunpack.c.l.b16 %v4331
        %v4588 = vunpack.c.l.b16 %v4332
        %v4589 = vunpack.c.l.b16 %v4333
        %v4590 = vunpack.c.l.b16 %v4334
        %v4591 = vunpack.c.l.b16 %v4335
        %v4592 = vunpack.c.l.b16 %v4336
        %v4593 = vunpack.c.l.b16 %v4337
        %v4594 = vunpack.c.l.b16 %v4338
        %v4595 = vunpack.c.l.b16 %v4339
        %v4596 = vunpack.c.l.b16 %v4340
        %v4597 = vunpack.c.l.b16 %v4341
        %v4598 = vunpack.c.l.b16 %v4342
        %v4599 = vunpack.c.l.b16 %v4343
        %v4600 = vunpack.c.l.b16 %v4344
        %v4601 = vunpack.c.l.b16 %v4345
        %v4602 = vunpack.c.l.b16 %v4346
        %v4603 = vunpack.c.l.b16 %v4347
        %v4604 = vunpack.c.l.b16 %v4348
        %v4605 = vunpack.c.l.b16 %v4349
        %v4606 = vunpack.c.l.b16 %v4350
        %v4607 = vunpack.c.l.b16 %v4351
        %v4608 = vunpack.c.l.b16 %v4352
        %v4609 = vunpack.c.l.b16 %v4353
        %v4610 = vunpack.c.l.b16 %v4354
        %v4611 = vunpack.c.l.b16 %v4355
        %v4612 = vunpack.c.l.b16 %v4356
        %v4613 = vunpack.c.l.b16 %v4357
        %v4614 = vunpack.c.l.b16 %v4358
        %v4615 = vunpack.c.l.b16 %v4359
        %v4616 = vunpack.c.l.b16 %v4360
        %v4617 = vunpack.c.l.b16 %v4361
        %v4618 = vunpack.c.l.b16 %v4362
        %v4619 = vunpack.c.l.b16 %v4363
        %v4620 = vunpack.c.l.b16 %v4364
        %v4621 = vunpack.c.l.b16 %v4365
        %v4622 = vunpack.c.l.b16 %v4366
        %v4623 = vunpack.c.l.b16 %v4367
        %v4624 = vunpack.c.l.b16 %v4368
        %v4625 = vunpack.c.l.b16 %v4369
        %v4626 = vunpack.c.l.b16 %v4370
        %v4627 = vunpack.c.l.b16 %v4371
        %v4628 = vunpack.c.l.b16 %v4372
        %v4629 = vunpack.c.l.b16 %v4373
        %v4630 = vunpack.c.l.b16 %v4374
        %v4631 = vunpack.c.l.b16 %v4375
        %v4632 = vunpack.c.l.b16 %v4376
        %v4633 = vunpack.c.l.b16 %v4377
        %v4634 = vunpack.c.l.b16 %v4378
        %v4635 = vunpack.c.l.b16 %v4379
        %v4636 = vunpack.c.l.b16 %v4380
        %v4637 = vunpack.c.l.b16 %v4381
        %v4638 = vunpack.c.l.b16 %v4382
        %v4639 = vunpack.c.l.b16 %v4383
        %v4640 = vunpack.c.l.b16 %v4384
        %v4641 = vunpack.c.l.b16 %v4385
        %v4642 = vunpack.c.l.b16 %v4386
        %v4643 = vunpack.c.l.b16 %v4387
        %v4644 = vunpack.c.l.b16 %v4388
        %v4645 = vunpack.c.l.b16 %v4389
        %v4646 = vunpack.c.l.b16 %v4390
        %v4647 = vunpack.c.l.b16 %v4391
        %v4648 = vunpack.c.l.b16 %v4392
        %v4649 = vunpack.c.l.b16 %v4393
        %v4650 = vunpack.c.l.b16 %v4394
        %v4651 = vunpack.c.l.b16 %v4395
        %v4652 = vunpack.c.l.b16 %v4396
        %v4653 = vunpack.c.l.b16 %v4397
        %v4654 = vunpack.c.l.b16 %v4398
        %v4655 = vunpack.c.l.b16 %v4399
        %v4656 = vunpack.c.l.b16 %v4400
        %v4657 = vunpack.c.l.b16 %v4401
        %v4658 = vunpack.c.l.b16 %v4402
        %v4659 = vunpack.c.l.b16 %v4403
        %v4660 = vunpack.c.l.b16 %v4404
        %v4661 = vunpack.c.l.b16 %v4405
        %v4662 = vunpack.c.l.b16 %v4406
        %v4663 = vunpack.c.l.b16 %v4407
        %v4664 = vunpack.c.l.b16 %v4408
        %v4665 = vunpack.c.l.b16 %v4409
        %v4666 = vunpack.c.l.b16 %v4410
        %v4667 = vunpack.c.l.b16 %v4411
        %v4668 = vunpack.c.l.b16 %v4412
        %v4669 = vunpack.c.l.b16 %v4413
        %v4670 = vunpack.c.l.b16 %v4414
        %v4671 = vunpack.c.l.b16 %v4415
        %v4672 = vunpack.c.l.b16 %v4416
        %v4673 = vunpack.c.l.b16 %v4417
        %v4674 = vunpack.c.l.b16 %v4418
        %v4675 = vunpack.c.l.b16 %v4419
        %v4676 = vunpack.c.l.b16 %v4420
        %v4677 = vunpack.c.l.b16 %v4421
        %v4678 = vunpack.c.l.b16 %v4422
        %v4679 = vunpack.c.l.b16 %v4423
        %v4680 = vunpack.c.l.b16 %v4424
        %v4681 = vunpack.c.l.b16 %v4425
        %v4682 = vunpack.c.l.b16 %v4426
        %v4683 = vunpack.c.l.b16 %v4427
        %v4684 = vunpack.c.l.b16 %v4428
        %v4685 = vunpack.c.l.b16 %v4429
        %v4686 = vunpack.c.l.b16 %v4430
        %v4687 = vunpack.c.l.b16 %v4431
        %v4688 = vunpack.c.l.b16 %v4432
        %v4689 = vunpack.c.l.b16 %v4433
        %v4690 = vunpack.c.l.b16 %v4434
        %v4691 = vunpack.c.l.b16 %v4435
        %v4692 = vunpack.c.l.b16 %v4436
        %v4693 = vunpack.c.l.b16 %v4437
        %v4694 = vunpack.c.l.b16 %v4438
        %v4695 = vunpack.c.l.b16 %v4439
        %v4696 = vunpack.c.l.b16 %v4440
        %v4697 = vunpack.c.l.b16 %v4441
        %v4698 = vunpack.c.l.b16 %v4442
        %v4699 = vunpack.c.l.b16 %v4443
        %v4700 = vunpack.c.l.b16 %v4444
        %v4701 = vunpack.c.l.b16 %v4445
        %v4702 = vunpack.c.l.b16 %v4446
        %v4703 = vunpack.c.l.b16 %v4447
        %v4704 = vunpack.c.l.b16 %v4448
        %v4705 = vunpack.c.l.b16 %v4449
        %v4706 = vunpack.c.l.b16 %v4450
        %v4707 = vunpack.c.l.b16 %v4451
        %v4708 = vunpack.c.l.b16 %v4452
        %v4709 = vunpack.c.l.b16 %v4453
        %v4710 = vunpack.c.l.b16 %v4454
        %v4711 = vunpack.c.l.b16 %v4455
        %v4712 = vunpack.c.l.b16 %v4456
        %v4713 = vpack.c.b16 %v4586, %v4585
        %v4714 = vpack.c.b16 %v4588, %v4587
        %v4715 = vpack.c.b16 %v4590, %v4589
        %v4716 = vpack.c.b16 %v4592, %v4591
        %v4717 = vpack.c.b16 %v4594, %v4593
        %v4718 = vpack.c.b16 %v4596, %v4595
        %v4719 = vpack.c.b16 %v4598, %v4597
        %v4720 = vpack.c.b16 %v4600, %v4599
        %v4721 = vpack.c.b16 %v4602, %v4601
        %v4722 = vpack.c.b16 %v4604, %v4603
        %v4723 = vpack.c.b16 %v4606, %v4605
        %v4724 = vpack.c.b16 %v4608, %v4607
        %v4725 = vpack.c.b16 %v4610, %v4609
        %v4726 = vpack.c.b16 %v4612, %v4611
        %v4727 = vpack.c.b16 %v4614, %v4613
        %v4728 = vpack.c.b16 %v4616, %v4615
        %v4729 = vpack.c.b16 %v4618, %v4617
        %v4730 = vpack.c.b16 %v4620, %v4619
        %v4731 = vpack.c.b16 %v4622, %v4621
        %v4732 = vpack.c.b16 %v4624, %v4623
        %v4733 = vpack.c.b16 %v4626, %v4625
        %v4734 = vpack.c.b16 %v4628, %v4627
        %v4735 = vpack.c.b16 %v4630, %v4629
        %v4736 = vpack.c.b16 %v4632, %v4631
        %v4737 = vpack.c.b16 %v4634, %v4633
        %v4738 = vpack.c.b16 %v4636, %v4635
        %v4739 = vpack.c.b16 %v4638, %v4637
        %v4740 = vpack.c.b16 %v4640, %v4639
        %v4741 = vpack.c.b16 %v4642, %v4641
        %v4742 = vpack.c.b16 %v4644, %v4643
        %v4743 = vpack.c.b16 %v4646, %v4645
        %v4744 = vpack.c.b16 %v4648, %v4647
        %v4745 = vpack.c.b16 %v4650, %v4649
        %v4746 = vpack.c.b16 %v4652, %v4651
        %v4747 = vpack.c.b16 %v4654, %v4653
        %v4748 = vpack.c.b16 %v4656, %v4655
        %v4749 = vpack.c.b16 %v4658, %v4657
        %v4750 = vpack.c.b16 %v4660, %v4659
        %v4751 = vpack.c.b16 %v4662, %v4661
        %v4752 = vpack.c.b16 %v4664, %v4663
        %v4753 = vpack.c.b16 %v4666, %v4665
        %v4754 = vpack.c.b16 %v4668, %v4667
        %v4755 = vpack.c.b16 %v4670, %v4669
        %v4756 = vpack.c.b16 %v4672, %v4671
        %v4757 = vpack.c.b16 %v4674, %v4673
        %v4758 = vpack.c.b16 %v4676, %v4675
        %v4759 = vpack.c.b16 %v4678, %v4677
        %v4760 = vpack.c.b16 %v4680, %v4679
        %v4761 = vpack.c.b16 %v4682, %v4681
        %v4762 = vpack.c.b16 %v4684, %v4683
        %v4763 = vpack.c.b16 %v4686, %v4685
        %v4764 = vpack.c.b16 %v4688, %v4687
        %v4765 = vpack.c.b16 %v4690, %v4689
        %v4766 = vpack.c.b16 %v4692, %v4691
        %v4767 = vpack.c.b16 %v4694, %v4693
        %v4768 = vpack.c.b16 %v4696, %v4695
        %v4769 = vpack.c.b16 %v4698, %v4697
        %v4770 = vpack.c.b16 %v4700, %v4699
        %v4771 = vpack.c.b16 %v4702, %v4701
        %v4772 = vpack.c.b16 %v4704, %v4703
        %v4773 = vpack.c.b16 %v4706, %v4705
        %v4774 = vpack.c.b16 %v4708, %v4707
        %v4775 = vpack.c.b16 %v4710, %v4709
        %v4776 = vpack.c.b16 %v4712, %v4711
        %4841 = vmatprep.subr.bf16.mxu0 0
        %4842 = vmatpush1.bf16.msra.mxu0 %v4713
        %4843 = vmatprep.subr.bf16.mxu0 0
        %4844 = vmatpush1.bf16.msra.mxu0 %v4714
        %4845 = vmatprep.subr.bf16.mxu0 0
        %4846 = vmatpush1.bf16.msra.mxu0 %v4715
        %4847 = vmatprep.subr.bf16.mxu0 0
        %4848 = vmatpush1.bf16.msra.mxu0 %v4716
        %4849 = vmatprep.subr.bf16.mxu0 0
        %4850 = vmatpush1.bf16.msra.mxu0 %v4717
        %4851 = vmatprep.subr.bf16.mxu0 0
        %4852 = vmatpush1.bf16.msra.mxu0 %v4718
        %4853 = vmatprep.subr.bf16.mxu0 0
        %4854 = vmatpush1.bf16.msra.mxu0 %v4719
        %4855 = vmatprep.subr.bf16.mxu0 0
        %4856 = vmatpush1.bf16.msra.mxu0 %v4720
        %4857 = vmatprep.subr.bf16.mxu0 0
        %4858 = vmatpush1.bf16.msra.mxu0 %v4721
        %4859 = vmatprep.subr.bf16.mxu0 0
        %4860 = vmatpush1.bf16.msra.mxu0 %v4722
        %4861 = vmatprep.subr.bf16.mxu0 0
        %4862 = vmatpush1.bf16.msra.mxu0 %v4723
        %4863 = vmatprep.subr.bf16.mxu0 0
        %4864 = vmatpush1.bf16.msra.mxu0 %v4724
        %4865 = vmatprep.subr.bf16.mxu0 0
        %4866 = vmatpush1.bf16.msra.mxu0 %v4725
        %4867 = vmatprep.subr.bf16.mxu0 0
        %4868 = vmatpush1.bf16.msra.mxu0 %v4726
        %4869 = vmatprep.subr.bf16.mxu0 0
        %4870 = vmatpush1.bf16.msra.mxu0 %v4727
        %4871 = vmatprep.subr.bf16.mxu0 0
        %4872 = vmatpush1.bf16.msra.mxu0 %v4728
        %4873 = vmatprep.mubr.bf16.mxu0 %v4321
        %4874 = vmatmul.mubr.bf16.gmra.mrb[0].mxu0 %v4320
        %v4875 = vpop.f32.mrb[0].mxu0
        %v4876 = vadd.f32 0.0, %v4875
        %v4877 = vpop.f32.mrb[0].mxu0
        %v4878 = vpop.f32.mrb[0].mxu0
        %v4879 = vpop.f32.mrb[0].mxu0
        %4880 = vdwg.mxu0
        %4881 = vmatprep.subr.bf16.mxu0 0
        %4882 = vmatpush1.bf16.msra.mxu0 %v4729
        %4883 = vmatprep.subr.bf16.mxu0 0
        %4884 = vmatpush1.bf16.msra.mxu0 %v4730
        %4885 = vmatprep.subr.bf16.mxu0 0
        %4886 = vmatpush1.bf16.msra.mxu0 %v4731
        %4887 = vmatprep.subr.bf16.mxu0 0
        %4888 = vmatpush1.bf16.msra.mxu0 %v4732
        %4889 = vmatprep.subr.bf16.mxu0 0
        %4890 = vmatpush1.bf16.msra.mxu0 %v4733
        %4891 = vmatprep.subr.bf16.mxu0 0
        %4892 = vmatpush1.bf16.msra.mxu0 %v4734
        %4893 = vmatprep.subr.bf16.mxu0 0
        %4894 = vmatpush1.bf16.msra.mxu0 %v4735
        %4895 = vmatprep.subr.bf16.mxu0 0
        %4896 = vmatpush1.bf16.msra.mxu0 %v4736
        %4897 = vmatprep.subr.bf16.mxu0 0
        %4898 = vmatpush1.bf16.msra.mxu0 %v4737
        %4899 = vmatprep.subr.bf16.mxu0 0
        %4900 = vmatpush1.bf16.msra.mxu0 %v4738
        %4901 = vmatprep.subr.bf16.mxu0 0
        %4902 = vmatpush1.bf16.msra.mxu0 %v4739
        %4903 = vmatprep.subr.bf16.mxu0 0
        %4904 = vmatpush1.bf16.msra.mxu0 %v4740
        %4905 = vmatprep.subr.bf16.mxu0 0
        %4906 = vmatpush1.bf16.msra.mxu0 %v4741
        %4907 = vmatprep.subr.bf16.mxu0 0
        %4908 = vmatpush1.bf16.msra.mxu0 %v4742
        %4909 = vmatprep.subr.bf16.mxu0 0
        %4910 = vmatpush1.bf16.msra.mxu0 %v4743
        %4911 = vmatprep.subr.bf16.mxu0 0
        %4912 = vmatpush1.bf16.msra.mxu0 %v4744
        %4913 = vmatprep.mubr.bf16.mxu0 %v4323
        %4914 = vmatmul.mubr.bf16.gmra.mrb[0].mxu0 %v4322
        %v4915 = vpop.f32.mrb[0].mxu0
        %v4916 = vadd.f32 %v4876, %v4915
        %v4917 = vpop.f32.mrb[0].mxu0
        %v4918 = vpop.f32.mrb[0].mxu0
        %v4919 = vpop.f32.mrb[0].mxu0
        %4920 = vdwg.mxu0
        %4921 = vmatprep.subr.bf16.mxu0 0
        %4922 = vmatpush1.bf16.msra.mxu0 %v4745
        %4923 = vmatprep.subr.bf16.mxu0 0
        %4924 = vmatpush1.bf16.msra.mxu0 %v4746
        %4925 = vmatprep.subr.bf16.mxu0 0
        %4926 = vmatpush1.bf16.msra.mxu0 %v4747
        %4927 = vmatprep.subr.bf16.mxu0 0
        %4928 = vmatpush1.bf16.msra.mxu0 %v4748
        %4929 = vmatprep.subr.bf16.mxu0 0
        %4930 = vmatpush1.bf16.msra.mxu0 %v4749
        %4931 = vmatprep.subr.bf16.mxu0 0
        %4932 = vmatpush1.bf16.msra.mxu0 %v4750
        %4933 = vmatprep.subr.bf16.mxu0 0
        %4934 = vmatpush1.bf16.msra.mxu0 %v4751
        %4935 = vmatprep.subr.bf16.mxu0 0
        %4936 = vmatpush1.bf16.msra.mxu0 %v4752
        %4937 = vmatprep.subr.bf16.mxu0 0
        %4938 = vmatpush1.bf16.msra.mxu0 %v4753
        %4939 = vmatprep.subr.bf16.mxu0 0
        %4940 = vmatpush1.bf16.msra.mxu0 %v4754
        %4941 = vmatprep.subr.bf16.mxu0 0
        %4942 = vmatpush1.bf16.msra.mxu0 %v4755
        %4943 = vmatprep.subr.bf16.mxu0 0
        %4944 = vmatpush1.bf16.msra.mxu0 %v4756
        %4945 = vmatprep.subr.bf16.mxu0 0
        %4946 = vmatpush1.bf16.msra.mxu0 %v4757
        %4947 = vmatprep.subr.bf16.mxu0 0
        %4948 = vmatpush1.bf16.msra.mxu0 %v4758
        %4949 = vmatprep.subr.bf16.mxu0 0
        %4950 = vmatpush1.bf16.msra.mxu0 %v4759
        %4951 = vmatprep.subr.bf16.mxu0 0
        %4952 = vmatpush1.bf16.msra.mxu0 %v4760
        %4953 = vmatprep.mubr.bf16.mxu0 %v4325
        %4954 = vmatmul.mubr.bf16.gmra.mrb[0].mxu0 %v4324
        %v4955 = vpop.f32.mrb[0].mxu0
        %v4956 = vadd.f32 %v4916, %v4955
        %v4957 = vpop.f32.mrb[0].mxu0
        %v4958 = vpop.f32.mrb[0].mxu0
        %v4959 = vpop.f32.mrb[0].mxu0
        %4960 = vdwg.mxu0
        %4961 = vmatprep.subr.bf16.mxu0 0
        %4962 = vmatpush1.bf16.msra.mxu0 %v4761
        %4963 = vmatprep.subr.bf16.mxu0 0
        %4964 = vmatpush1.bf16.msra.mxu0 %v4762
        %4965 = vmatprep.subr.bf16.mxu0 0
        %4966 = vmatpush1.bf16.msra.mxu0 %v4763
        %4967 = vmatprep.subr.bf16.mxu0 0
        %4968 = vmatpush1.bf16.msra.mxu0 %v4764
        %4969 = vmatprep.subr.bf16.mxu0 0
        %4970 = vmatpush1.bf16.msra.mxu0 %v4765
        %4971 = vmatprep.subr.bf16.mxu0 0
        %4972 = vmatpush1.bf16.msra.mxu0 %v4766
        %4973 = vmatprep.subr.bf16.mxu0 0
        %4974 = vmatpush1.bf16.msra.mxu0 %v4767
        %4975 = vmatprep.subr.bf16.mxu0 0
        %4976 = vmatpush1.bf16.msra.mxu0 %v4768
        %4977 = vmatprep.subr.bf16.mxu0 0
        %4978 = vmatpush1.bf16.msra.mxu0 %v4769
        %4979 = vmatprep.subr.bf16.mxu0 0
        %4980 = vmatpush1.bf16.msra.mxu0 %v4770
        %4981 = vmatprep.subr.bf16.mxu0 0
        %4982 = vmatpush1.bf16.msra.mxu0 %v4771
        %4983 = vmatprep.subr.bf16.mxu0 0
        %4984 = vmatpush1.bf16.msra.mxu0 %v4772
        %4985 = vmatprep.subr.bf16.mxu0 0
        %4986 = vmatpush1.bf16.msra.mxu0 %v4773
        %4987 = vmatprep.subr.bf16.mxu0 0
        %4988 = vmatpush1.bf16.msra.mxu0 %v4774
        %4989 = vmatprep.subr.bf16.mxu0 0
        %4990 = vmatpush1.bf16.msra.mxu0 %v4775
        %4991 = vmatprep.subr.bf16.mxu0 0
        %4992 = vmatpush1.bf16.msra.mxu0 %v4776
        %4993 = vmatprep.mubr.bf16.mxu0 %v4327
        %4994 = vmatmul.mubr.bf16.gmra.mrb[0].mxu0 %v4326
        %v4995 = vpop.f32.mrb[0].mxu0
        %v4996 = vadd.f32 %v4956, %v4995
        %v4997 = vpop.f32.mrb[0].mxu0
        %v4998 = vpop.f32.mrb[0].mxu0
        %v4999 = vpop.f32.mrb[0].mxu0
        %5000 = vdwg.mxu0
        %v5001 = vadd.f32 %v4306, %v4996
        %s5002 = scalar_lea.vmem [#allocation2], 192
        %v5003 = vld [vmem:[%s5002] sm:$0xff]
        %v5004 = vld [vmem:[%s5002 + $0x8] sm:$0xff]
        %v5005 = vld [vmem:[%s5002 + $0x10] sm:$0xff]
        %v5006 = vld [vmem:[%s5002 + $0x18] sm:$0xff]
        %v5007 = vld [vmem:[%s5002 + $0x20] sm:$0xff]
        %v5008 = vld [vmem:[%s5002 + $0x28] sm:$0xff]
        %v5009 = vld [vmem:[%s5002 + $0x30] sm:$0xff]
        %v5010 = vld [vmem:[%s5002 + $0x38] sm:$0xff]
        %v5011 = vpack.c.bf16 %v5003, %v5003
        %v5012 = vpack.c.bf16 %v5004, %v5004
        %v5013 = vpack.c.bf16 %v5005, %v5005
        %v5014 = vpack.c.bf16 %v5006, %v5006
        %v5015 = vpack.c.bf16 %v5007, %v5007
        %v5016 = vpack.c.bf16 %v5008, %v5008
        %v5017 = vpack.c.bf16 %v5009, %v5009
        %v5018 = vpack.c.bf16 %v5010, %v5010
        %s5019 = scalar_lea.vmem %s3, 1536
        %v5020 = vld [vmem:[%s5019] sm:$0xf]
        %v5021 = vld [vmem:[%s5019 + $0x4] sm:$0xf]
        %v5022 = vld [vmem:[%s5019 + $0x8] sm:$0xf]
        %v5023 = vld [vmem:[%s5019 + $0xc] sm:$0xf]
        %v5024 = vld [vmem:[%s5019 + $0x10] sm:$0xf]
        %v5025 = vld [vmem:[%s5019 + $0x14] sm:$0xf]
        %v5026 = vld [vmem:[%s5019 + $0x18] sm:$0xf]
        %v5027 = vld [vmem:[%s5019 + $0x1c] sm:$0xf]
        %v5028 = vld [vmem:[%s5019 + $0x20] sm:$0xf]
        %v5029 = vld [vmem:[%s5019 + $0x24] sm:$0xf]
        %v5030 = vld [vmem:[%s5019 + $0x28] sm:$0xf]
        %v5031 = vld [vmem:[%s5019 + $0x2c] sm:$0xf]
        %v5032 = vld [vmem:[%s5019 + $0x30] sm:$0xf]
        %v5033 = vld [vmem:[%s5019 + $0x34] sm:$0xf]
        %v5034 = vld [vmem:[%s5019 + $0x38] sm:$0xf]
        %v5035 = vld [vmem:[%s5019 + $0x3c] sm:$0xf]
        %v5036 = vld [vmem:[%s5019 + $0x40] sm:$0xf]
        %v5037 = vld [vmem:[%s5019 + $0x44] sm:$0xf]
        %v5038 = vld [vmem:[%s5019 + $0x48] sm:$0xf]
        %v5039 = vld [vmem:[%s5019 + $0x4c] sm:$0xf]
        %v5040 = vld [vmem:[%s5019 + $0x50] sm:$0xf]
        %v5041 = vld [vmem:[%s5019 + $0x54] sm:$0xf]
        %v5042 = vld [vmem:[%s5019 + $0x58] sm:$0xf]
        %v5043 = vld [vmem:[%s5019 + $0x5c] sm:$0xf]
        %v5044 = vld [vmem:[%s5019 + $0x60] sm:$0xf]
        %v5045 = vld [vmem:[%s5019 + $0x64] sm:$0xf]
        %v5046 = vld [vmem:[%s5019 + $0x68] sm:$0xf]
        %v5047 = vld [vmem:[%s5019 + $0x6c] sm:$0xf]
        %v5048 = vld [vmem:[%s5019 + $0x70] sm:$0xf]
        %v5049 = vld [vmem:[%s5019 + $0x74] sm:$0xf]
        %v5050 = vld [vmem:[%s5019 + $0x78] sm:$0xf]
        %v5051 = vld [vmem:[%s5019 + $0x7c] sm:$0xf]
        %v5052 = vld [vmem:[%s5019 + $0x80] sm:$0xf]
        %v5053 = vld [vmem:[%s5019 + $0x84] sm:$0xf]
        %v5054 = vld [vmem:[%s5019 + $0x88] sm:$0xf]
        %v5055 = vld [vmem:[%s5019 + $0x8c] sm:$0xf]
        %v5056 = vld [vmem:[%s5019 + $0x90] sm:$0xf]
        %v5057 = vld [vmem:[%s5019 + $0x94] sm:$0xf]
        %v5058 = vld [vmem:[%s5019 + $0x98] sm:$0xf]
        %v5059 = vld [vmem:[%s5019 + $0x9c] sm:$0xf]
        %v5060 = vld [vmem:[%s5019 + $0xa0] sm:$0xf]
        %v5061 = vld [vmem:[%s5019 + $0xa4] sm:$0xf]
        %v5062 = vld [vmem:[%s5019 + $0xa8] sm:$0xf]
        %v5063 = vld [vmem:[%s5019 + $0xac] sm:$0xf]
        %v5064 = vld [vmem:[%s5019 + $0xb0] sm:$0xf]
        %v5065 = vld [vmem:[%s5019 + $0xb4] sm:$0xf]
        %v5066 = vld [vmem:[%s5019 + $0xb8] sm:$0xf]
        %v5067 = vld [vmem:[%s5019 + $0xbc] sm:$0xf]
        %v5068 = vld [vmem:[%s5019 + $0xc0] sm:$0xf]
        %v5069 = vld [vmem:[%s5019 + $0xc4] sm:$0xf]
        %v5070 = vld [vmem:[%s5019 + $0xc8] sm:$0xf]
        %v5071 = vld [vmem:[%s5019 + $0xcc] sm:$0xf]
        %v5072 = vld [vmem:[%s5019 + $0xd0] sm:$0xf]
        %v5073 = vld [vmem:[%s5019 + $0xd4] sm:$0xf]
        %v5074 = vld [vmem:[%s5019 + $0xd8] sm:$0xf]
        %v5075 = vld [vmem:[%s5019 + $0xdc] sm:$0xf]
        %v5076 = vld [vmem:[%s5019 + $0xe0] sm:$0xf]
        %v5077 = vld [vmem:[%s5019 + $0xe4] sm:$0xf]
        %v5078 = vld [vmem:[%s5019 + $0xe8] sm:$0xf]
        %v5079 = vld [vmem:[%s5019 + $0xec] sm:$0xf]
        %v5080 = vld [vmem:[%s5019 + $0xf0] sm:$0xf]
        %v5081 = vld [vmem:[%s5019 + $0xf4] sm:$0xf]
        %v5082 = vld [vmem:[%s5019 + $0xf8] sm:$0xf]
        %v5083 = vld [vmem:[%s5019 + $0xfc] sm:$0xf]
        %v5084 = vld [vmem:[%s5019 + $0x100] sm:$0xf]
        %v5085 = vld [vmem:[%s5019 + $0x104] sm:$0xf]
        %v5086 = vld [vmem:[%s5019 + $0x108] sm:$0xf]
        %v5087 = vld [vmem:[%s5019 + $0x10c] sm:$0xf]
        %v5088 = vld [vmem:[%s5019 + $0x110] sm:$0xf]
        %v5089 = vld [vmem:[%s5019 + $0x114] sm:$0xf]
        %v5090 = vld [vmem:[%s5019 + $0x118] sm:$0xf]
        %v5091 = vld [vmem:[%s5019 + $0x11c] sm:$0xf]
        %v5092 = vld [vmem:[%s5019 + $0x120] sm:$0xf]
        %v5093 = vld [vmem:[%s5019 + $0x124] sm:$0xf]
        %v5094 = vld [vmem:[%s5019 + $0x128] sm:$0xf]
        %v5095 = vld [vmem:[%s5019 + $0x12c] sm:$0xf]
        %v5096 = vld [vmem:[%s5019 + $0x130] sm:$0xf]
        %v5097 = vld [vmem:[%s5019 + $0x134] sm:$0xf]
        %v5098 = vld [vmem:[%s5019 + $0x138] sm:$0xf]
        %v5099 = vld [vmem:[%s5019 + $0x13c] sm:$0xf]
        %v5100 = vld [vmem:[%s5019 + $0x140] sm:$0xf]
        %v5101 = vld [vmem:[%s5019 + $0x144] sm:$0xf]
        %v5102 = vld [vmem:[%s5019 + $0x148] sm:$0xf]
        %v5103 = vld [vmem:[%s5019 + $0x14c] sm:$0xf]
        %v5104 = vld [vmem:[%s5019 + $0x150] sm:$0xf]
        %v5105 = vld [vmem:[%s5019 + $0x154] sm:$0xf]
        %v5106 = vld [vmem:[%s5019 + $0x158] sm:$0xf]
        %v5107 = vld [vmem:[%s5019 + $0x15c] sm:$0xf]
        %v5108 = vld [vmem:[%s5019 + $0x160] sm:$0xf]
        %v5109 = vld [vmem:[%s5019 + $0x164] sm:$0xf]
        %v5110 = vld [vmem:[%s5019 + $0x168] sm:$0xf]
        %v5111 = vld [vmem:[%s5019 + $0x16c] sm:$0xf]
        %v5112 = vld [vmem:[%s5019 + $0x170] sm:$0xf]
        %v5113 = vld [vmem:[%s5019 + $0x174] sm:$0xf]
        %v5114 = vld [vmem:[%s5019 + $0x178] sm:$0xf]
        %v5115 = vld [vmem:[%s5019 + $0x17c] sm:$0xf]
        %v5116 = vld [vmem:[%s5019 + $0x180] sm:$0xf]
        %v5117 = vld [vmem:[%s5019 + $0x184] sm:$0xf]
        %v5118 = vld [vmem:[%s5019 + $0x188] sm:$0xf]
        %v5119 = vld [vmem:[%s5019 + $0x18c] sm:$0xf]
        %v5120 = vld [vmem:[%s5019 + $0x190] sm:$0xf]
        %v5121 = vld [vmem:[%s5019 + $0x194] sm:$0xf]
        %v5122 = vld [vmem:[%s5019 + $0x198] sm:$0xf]
        %v5123 = vld [vmem:[%s5019 + $0x19c] sm:$0xf]
        %v5124 = vld [vmem:[%s5019 + $0x1a0] sm:$0xf]
        %v5125 = vld [vmem:[%s5019 + $0x1a4] sm:$0xf]
        %v5126 = vld [vmem:[%s5019 + $0x1a8] sm:$0xf]
        %v5127 = vld [vmem:[%s5019 + $0x1ac] sm:$0xf]
        %v5128 = vld [vmem:[%s5019 + $0x1b0] sm:$0xf]
        %v5129 = vld [vmem:[%s5019 + $0x1b4] sm:$0xf]
        %v5130 = vld [vmem:[%s5019 + $0x1b8] sm:$0xf]
        %v5131 = vld [vmem:[%s5019 + $0x1bc] sm:$0xf]
        %v5132 = vld [vmem:[%s5019 + $0x1c0] sm:$0xf]
        %v5133 = vld [vmem:[%s5019 + $0x1c4] sm:$0xf]
        %v5134 = vld [vmem:[%s5019 + $0x1c8] sm:$0xf]
        %v5135 = vld [vmem:[%s5019 + $0x1cc] sm:$0xf]
        %v5136 = vld [vmem:[%s5019 + $0x1d0] sm:$0xf]
        %v5137 = vld [vmem:[%s5019 + $0x1d4] sm:$0xf]
        %v5138 = vld [vmem:[%s5019 + $0x1d8] sm:$0xf]
        %v5139 = vld [vmem:[%s5019 + $0x1dc] sm:$0xf]
        %v5140 = vld [vmem:[%s5019 + $0x1e0] sm:$0xf]
        %v5141 = vld [vmem:[%s5019 + $0x1e4] sm:$0xf]
        %v5142 = vld [vmem:[%s5019 + $0x1e8] sm:$0xf]
        %v5143 = vld [vmem:[%s5019 + $0x1ec] sm:$0xf]
        %v5144 = vld [vmem:[%s5019 + $0x1f0] sm:$0xf]
        %v5145 = vld [vmem:[%s5019 + $0x1f4] sm:$0xf]
        %v5146 = vld [vmem:[%s5019 + $0x1f8] sm:$0xf]
        %v5147 = vld [vmem:[%s5019 + $0x1fc] sm:$0xf]
        %v5276 = vunpack.c.l.b16 %v5020
        %v5277 = vunpack.c.l.b16 %v5021
        %v5278 = vunpack.c.l.b16 %v5022
        %v5279 = vunpack.c.l.b16 %v5023
        %v5280 = vunpack.c.l.b16 %v5024
        %v5281 = vunpack.c.l.b16 %v5025
        %v5282 = vunpack.c.l.b16 %v5026
        %v5283 = vunpack.c.l.b16 %v5027
        %v5284 = vunpack.c.l.b16 %v5028
        %v5285 = vunpack.c.l.b16 %v5029
        %v5286 = vunpack.c.l.b16 %v5030
        %v5287 = vunpack.c.l.b16 %v5031
        %v5288 = vunpack.c.l.b16 %v5032
        %v5289 = vunpack.c.l.b16 %v5033
        %v5290 = vunpack.c.l.b16 %v5034
        %v5291 = vunpack.c.l.b16 %v5035
        %v5292 = vunpack.c.l.b16 %v5036
        %v5293 = vunpack.c.l.b16 %v5037
        %v5294 = vunpack.c.l.b16 %v5038
        %v5295 = vunpack.c.l.b16 %v5039
        %v5296 = vunpack.c.l.b16 %v5040
        %v5297 = vunpack.c.l.b16 %v5041
        %v5298 = vunpack.c.l.b16 %v5042
        %v5299 = vunpack.c.l.b16 %v5043
        %v5300 = vunpack.c.l.b16 %v5044
        %v5301 = vunpack.c.l.b16 %v5045
        %v5302 = vunpack.c.l.b16 %v5046
        %v5303 = vunpack.c.l.b16 %v5047
        %v5304 = vunpack.c.l.b16 %v5048
        %v5305 = vunpack.c.l.b16 %v5049
        %v5306 = vunpack.c.l.b16 %v5050
        %v5307 = vunpack.c.l.b16 %v5051
        %v5308 = vunpack.c.l.b16 %v5052
        %v5309 = vunpack.c.l.b16 %v5053
        %v5310 = vunpack.c.l.b16 %v5054
        %v5311 = vunpack.c.l.b16 %v5055
        %v5312 = vunpack.c.l.b16 %v5056
        %v5313 = vunpack.c.l.b16 %v5057
        %v5314 = vunpack.c.l.b16 %v5058
        %v5315 = vunpack.c.l.b16 %v5059
        %v5316 = vunpack.c.l.b16 %v5060
        %v5317 = vunpack.c.l.b16 %v5061
        %v5318 = vunpack.c.l.b16 %v5062
        %v5319 = vunpack.c.l.b16 %v5063
        %v5320 = vunpack.c.l.b16 %v5064
        %v5321 = vunpack.c.l.b16 %v5065
        %v5322 = vunpack.c.l.b16 %v5066
        %v5323 = vunpack.c.l.b16 %v5067
        %v5324 = vunpack.c.l.b16 %v5068
        %v5325 = vunpack.c.l.b16 %v5069
        %v5326 = vunpack.c.l.b16 %v5070
        %v5327 = vunpack.c.l.b16 %v5071
        %v5328 = vunpack.c.l.b16 %v5072
        %v5329 = vunpack.c.l.b16 %v5073
        %v5330 = vunpack.c.l.b16 %v5074
        %v5331 = vunpack.c.l.b16 %v5075
        %v5332 = vunpack.c.l.b16 %v5076
        %v5333 = vunpack.c.l.b16 %v5077
        %v5334 = vunpack.c.l.b16 %v5078
        %v5335 = vunpack.c.l.b16 %v5079
        %v5336 = vunpack.c.l.b16 %v5080
        %v5337 = vunpack.c.l.b16 %v5081
        %v5338 = vunpack.c.l.b16 %v5082
        %v5339 = vunpack.c.l.b16 %v5083
        %v5340 = vunpack.c.l.b16 %v5084
        %v5341 = vunpack.c.l.b16 %v5085
        %v5342 = vunpack.c.l.b16 %v5086
        %v5343 = vunpack.c.l.b16 %v5087
        %v5344 = vunpack.c.l.b16 %v5088
        %v5345 = vunpack.c.l.b16 %v5089
        %v5346 = vunpack.c.l.b16 %v5090
        %v5347 = vunpack.c.l.b16 %v5091
        %v5348 = vunpack.c.l.b16 %v5092
        %v5349 = vunpack.c.l.b16 %v5093
        %v5350 = vunpack.c.l.b16 %v5094
        %v5351 = vunpack.c.l.b16 %v5095
        %v5352 = vunpack.c.l.b16 %v5096
        %v5353 = vunpack.c.l.b16 %v5097
        %v5354 = vunpack.c.l.b16 %v5098
        %v5355 = vunpack.c.l.b16 %v5099
        %v5356 = vunpack.c.l.b16 %v5100
        %v5357 = vunpack.c.l.b16 %v5101
        %v5358 = vunpack.c.l.b16 %v5102
        %v5359 = vunpack.c.l.b16 %v5103
        %v5360 = vunpack.c.l.b16 %v5104
        %v5361 = vunpack.c.l.b16 %v5105
        %v5362 = vunpack.c.l.b16 %v5106
        %v5363 = vunpack.c.l.b16 %v5107
        %v5364 = vunpack.c.l.b16 %v5108
        %v5365 = vunpack.c.l.b16 %v5109
        %v5366 = vunpack.c.l.b16 %v5110
        %v5367 = vunpack.c.l.b16 %v5111
        %v5368 = vunpack.c.l.b16 %v5112
        %v5369 = vunpack.c.l.b16 %v5113
        %v5370 = vunpack.c.l.b16 %v5114
        %v5371 = vunpack.c.l.b16 %v5115
        %v5372 = vunpack.c.l.b16 %v5116
        %v5373 = vunpack.c.l.b16 %v5117
        %v5374 = vunpack.c.l.b16 %v5118
        %v5375 = vunpack.c.l.b16 %v5119
        %v5376 = vunpack.c.l.b16 %v5120
        %v5377 = vunpack.c.l.b16 %v5121
        %v5378 = vunpack.c.l.b16 %v5122
        %v5379 = vunpack.c.l.b16 %v5123
        %v5380 = vunpack.c.l.b16 %v5124
        %v5381 = vunpack.c.l.b16 %v5125
        %v5382 = vunpack.c.l.b16 %v5126
        %v5383 = vunpack.c.l.b16 %v5127
        %v5384 = vunpack.c.l.b16 %v5128
        %v5385 = vunpack.c.l.b16 %v5129
        %v5386 = vunpack.c.l.b16 %v5130
        %v5387 = vunpack.c.l.b16 %v5131
        %v5388 = vunpack.c.l.b16 %v5132
        %v5389 = vunpack.c.l.b16 %v5133
        %v5390 = vunpack.c.l.b16 %v5134
        %v5391 = vunpack.c.l.b16 %v5135
        %v5392 = vunpack.c.l.b16 %v5136
        %v5393 = vunpack.c.l.b16 %v5137
        %v5394 = vunpack.c.l.b16 %v5138
        %v5395 = vunpack.c.l.b16 %v5139
        %v5396 = vunpack.c.l.b16 %v5140
        %v5397 = vunpack.c.l.b16 %v5141
        %v5398 = vunpack.c.l.b16 %v5142
        %v5399 = vunpack.c.l.b16 %v5143
        %v5400 = vunpack.c.l.b16 %v5144
        %v5401 = vunpack.c.l.b16 %v5145
        %v5402 = vunpack.c.l.b16 %v5146
        %v5403 = vunpack.c.l.b16 %v5147
        %v5404 = vpack.c.b16 %v5277, %v5276
        %v5405 = vpack.c.b16 %v5279, %v5278
        %v5406 = vpack.c.b16 %v5281, %v5280
        %v5407 = vpack.c.b16 %v5283, %v5282
        %v5408 = vpack.c.b16 %v5285, %v5284
        %v5409 = vpack.c.b16 %v5287, %v5286
        %v5410 = vpack.c.b16 %v5289, %v5288
        %v5411 = vpack.c.b16 %v5291, %v5290
        %v5412 = vpack.c.b16 %v5293, %v5292
        %v5413 = vpack.c.b16 %v5295, %v5294
        %v5414 = vpack.c.b16 %v5297, %v5296
        %v5415 = vpack.c.b16 %v5299, %v5298
        %v5416 = vpack.c.b16 %v5301, %v5300
        %v5417 = vpack.c.b16 %v5303, %v5302
        %v5418 = vpack.c.b16 %v5305, %v5304
        %v5419 = vpack.c.b16 %v5307, %v5306
        %v5420 = vpack.c.b16 %v5309, %v5308
        %v5421 = vpack.c.b16 %v5311, %v5310
        %v5422 = vpack.c.b16 %v5313, %v5312
        %v5423 = vpack.c.b16 %v5315, %v5314
        %v5424 = vpack.c.b16 %v5317, %v5316
        %v5425 = vpack.c.b16 %v5319, %v5318
        %v5426 = vpack.c.b16 %v5321, %v5320
        %v5427 = vpack.c.b16 %v5323, %v5322
        %v5428 = vpack.c.b16 %v5325, %v5324
        %v5429 = vpack.c.b16 %v5327, %v5326
        %v5430 = vpack.c.b16 %v5329, %v5328
        %v5431 = vpack.c.b16 %v5331, %v5330
        %v5432 = vpack.c.b16 %v5333, %v5332
        %v5433 = vpack.c.b16 %v5335, %v5334
        %v5434 = vpack.c.b16 %v5337, %v5336
        %v5435 = vpack.c.b16 %v5339, %v5338
        %v5436 = vpack.c.b16 %v5341, %v5340
        %v5437 = vpack.c.b16 %v5343, %v5342
        %v5438 = vpack.c.b16 %v5345, %v5344
        %v5439 = vpack.c.b16 %v5347, %v5346
        %v5440 = vpack.c.b16 %v5349, %v5348
        %v5441 = vpack.c.b16 %v5351, %v5350
        %v5442 = vpack.c.b16 %v5353, %v5352
        %v5443 = vpack.c.b16 %v5355, %v5354
        %v5444 = vpack.c.b16 %v5357, %v5356
        %v5445 = vpack.c.b16 %v5359, %v5358
        %v5446 = vpack.c.b16 %v5361, %v5360
        %v5447 = vpack.c.b16 %v5363, %v5362
        %v5448 = vpack.c.b16 %v5365, %v5364
        %v5449 = vpack.c.b16 %v5367, %v5366
        %v5450 = vpack.c.b16 %v5369, %v5368
        %v5451 = vpack.c.b16 %v5371, %v5370
        %v5452 = vpack.c.b16 %v5373, %v5372
        %v5453 = vpack.c.b16 %v5375, %v5374
        %v5454 = vpack.c.b16 %v5377, %v5376
        %v5455 = vpack.c.b16 %v5379, %v5378
        %v5456 = vpack.c.b16 %v5381, %v5380
        %v5457 = vpack.c.b16 %v5383, %v5382
        %v5458 = vpack.c.b16 %v5385, %v5384
        %v5459 = vpack.c.b16 %v5387, %v5386
        %v5460 = vpack.c.b16 %v5389, %v5388
        %v5461 = vpack.c.b16 %v5391, %v5390
        %v5462 = vpack.c.b16 %v5393, %v5392
        %v5463 = vpack.c.b16 %v5395, %v5394
        %v5464 = vpack.c.b16 %v5397, %v5396
        %v5465 = vpack.c.b16 %v5399, %v5398
        %v5466 = vpack.c.b16 %v5401, %v5400
        %v5467 = vpack.c.b16 %v5403, %v5402
        %5532 = vmatprep.subr.bf16.mxu0 0
        %5533 = vmatpush1.bf16.msra.mxu0 %v5404
        %5534 = vmatprep.subr.bf16.mxu0 0
        %5535 = vmatpush1.bf16.msra.mxu0 %v5405
        %5536 = vmatprep.subr.bf16.mxu0 0
        %5537 = vmatpush1.bf16.msra.mxu0 %v5406
        %5538 = vmatprep.subr.bf16.mxu0 0
        %5539 = vmatpush1.bf16.msra.mxu0 %v5407
        %5540 = vmatprep.subr.bf16.mxu0 0
        %5541 = vmatpush1.bf16.msra.mxu0 %v5408
        %5542 = vmatprep.subr.bf16.mxu0 0
        %5543 = vmatpush1.bf16.msra.mxu0 %v5409
        %5544 = vmatprep.subr.bf16.mxu0 0
        %5545 = vmatpush1.bf16.msra.mxu0 %v5410
        %5546 = vmatprep.subr.bf16.mxu0 0
        %5547 = vmatpush1.bf16.msra.mxu0 %v5411
        %5548 = vmatprep.subr.bf16.mxu0 0
        %5549 = vmatpush1.bf16.msra.mxu0 %v5412
        %5550 = vmatprep.subr.bf16.mxu0 0
        %5551 = vmatpush1.bf16.msra.mxu0 %v5413
        %5552 = vmatprep.subr.bf16.mxu0 0
        %5553 = vmatpush1.bf16.msra.mxu0 %v5414
        %5554 = vmatprep.subr.bf16.mxu0 0
        %5555 = vmatpush1.bf16.msra.mxu0 %v5415
        %5556 = vmatprep.subr.bf16.mxu0 0
        %5557 = vmatpush1.bf16.msra.mxu0 %v5416
        %5558 = vmatprep.subr.bf16.mxu0 0
        %5559 = vmatpush1.bf16.msra.mxu0 %v5417
        %5560 = vmatprep.subr.bf16.mxu0 0
        %5561 = vmatpush1.bf16.msra.mxu0 %v5418
        %5562 = vmatprep.subr.bf16.mxu0 0
        %5563 = vmatpush1.bf16.msra.mxu0 %v5419
        %5564 = vmatprep.mubr.bf16.mxu0 %v5012
        %5565 = vmatmul.mubr.bf16.gmra.mrb[0].mxu0 %v5011
        %v5566 = vpop.f32.mrb[0].mxu0
        %v5567 = vadd.f32 0.0, %v5566
        %v5568 = vpop.f32.mrb[0].mxu0
        %v5569 = vpop.f32.mrb[0].mxu0
        %v5570 = vpop.f32.mrb[0].mxu0
        %5571 = vdwg.mxu0
        %5572 = vmatprep.subr.bf16.mxu0 0
        %5573 = vmatpush1.bf16.msra.mxu0 %v5420
        %5574 = vmatprep.subr.bf16.mxu0 0
        %5575 = vmatpush1.bf16.msra.mxu0 %v5421
        %5576 = vmatprep.subr.bf16.mxu0 0
        %5577 = vmatpush1.bf16.msra.mxu0 %v5422
        %5578 = vmatprep.subr.bf16.mxu0 0
        %5579 = vmatpush1.bf16.msra.mxu0 %v5423
        %5580 = vmatprep.subr.bf16.mxu0 0
        %5581 = vmatpush1.bf16.msra.mxu0 %v5424
        %5582 = vmatprep.subr.bf16.mxu0 0
        %5583 = vmatpush1.bf16.msra.mxu0 %v5425
        %5584 = vmatprep.subr.bf16.mxu0 0
        %5585 = vmatpush1.bf16.msra.mxu0 %v5426
        %5586 = vmatprep.subr.bf16.mxu0 0
        %5587 = vmatpush1.bf16.msra.mxu0 %v5427
        %5588 = vmatprep.subr.bf16.mxu0 0
        %5589 = vmatpush1.bf16.msra.mxu0 %v5428
        %5590 = vmatprep.subr.bf16.mxu0 0
        %5591 = vmatpush1.bf16.msra.mxu0 %v5429
        %5592 = vmatprep.subr.bf16.mxu0 0
        %5593 = vmatpush1.bf16.msra.mxu0 %v5430
        %5594 = vmatprep.subr.bf16.mxu0 0
        %5595 = vmatpush1.bf16.msra.mxu0 %v5431
        %5596 = vmatprep.subr.bf16.mxu0 0
        %5597 = vmatpush1.bf16.msra.mxu0 %v5432
        %5598 = vmatprep.subr.bf16.mxu0 0
        %5599 = vmatpush1.bf16.msra.mxu0 %v5433
        %5600 = vmatprep.subr.bf16.mxu0 0
        %5601 = vmatpush1.bf16.msra.mxu0 %v5434
        %5602 = vmatprep.subr.bf16.mxu0 0
        %5603 = vmatpush1.bf16.msra.mxu0 %v5435
        %5604 = vmatprep.mubr.bf16.mxu0 %v5014
        %5605 = vmatmul.mubr.bf16.gmra.mrb[0].mxu0 %v5013
        %v5606 = vpop.f32.mrb[0].mxu0
        %v5607 = vadd.f32 %v5567, %v5606
        %v5608 = vpop.f32.mrb[0].mxu0
        %v5609 = vpop.f32.mrb[0].mxu0
        %v5610 = vpop.f32.mrb[0].mxu0
        %5611 = vdwg.mxu0
        %5612 = vmatprep.subr.bf16.mxu0 0
        %5613 = vmatpush1.bf16.msra.mxu0 %v5436
        %5614 = vmatprep.subr.bf16.mxu0 0
        %5615 = vmatpush1.bf16.msra.mxu0 %v5437
        %5616 = vmatprep.subr.bf16.mxu0 0
        %5617 = vmatpush1.bf16.msra.mxu0 %v5438
        %5618 = vmatprep.subr.bf16.mxu0 0
        %5619 = vmatpush1.bf16.msra.mxu0 %v5439
        %5620 = vmatprep.subr.bf16.mxu0 0
        %5621 = vmatpush1.bf16.msra.mxu0 %v5440
        %5622 = vmatprep.subr.bf16.mxu0 0
        %5623 = vmatpush1.bf16.msra.mxu0 %v5441
        %5624 = vmatprep.subr.bf16.mxu0 0
        %5625 = vmatpush1.bf16.msra.mxu0 %v5442
        %5626 = vmatprep.subr.bf16.mxu0 0
        %5627 = vmatpush1.bf16.msra.mxu0 %v5443
        %5628 = vmatprep.subr.bf16.mxu0 0
        %5629 = vmatpush1.bf16.msra.mxu0 %v5444
        %5630 = vmatprep.subr.bf16.mxu0 0
        %5631 = vmatpush1.bf16.msra.mxu0 %v5445
        %5632 = vmatprep.subr.bf16.mxu0 0
        %5633 = vmatpush1.bf16.msra.mxu0 %v5446
        %5634 = vmatprep.subr.bf16.mxu0 0
        %5635 = vmatpush1.bf16.msra.mxu0 %v5447
        %5636 = vmatprep.subr.bf16.mxu0 0
        %5637 = vmatpush1.bf16.msra.mxu0 %v5448
        %5638 = vmatprep.subr.bf16.mxu0 0
        %5639 = vmatpush1.bf16.msra.mxu0 %v5449
        %5640 = vmatprep.subr.bf16.mxu0 0
        %5641 = vmatpush1.bf16.msra.mxu0 %v5450
        %5642 = vmatprep.subr.bf16.mxu0 0
        %5643 = vmatpush1.bf16.msra.mxu0 %v5451
        %5644 = vmatprep.mubr.bf16.mxu0 %v5016
        %5645 = vmatmul.mubr.bf16.gmra.mrb[0].mxu0 %v5015
        %v5646 = vpop.f32.mrb[0].mxu0
        %v5647 = vadd.f32 %v5607, %v5646
        %v5648 = vpop.f32.mrb[0].mxu0
        %v5649 = vpop.f32.mrb[0].mxu0
        %v5650 = vpop.f32.mrb[0].mxu0
        %5651 = vdwg.mxu0
        %5652 = vmatprep.subr.bf16.mxu0 0
        %5653 = vmatpush1.bf16.msra.mxu0 %v5452
        %5654 = vmatprep.subr.bf16.mxu0 0
        %5655 = vmatpush1.bf16.msra.mxu0 %v5453
        %5656 = vmatprep.subr.bf16.mxu0 0
        %5657 = vmatpush1.bf16.msra.mxu0 %v5454
        %5658 = vmatprep.subr.bf16.mxu0 0
        %5659 = vmatpush1.bf16.msra.mxu0 %v5455
        %5660 = vmatprep.subr.bf16.mxu0 0
        %5661 = vmatpush1.bf16.msra.mxu0 %v5456
        %5662 = vmatprep.subr.bf16.mxu0 0
        %5663 = vmatpush1.bf16.msra.mxu0 %v5457
        %5664 = vmatprep.subr.bf16.mxu0 0
        %5665 = vmatpush1.bf16.msra.mxu0 %v5458
        %5666 = vmatprep.subr.bf16.mxu0 0
        %5667 = vmatpush1.bf16.msra.mxu0 %v5459
        %5668 = vmatprep.subr.bf16.mxu0 0
        %5669 = vmatpush1.bf16.msra.mxu0 %v5460
        %5670 = vmatprep.subr.bf16.mxu0 0
        %5671 = vmatpush1.bf16.msra.mxu0 %v5461
        %5672 = vmatprep.subr.bf16.mxu0 0
        %5673 = vmatpush1.bf16.msra.mxu0 %v5462
        %5674 = vmatprep.subr.bf16.mxu0 0
        %5675 = vmatpush1.bf16.msra.mxu0 %v5463
        %5676 = vmatprep.subr.bf16.mxu0 0
        %5677 = vmatpush1.bf16.msra.mxu0 %v5464
        %5678 = vmatprep.subr.bf16.mxu0 0
        %5679 = vmatpush1.bf16.msra.mxu0 %v5465
        %5680 = vmatprep.subr.bf16.mxu0 0
        %5681 = vmatpush1.bf16.msra.mxu0 %v5466
        %5682 = vmatprep.subr.bf16.mxu0 0
        %5683 = vmatpush1.bf16.msra.mxu0 %v5467
        %5684 = vmatprep.mubr.bf16.mxu0 %v5018
        %5685 = vmatmul.mubr.bf16.gmra.mrb[0].mxu0 %v5017
        %v5686 = vpop.f32.mrb[0].mxu0
        %v5687 = vadd.f32 %v5647, %v5686
        %v5688 = vpop.f32.mrb[0].mxu0
        %v5689 = vpop.f32.mrb[0].mxu0
        %v5690 = vpop.f32.mrb[0].mxu0
        %5691 = vdwg.mxu0
        %v5692 = vadd.f32 %v5001, %v5687
        %s5693 = scalar_lea.vmem [#allocation2], 256
        %v5694 = vld [vmem:[%s5693] sm:$0xff]
        %v5695 = vld [vmem:[%s5693 + $0x8] sm:$0xff]
        %v5696 = vld [vmem:[%s5693 + $0x10] sm:$0xff]
        %v5697 = vld [vmem:[%s5693 + $0x18] sm:$0xff]
        %v5698 = vld [vmem:[%s5693 + $0x20] sm:$0xff]
        %v5699 = vld [vmem:[%s5693 + $0x28] sm:$0xff]
        %v5700 = vld [vmem:[%s5693 + $0x30] sm:$0xff]
        %v5701 = vld [vmem:[%s5693 + $0x38] sm:$0xff]
        %v5702 = vpack.c.bf16 %v5694, %v5694
        %v5703 = vpack.c.bf16 %v5695, %v5695
        %v5704 = vpack.c.bf16 %v5696, %v5696
        %v5705 = vpack.c.bf16 %v5697, %v5697
        %v5706 = vpack.c.bf16 %v5698, %v5698
        %v5707 = vpack.c.bf16 %v5699, %v5699
        %v5708 = vpack.c.bf16 %v5700, %v5700
        %v5709 = vpack.c.bf16 %v5701, %v5701
        %s5710 = scalar_lea.vmem %s3, 2048
        %v5711 = vld [vmem:[%s5710] sm:$0xf]
        %v5712 = vld [vmem:[%s5710 + $0x4] sm:$0xf]
        %v5713 = vld [vmem:[%s5710 + $0x8] sm:$0xf]
        %v5714 = vld [vmem:[%s5710 + $0xc] sm:$0xf]
        %v5715 = vld [vmem:[%s5710 + $0x10] sm:$0xf]
        %v5716 = vld [vmem:[%s5710 + $0x14] sm:$0xf]
        %v5717 = vld [vmem:[%s5710 + $0x18] sm:$0xf]
        %v5718 = vld [vmem:[%s5710 + $0x1c] sm:$0xf]
        %v5719 = vld [vmem:[%s5710 + $0x20] sm:$0xf]
        %v5720 = vld [vmem:[%s5710 + $0x24] sm:$0xf]
        %v5721 = vld [vmem:[%s5710 + $0x28] sm:$0xf]
        %v5722 = vld [vmem:[%s5710 + $0x2c] sm:$0xf]
        %v5723 = vld [vmem:[%s5710 + $0x30] sm:$0xf]
        %v5724 = vld [vmem:[%s5710 + $0x34] sm:$0xf]
        %v5725 = vld [vmem:[%s5710 + $0x38] sm:$0xf]
        %v5726 = vld [vmem:[%s5710 + $0x3c] sm:$0xf]
        %v5727 = vld [vmem:[%s5710 + $0x40] sm:$0xf]
        %v5728 = vld [vmem:[%s5710 + $0x44] sm:$0xf]
        %v5729 = vld [vmem:[%s5710 + $0x48] sm:$0xf]
        %v5730 = vld [vmem:[%s5710 + $0x4c] sm:$0xf]
        %v5731 = vld [vmem:[%s5710 + $0x50] sm:$0xf]
        %v5732 = vld [vmem:[%s5710 + $0x54] sm:$0xf]
        %v5733 = vld [vmem:[%s5710 + $0x58] sm:$0xf]
        %v5734 = vld [vmem:[%s5710 + $0x5c] sm:$0xf]
        %v5735 = vld [vmem:[%s5710 + $0x60] sm:$0xf]
        %v5736 = vld [vmem:[%s5710 + $0x64] sm:$0xf]
        %v5737 = vld [vmem:[%s5710 + $0x68] sm:$0xf]
        %v5738 = vld [vmem:[%s5710 + $0x6c] sm:$0xf]
        %v5739 = vld [vmem:[%s5710 + $0x70] sm:$0xf]
        %v5740 = vld [vmem:[%s5710 + $0x74] sm:$0xf]
        %v5741 = vld [vmem:[%s5710 + $0x78] sm:$0xf]
        %v5742 = vld [vmem:[%s5710 + $0x7c] sm:$0xf]
        %v5743 = vld [vmem:[%s5710 + $0x80] sm:$0xf]
        %v5744 = vld [vmem:[%s5710 + $0x84] sm:$0xf]
        %v5745 = vld [vmem:[%s5710 + $0x88] sm:$0xf]
        %v5746 = vld [vmem:[%s5710 + $0x8c] sm:$0xf]
        %v5747 = vld [vmem:[%s5710 + $0x90] sm:$0xf]
        %v5748 = vld [vmem:[%s5710 + $0x94] sm:$0xf]
        %v5749 = vld [vmem:[%s5710 + $0x98] sm:$0xf]
        %v5750 = vld [vmem:[%s5710 + $0x9c] sm:$0xf]
        %v5751 = vld [vmem:[%s5710 + $0xa0] sm:$0xf]
        %v5752 = vld [vmem:[%s5710 + $0xa4] sm:$0xf]
        %v5753 = vld [vmem:[%s5710 + $0xa8] sm:$0xf]
        %v5754 = vld [vmem:[%s5710 + $0xac] sm:$0xf]
        %v5755 = vld [vmem:[%s5710 + $0xb0] sm:$0xf]
        %v5756 = vld [vmem:[%s5710 + $0xb4] sm:$0xf]
        %v5757 = vld [vmem:[%s5710 + $0xb8] sm:$0xf]
        %v5758 = vld [vmem:[%s5710 + $0xbc] sm:$0xf]
        %v5759 = vld [vmem:[%s5710 + $0xc0] sm:$0xf]
        %v5760 = vld [vmem:[%s5710 + $0xc4] sm:$0xf]
        %v5761 = vld [vmem:[%s5710 + $0xc8] sm:$0xf]
        %v5762 = vld [vmem:[%s5710 + $0xcc] sm:$0xf]
        %v5763 = vld [vmem:[%s5710 + $0xd0] sm:$0xf]
        %v5764 = vld [vmem:[%s5710 + $0xd4] sm:$0xf]
        %v5765 = vld [vmem:[%s5710 + $0xd8] sm:$0xf]
        %v5766 = vld [vmem:[%s5710 + $0xdc] sm:$0xf]
        %v5767 = vld [vmem:[%s5710 + $0xe0] sm:$0xf]
        %v5768 = vld [vmem:[%s5710 + $0xe4] sm:$0xf]
        %v5769 = vld [vmem:[%s5710 + $0xe8] sm:$0xf]
        %v5770 = vld [vmem:[%s5710 + $0xec] sm:$0xf]
        %v5771 = vld [vmem:[%s5710 + $0xf0] sm:$0xf]
        %v5772 = vld [vmem:[%s5710 + $0xf4] sm:$0xf]
        %v5773 = vld [vmem:[%s5710 + $0xf8] sm:$0xf]
        %v5774 = vld [vmem:[%s5710 + $0xfc] sm:$0xf]
        %v5775 = vld [vmem:[%s5710 + $0x100] sm:$0xf]
        %v5776 = vld [vmem:[%s5710 + $0x104] sm:$0xf]
        %v5777 = vld [vmem:[%s5710 + $0x108] sm:$0xf]
        %v5778 = vld [vmem:[%s5710 + $0x10c] sm:$0xf]
        %v5779 = vld [vmem:[%s5710 + $0x110] sm:$0xf]
        %v5780 = vld [vmem:[%s5710 + $0x114] sm:$0xf]
        %v5781 = vld [vmem:[%s5710 + $0x118] sm:$0xf]
        %v5782 = vld [vmem:[%s5710 + $0x11c] sm:$0xf]
        %v5783 = vld [vmem:[%s5710 + $0x120] sm:$0xf]
        %v5784 = vld [vmem:[%s5710 + $0x124] sm:$0xf]
        %v5785 = vld [vmem:[%s5710 + $0x128] sm:$0xf]
        %v5786 = vld [vmem:[%s5710 + $0x12c] sm:$0xf]
        %v5787 = vld [vmem:[%s5710 + $0x130] sm:$0xf]
        %v5788 = vld [vmem:[%s5710 + $0x134] sm:$0xf]
        %v5789 = vld [vmem:[%s5710 + $0x138] sm:$0xf]
        %v5790 = vld [vmem:[%s5710 + $0x13c] sm:$0xf]
        %v5791 = vld [vmem:[%s5710 + $0x140] sm:$0xf]
        %v5792 = vld [vmem:[%s5710 + $0x144] sm:$0xf]
        %v5793 = vld [vmem:[%s5710 + $0x148] sm:$0xf]
        %v5794 = vld [vmem:[%s5710 + $0x14c] sm:$0xf]
        %v5795 = vld [vmem:[%s5710 + $0x150] sm:$0xf]
        %v5796 = vld [vmem:[%s5710 + $0x154] sm:$0xf]
        %v5797 = vld [vmem:[%s5710 + $0x158] sm:$0xf]
        %v5798 = vld [vmem:[%s5710 + $0x15c] sm:$0xf]
        %v5799 = vld [vmem:[%s5710 + $0x160] sm:$0xf]
        %v5800 = vld [vmem:[%s5710 + $0x164] sm:$0xf]
        %v5801 = vld [vmem:[%s5710 + $0x168] sm:$0xf]
        %v5802 = vld [vmem:[%s5710 + $0x16c] sm:$0xf]
        %v5803 = vld [vmem:[%s5710 + $0x170] sm:$0xf]
        %v5804 = vld [vmem:[%s5710 + $0x174] sm:$0xf]
        %v5805 = vld [vmem:[%s5710 + $0x178] sm:$0xf]
        %v5806 = vld [vmem:[%s5710 + $0x17c] sm:$0xf]
        %v5807 = vld [vmem:[%s5710 + $0x180] sm:$0xf]
        %v5808 = vld [vmem:[%s5710 + $0x184] sm:$0xf]
        %v5809 = vld [vmem:[%s5710 + $0x188] sm:$0xf]
        %v5810 = vld [vmem:[%s5710 + $0x18c] sm:$0xf]
        %v5811 = vld [vmem:[%s5710 + $0x190] sm:$0xf]
        %v5812 = vld [vmem:[%s5710 + $0x194] sm:$0xf]
        %v5813 = vld [vmem:[%s5710 + $0x198] sm:$0xf]
        %v5814 = vld [vmem:[%s5710 + $0x19c] sm:$0xf]
        %v5815 = vld [vmem:[%s5710 + $0x1a0] sm:$0xf]
        %v5816 = vld [vmem:[%s5710 + $0x1a4] sm:$0xf]
        %v5817 = vld [vmem:[%s5710 + $0x1a8] sm:$0xf]
        %v5818 = vld [vmem:[%s5710 + $0x1ac] sm:$0xf]
        %v5819 = vld [vmem:[%s5710 + $0x1b0] sm:$0xf]
        %v5820 = vld [vmem:[%s5710 + $0x1b4] sm:$0xf]
        %v5821 = vld [vmem:[%s5710 + $0x1b8] sm:$0xf]
        %v5822 = vld [vmem:[%s5710 + $0x1bc] sm:$0xf]
        %v5823 = vld [vmem:[%s5710 + $0x1c0] sm:$0xf]
        %v5824 = vld [vmem:[%s5710 + $0x1c4] sm:$0xf]
        %v5825 = vld [vmem:[%s5710 + $0x1c8] sm:$0xf]
        %v5826 = vld [vmem:[%s5710 + $0x1cc] sm:$0xf]
        %v5827 = vld [vmem:[%s5710 + $0x1d0] sm:$0xf]
        %v5828 = vld [vmem:[%s5710 + $0x1d4] sm:$0xf]
        %v5829 = vld [vmem:[%s5710 + $0x1d8] sm:$0xf]
        %v5830 = vld [vmem:[%s5710 + $0x1dc] sm:$0xf]
        %v5831 = vld [vmem:[%s5710 + $0x1e0] sm:$0xf]
        %v5832 = vld [vmem:[%s5710 + $0x1e4] sm:$0xf]
        %v5833 = vld [vmem:[%s5710 + $0x1e8] sm:$0xf]
        %v5834 = vld [vmem:[%s5710 + $0x1ec] sm:$0xf]
        %v5835 = vld [vmem:[%s5710 + $0x1f0] sm:$0xf]
        %v5836 = vld [vmem:[%s5710 + $0x1f4] sm:$0xf]
        %v5837 = vld [vmem:[%s5710 + $0x1f8] sm:$0xf]
        %v5838 = vld [vmem:[%s5710 + $0x1fc] sm:$0xf]
        %v5967 = vunpack.c.l.b16 %v5711
        %v5968 = vunpack.c.l.b16 %v5712
        %v5969 = vunpack.c.l.b16 %v5713
        %v5970 = vunpack.c.l.b16 %v5714
        %v5971 = vunpack.c.l.b16 %v5715
        %v5972 = vunpack.c.l.b16 %v5716
        %v5973 = vunpack.c.l.b16 %v5717
        %v5974 = vunpack.c.l.b16 %v5718
        %v5975 = vunpack.c.l.b16 %v5719
        %v5976 = vunpack.c.l.b16 %v5720
        %v5977 = vunpack.c.l.b16 %v5721
        %v5978 = vunpack.c.l.b16 %v5722
        %v5979 = vunpack.c.l.b16 %v5723
        %v5980 = vunpack.c.l.b16 %v5724
        %v5981 = vunpack.c.l.b16 %v5725
        %v5982 = vunpack.c.l.b16 %v5726
        %v5983 = vunpack.c.l.b16 %v5727
        %v5984 = vunpack.c.l.b16 %v5728
        %v5985 = vunpack.c.l.b16 %v5729
        %v5986 = vunpack.c.l.b16 %v5730
        %v5987 = vunpack.c.l.b16 %v5731
        %v5988 = vunpack.c.l.b16 %v5732
        %v5989 = vunpack.c.l.b16 %v5733
        %v5990 = vunpack.c.l.b16 %v5734
        %v5991 = vunpack.c.l.b16 %v5735
        %v5992 = vunpack.c.l.b16 %v5736
        %v5993 = vunpack.c.l.b16 %v5737
        %v5994 = vunpack.c.l.b16 %v5738
        %v5995 = vunpack.c.l.b16 %v5739
        %v5996 = vunpack.c.l.b16 %v5740
        %v5997 = vunpack.c.l.b16 %v5741
        %v5998 = vunpack.c.l.b16 %v5742
        %v5999 = vunpack.c.l.b16 %v5743
        %v6000 = vunpack.c.l.b16 %v5744
        %v6001 = vunpack.c.l.b16 %v5745
        %v6002 = vunpack.c.l.b16 %v5746
        %v6003 = vunpack.c.l.b16 %v5747
        %v6004 = vunpack.c.l.b16 %v5748
        %v6005 = vunpack.c.l.b16 %v5749
        %v6006 = vunpack.c.l.b16 %v5750
        %v6007 = vunpack.c.l.b16 %v5751
        %v6008 = vunpack.c.l.b16 %v5752
        %v6009 = vunpack.c.l.b16 %v5753
        %v6010 = vunpack.c.l.b16 %v5754
        %v6011 = vunpack.c.l.b16 %v5755
        %v6012 = vunpack.c.l.b16 %v5756
        %v6013 = vunpack.c.l.b16 %v5757
        %v6014 = vunpack.c.l.b16 %v5758
        %v6015 = vunpack.c.l.b16 %v5759
        %v6016 = vunpack.c.l.b16 %v5760
        %v6017 = vunpack.c.l.b16 %v5761
        %v6018 = vunpack.c.l.b16 %v5762
        %v6019 = vunpack.c.l.b16 %v5763
        %v6020 = vunpack.c.l.b16 %v5764
        %v6021 = vunpack.c.l.b16 %v5765
        %v6022 = vunpack.c.l.b16 %v5766
        %v6023 = vunpack.c.l.b16 %v5767
        %v6024 = vunpack.c.l.b16 %v5768
        %v6025 = vunpack.c.l.b16 %v5769
        %v6026 = vunpack.c.l.b16 %v5770
        %v6027 = vunpack.c.l.b16 %v5771
        %v6028 = vunpack.c.l.b16 %v5772
        %v6029 = vunpack.c.l.b16 %v5773
        %v6030 = vunpack.c.l.b16 %v5774
        %v6031 = vunpack.c.l.b16 %v5775
        %v6032 = vunpack.c.l.b16 %v5776
        %v6033 = vunpack.c.l.b16 %v5777
        %v6034 = vunpack.c.l.b16 %v5778
        %v6035 = vunpack.c.l.b16 %v5779
        %v6036 = vunpack.c.l.b16 %v5780
        %v6037 = vunpack.c.l.b16 %v5781
        %v6038 = vunpack.c.l.b16 %v5782
        %v6039 = vunpack.c.l.b16 %v5783
        %v6040 = vunpack.c.l.b16 %v5784
        %v6041 = vunpack.c.l.b16 %v5785
        %v6042 = vunpack.c.l.b16 %v5786
        %v6043 = vunpack.c.l.b16 %v5787
        %v6044 = vunpack.c.l.b16 %v5788
        %v6045 = vunpack.c.l.b16 %v5789
        %v6046 = vunpack.c.l.b16 %v5790
        %v6047 = vunpack.c.l.b16 %v5791
        %v6048 = vunpack.c.l.b16 %v5792
        %v6049 = vunpack.c.l.b16 %v5793
        %v6050 = vunpack.c.l.b16 %v5794
        %v6051 = vunpack.c.l.b16 %v5795
        %v6052 = vunpack.c.l.b16 %v5796
        %v6053 = vunpack.c.l.b16 %v5797
        %v6054 = vunpack.c.l.b16 %v5798
        %v6055 = vunpack.c.l.b16 %v5799
        %v6056 = vunpack.c.l.b16 %v5800
        %v6057 = vunpack.c.l.b16 %v5801
        %v6058 = vunpack.c.l.b16 %v5802
        %v6059 = vunpack.c.l.b16 %v5803
        %v6060 = vunpack.c.l.b16 %v5804
        %v6061 = vunpack.c.l.b16 %v5805
        %v6062 = vunpack.c.l.b16 %v5806
        %v6063 = vunpack.c.l.b16 %v5807
        %v6064 = vunpack.c.l.b16 %v5808
        %v6065 = vunpack.c.l.b16 %v5809
        %v6066 = vunpack.c.l.b16 %v5810
        %v6067 = vunpack.c.l.b16 %v5811
        %v6068 = vunpack.c.l.b16 %v5812
        %v6069 = vunpack.c.l.b16 %v5813
        %v6070 = vunpack.c.l.b16 %v5814
        %v6071 = vunpack.c.l.b16 %v5815
        %v6072 = vunpack.c.l.b16 %v5816
        %v6073 = vunpack.c.l.b16 %v5817
        %v6074 = vunpack.c.l.b16 %v5818
        %v6075 = vunpack.c.l.b16 %v5819
        %v6076 = vunpack.c.l.b16 %v5820
        %v6077 = vunpack.c.l.b16 %v5821
        %v6078 = vunpack.c.l.b16 %v5822
        %v6079 = vunpack.c.l.b16 %v5823
        %v6080 = vunpack.c.l.b16 %v5824
        %v6081 = vunpack.c.l.b16 %v5825
        %v6082 = vunpack.c.l.b16 %v5826
        %v6083 = vunpack.c.l.b16 %v5827
        %v6084 = vunpack.c.l.b16 %v5828
        %v6085 = vunpack.c.l.b16 %v5829
        %v6086 = vunpack.c.l.b16 %v5830
        %v6087 = vunpack.c.l.b16 %v5831
        %v6088 = vunpack.c.l.b16 %v5832
        %v6089 = vunpack.c.l.b16 %v5833
        %v6090 = vunpack.c.l.b16 %v5834
        %v6091 = vunpack.c.l.b16 %v5835
        %v6092 = vunpack.c.l.b16 %v5836
        %v6093 = vunpack.c.l.b16 %v5837
        %v6094 = vunpack.c.l.b16 %v5838
        %v6095 = vpack.c.b16 %v5968, %v5967
        %v6096 = vpack.c.b16 %v5970, %v5969
        %v6097 = vpack.c.b16 %v5972, %v5971
        %v6098 = vpack.c.b16 %v5974, %v5973
        %v6099 = vpack.c.b16 %v5976, %v5975
        %v6100 = vpack.c.b16 %v5978, %v5977
        %v6101 = vpack.c.b16 %v5980, %v5979
        %v6102 = vpack.c.b16 %v5982, %v5981
        %v6103 = vpack.c.b16 %v5984, %v5983
        %v6104 = vpack.c.b16 %v5986, %v5985
        %v6105 = vpack.c.b16 %v5988, %v5987
        %v6106 = vpack.c.b16 %v5990, %v5989
        %v6107 = vpack.c.b16 %v5992, %v5991
        %v6108 = vpack.c.b16 %v5994, %v5993
        %v6109 = vpack.c.b16 %v5996, %v5995
        %v6110 = vpack.c.b16 %v5998, %v5997
        %v6111 = vpack.c.b16 %v6000, %v5999
        %v6112 = vpack.c.b16 %v6002, %v6001
        %v6113 = vpack.c.b16 %v6004, %v6003
        %v6114 = vpack.c.b16 %v6006, %v6005
        %v6115 = vpack.c.b16 %v6008, %v6007
        %v6116 = vpack.c.b16 %v6010, %v6009
        %v6117 = vpack.c.b16 %v6012, %v6011
        %v6118 = vpack.c.b16 %v6014, %v6013
        %v6119 = vpack.c.b16 %v6016, %v6015
        %v6120 = vpack.c.b16 %v6018, %v6017
        %v6121 = vpack.c.b16 %v6020, %v6019
        %v6122 = vpack.c.b16 %v6022, %v6021
        %v6123 = vpack.c.b16 %v6024, %v6023
        %v6124 = vpack.c.b16 %v6026, %v6025
        %v6125 = vpack.c.b16 %v6028, %v6027
        %v6126 = vpack.c.b16 %v6030, %v6029
        %v6127 = vpack.c.b16 %v6032, %v6031
        %v6128 = vpack.c.b16 %v6034, %v6033
        %v6129 = vpack.c.b16 %v6036, %v6035
        %v6130 = vpack.c.b16 %v6038, %v6037
        %v6131 = vpack.c.b16 %v6040, %v6039
        %v6132 = vpack.c.b16 %v6042, %v6041
        %v6133 = vpack.c.b16 %v6044, %v6043
        %v6134 = vpack.c.b16 %v6046, %v6045
        %v6135 = vpack.c.b16 %v6048, %v6047
        %v6136 = vpack.c.b16 %v6050, %v6049
        %v6137 = vpack.c.b16 %v6052, %v6051
        %v6138 = vpack.c.b16 %v6054, %v6053
        %v6139 = vpack.c.b16 %v6056, %v6055
        %v6140 = vpack.c.b16 %v6058, %v6057
        %v6141 = vpack.c.b16 %v6060, %v6059
        %v6142 = vpack.c.b16 %v6062, %v6061
        %v6143 = vpack.c.b16 %v6064, %v6063
        %v6144 = vpack.c.b16 %v6066, %v6065
        %v6145 = vpack.c.b16 %v6068, %v6067
        %v6146 = vpack.c.b16 %v6070, %v6069
        %v6147 = vpack.c.b16 %v6072, %v6071
        %v6148 = vpack.c.b16 %v6074, %v6073
        %v6149 = vpack.c.b16 %v6076, %v6075
        %v6150 = vpack.c.b16 %v6078, %v6077
        %v6151 = vpack.c.b16 %v6080, %v6079
        %v6152 = vpack.c.b16 %v6082, %v6081
        %v6153 = vpack.c.b16 %v6084, %v6083
        %v6154 = vpack.c.b16 %v6086, %v6085
        %v6155 = vpack.c.b16 %v6088, %v6087
        %v6156 = vpack.c.b16 %v6090, %v6089
        %v6157 = vpack.c.b16 %v6092, %v6091
        %v6158 = vpack.c.b16 %v6094, %v6093
        %6223 = vmatprep.subr.bf16.mxu0 0
        %6224 = vmatpush1.bf16.msra.mxu0 %v6095
        %6225 = vmatprep.subr.bf16.mxu0 0
        %6226 = vmatpush1.bf16.msra.mxu0 %v6096
        %6227 = vmatprep.subr.bf16.mxu0 0
        %6228 = vmatpush1.bf16.msra.mxu0 %v6097
        %6229 = vmatprep.subr.bf16.mxu0 0
        %6230 = vmatpush1.bf16.msra.mxu0 %v6098
        %6231 = vmatprep.subr.bf16.mxu0 0
        %6232 = vmatpush1.bf16.msra.mxu0 %v6099
        %6233 = vmatprep.subr.bf16.mxu0 0
        %6234 = vmatpush1.bf16.msra.mxu0 %v6100
        %6235 = vmatprep.subr.bf16.mxu0 0
        %6236 = vmatpush1.bf16.msra.mxu0 %v6101
        %6237 = vmatprep.subr.bf16.mxu0 0
        %6238 = vmatpush1.bf16.msra.mxu0 %v6102
        %6239 = vmatprep.subr.bf16.mxu0 0
        %6240 = vmatpush1.bf16.msra.mxu0 %v6103
        %6241 = vmatprep.subr.bf16.mxu0 0
        %6242 = vmatpush1.bf16.msra.mxu0 %v6104
        %6243 = vmatprep.subr.bf16.mxu0 0
        %6244 = vmatpush1.bf16.msra.mxu0 %v6105
        %6245 = vmatprep.subr.bf16.mxu0 0
        %6246 = vmatpush1.bf16.msra.mxu0 %v6106
        %6247 = vmatprep.subr.bf16.mxu0 0
        %6248 = vmatpush1.bf16.msra.mxu0 %v6107
        %6249 = vmatprep.subr.bf16.mxu0 0
        %6250 = vmatpush1.bf16.msra.mxu0 %v6108
        %6251 = vmatprep.subr.bf16.mxu0 0
        %6252 = vmatpush1.bf16.msra.mxu0 %v6109
        %6253 = vmatprep.subr.bf16.mxu0 0
        %6254 = vmatpush1.bf16.msra.mxu0 %v6110
        %6255 = vmatprep.mubr.bf16.mxu0 %v5703
        %6256 = vmatmul.mubr.bf16.gmra.mrb[0].mxu0 %v5702
        %v6257 = vpop.f32.mrb[0].mxu0
        %v6258 = vadd.f32 0.0, %v6257
        %v6259 = vpop.f32.mrb[0].mxu0
        %v6260 = vpop.f32.mrb[0].mxu0
        %v6261 = vpop.f32.mrb[0].mxu0
        %6262 = vdwg.mxu0
        %6263 = vmatprep.subr.bf16.mxu0 0
        %6264 = vmatpush1.bf16.msra.mxu0 %v6111
        %6265 = vmatprep.subr.bf16.mxu0 0
        %6266 = vmatpush1.bf16.msra.mxu0 %v6112
        %6267 = vmatprep.subr.bf16.mxu0 0
        %6268 = vmatpush1.bf16.msra.mxu0 %v6113
        %6269 = vmatprep.subr.bf16.mxu0 0
        %6270 = vmatpush1.bf16.msra.mxu0 %v6114
        %6271 = vmatprep.subr.bf16.mxu0 0
        %6272 = vmatpush1.bf16.msra.mxu0 %v6115
        %6273 = vmatprep.subr.bf16.mxu0 0
        %6274 = vmatpush1.bf16.msra.mxu0 %v6116
        %6275 = vmatprep.subr.bf16.mxu0 0
        %6276 = vmatpush1.bf16.msra.mxu0 %v6117
        %6277 = vmatprep.subr.bf16.mxu0 0
        %6278 = vmatpush1.bf16.msra.mxu0 %v6118
        %6279 = vmatprep.subr.bf16.mxu0 0
        %6280 = vmatpush1.bf16.msra.mxu0 %v6119
        %6281 = vmatprep.subr.bf16.mxu0 0
        %6282 = vmatpush1.bf16.msra.mxu0 %v6120
        %6283 = vmatprep.subr.bf16.mxu0 0
        %6284 = vmatpush1.bf16.msra.mxu0 %v6121
        %6285 = vmatprep.subr.bf16.mxu0 0
        %6286 = vmatpush1.bf16.msra.mxu0 %v6122
        %6287 = vmatprep.subr.bf16.mxu0 0
        %6288 = vmatpush1.bf16.msra.mxu0 %v6123
        %6289 = vmatprep.subr.bf16.mxu0 0
        %6290 = vmatpush1.bf16.msra.mxu0 %v6124
        %6291 = vmatprep.subr.bf16.mxu0 0
        %6292 = vmatpush1.bf16.msra.mxu0 %v6125
        %6293 = vmatprep.subr.bf16.mxu0 0
        %6294 = vmatpush1.bf16.msra.mxu0 %v6126
        %6295 = vmatprep.mubr.bf16.mxu0 %v5705
        %6296 = vmatmul.mubr.bf16.gmra.mrb[0].mxu0 %v5704
        %v6297 = vpop.f32.mrb[0].mxu0
        %v6298 = vadd.f32 %v6258, %v6297
        %v6299 = vpop.f32.mrb[0].mxu0
        %v6300 = vpop.f32.mrb[0].mxu0
        %v6301 = vpop.f32.mrb[0].mxu0
        %6302 = vdwg.mxu0
        %6303 = vmatprep.subr.bf16.mxu0 0
        %6304 = vmatpush1.bf16.msra.mxu0 %v6127
        %6305 = vmatprep.subr.bf16.mxu0 0
        %6306 = vmatpush1.bf16.msra.mxu0 %v6128
        %6307 = vmatprep.subr.bf16.mxu0 0
        %6308 = vmatpush1.bf16.msra.mxu0 %v6129
        %6309 = vmatprep.subr.bf16.mxu0 0
        %6310 = vmatpush1.bf16.msra.mxu0 %v6130
        %6311 = vmatprep.subr.bf16.mxu0 0
        %6312 = vmatpush1.bf16.msra.mxu0 %v6131
        %6313 = vmatprep.subr.bf16.mxu0 0
        %6314 = vmatpush1.bf16.msra.mxu0 %v6132
        %6315 = vmatprep.subr.bf16.mxu0 0
        %6316 = vmatpush1.bf16.msra.mxu0 %v6133
        %6317 = vmatprep.subr.bf16.mxu0 0
        %6318 = vmatpush1.bf16.msra.mxu0 %v6134
        %6319 = vmatprep.subr.bf16.mxu0 0
        %6320 = vmatpush1.bf16.msra.mxu0 %v6135
        %6321 = vmatprep.subr.bf16.mxu0 0
        %6322 = vmatpush1.bf16.msra.mxu0 %v6136
        %6323 = vmatprep.subr.bf16.mxu0 0
        %6324 = vmatpush1.bf16.msra.mxu0 %v6137
        %6325 = vmatprep.subr.bf16.mxu0 0
        %6326 = vmatpush1.bf16.msra.mxu0 %v6138
        %6327 = vmatprep.subr.bf16.mxu0 0
        %6328 = vmatpush1.bf16.msra.mxu0 %v6139
        %6329 = vmatprep.subr.bf16.mxu0 0
        %6330 = vmatpush1.bf16.msra.mxu0 %v6140
        %6331 = vmatprep.subr.bf16.mxu0 0
        %6332 = vmatpush1.bf16.msra.mxu0 %v6141
        %6333 = vmatprep.subr.bf16.mxu0 0
        %6334 = vmatpush1.bf16.msra.mxu0 %v6142
        %6335 = vmatprep.mubr.bf16.mxu0 %v5707
        %6336 = vmatmul.mubr.bf16.gmra.mrb[0].mxu0 %v5706
        %v6337 = vpop.f32.mrb[0].mxu0
        %v6338 = vadd.f32 %v6298, %v6337
        %v6339 = vpop.f32.mrb[0].mxu0
        %v6340 = vpop.f32.mrb[0].mxu0
        %v6341 = vpop.f32.mrb[0].mxu0
        %6342 = vdwg.mxu0
        %6343 = vmatprep.subr.bf16.mxu0 0
        %6344 = vmatpush1.bf16.msra.mxu0 %v6143
        %6345 = vmatprep.subr.bf16.mxu0 0
        %6346 = vmatpush1.bf16.msra.mxu0 %v6144
        %6347 = vmatprep.subr.bf16.mxu0 0
        %6348 = vmatpush1.bf16.msra.mxu0 %v6145
        %6349 = vmatprep.subr.bf16.mxu0 0
        %6350 = vmatpush1.bf16.msra.mxu0 %v6146
        %6351 = vmatprep.subr.bf16.mxu0 0
        %6352 = vmatpush1.bf16.msra.mxu0 %v6147
        %6353 = vmatprep.subr.bf16.mxu0 0
        %6354 = vmatpush1.bf16.msra.mxu0 %v6148
        %6355 = vmatprep.subr.bf16.mxu0 0
        %6356 = vmatpush1.bf16.msra.mxu0 %v6149
        %6357 = vmatprep.subr.bf16.mxu0 0
        %6358 = vmatpush1.bf16.msra.mxu0 %v6150
        %6359 = vmatprep.subr.bf16.mxu0 0
        %6360 = vmatpush1.bf16.msra.mxu0 %v6151
        %6361 = vmatprep.subr.bf16.mxu0 0
        %6362 = vmatpush1.bf16.msra.mxu0 %v6152
        %6363 = vmatprep.subr.bf16.mxu0 0
        %6364 = vmatpush1.bf16.msra.mxu0 %v6153
        %6365 = vmatprep.subr.bf16.mxu0 0
        %6366 = vmatpush1.bf16.msra.mxu0 %v6154
        %6367 = vmatprep.subr.bf16.mxu0 0
        %6368 = vmatpush1.bf16.msra.mxu0 %v6155
        %6369 = vmatprep.subr.bf16.mxu0 0
        %6370 = vmatpush1.bf16.msra.mxu0 %v6156
        %6371 = vmatprep.subr.bf16.mxu0 0
        %6372 = vmatpush1.bf16.msra.mxu0 %v6157
        %6373 = vmatprep.subr.bf16.mxu0 0
        %6374 = vmatpush1.bf16.msra.mxu0 %v6158
        %6375 = vmatprep.mubr.bf16.mxu0 %v5709
        %6376 = vmatmul.mubr.bf16.gmra.mrb[0].mxu0 %v5708
        %v6377 = vpop.f32.mrb[0].mxu0
        %v6378 = vadd.f32 %v6338, %v6377
        %v6379 = vpop.f32.mrb[0].mxu0
        %v6380 = vpop.f32.mrb[0].mxu0
        %v6381 = vpop.f32.mrb[0].mxu0
        %6382 = vdwg.mxu0
        %v6383 = vadd.f32 %v5692, %v6378
        %s6384 = scalar_lea.vmem [#allocation2], 320
        %v6385 = vld [vmem:[%s6384] sm:$0xff]
        %v6386 = vld [vmem:[%s6384 + $0x8] sm:$0xff]
        %v6387 = vld [vmem:[%s6384 + $0x10] sm:$0xff]
        %v6388 = vld [vmem:[%s6384 + $0x18] sm:$0xff]
        %v6389 = vld [vmem:[%s6384 + $0x20] sm:$0xff]
        %v6390 = vld [vmem:[%s6384 + $0x28] sm:$0xff]
        %v6391 = vld [vmem:[%s6384 + $0x30] sm:$0xff]
        %v6392 = vld [vmem:[%s6384 + $0x38] sm:$0xff]
        %v6393 = vpack.c.bf16 %v6385, %v6385
        %v6394 = vpack.c.bf16 %v6386, %v6386
        %v6395 = vpack.c.bf16 %v6387, %v6387
        %v6396 = vpack.c.bf16 %v6388, %v6388
        %v6397 = vpack.c.bf16 %v6389, %v6389
        %v6398 = vpack.c.bf16 %v6390, %v6390
        %v6399 = vpack.c.bf16 %v6391, %v6391
        %v6400 = vpack.c.bf16 %v6392, %v6392
        %s6401 = scalar_lea.vmem %s3, 2560
        %v6402 = vld [vmem:[%s6401] sm:$0xf]
        %v6403 = vld [vmem:[%s6401 + $0x4] sm:$0xf]
        %v6404 = vld [vmem:[%s6401 + $0x8] sm:$0xf]
        %v6405 = vld [vmem:[%s6401 + $0xc] sm:$0xf]
        %v6406 = vld [vmem:[%s6401 + $0x10] sm:$0xf]
        %v6407 = vld [vmem:[%s6401 + $0x14] sm:$0xf]
        %v6408 = vld [vmem:[%s6401 + $0x18] sm:$0xf]
        %v6409 = vld [vmem:[%s6401 + $0x1c] sm:$0xf]
        %v6410 = vld [vmem:[%s6401 + $0x20] sm:$0xf]
        %v6411 = vld [vmem:[%s6401 + $0x24] sm:$0xf]
        %v6412 = vld [vmem:[%s6401 + $0x28] sm:$0xf]
        %v6413 = vld [vmem:[%s6401 + $0x2c] sm:$0xf]
        %v6414 = vld [vmem:[%s6401 + $0x30] sm:$0xf]
        %v6415 = vld [vmem:[%s6401 + $0x34] sm:$0xf]
        %v6416 = vld [vmem:[%s6401 + $0x38] sm:$0xf]
        %v6417 = vld [vmem:[%s6401 + $0x3c] sm:$0xf]
        %v6418 = vld [vmem:[%s6401 + $0x40] sm:$0xf]
        %v6419 = vld [vmem:[%s6401 + $0x44] sm:$0xf]
        %v6420 = vld [vmem:[%s6401 + $0x48] sm:$0xf]
        %v6421 = vld [vmem:[%s6401 + $0x4c] sm:$0xf]
        %v6422 = vld [vmem:[%s6401 + $0x50] sm:$0xf]
        %v6423 = vld [vmem:[%s6401 + $0x54] sm:$0xf]
        %v6424 = vld [vmem:[%s6401 + $0x58] sm:$0xf]
        %v6425 = vld [vmem:[%s6401 + $0x5c] sm:$0xf]
        %v6426 = vld [vmem:[%s6401 + $0x60] sm:$0xf]
        %v6427 = vld [vmem:[%s6401 + $0x64] sm:$0xf]
        %v6428 = vld [vmem:[%s6401 + $0x68] sm:$0xf]
        %v6429 = vld [vmem:[%s6401 + $0x6c] sm:$0xf]
        %v6430 = vld [vmem:[%s6401 + $0x70] sm:$0xf]
        %v6431 = vld [vmem:[%s6401 + $0x74] sm:$0xf]
        %v6432 = vld [vmem:[%s6401 + $0x78] sm:$0xf]
        %v6433 = vld [vmem:[%s6401 + $0x7c] sm:$0xf]
        %v6434 = vld [vmem:[%s6401 + $0x80] sm:$0xf]
        %v6435 = vld [vmem:[%s6401 + $0x84] sm:$0xf]
        %v6436 = vld [vmem:[%s6401 + $0x88] sm:$0xf]
        %v6437 = vld [vmem:[%s6401 + $0x8c] sm:$0xf]
        %v6438 = vld [vmem:[%s6401 + $0x90] sm:$0xf]
        %v6439 = vld [vmem:[%s6401 + $0x94] sm:$0xf]
        %v6440 = vld [vmem:[%s6401 + $0x98] sm:$0xf]
        %v6441 = vld [vmem:[%s6401 + $0x9c] sm:$0xf]
        %v6442 = vld [vmem:[%s6401 + $0xa0] sm:$0xf]
        %v6443 = vld [vmem:[%s6401 + $0xa4] sm:$0xf]
        %v6444 = vld [vmem:[%s6401 + $0xa8] sm:$0xf]
        %v6445 = vld [vmem:[%s6401 + $0xac] sm:$0xf]
        %v6446 = vld [vmem:[%s6401 + $0xb0] sm:$0xf]
        %v6447 = vld [vmem:[%s6401 + $0xb4] sm:$0xf]
        %v6448 = vld [vmem:[%s6401 + $0xb8] sm:$0xf]
        %v6449 = vld [vmem:[%s6401 + $0xbc] sm:$0xf]
        %v6450 = vld [vmem:[%s6401 + $0xc0] sm:$0xf]
        %v6451 = vld [vmem:[%s6401 + $0xc4] sm:$0xf]
        %v6452 = vld [vmem:[%s6401 + $0xc8] sm:$0xf]
        %v6453 = vld [vmem:[%s6401 + $0xcc] sm:$0xf]
        %v6454 = vld [vmem:[%s6401 + $0xd0] sm:$0xf]
        %v6455 = vld [vmem:[%s6401 + $0xd4] sm:$0xf]
        %v6456 = vld [vmem:[%s6401 + $0xd8] sm:$0xf]
        %v6457 = vld [vmem:[%s6401 + $0xdc] sm:$0xf]
        %v6458 = vld [vmem:[%s6401 + $0xe0] sm:$0xf]
        %v6459 = vld [vmem:[%s6401 + $0xe4] sm:$0xf]
        %v6460 = vld [vmem:[%s6401 + $0xe8] sm:$0xf]
        %v6461 = vld [vmem:[%s6401 + $0xec] sm:$0xf]
        %v6462 = vld [vmem:[%s6401 + $0xf0] sm:$0xf]
        %v6463 = vld [vmem:[%s6401 + $0xf4] sm:$0xf]
        %v6464 = vld [vmem:[%s6401 + $0xf8] sm:$0xf]
        %v6465 = vld [vmem:[%s6401 + $0xfc] sm:$0xf]
        %v6466 = vld [vmem:[%s6401 + $0x100] sm:$0xf]
        %v6467 = vld [vmem:[%s6401 + $0x104] sm:$0xf]
        %v6468 = vld [vmem:[%s6401 + $0x108] sm:$0xf]
        %v6469 = vld [vmem:[%s6401 + $0x10c] sm:$0xf]
        %v6470 = vld [vmem:[%s6401 + $0x110] sm:$0xf]
        %v6471 = vld [vmem:[%s6401 + $0x114] sm:$0xf]
        %v6472 = vld [vmem:[%s6401 + $0x118] sm:$0xf]
        %v6473 = vld [vmem:[%s6401 + $0x11c] sm:$0xf]
        %v6474 = vld [vmem:[%s6401 + $0x120] sm:$0xf]
        %v6475 = vld [vmem:[%s6401 + $0x124] sm:$0xf]
        %v6476 = vld [vmem:[%s6401 + $0x128] sm:$0xf]
        %v6477 = vld [vmem:[%s6401 + $0x12c] sm:$0xf]
        %v6478 = vld [vmem:[%s6401 + $0x130] sm:$0xf]
        %v6479 = vld [vmem:[%s6401 + $0x134] sm:$0xf]
        %v6480 = vld [vmem:[%s6401 + $0x138] sm:$0xf]
        %v6481 = vld [vmem:[%s6401 + $0x13c] sm:$0xf]
        %v6482 = vld [vmem:[%s6401 + $0x140] sm:$0xf]
        %v6483 = vld [vmem:[%s6401 + $0x144] sm:$0xf]
        %v6484 = vld [vmem:[%s6401 + $0x148] sm:$0xf]
        %v6485 = vld [vmem:[%s6401 + $0x14c] sm:$0xf]
        %v6486 = vld [vmem:[%s6401 + $0x150] sm:$0xf]
        %v6487 = vld [vmem:[%s6401 + $0x154] sm:$0xf]
        %v6488 = vld [vmem:[%s6401 + $0x158] sm:$0xf]
        %v6489 = vld [vmem:[%s6401 + $0x15c] sm:$0xf]
        %v6490 = vld [vmem:[%s6401 + $0x160] sm:$0xf]
        %v6491 = vld [vmem:[%s6401 + $0x164] sm:$0xf]
        %v6492 = vld [vmem:[%s6401 + $0x168] sm:$0xf]
        %v6493 = vld [vmem:[%s6401 + $0x16c] sm:$0xf]
        %v6494 = vld [vmem:[%s6401 + $0x170] sm:$0xf]
        %v6495 = vld [vmem:[%s6401 + $0x174] sm:$0xf]
        %v6496 = vld [vmem:[%s6401 + $0x178] sm:$0xf]
        %v6497 = vld [vmem:[%s6401 + $0x17c] sm:$0xf]
        %v6498 = vld [vmem:[%s6401 + $0x180] sm:$0xf]
        %v6499 = vld [vmem:[%s6401 + $0x184] sm:$0xf]
        %v6500 = vld [vmem:[%s6401 + $0x188] sm:$0xf]
        %v6501 = vld [vmem:[%s6401 + $0x18c] sm:$0xf]
        %v6502 = vld [vmem:[%s6401 + $0x190] sm:$0xf]
        %v6503 = vld [vmem:[%s6401 + $0x194] sm:$0xf]
        %v6504 = vld [vmem:[%s6401 + $0x198] sm:$0xf]
        %v6505 = vld [vmem:[%s6401 + $0x19c] sm:$0xf]
        %v6506 = vld [vmem:[%s6401 + $0x1a0] sm:$0xf]
        %v6507 = vld [vmem:[%s6401 + $0x1a4] sm:$0xf]
        %v6508 = vld [vmem:[%s6401 + $0x1a8] sm:$0xf]
        %v6509 = vld [vmem:[%s6401 + $0x1ac] sm:$0xf]
        %v6510 = vld [vmem:[%s6401 + $0x1b0] sm:$0xf]
        %v6511 = vld [vmem:[%s6401 + $0x1b4] sm:$0xf]
        %v6512 = vld [vmem:[%s6401 + $0x1b8] sm:$0xf]
        %v6513 = vld [vmem:[%s6401 + $0x1bc] sm:$0xf]
        %v6514 = vld [vmem:[%s6401 + $0x1c0] sm:$0xf]
        %v6515 = vld [vmem:[%s6401 + $0x1c4] sm:$0xf]
        %v6516 = vld [vmem:[%s6401 + $0x1c8] sm:$0xf]
        %v6517 = vld [vmem:[%s6401 + $0x1cc] sm:$0xf]
        %v6518 = vld [vmem:[%s6401 + $0x1d0] sm:$0xf]
        %v6519 = vld [vmem:[%s6401 + $0x1d4] sm:$0xf]
        %v6520 = vld [vmem:[%s6401 + $0x1d8] sm:$0xf]
        %v6521 = vld [vmem:[%s6401 + $0x1dc] sm:$0xf]
        %v6522 = vld [vmem:[%s6401 + $0x1e0] sm:$0xf]
        %v6523 = vld [vmem:[%s6401 + $0x1e4] sm:$0xf]
        %v6524 = vld [vmem:[%s6401 + $0x1e8] sm:$0xf]
        %v6525 = vld [vmem:[%s6401 + $0x1ec] sm:$0xf]
        %v6526 = vld [vmem:[%s6401 + $0x1f0] sm:$0xf]
        %v6527 = vld [vmem:[%s6401 + $0x1f4] sm:$0xf]
        %v6528 = vld [vmem:[%s6401 + $0x1f8] sm:$0xf]
        %v6529 = vld [vmem:[%s6401 + $0x1fc] sm:$0xf]
        %v6658 = vunpack.c.l.b16 %v6402
        %v6659 = vunpack.c.l.b16 %v6403
        %v6660 = vunpack.c.l.b16 %v6404
        %v6661 = vunpack.c.l.b16 %v6405
        %v6662 = vunpack.c.l.b16 %v6406
        %v6663 = vunpack.c.l.b16 %v6407
        %v6664 = vunpack.c.l.b16 %v6408
        %v6665 = vunpack.c.l.b16 %v6409
        %v6666 = vunpack.c.l.b16 %v6410
        %v6667 = vunpack.c.l.b16 %v6411
        %v6668 = vunpack.c.l.b16 %v6412
        %v6669 = vunpack.c.l.b16 %v6413
        %v6670 = vunpack.c.l.b16 %v6414
        %v6671 = vunpack.c.l.b16 %v6415
        %v6672 = vunpack.c.l.b16 %v6416
        %v6673 = vunpack.c.l.b16 %v6417
        %v6674 = vunpack.c.l.b16 %v6418
        %v6675 = vunpack.c.l.b16 %v6419
        %v6676 = vunpack.c.l.b16 %v6420
        %v6677 = vunpack.c.l.b16 %v6421
        %v6678 = vunpack.c.l.b16 %v6422
        %v6679 = vunpack.c.l.b16 %v6423
        %v6680 = vunpack.c.l.b16 %v6424
        %v6681 = vunpack.c.l.b16 %v6425
        %v6682 = vunpack.c.l.b16 %v6426
        %v6683 = vunpack.c.l.b16 %v6427
        %v6684 = vunpack.c.l.b16 %v6428
        %v6685 = vunpack.c.l.b16 %v6429
        %v6686 = vunpack.c.l.b16 %v6430
        %v6687 = vunpack.c.l.b16 %v6431
        %v6688 = vunpack.c.l.b16 %v6432
        %v6689 = vunpack.c.l.b16 %v6433
        %v6690 = vunpack.c.l.b16 %v6434
        %v6691 = vunpack.c.l.b16 %v6435
        %v6692 = vunpack.c.l.b16 %v6436
        %v6693 = vunpack.c.l.b16 %v6437
        %v6694 = vunpack.c.l.b16 %v6438
        %v6695 = vunpack.c.l.b16 %v6439
        %v6696 = vunpack.c.l.b16 %v6440
        %v6697 = vunpack.c.l.b16 %v6441
        %v6698 = vunpack.c.l.b16 %v6442
        %v6699 = vunpack.c.l.b16 %v6443
        %v6700 = vunpack.c.l.b16 %v6444
        %v6701 = vunpack.c.l.b16 %v6445
        %v6702 = vunpack.c.l.b16 %v6446
        %v6703 = vunpack.c.l.b16 %v6447
        %v6704 = vunpack.c.l.b16 %v6448
        %v6705 = vunpack.c.l.b16 %v6449
        %v6706 = vunpack.c.l.b16 %v6450
        %v6707 = vunpack.c.l.b16 %v6451
        %v6708 = vunpack.c.l.b16 %v6452
        %v6709 = vunpack.c.l.b16 %v6453
        %v6710 = vunpack.c.l.b16 %v6454
        %v6711 = vunpack.c.l.b16 %v6455
        %v6712 = vunpack.c.l.b16 %v6456
        %v6713 = vunpack.c.l.b16 %v6457
        %v6714 = vunpack.c.l.b16 %v6458
        %v6715 = vunpack.c.l.b16 %v6459
        %v6716 = vunpack.c.l.b16 %v6460
        %v6717 = vunpack.c.l.b16 %v6461
        %v6718 = vunpack.c.l.b16 %v6462
        %v6719 = vunpack.c.l.b16 %v6463
        %v6720 = vunpack.c.l.b16 %v6464
        %v6721 = vunpack.c.l.b16 %v6465
        %v6722 = vunpack.c.l.b16 %v6466
        %v6723 = vunpack.c.l.b16 %v6467
        %v6724 = vunpack.c.l.b16 %v6468
        %v6725 = vunpack.c.l.b16 %v6469
        %v6726 = vunpack.c.l.b16 %v6470
        %v6727 = vunpack.c.l.b16 %v6471
        %v6728 = vunpack.c.l.b16 %v6472
        %v6729 = vunpack.c.l.b16 %v6473
        %v6730 = vunpack.c.l.b16 %v6474
        %v6731 = vunpack.c.l.b16 %v6475
        %v6732 = vunpack.c.l.b16 %v6476
        %v6733 = vunpack.c.l.b16 %v6477
        %v6734 = vunpack.c.l.b16 %v6478
        %v6735 = vunpack.c.l.b16 %v6479
        %v6736 = vunpack.c.l.b16 %v6480
        %v6737 = vunpack.c.l.b16 %v6481
        %v6738 = vunpack.c.l.b16 %v6482
        %v6739 = vunpack.c.l.b16 %v6483
        %v6740 = vunpack.c.l.b16 %v6484
        %v6741 = vunpack.c.l.b16 %v6485
        %v6742 = vunpack.c.l.b16 %v6486
        %v6743 = vunpack.c.l.b16 %v6487
        %v6744 = vunpack.c.l.b16 %v6488
        %v6745 = vunpack.c.l.b16 %v6489
        %v6746 = vunpack.c.l.b16 %v6490
        %v6747 = vunpack.c.l.b16 %v6491
        %v6748 = vunpack.c.l.b16 %v6492
        %v6749 = vunpack.c.l.b16 %v6493
        %v6750 = vunpack.c.l.b16 %v6494
        %v6751 = vunpack.c.l.b16 %v6495
        %v6752 = vunpack.c.l.b16 %v6496
        %v6753 = vunpack.c.l.b16 %v6497
        %v6754 = vunpack.c.l.b16 %v6498
        %v6755 = vunpack.c.l.b16 %v6499
        %v6756 = vunpack.c.l.b16 %v6500
        %v6757 = vunpack.c.l.b16 %v6501
        %v6758 = vunpack.c.l.b16 %v6502
        %v6759 = vunpack.c.l.b16 %v6503
        %v6760 = vunpack.c.l.b16 %v6504
        %v6761 = vunpack.c.l.b16 %v6505
        %v6762 = vunpack.c.l.b16 %v6506
        %v6763 = vunpack.c.l.b16 %v6507
        %v6764 = vunpack.c.l.b16 %v6508
        %v6765 = vunpack.c.l.b16 %v6509
        %v6766 = vunpack.c.l.b16 %v6510
        %v6767 = vunpack.c.l.b16 %v6511
        %v6768 = vunpack.c.l.b16 %v6512
        %v6769 = vunpack.c.l.b16 %v6513
        %v6770 = vunpack.c.l.b16 %v6514
        %v6771 = vunpack.c.l.b16 %v6515
        %v6772 = vunpack.c.l.b16 %v6516
        %v6773 = vunpack.c.l.b16 %v6517
        %v6774 = vunpack.c.l.b16 %v6518
        %v6775 = vunpack.c.l.b16 %v6519
        %v6776 = vunpack.c.l.b16 %v6520
        %v6777 = vunpack.c.l.b16 %v6521
        %v6778 = vunpack.c.l.b16 %v6522
        %v6779 = vunpack.c.l.b16 %v6523
        %v6780 = vunpack.c.l.b16 %v6524
        %v6781 = vunpack.c.l.b16 %v6525
        %v6782 = vunpack.c.l.b16 %v6526
        %v6783 = vunpack.c.l.b16 %v6527
        %v6784 = vunpack.c.l.b16 %v6528
        %v6785 = vunpack.c.l.b16 %v6529
        %v6786 = vpack.c.b16 %v6659, %v6658
        %v6787 = vpack.c.b16 %v6661, %v6660
        %v6788 = vpack.c.b16 %v6663, %v6662
        %v6789 = vpack.c.b16 %v6665, %v6664
        %v6790 = vpack.c.b16 %v6667, %v6666
        %v6791 = vpack.c.b16 %v6669, %v6668
        %v6792 = vpack.c.b16 %v6671, %v6670
        %v6793 = vpack.c.b16 %v6673, %v6672
        %v6794 = vpack.c.b16 %v6675, %v6674
        %v6795 = vpack.c.b16 %v6677, %v6676
        %v6796 = vpack.c.b16 %v6679, %v6678
        %v6797 = vpack.c.b16 %v6681, %v6680
        %v6798 = vpack.c.b16 %v6683, %v6682
        %v6799 = vpack.c.b16 %v6685, %v6684
        %v6800 = vpack.c.b16 %v6687, %v6686
        %v6801 = vpack.c.b16 %v6689, %v6688
        %v6802 = vpack.c.b16 %v6691, %v6690
        %v6803 = vpack.c.b16 %v6693, %v6692
        %v6804 = vpack.c.b16 %v6695, %v6694
        %v6805 = vpack.c.b16 %v6697, %v6696
        %v6806 = vpack.c.b16 %v6699, %v6698
        %v6807 = vpack.c.b16 %v6701, %v6700
        %v6808 = vpack.c.b16 %v6703, %v6702
        %v6809 = vpack.c.b16 %v6705, %v6704
        %v6810 = vpack.c.b16 %v6707, %v6706
        %v6811 = vpack.c.b16 %v6709, %v6708
        %v6812 = vpack.c.b16 %v6711, %v6710
        %v6813 = vpack.c.b16 %v6713, %v6712
        %v6814 = vpack.c.b16 %v6715, %v6714
        %v6815 = vpack.c.b16 %v6717, %v6716
        %v6816 = vpack.c.b16 %v6719, %v6718
        %v6817 = vpack.c.b16 %v6721, %v6720
        %v6818 = vpack.c.b16 %v6723, %v6722
        %v6819 = vpack.c.b16 %v6725, %v6724
        %v6820 = vpack.c.b16 %v6727, %v6726
        %v6821 = vpack.c.b16 %v6729, %v6728
        %v6822 = vpack.c.b16 %v6731, %v6730
        %v6823 = vpack.c.b16 %v6733, %v6732
        %v6824 = vpack.c.b16 %v6735, %v6734
        %v6825 = vpack.c.b16 %v6737, %v6736
        %v6826 = vpack.c.b16 %v6739, %v6738
        %v6827 = vpack.c.b16 %v6741, %v6740
        %v6828 = vpack.c.b16 %v6743, %v6742
        %v6829 = vpack.c.b16 %v6745, %v6744
        %v6830 = vpack.c.b16 %v6747, %v6746
        %v6831 = vpack.c.b16 %v6749, %v6748
        %v6832 = vpack.c.b16 %v6751, %v6750
        %v6833 = vpack.c.b16 %v6753, %v6752
        %v6834 = vpack.c.b16 %v6755, %v6754
        %v6835 = vpack.c.b16 %v6757, %v6756
        %v6836 = vpack.c.b16 %v6759, %v6758
        %v6837 = vpack.c.b16 %v6761, %v6760
        %v6838 = vpack.c.b16 %v6763, %v6762
        %v6839 = vpack.c.b16 %v6765, %v6764
        %v6840 = vpack.c.b16 %v6767, %v6766
        %v6841 = vpack.c.b16 %v6769, %v6768
        %v6842 = vpack.c.b16 %v6771, %v6770
        %v6843 = vpack.c.b16 %v6773, %v6772
        %v6844 = vpack.c.b16 %v6775, %v6774
        %v6845 = vpack.c.b16 %v6777, %v6776
        %v6846 = vpack.c.b16 %v6779, %v6778
        %v6847 = vpack.c.b16 %v6781, %v6780
        %v6848 = vpack.c.b16 %v6783, %v6782
        %v6849 = vpack.c.b16 %v6785, %v6784
        %6914 = vmatprep.subr.bf16.mxu0 0
        %6915 = vmatpush1.bf16.msra.mxu0 %v6786
        %6916 = vmatprep.subr.bf16.mxu0 0
        %6917 = vmatpush1.bf16.msra.mxu0 %v6787
        %6918 = vmatprep.subr.bf16.mxu0 0
        %6919 = vmatpush1.bf16.msra.mxu0 %v6788
        %6920 = vmatprep.subr.bf16.mxu0 0
        %6921 = vmatpush1.bf16.msra.mxu0 %v6789
        %6922 = vmatprep.subr.bf16.mxu0 0
        %6923 = vmatpush1.bf16.msra.mxu0 %v6790
        %6924 = vmatprep.subr.bf16.mxu0 0
        %6925 = vmatpush1.bf16.msra.mxu0 %v6791
        %6926 = vmatprep.subr.bf16.mxu0 0
        %6927 = vmatpush1.bf16.msra.mxu0 %v6792
        %6928 = vmatprep.subr.bf16.mxu0 0
        %6929 = vmatpush1.bf16.msra.mxu0 %v6793
        %6930 = vmatprep.subr.bf16.mxu0 0
        %6931 = vmatpush1.bf16.msra.mxu0 %v6794
        %6932 = vmatprep.subr.bf16.mxu0 0
        %6933 = vmatpush1.bf16.msra.mxu0 %v6795
        %6934 = vmatprep.subr.bf16.mxu0 0
        %6935 = vmatpush1.bf16.msra.mxu0 %v6796
        %6936 = vmatprep.subr.bf16.mxu0 0
        %6937 = vmatpush1.bf16.msra.mxu0 %v6797
        %6938 = vmatprep.subr.bf16.mxu0 0
        %6939 = vmatpush1.bf16.msra.mxu0 %v6798
        %6940 = vmatprep.subr.bf16.mxu0 0
        %6941 = vmatpush1.bf16.msra.mxu0 %v6799
        %6942 = vmatprep.subr.bf16.mxu0 0
        %6943 = vmatpush1.bf16.msra.mxu0 %v6800
        %6944 = vmatprep.subr.bf16.mxu0 0
        %6945 = vmatpush1.bf16.msra.mxu0 %v6801
        %6946 = vmatprep.mubr.bf16.mxu0 %v6394
        %6947 = vmatmul.mubr.bf16.gmra.mrb[0].mxu0 %v6393
        %v6948 = vpop.f32.mrb[0].mxu0
        %v6949 = vadd.f32 0.0, %v6948
        %v6950 = vpop.f32.mrb[0].mxu0
        %v6951 = vpop.f32.mrb[0].mxu0
        %v6952 = vpop.f32.mrb[0].mxu0
        %6953 = vdwg.mxu0
        %6954 = vmatprep.subr.bf16.mxu0 0
        %6955 = vmatpush1.bf16.msra.mxu0 %v6802
        %6956 = vmatprep.subr.bf16.mxu0 0
        %6957 = vmatpush1.bf16.msra.mxu0 %v6803
        %6958 = vmatprep.subr.bf16.mxu0 0
        %6959 = vmatpush1.bf16.msra.mxu0 %v6804
        %6960 = vmatprep.subr.bf16.mxu0 0
        %6961 = vmatpush1.bf16.msra.mxu0 %v6805
        %6962 = vmatprep.subr.bf16.mxu0 0
        %6963 = vmatpush1.bf16.msra.mxu0 %v6806
        %6964 = vmatprep.subr.bf16.mxu0 0
        %6965 = vmatpush1.bf16.msra.mxu0 %v6807
        %6966 = vmatprep.subr.bf16.mxu0 0
        %6967 = vmatpush1.bf16.msra.mxu0 %v6808
        %6968 = vmatprep.subr.bf16.mxu0 0
        %6969 = vmatpush1.bf16.msra.mxu0 %v6809
        %6970 = vmatprep.subr.bf16.mxu0 0
        %6971 = vmatpush1.bf16.msra.mxu0 %v6810
        %6972 = vmatprep.subr.bf16.mxu0 0
        %6973 = vmatpush1.bf16.msra.mxu0 %v6811
        %6974 = vmatprep.subr.bf16.mxu0 0
        %6975 = vmatpush1.bf16.msra.mxu0 %v6812
        %6976 = vmatprep.subr.bf16.mxu0 0
        %6977 = vmatpush1.bf16.msra.mxu0 %v6813
        %6978 = vmatprep.subr.bf16.mxu0 0
        %6979 = vmatpush1.bf16.msra.mxu0 %v6814
        %6980 = vmatprep.subr.bf16.mxu0 0
        %6981 = vmatpush1.bf16.msra.mxu0 %v6815
        %6982 = vmatprep.subr.bf16.mxu0 0
        %6983 = vmatpush1.bf16.msra.mxu0 %v6816
        %6984 = vmatprep.subr.bf16.mxu0 0
        %6985 = vmatpush1.bf16.msra.mxu0 %v6817
        %6986 = vmatprep.mubr.bf16.mxu0 %v6396
        %6987 = vmatmul.mubr.bf16.gmra.mrb[0].mxu0 %v6395
        %v6988 = vpop.f32.mrb[0].mxu0
        %v6989 = vadd.f32 %v6949, %v6988
        %v6990 = vpop.f32.mrb[0].mxu0
        %v6991 = vpop.f32.mrb[0].mxu0
        %v6992 = vpop.f32.mrb[0].mxu0
        %6993 = vdwg.mxu0
        %6994 = vmatprep.subr.bf16.mxu0 0
        %6995 = vmatpush1.bf16.msra.mxu0 %v6818
        %6996 = vmatprep.subr.bf16.mxu0 0
        %6997 = vmatpush1.bf16.msra.mxu0 %v6819
        %6998 = vmatprep.subr.bf16.mxu0 0
        %6999 = vmatpush1.bf16.msra.mxu0 %v6820
        %7000 = vmatprep.subr.bf16.mxu0 0
        %7001 = vmatpush1.bf16.msra.mxu0 %v6821
        %7002 = vmatprep.subr.bf16.mxu0 0
        %7003 = vmatpush1.bf16.msra.mxu0 %v6822
        %7004 = vmatprep.subr.bf16.mxu0 0
        %7005 = vmatpush1.bf16.msra.mxu0 %v6823
        %7006 = vmatprep.subr.bf16.mxu0 0
        %7007 = vmatpush1.bf16.msra.mxu0 %v6824
        %7008 = vmatprep.subr.bf16.mxu0 0
        %7009 = vmatpush1.bf16.msra.mxu0 %v6825
        %7010 = vmatprep.subr.bf16.mxu0 0
        %7011 = vmatpush1.bf16.msra.mxu0 %v6826
        %7012 = vmatprep.subr.bf16.mxu0 0
        %7013 = vmatpush1.bf16.msra.mxu0 %v6827
        %7014 = vmatprep.subr.bf16.mxu0 0
        %7015 = vmatpush1.bf16.msra.mxu0 %v6828
        %7016 = vmatprep.subr.bf16.mxu0 0
        %7017 = vmatpush1.bf16.msra.mxu0 %v6829
        %7018 = vmatprep.subr.bf16.mxu0 0
        %7019 = vmatpush1.bf16.msra.mxu0 %v6830
        %7020 = vmatprep.subr.bf16.mxu0 0
        %7021 = vmatpush1.bf16.msra.mxu0 %v6831
        %7022 = vmatprep.subr.bf16.mxu0 0
        %7023 = vmatpush1.bf16.msra.mxu0 %v6832
        %7024 = vmatprep.subr.bf16.mxu0 0
        %7025 = vmatpush1.bf16.msra.mxu0 %v6833
        %7026 = vmatprep.mubr.bf16.mxu0 %v6398
        %7027 = vmatmul.mubr.bf16.gmra.mrb[0].mxu0 %v6397
        %v7028 = vpop.f32.mrb[0].mxu0
        %v7029 = vadd.f32 %v6989, %v7028
        %v7030 = vpop.f32.mrb[0].mxu0
        %v7031 = vpop.f32.mrb[0].mxu0
        %v7032 = vpop.f32.mrb[0].mxu0
        %7033 = vdwg.mxu0
        %7034 = vmatprep.subr.bf16.mxu0 0
        %7035 = vmatpush1.bf16.msra.mxu0 %v6834
        %7036 = vmatprep.subr.bf16.mxu0 0
        %7037 = vmatpush1.bf16.msra.mxu0 %v6835
        %7038 = vmatprep.subr.bf16.mxu0 0
        %7039 = vmatpush1.bf16.msra.mxu0 %v6836
        %7040 = vmatprep.subr.bf16.mxu0 0
        %7041 = vmatpush1.bf16.msra.mxu0 %v6837
        %7042 = vmatprep.subr.bf16.mxu0 0
        %7043 = vmatpush1.bf16.msra.mxu0 %v6838
        %7044 = vmatprep.subr.bf16.mxu0 0
        %7045 = vmatpush1.bf16.msra.mxu0 %v6839
        %7046 = vmatprep.subr.bf16.mxu0 0
        %7047 = vmatpush1.bf16.msra.mxu0 %v6840
        %7048 = vmatprep.subr.bf16.mxu0 0
        %7049 = vmatpush1.bf16.msra.mxu0 %v6841
        %7050 = vmatprep.subr.bf16.mxu0 0
        %7051 = vmatpush1.bf16.msra.mxu0 %v6842
        %7052 = vmatprep.subr.bf16.mxu0 0
        %7053 = vmatpush1.bf16.msra.mxu0 %v6843
        %7054 = vmatprep.subr.bf16.mxu0 0
        %7055 = vmatpush1.bf16.msra.mxu0 %v6844
        %7056 = vmatprep.subr.bf16.mxu0 0
        %7057 = vmatpush1.bf16.msra.mxu0 %v6845
        %7058 = vmatprep.subr.bf16.mxu0 0
        %7059 = vmatpush1.bf16.msra.mxu0 %v6846
        %7060 = vmatprep.subr.bf16.mxu0 0
        %7061 = vmatpush1.bf16.msra.mxu0 %v6847
        %7062 = vmatprep.subr.bf16.mxu0 0
        %7063 = vmatpush1.bf16.msra.mxu0 %v6848
        %7064 = vmatprep.subr.bf16.mxu0 0
        %7065 = vmatpush1.bf16.msra.mxu0 %v6849
        %7066 = vmatprep.mubr.bf16.mxu0 %v6400
        %7067 = vmatmul.mubr.bf16.gmra.mrb[0].mxu0 %v6399
        %v7068 = vpop.f32.mrb[0].mxu0
        %v7069 = vadd.f32 %v7029, %v7068
        %v7070 = vpop.f32.mrb[0].mxu0
        %v7071 = vpop.f32.mrb[0].mxu0
        %v7072 = vpop.f32.mrb[0].mxu0
        %7073 = vdwg.mxu0
        %v7074 = vadd.f32 %v6383, %v7069
        %s7075 = scalar_lea.vmem [#allocation2], 384
        %v7076 = vld [vmem:[%s7075] sm:$0xff]
        %v7077 = vld [vmem:[%s7075 + $0x8] sm:$0xff]
        %v7078 = vld [vmem:[%s7075 + $0x10] sm:$0xff]
        %v7079 = vld [vmem:[%s7075 + $0x18] sm:$0xff]
        %v7080 = vld [vmem:[%s7075 + $0x20] sm:$0xff]
        %v7081 = vld [vmem:[%s7075 + $0x28] sm:$0xff]
        %v7082 = vld [vmem:[%s7075 + $0x30] sm:$0xff]
        %v7083 = vld [vmem:[%s7075 + $0x38] sm:$0xff]
        %v7084 = vpack.c.bf16 %v7076, %v7076
        %v7085 = vpack.c.bf16 %v7077, %v7077
        %v7086 = vpack.c.bf16 %v7078, %v7078
        %v7087 = vpack.c.bf16 %v7079, %v7079
        %v7088 = vpack.c.bf16 %v7080, %v7080
        %v7089 = vpack.c.bf16 %v7081, %v7081
        %v7090 = vpack.c.bf16 %v7082, %v7082
        %v7091 = vpack.c.bf16 %v7083, %v7083
        %s7092 = scalar_lea.vmem %s3, 3072
        %v7093 = vld [vmem:[%s7092] sm:$0xf]
        %v7094 = vld [vmem:[%s7092 + $0x4] sm:$0xf]
        %v7095 = vld [vmem:[%s7092 + $0x8] sm:$0xf]
        %v7096 = vld [vmem:[%s7092 + $0xc] sm:$0xf]
        %v7097 = vld [vmem:[%s7092 + $0x10] sm:$0xf]
        %v7098 = vld [vmem:[%s7092 + $0x14] sm:$0xf]
        %v7099 = vld [vmem:[%s7092 + $0x18] sm:$0xf]
        %v7100 = vld [vmem:[%s7092 + $0x1c] sm:$0xf]
        %v7101 = vld [vmem:[%s7092 + $0x20] sm:$0xf]
        %v7102 = vld [vmem:[%s7092 + $0x24] sm:$0xf]
        %v7103 = vld [vmem:[%s7092 + $0x28] sm:$0xf]
        %v7104 = vld [vmem:[%s7092 + $0x2c] sm:$0xf]
        %v7105 = vld [vmem:[%s7092 + $0x30] sm:$0xf]
        %v7106 = vld [vmem:[%s7092 + $0x34] sm:$0xf]
        %v7107 = vld [vmem:[%s7092 + $0x38] sm:$0xf]
        %v7108 = vld [vmem:[%s7092 + $0x3c] sm:$0xf]
        %v7109 = vld [vmem:[%s7092 + $0x40] sm:$0xf]
        %v7110 = vld [vmem:[%s7092 + $0x44] sm:$0xf]
        %v7111 = vld [vmem:[%s7092 + $0x48] sm:$0xf]
        %v7112 = vld [vmem:[%s7092 + $0x4c] sm:$0xf]
        %v7113 = vld [vmem:[%s7092 + $0x50] sm:$0xf]
        %v7114 = vld [vmem:[%s7092 + $0x54] sm:$0xf]
        %v7115 = vld [vmem:[%s7092 + $0x58] sm:$0xf]
        %v7116 = vld [vmem:[%s7092 + $0x5c] sm:$0xf]
        %v7117 = vld [vmem:[%s7092 + $0x60] sm:$0xf]
        %v7118 = vld [vmem:[%s7092 + $0x64] sm:$0xf]
        %v7119 = vld [vmem:[%s7092 + $0x68] sm:$0xf]
        %v7120 = vld [vmem:[%s7092 + $0x6c] sm:$0xf]
        %v7121 = vld [vmem:[%s7092 + $0x70] sm:$0xf]
        %v7122 = vld [vmem:[%s7092 + $0x74] sm:$0xf]
        %v7123 = vld [vmem:[%s7092 + $0x78] sm:$0xf]
        %v7124 = vld [vmem:[%s7092 + $0x7c] sm:$0xf]
        %v7125 = vld [vmem:[%s7092 + $0x80] sm:$0xf]
        %v7126 = vld [vmem:[%s7092 + $0x84] sm:$0xf]
        %v7127 = vld [vmem:[%s7092 + $0x88] sm:$0xf]
        %v7128 = vld [vmem:[%s7092 + $0x8c] sm:$0xf]
        %v7129 = vld [vmem:[%s7092 + $0x90] sm:$0xf]
        %v7130 = vld [vmem:[%s7092 + $0x94] sm:$0xf]
        %v7131 = vld [vmem:[%s7092 + $0x98] sm:$0xf]
        %v7132 = vld [vmem:[%s7092 + $0x9c] sm:$0xf]
        %v7133 = vld [vmem:[%s7092 + $0xa0] sm:$0xf]
        %v7134 = vld [vmem:[%s7092 + $0xa4] sm:$0xf]
        %v7135 = vld [vmem:[%s7092 + $0xa8] sm:$0xf]
        %v7136 = vld [vmem:[%s7092 + $0xac] sm:$0xf]
        %v7137 = vld [vmem:[%s7092 + $0xb0] sm:$0xf]
        %v7138 = vld [vmem:[%s7092 + $0xb4] sm:$0xf]
        %v7139 = vld [vmem:[%s7092 + $0xb8] sm:$0xf]
        %v7140 = vld [vmem:[%s7092 + $0xbc] sm:$0xf]
        %v7141 = vld [vmem:[%s7092 + $0xc0] sm:$0xf]
        %v7142 = vld [vmem:[%s7092 + $0xc4] sm:$0xf]
        %v7143 = vld [vmem:[%s7092 + $0xc8] sm:$0xf]
        %v7144 = vld [vmem:[%s7092 + $0xcc] sm:$0xf]
        %v7145 = vld [vmem:[%s7092 + $0xd0] sm:$0xf]
        %v7146 = vld [vmem:[%s7092 + $0xd4] sm:$0xf]
        %v7147 = vld [vmem:[%s7092 + $0xd8] sm:$0xf]
        %v7148 = vld [vmem:[%s7092 + $0xdc] sm:$0xf]
        %v7149 = vld [vmem:[%s7092 + $0xe0] sm:$0xf]
        %v7150 = vld [vmem:[%s7092 + $0xe4] sm:$0xf]
        %v7151 = vld [vmem:[%s7092 + $0xe8] sm:$0xf]
        %v7152 = vld [vmem:[%s7092 + $0xec] sm:$0xf]
        %v7153 = vld [vmem:[%s7092 + $0xf0] sm:$0xf]
        %v7154 = vld [vmem:[%s7092 + $0xf4] sm:$0xf]
        %v7155 = vld [vmem:[%s7092 + $0xf8] sm:$0xf]
        %v7156 = vld [vmem:[%s7092 + $0xfc] sm:$0xf]
        %v7157 = vld [vmem:[%s7092 + $0x100] sm:$0xf]
        %v7158 = vld [vmem:[%s7092 + $0x104] sm:$0xf]
        %v7159 = vld [vmem:[%s7092 + $0x108] sm:$0xf]
        %v7160 = vld [vmem:[%s7092 + $0x10c] sm:$0xf]
        %v7161 = vld [vmem:[%s7092 + $0x110] sm:$0xf]
        %v7162 = vld [vmem:[%s7092 + $0x114] sm:$0xf]
        %v7163 = vld [vmem:[%s7092 + $0x118] sm:$0xf]
        %v7164 = vld [vmem:[%s7092 + $0x11c] sm:$0xf]
        %v7165 = vld [vmem:[%s7092 + $0x120] sm:$0xf]
        %v7166 = vld [vmem:[%s7092 + $0x124] sm:$0xf]
        %v7167 = vld [vmem:[%s7092 + $0x128] sm:$0xf]
        %v7168 = vld [vmem:[%s7092 + $0x12c] sm:$0xf]
        %v7169 = vld [vmem:[%s7092 + $0x130] sm:$0xf]
        %v7170 = vld [vmem:[%s7092 + $0x134] sm:$0xf]
        %v7171 = vld [vmem:[%s7092 + $0x138] sm:$0xf]
        %v7172 = vld [vmem:[%s7092 + $0x13c] sm:$0xf]
        %v7173 = vld [vmem:[%s7092 + $0x140] sm:$0xf]
        %v7174 = vld [vmem:[%s7092 + $0x144] sm:$0xf]
        %v7175 = vld [vmem:[%s7092 + $0x148] sm:$0xf]
        %v7176 = vld [vmem:[%s7092 + $0x14c] sm:$0xf]
        %v7177 = vld [vmem:[%s7092 + $0x150] sm:$0xf]
        %v7178 = vld [vmem:[%s7092 + $0x154] sm:$0xf]
        %v7179 = vld [vmem:[%s7092 + $0x158] sm:$0xf]
        %v7180 = vld [vmem:[%s7092 + $0x15c] sm:$0xf]
        %v7181 = vld [vmem:[%s7092 + $0x160] sm:$0xf]
        %v7182 = vld [vmem:[%s7092 + $0x164] sm:$0xf]
        %v7183 = vld [vmem:[%s7092 + $0x168] sm:$0xf]
        %v7184 = vld [vmem:[%s7092 + $0x16c] sm:$0xf]
        %v7185 = vld [vmem:[%s7092 + $0x170] sm:$0xf]
        %v7186 = vld [vmem:[%s7092 + $0x174] sm:$0xf]
        %v7187 = vld [vmem:[%s7092 + $0x178] sm:$0xf]
        %v7188 = vld [vmem:[%s7092 + $0x17c] sm:$0xf]
        %v7189 = vld [vmem:[%s7092 + $0x180] sm:$0xf]
        %v7190 = vld [vmem:[%s7092 + $0x184] sm:$0xf]
        %v7191 = vld [vmem:[%s7092 + $0x188] sm:$0xf]
        %v7192 = vld [vmem:[%s7092 + $0x18c] sm:$0xf]
        %v7193 = vld [vmem:[%s7092 + $0x190] sm:$0xf]
        %v7194 = vld [vmem:[%s7092 + $0x194] sm:$0xf]
        %v7195 = vld [vmem:[%s7092 + $0x198] sm:$0xf]
        %v7196 = vld [vmem:[%s7092 + $0x19c] sm:$0xf]
        %v7197 = vld [vmem:[%s7092 + $0x1a0] sm:$0xf]
        %v7198 = vld [vmem:[%s7092 + $0x1a4] sm:$0xf]
        %v7199 = vld [vmem:[%s7092 + $0x1a8] sm:$0xf]
        %v7200 = vld [vmem:[%s7092 + $0x1ac] sm:$0xf]
        %v7201 = vld [vmem:[%s7092 + $0x1b0] sm:$0xf]
        %v7202 = vld [vmem:[%s7092 + $0x1b4] sm:$0xf]
        %v7203 = vld [vmem:[%s7092 + $0x1b8] sm:$0xf]
        %v7204 = vld [vmem:[%s7092 + $0x1bc] sm:$0xf]
        %v7205 = vld [vmem:[%s7092 + $0x1c0] sm:$0xf]
        %v7206 = vld [vmem:[%s7092 + $0x1c4] sm:$0xf]
        %v7207 = vld [vmem:[%s7092 + $0x1c8] sm:$0xf]
        %v7208 = vld [vmem:[%s7092 + $0x1cc] sm:$0xf]
        %v7209 = vld [vmem:[%s7092 + $0x1d0] sm:$0xf]
        %v7210 = vld [vmem:[%s7092 + $0x1d4] sm:$0xf]
        %v7211 = vld [vmem:[%s7092 + $0x1d8] sm:$0xf]
        %v7212 = vld [vmem:[%s7092 + $0x1dc] sm:$0xf]
        %v7213 = vld [vmem:[%s7092 + $0x1e0] sm:$0xf]
        %v7214 = vld [vmem:[%s7092 + $0x1e4] sm:$0xf]
        %v7215 = vld [vmem:[%s7092 + $0x1e8] sm:$0xf]
        %v7216 = vld [vmem:[%s7092 + $0x1ec] sm:$0xf]
        %v7217 = vld [vmem:[%s7092 + $0x1f0] sm:$0xf]
        %v7218 = vld [vmem:[%s7092 + $0x1f4] sm:$0xf]
        %v7219 = vld [vmem:[%s7092 + $0x1f8] sm:$0xf]
        %v7220 = vld [vmem:[%s7092 + $0x1fc] sm:$0xf]
        %v7349 = vunpack.c.l.b16 %v7093
        %v7350 = vunpack.c.l.b16 %v7094
        %v7351 = vunpack.c.l.b16 %v7095
        %v7352 = vunpack.c.l.b16 %v7096
        %v7353 = vunpack.c.l.b16 %v7097
        %v7354 = vunpack.c.l.b16 %v7098
        %v7355 = vunpack.c.l.b16 %v7099
        %v7356 = vunpack.c.l.b16 %v7100
        %v7357 = vunpack.c.l.b16 %v7101
        %v7358 = vunpack.c.l.b16 %v7102
        %v7359 = vunpack.c.l.b16 %v7103
        %v7360 = vunpack.c.l.b16 %v7104
        %v7361 = vunpack.c.l.b16 %v7105
        %v7362 = vunpack.c.l.b16 %v7106
        %v7363 = vunpack.c.l.b16 %v7107
        %v7364 = vunpack.c.l.b16 %v7108
        %v7365 = vunpack.c.l.b16 %v7109
        %v7366 = vunpack.c.l.b16 %v7110
        %v7367 = vunpack.c.l.b16 %v7111
        %v7368 = vunpack.c.l.b16 %v7112
        %v7369 = vunpack.c.l.b16 %v7113
        %v7370 = vunpack.c.l.b16 %v7114
        %v7371 = vunpack.c.l.b16 %v7115
        %v7372 = vunpack.c.l.b16 %v7116
        %v7373 = vunpack.c.l.b16 %v7117
        %v7374 = vunpack.c.l.b16 %v7118
        %v7375 = vunpack.c.l.b16 %v7119
        %v7376 = vunpack.c.l.b16 %v7120
        %v7377 = vunpack.c.l.b16 %v7121
        %v7378 = vunpack.c.l.b16 %v7122
        %v7379 = vunpack.c.l.b16 %v7123
        %v7380 = vunpack.c.l.b16 %v7124
        %v7381 = vunpack.c.l.b16 %v7125
        %v7382 = vunpack.c.l.b16 %v7126
        %v7383 = vunpack.c.l.b16 %v7127
        %v7384 = vunpack.c.l.b16 %v7128
        %v7385 = vunpack.c.l.b16 %v7129
        %v7386 = vunpack.c.l.b16 %v7130
        %v7387 = vunpack.c.l.b16 %v7131
        %v7388 = vunpack.c.l.b16 %v7132
        %v7389 = vunpack.c.l.b16 %v7133
        %v7390 = vunpack.c.l.b16 %v7134
        %v7391 = vunpack.c.l.b16 %v7135
        %v7392 = vunpack.c.l.b16 %v7136
        %v7393 = vunpack.c.l.b16 %v7137
        %v7394 = vunpack.c.l.b16 %v7138
        %v7395 = vunpack.c.l.b16 %v7139
        %v7396 = vunpack.c.l.b16 %v7140
        %v7397 = vunpack.c.l.b16 %v7141
        %v7398 = vunpack.c.l.b16 %v7142
        %v7399 = vunpack.c.l.b16 %v7143
        %v7400 = vunpack.c.l.b16 %v7144
        %v7401 = vunpack.c.l.b16 %v7145
        %v7402 = vunpack.c.l.b16 %v7146
        %v7403 = vunpack.c.l.b16 %v7147
        %v7404 = vunpack.c.l.b16 %v7148
        %v7405 = vunpack.c.l.b16 %v7149
        %v7406 = vunpack.c.l.b16 %v7150
        %v7407 = vunpack.c.l.b16 %v7151
        %v7408 = vunpack.c.l.b16 %v7152
        %v7409 = vunpack.c.l.b16 %v7153
        %v7410 = vunpack.c.l.b16 %v7154
        %v7411 = vunpack.c.l.b16 %v7155
        %v7412 = vunpack.c.l.b16 %v7156
        %v7413 = vunpack.c.l.b16 %v7157
        %v7414 = vunpack.c.l.b16 %v7158
        %v7415 = vunpack.c.l.b16 %v7159
        %v7416 = vunpack.c.l.b16 %v7160
        %v7417 = vunpack.c.l.b16 %v7161
        %v7418 = vunpack.c.l.b16 %v7162
        %v7419 = vunpack.c.l.b16 %v7163
        %v7420 = vunpack.c.l.b16 %v7164
        %v7421 = vunpack.c.l.b16 %v7165
        %v7422 = vunpack.c.l.b16 %v7166
        %v7423 = vunpack.c.l.b16 %v7167
        %v7424 = vunpack.c.l.b16 %v7168
        %v7425 = vunpack.c.l.b16 %v7169
        %v7426 = vunpack.c.l.b16 %v7170
        %v7427 = vunpack.c.l.b16 %v7171
        %v7428 = vunpack.c.l.b16 %v7172
        %v7429 = vunpack.c.l.b16 %v7173
        %v7430 = vunpack.c.l.b16 %v7174
        %v7431 = vunpack.c.l.b16 %v7175
        %v7432 = vunpack.c.l.b16 %v7176
        %v7433 = vunpack.c.l.b16 %v7177
        %v7434 = vunpack.c.l.b16 %v7178
        %v7435 = vunpack.c.l.b16 %v7179
        %v7436 = vunpack.c.l.b16 %v7180
        %v7437 = vunpack.c.l.b16 %v7181
        %v7438 = vunpack.c.l.b16 %v7182
        %v7439 = vunpack.c.l.b16 %v7183
        %v7440 = vunpack.c.l.b16 %v7184
        %v7441 = vunpack.c.l.b16 %v7185
        %v7442 = vunpack.c.l.b16 %v7186
        %v7443 = vunpack.c.l.b16 %v7187
        %v7444 = vunpack.c.l.b16 %v7188
        %v7445 = vunpack.c.l.b16 %v7189
        %v7446 = vunpack.c.l.b16 %v7190
        %v7447 = vunpack.c.l.b16 %v7191
        %v7448 = vunpack.c.l.b16 %v7192
        %v7449 = vunpack.c.l.b16 %v7193
        %v7450 = vunpack.c.l.b16 %v7194
        %v7451 = vunpack.c.l.b16 %v7195
        %v7452 = vunpack.c.l.b16 %v7196
        %v7453 = vunpack.c.l.b16 %v7197
        %v7454 = vunpack.c.l.b16 %v7198
        %v7455 = vunpack.c.l.b16 %v7199
        %v7456 = vunpack.c.l.b16 %v7200
        %v7457 = vunpack.c.l.b16 %v7201
        %v7458 = vunpack.c.l.b16 %v7202
        %v7459 = vunpack.c.l.b16 %v7203
        %v7460 = vunpack.c.l.b16 %v7204
        %v7461 = vunpack.c.l.b16 %v7205
        %v7462 = vunpack.c.l.b16 %v7206
        %v7463 = vunpack.c.l.b16 %v7207
        %v7464 = vunpack.c.l.b16 %v7208
        %v7465 = vunpack.c.l.b16 %v7209
        %v7466 = vunpack.c.l.b16 %v7210
        %v7467 = vunpack.c.l.b16 %v7211
        %v7468 = vunpack.c.l.b16 %v7212
        %v7469 = vunpack.c.l.b16 %v7213
        %v7470 = vunpack.c.l.b16 %v7214
        %v7471 = vunpack.c.l.b16 %v7215
        %v7472 = vunpack.c.l.b16 %v7216
        %v7473 = vunpack.c.l.b16 %v7217
        %v7474 = vunpack.c.l.b16 %v7218
        %v7475 = vunpack.c.l.b16 %v7219
        %v7476 = vunpack.c.l.b16 %v7220
        %v7477 = vpack.c.b16 %v7350, %v7349
        %v7478 = vpack.c.b16 %v7352, %v7351
        %v7479 = vpack.c.b16 %v7354, %v7353
        %v7480 = vpack.c.b16 %v7356, %v7355
        %v7481 = vpack.c.b16 %v7358, %v7357
        %v7482 = vpack.c.b16 %v7360, %v7359
        %v7483 = vpack.c.b16 %v7362, %v7361
        %v7484 = vpack.c.b16 %v7364, %v7363
        %v7485 = vpack.c.b16 %v7366, %v7365
        %v7486 = vpack.c.b16 %v7368, %v7367
        %v7487 = vpack.c.b16 %v7370, %v7369
        %v7488 = vpack.c.b16 %v7372, %v7371
        %v7489 = vpack.c.b16 %v7374, %v7373
        %v7490 = vpack.c.b16 %v7376, %v7375
        %v7491 = vpack.c.b16 %v7378, %v7377
        %v7492 = vpack.c.b16 %v7380, %v7379
        %v7493 = vpack.c.b16 %v7382, %v7381
        %v7494 = vpack.c.b16 %v7384, %v7383
        %v7495 = vpack.c.b16 %v7386, %v7385
        %v7496 = vpack.c.b16 %v7388, %v7387
        %v7497 = vpack.c.b16 %v7390, %v7389
        %v7498 = vpack.c.b16 %v7392, %v7391
        %v7499 = vpack.c.b16 %v7394, %v7393
        %v7500 = vpack.c.b16 %v7396, %v7395
        %v7501 = vpack.c.b16 %v7398, %v7397
        %v7502 = vpack.c.b16 %v7400, %v7399
        %v7503 = vpack.c.b16 %v7402, %v7401
        %v7504 = vpack.c.b16 %v7404, %v7403
        %v7505 = vpack.c.b16 %v7406, %v7405
        %v7506 = vpack.c.b16 %v7408, %v7407
        %v7507 = vpack.c.b16 %v7410, %v7409
        %v7508 = vpack.c.b16 %v7412, %v7411
        %v7509 = vpack.c.b16 %v7414, %v7413
        %v7510 = vpack.c.b16 %v7416, %v7415
        %v7511 = vpack.c.b16 %v7418, %v7417
        %v7512 = vpack.c.b16 %v7420, %v7419
        %v7513 = vpack.c.b16 %v7422, %v7421
        %v7514 = vpack.c.b16 %v7424, %v7423
        %v7515 = vpack.c.b16 %v7426, %v7425
        %v7516 = vpack.c.b16 %v7428, %v7427
        %v7517 = vpack.c.b16 %v7430, %v7429
        %v7518 = vpack.c.b16 %v7432, %v7431
        %v7519 = vpack.c.b16 %v7434, %v7433
        %v7520 = vpack.c.b16 %v7436, %v7435
        %v7521 = vpack.c.b16 %v7438, %v7437
        %v7522 = vpack.c.b16 %v7440, %v7439
        %v7523 = vpack.c.b16 %v7442, %v7441
        %v7524 = vpack.c.b16 %v7444, %v7443
        %v7525 = vpack.c.b16 %v7446, %v7445
        %v7526 = vpack.c.b16 %v7448, %v7447
        %v7527 = vpack.c.b16 %v7450, %v7449
        %v7528 = vpack.c.b16 %v7452, %v7451
        %v7529 = vpack.c.b16 %v7454, %v7453
        %v7530 = vpack.c.b16 %v7456, %v7455
        %v7531 = vpack.c.b16 %v7458, %v7457
        %v7532 = vpack.c.b16 %v7460, %v7459
        %v7533 = vpack.c.b16 %v7462, %v7461
        %v7534 = vpack.c.b16 %v7464, %v7463
        %v7535 = vpack.c.b16 %v7466, %v7465
        %v7536 = vpack.c.b16 %v7468, %v7467
        %v7537 = vpack.c.b16 %v7470, %v7469
        %v7538 = vpack.c.b16 %v7472, %v7471
        %v7539 = vpack.c.b16 %v7474, %v7473
        %v7540 = vpack.c.b16 %v7476, %v7475
        %7605 = vmatprep.subr.bf16.mxu0 0
        %7606 = vmatpush1.bf16.msra.mxu0 %v7477
        %7607 = vmatprep.subr.bf16.mxu0 0
        %7608 = vmatpush1.bf16.msra.mxu0 %v7478
        %7609 = vmatprep.subr.bf16.mxu0 0
        %7610 = vmatpush1.bf16.msra.mxu0 %v7479
        %7611 = vmatprep.subr.bf16.mxu0 0
        %7612 = vmatpush1.bf16.msra.mxu0 %v7480
        %7613 = vmatprep.subr.bf16.mxu0 0
        %7614 = vmatpush1.bf16.msra.mxu0 %v7481
        %7615 = vmatprep.subr.bf16.mxu0 0
        %7616 = vmatpush1.bf16.msra.mxu0 %v7482
        %7617 = vmatprep.subr.bf16.mxu0 0
        %7618 = vmatpush1.bf16.msra.mxu0 %v7483
        %7619 = vmatprep.subr.bf16.mxu0 0
        %7620 = vmatpush1.bf16.msra.mxu0 %v7484
        %7621 = vmatprep.subr.bf16.mxu0 0
        %7622 = vmatpush1.bf16.msra.mxu0 %v7485
        %7623 = vmatprep.subr.bf16.mxu0 0
        %7624 = vmatpush1.bf16.msra.mxu0 %v7486
        %7625 = vmatprep.subr.bf16.mxu0 0
        %7626 = vmatpush1.bf16.msra.mxu0 %v7487
        %7627 = vmatprep.subr.bf16.mxu0 0
        %7628 = vmatpush1.bf16.msra.mxu0 %v7488
        %7629 = vmatprep.subr.bf16.mxu0 0
        %7630 = vmatpush1.bf16.msra.mxu0 %v7489
        %7631 = vmatprep.subr.bf16.mxu0 0
        %7632 = vmatpush1.bf16.msra.mxu0 %v7490
        %7633 = vmatprep.subr.bf16.mxu0 0
        %7634 = vmatpush1.bf16.msra.mxu0 %v7491
        %7635 = vmatprep.subr.bf16.mxu0 0
        %7636 = vmatpush1.bf16.msra.mxu0 %v7492
        %7637 = vmatprep.mubr.bf16.mxu0 %v7085
        %7638 = vmatmul.mubr.bf16.gmra.mrb[0].mxu0 %v7084
        %v7639 = vpop.f32.mrb[0].mxu0
        %v7640 = vadd.f32 0.0, %v7639
        %v7641 = vpop.f32.mrb[0].mxu0
        %v7642 = vpop.f32.mrb[0].mxu0
        %v7643 = vpop.f32.mrb[0].mxu0
        %7644 = vdwg.mxu0
        %7645 = vmatprep.subr.bf16.mxu0 0
        %7646 = vmatpush1.bf16.msra.mxu0 %v7493
        %7647 = vmatprep.subr.bf16.mxu0 0
        %7648 = vmatpush1.bf16.msra.mxu0 %v7494
        %7649 = vmatprep.subr.bf16.mxu0 0
        %7650 = vmatpush1.bf16.msra.mxu0 %v7495
        %7651 = vmatprep.subr.bf16.mxu0 0
        %7652 = vmatpush1.bf16.msra.mxu0 %v7496
        %7653 = vmatprep.subr.bf16.mxu0 0
        %7654 = vmatpush1.bf16.msra.mxu0 %v7497
        %7655 = vmatprep.subr.bf16.mxu0 0
        %7656 = vmatpush1.bf16.msra.mxu0 %v7498
        %7657 = vmatprep.subr.bf16.mxu0 0
        %7658 = vmatpush1.bf16.msra.mxu0 %v7499
        %7659 = vmatprep.subr.bf16.mxu0 0
        %7660 = vmatpush1.bf16.msra.mxu0 %v7500
        %7661 = vmatprep.subr.bf16.mxu0 0
        %7662 = vmatpush1.bf16.msra.mxu0 %v7501
        %7663 = vmatprep.subr.bf16.mxu0 0
        %7664 = vmatpush1.bf16.msra.mxu0 %v7502
        %7665 = vmatprep.subr.bf16.mxu0 0
        %7666 = vmatpush1.bf16.msra.mxu0 %v7503
        %7667 = vmatprep.subr.bf16.mxu0 0
        %7668 = vmatpush1.bf16.msra.mxu0 %v7504
        %7669 = vmatprep.subr.bf16.mxu0 0
        %7670 = vmatpush1.bf16.msra.mxu0 %v7505
        %7671 = vmatprep.subr.bf16.mxu0 0
        %7672 = vmatpush1.bf16.msra.mxu0 %v7506
        %7673 = vmatprep.subr.bf16.mxu0 0
        %7674 = vmatpush1.bf16.msra.mxu0 %v7507
        %7675 = vmatprep.subr.bf16.mxu0 0
        %7676 = vmatpush1.bf16.msra.mxu0 %v7508
        %7677 = vmatprep.mubr.bf16.mxu0 %v7087
        %7678 = vmatmul.mubr.bf16.gmra.mrb[0].mxu0 %v7086
        %v7679 = vpop.f32.mrb[0].mxu0
        %v7680 = vadd.f32 %v7640, %v7679
        %v7681 = vpop.f32.mrb[0].mxu0
        %v7682 = vpop.f32.mrb[0].mxu0
        %v7683 = vpop.f32.mrb[0].mxu0
        %7684 = vdwg.mxu0
        %7685 = vmatprep.subr.bf16.mxu0 0
        %7686 = vmatpush1.bf16.msra.mxu0 %v7509
        %7687 = vmatprep.subr.bf16.mxu0 0
        %7688 = vmatpush1.bf16.msra.mxu0 %v7510
        %7689 = vmatprep.subr.bf16.mxu0 0
        %7690 = vmatpush1.bf16.msra.mxu0 %v7511
        %7691 = vmatprep.subr.bf16.mxu0 0
        %7692 = vmatpush1.bf16.msra.mxu0 %v7512
        %7693 = vmatprep.subr.bf16.mxu0 0
        %7694 = vmatpush1.bf16.msra.mxu0 %v7513
        %7695 = vmatprep.subr.bf16.mxu0 0
        %7696 = vmatpush1.bf16.msra.mxu0 %v7514
        %7697 = vmatprep.subr.bf16.mxu0 0
        %7698 = vmatpush1.bf16.msra.mxu0 %v7515
        %7699 = vmatprep.subr.bf16.mxu0 0
        %7700 = vmatpush1.bf16.msra.mxu0 %v7516
        %7701 = vmatprep.subr.bf16.mxu0 0
        %7702 = vmatpush1.bf16.msra.mxu0 %v7517
        %7703 = vmatprep.subr.bf16.mxu0 0
        %7704 = vmatpush1.bf16.msra.mxu0 %v7518
        %7705 = vmatprep.subr.bf16.mxu0 0
        %7706 = vmatpush1.bf16.msra.mxu0 %v7519
        %7707 = vmatprep.subr.bf16.mxu0 0
        %7708 = vmatpush1.bf16.msra.mxu0 %v7520
        %7709 = vmatprep.subr.bf16.mxu0 0
        %7710 = vmatpush1.bf16.msra.mxu0 %v7521
        %7711 = vmatprep.subr.bf16.mxu0 0
        %7712 = vmatpush1.bf16.msra.mxu0 %v7522
        %7713 = vmatprep.subr.bf16.mxu0 0
        %7714 = vmatpush1.bf16.msra.mxu0 %v7523
        %7715 = vmatprep.subr.bf16.mxu0 0
        %7716 = vmatpush1.bf16.msra.mxu0 %v7524
        %7717 = vmatprep.mubr.bf16.mxu0 %v7089
        %7718 = vmatmul.mubr.bf16.gmra.mrb[0].mxu0 %v7088
        %v7719 = vpop.f32.mrb[0].mxu0
        %v7720 = vadd.f32 %v7680, %v7719
        %v7721 = vpop.f32.mrb[0].mxu0
        %v7722 = vpop.f32.mrb[0].mxu0
        %v7723 = vpop.f32.mrb[0].mxu0
        %7724 = vdwg.mxu0
        %7725 = vmatprep.subr.bf16.mxu0 0
        %7726 = vmatpush1.bf16.msra.mxu0 %v7525
        %7727 = vmatprep.subr.bf16.mxu0 0
        %7728 = vmatpush1.bf16.msra.mxu0 %v7526
        %7729 = vmatprep.subr.bf16.mxu0 0
        %7730 = vmatpush1.bf16.msra.mxu0 %v7527
        %7731 = vmatprep.subr.bf16.mxu0 0
        %7732 = vmatpush1.bf16.msra.mxu0 %v7528
        %7733 = vmatprep.subr.bf16.mxu0 0
        %7734 = vmatpush1.bf16.msra.mxu0 %v7529
        %7735 = vmatprep.subr.bf16.mxu0 0
        %7736 = vmatpush1.bf16.msra.mxu0 %v7530
        %7737 = vmatprep.subr.bf16.mxu0 0
        %7738 = vmatpush1.bf16.msra.mxu0 %v7531
        %7739 = vmatprep.subr.bf16.mxu0 0
        %7740 = vmatpush1.bf16.msra.mxu0 %v7532
        %7741 = vmatprep.subr.bf16.mxu0 0
        %7742 = vmatpush1.bf16.msra.mxu0 %v7533
        %7743 = vmatprep.subr.bf16.mxu0 0
        %7744 = vmatpush1.bf16.msra.mxu0 %v7534
        %7745 = vmatprep.subr.bf16.mxu0 0
        %7746 = vmatpush1.bf16.msra.mxu0 %v7535
        %7747 = vmatprep.subr.bf16.mxu0 0
        %7748 = vmatpush1.bf16.msra.mxu0 %v7536
        %7749 = vmatprep.subr.bf16.mxu0 0
        %7750 = vmatpush1.bf16.msra.mxu0 %v7537
        %7751 = vmatprep.subr.bf16.mxu0 0
        %7752 = vmatpush1.bf16.msra.mxu0 %v7538
        %7753 = vmatprep.subr.bf16.mxu0 0
        %7754 = vmatpush1.bf16.msra.mxu0 %v7539
        %7755 = vmatprep.subr.bf16.mxu0 0
        %7756 = vmatpush1.bf16.msra.mxu0 %v7540
        %7757 = vmatprep.mubr.bf16.mxu0 %v7091
        %7758 = vmatmul.mubr.bf16.gmra.mrb[0].mxu0 %v7090
        %v7759 = vpop.f32.mrb[0].mxu0
        %v7760 = vadd.f32 %v7720, %v7759
        %v7761 = vpop.f32.mrb[0].mxu0
        %v7762 = vpop.f32.mrb[0].mxu0
        %v7763 = vpop.f32.mrb[0].mxu0
        %7764 = vdwg.mxu0
        %v7765 = vadd.f32 %v7074, %v7760
        %s7766 = scalar_lea.vmem [#allocation2], 448
        %v7767 = vld [vmem:[%s7766] sm:$0xff]
        %v7768 = vld [vmem:[%s7766 + $0x8] sm:$0xff]
        %v7769 = vld [vmem:[%s7766 + $0x10] sm:$0xff]
        %v7770 = vld [vmem:[%s7766 + $0x18] sm:$0xff]
        %v7771 = vld [vmem:[%s7766 + $0x20] sm:$0xff]
        %v7772 = vld [vmem:[%s7766 + $0x28] sm:$0xff]
        %v7773 = vld [vmem:[%s7766 + $0x30] sm:$0xff]
        %v7774 = vld [vmem:[%s7766 + $0x38] sm:$0xff]
        %v7775 = vpack.c.bf16 %v7767, %v7767
        %v7776 = vpack.c.bf16 %v7768, %v7768
        %v7777 = vpack.c.bf16 %v7769, %v7769
        %v7778 = vpack.c.bf16 %v7770, %v7770
        %v7779 = vpack.c.bf16 %v7771, %v7771
        %v7780 = vpack.c.bf16 %v7772, %v7772
        %v7781 = vpack.c.bf16 %v7773, %v7773
        %v7782 = vpack.c.bf16 %v7774, %v7774
        %s7783 = scalar_lea.vmem %s3, 3584
        %v7784 = vld [vmem:[%s7783] sm:$0xf]
        %v7785 = vld [vmem:[%s7783 + $0x4] sm:$0xf]
        %v7786 = vld [vmem:[%s7783 + $0x8] sm:$0xf]
        %v7787 = vld [vmem:[%s7783 + $0xc] sm:$0xf]
        %v7788 = vld [vmem:[%s7783 + $0x10] sm:$0xf]
        %v7789 = vld [vmem:[%s7783 + $0x14] sm:$0xf]
        %v7790 = vld [vmem:[%s7783 + $0x18] sm:$0xf]
        %v7791 = vld [vmem:[%s7783 + $0x1c] sm:$0xf]
        %v7792 = vld [vmem:[%s7783 + $0x20] sm:$0xf]
        %v7793 = vld [vmem:[%s7783 + $0x24] sm:$0xf]
        %v7794 = vld [vmem:[%s7783 + $0x28] sm:$0xf]
        %v7795 = vld [vmem:[%s7783 + $0x2c] sm:$0xf]
        %v7796 = vld [vmem:[%s7783 + $0x30] sm:$0xf]
        %v7797 = vld [vmem:[%s7783 + $0x34] sm:$0xf]
        %v7798 = vld [vmem:[%s7783 + $0x38] sm:$0xf]
        %v7799 = vld [vmem:[%s7783 + $0x3c] sm:$0xf]
        %v7800 = vld [vmem:[%s7783 + $0x40] sm:$0xf]
        %v7801 = vld [vmem:[%s7783 + $0x44] sm:$0xf]
        %v7802 = vld [vmem:[%s7783 + $0x48] sm:$0xf]
        %v7803 = vld [vmem:[%s7783 + $0x4c] sm:$0xf]
        %v7804 = vld [vmem:[%s7783 + $0x50] sm:$0xf]
        %v7805 = vld [vmem:[%s7783 + $0x54] sm:$0xf]
        %v7806 = vld [vmem:[%s7783 + $0x58] sm:$0xf]
        %v7807 = vld [vmem:[%s7783 + $0x5c] sm:$0xf]
        %v7808 = vld [vmem:[%s7783 + $0x60] sm:$0xf]
        %v7809 = vld [vmem:[%s7783 + $0x64] sm:$0xf]
        %v7810 = vld [vmem:[%s7783 + $0x68] sm:$0xf]
        %v7811 = vld [vmem:[%s7783 + $0x6c] sm:$0xf]
        %v7812 = vld [vmem:[%s7783 + $0x70] sm:$0xf]
        %v7813 = vld [vmem:[%s7783 + $0x74] sm:$0xf]
        %v7814 = vld [vmem:[%s7783 + $0x78] sm:$0xf]
        %v7815 = vld [vmem:[%s7783 + $0x7c] sm:$0xf]
        %v7816 = vld [vmem:[%s7783 + $0x80] sm:$0xf]
        %v7817 = vld [vmem:[%s7783 + $0x84] sm:$0xf]
        %v7818 = vld [vmem:[%s7783 + $0x88] sm:$0xf]
        %v7819 = vld [vmem:[%s7783 + $0x8c] sm:$0xf]
        %v7820 = vld [vmem:[%s7783 + $0x90] sm:$0xf]
        %v7821 = vld [vmem:[%s7783 + $0x94] sm:$0xf]
        %v7822 = vld [vmem:[%s7783 + $0x98] sm:$0xf]
        %v7823 = vld [vmem:[%s7783 + $0x9c] sm:$0xf]
        %v7824 = vld [vmem:[%s7783 + $0xa0] sm:$0xf]
        %v7825 = vld [vmem:[%s7783 + $0xa4] sm:$0xf]
        %v7826 = vld [vmem:[%s7783 + $0xa8] sm:$0xf]
        %v7827 = vld [vmem:[%s7783 + $0xac] sm:$0xf]
        %v7828 = vld [vmem:[%s7783 + $0xb0] sm:$0xf]
        %v7829 = vld [vmem:[%s7783 + $0xb4] sm:$0xf]
        %v7830 = vld [vmem:[%s7783 + $0xb8] sm:$0xf]
        %v7831 = vld [vmem:[%s7783 + $0xbc] sm:$0xf]
        %v7832 = vld [vmem:[%s7783 + $0xc0] sm:$0xf]
        %v7833 = vld [vmem:[%s7783 + $0xc4] sm:$0xf]
        %v7834 = vld [vmem:[%s7783 + $0xc8] sm:$0xf]
        %v7835 = vld [vmem:[%s7783 + $0xcc] sm:$0xf]
        %v7836 = vld [vmem:[%s7783 + $0xd0] sm:$0xf]
        %v7837 = vld [vmem:[%s7783 + $0xd4] sm:$0xf]
        %v7838 = vld [vmem:[%s7783 + $0xd8] sm:$0xf]
        %v7839 = vld [vmem:[%s7783 + $0xdc] sm:$0xf]
        %v7840 = vld [vmem:[%s7783 + $0xe0] sm:$0xf]
        %v7841 = vld [vmem:[%s7783 + $0xe4] sm:$0xf]
        %v7842 = vld [vmem:[%s7783 + $0xe8] sm:$0xf]
        %v7843 = vld [vmem:[%s7783 + $0xec] sm:$0xf]
        %v7844 = vld [vmem:[%s7783 + $0xf0] sm:$0xf]
        %v7845 = vld [vmem:[%s7783 + $0xf4] sm:$0xf]
        %v7846 = vld [vmem:[%s7783 + $0xf8] sm:$0xf]
        %v7847 = vld [vmem:[%s7783 + $0xfc] sm:$0xf]
        %v7848 = vld [vmem:[%s7783 + $0x100] sm:$0xf]
        %v7849 = vld [vmem:[%s7783 + $0x104] sm:$0xf]
        %v7850 = vld [vmem:[%s7783 + $0x108] sm:$0xf]
        %v7851 = vld [vmem:[%s7783 + $0x10c] sm:$0xf]
        %v7852 = vld [vmem:[%s7783 + $0x110] sm:$0xf]
        %v7853 = vld [vmem:[%s7783 + $0x114] sm:$0xf]
        %v7854 = vld [vmem:[%s7783 + $0x118] sm:$0xf]
        %v7855 = vld [vmem:[%s7783 + $0x11c] sm:$0xf]
        %v7856 = vld [vmem:[%s7783 + $0x120] sm:$0xf]
        %v7857 = vld [vmem:[%s7783 + $0x124] sm:$0xf]
        %v7858 = vld [vmem:[%s7783 + $0x128] sm:$0xf]
        %v7859 = vld [vmem:[%s7783 + $0x12c] sm:$0xf]
        %v7860 = vld [vmem:[%s7783 + $0x130] sm:$0xf]
        %v7861 = vld [vmem:[%s7783 + $0x134] sm:$0xf]
        %v7862 = vld [vmem:[%s7783 + $0x138] sm:$0xf]
        %v7863 = vld [vmem:[%s7783 + $0x13c] sm:$0xf]
        %v7864 = vld [vmem:[%s7783 + $0x140] sm:$0xf]
        %v7865 = vld [vmem:[%s7783 + $0x144] sm:$0xf]
        %v7866 = vld [vmem:[%s7783 + $0x148] sm:$0xf]
        %v7867 = vld [vmem:[%s7783 + $0x14c] sm:$0xf]
        %v7868 = vld [vmem:[%s7783 + $0x150] sm:$0xf]
        %v7869 = vld [vmem:[%s7783 + $0x154] sm:$0xf]
        %v7870 = vld [vmem:[%s7783 + $0x158] sm:$0xf]
        %v7871 = vld [vmem:[%s7783 + $0x15c] sm:$0xf]
        %v7872 = vld [vmem:[%s7783 + $0x160] sm:$0xf]
        %v7873 = vld [vmem:[%s7783 + $0x164] sm:$0xf]
        %v7874 = vld [vmem:[%s7783 + $0x168] sm:$0xf]
        %v7875 = vld [vmem:[%s7783 + $0x16c] sm:$0xf]
        %v7876 = vld [vmem:[%s7783 + $0x170] sm:$0xf]
        %v7877 = vld [vmem:[%s7783 + $0x174] sm:$0xf]
        %v7878 = vld [vmem:[%s7783 + $0x178] sm:$0xf]
        %v7879 = vld [vmem:[%s7783 + $0x17c] sm:$0xf]
        %v7880 = vld [vmem:[%s7783 + $0x180] sm:$0xf]
        %v7881 = vld [vmem:[%s7783 + $0x184] sm:$0xf]
        %v7882 = vld [vmem:[%s7783 + $0x188] sm:$0xf]
        %v7883 = vld [vmem:[%s7783 + $0x18c] sm:$0xf]
        %v7884 = vld [vmem:[%s7783 + $0x190] sm:$0xf]
        %v7885 = vld [vmem:[%s7783 + $0x194] sm:$0xf]
        %v7886 = vld [vmem:[%s7783 + $0x198] sm:$0xf]
        %v7887 = vld [vmem:[%s7783 + $0x19c] sm:$0xf]
        %v7888 = vld [vmem:[%s7783 + $0x1a0] sm:$0xf]
        %v7889 = vld [vmem:[%s7783 + $0x1a4] sm:$0xf]
        %v7890 = vld [vmem:[%s7783 + $0x1a8] sm:$0xf]
        %v7891 = vld [vmem:[%s7783 + $0x1ac] sm:$0xf]
        %v7892 = vld [vmem:[%s7783 + $0x1b0] sm:$0xf]
        %v7893 = vld [vmem:[%s7783 + $0x1b4] sm:$0xf]
        %v7894 = vld [vmem:[%s7783 + $0x1b8] sm:$0xf]
        %v7895 = vld [vmem:[%s7783 + $0x1bc] sm:$0xf]
        %v7896 = vld [vmem:[%s7783 + $0x1c0] sm:$0xf]
        %v7897 = vld [vmem:[%s7783 + $0x1c4] sm:$0xf]
        %v7898 = vld [vmem:[%s7783 + $0x1c8] sm:$0xf]
        %v7899 = vld [vmem:[%s7783 + $0x1cc] sm:$0xf]
        %v7900 = vld [vmem:[%s7783 + $0x1d0] sm:$0xf]
        %v7901 = vld [vmem:[%s7783 + $0x1d4] sm:$0xf]
        %v7902 = vld [vmem:[%s7783 + $0x1d8] sm:$0xf]
        %v7903 = vld [vmem:[%s7783 + $0x1dc] sm:$0xf]
        %v7904 = vld [vmem:[%s7783 + $0x1e0] sm:$0xf]
        %v7905 = vld [vmem:[%s7783 + $0x1e4] sm:$0xf]
        %v7906 = vld [vmem:[%s7783 + $0x1e8] sm:$0xf]
        %v7907 = vld [vmem:[%s7783 + $0x1ec] sm:$0xf]
        %v7908 = vld [vmem:[%s7783 + $0x1f0] sm:$0xf]
        %v7909 = vld [vmem:[%s7783 + $0x1f4] sm:$0xf]
        %v7910 = vld [vmem:[%s7783 + $0x1f8] sm:$0xf]
        %v7911 = vld [vmem:[%s7783 + $0x1fc] sm:$0xf]
        %v8040 = vunpack.c.l.b16 %v7784
        %v8041 = vunpack.c.l.b16 %v7785
        %v8042 = vunpack.c.l.b16 %v7786
        %v8043 = vunpack.c.l.b16 %v7787
        %v8044 = vunpack.c.l.b16 %v7788
        %v8045 = vunpack.c.l.b16 %v7789
        %v8046 = vunpack.c.l.b16 %v7790
        %v8047 = vunpack.c.l.b16 %v7791
        %v8048 = vunpack.c.l.b16 %v7792
        %v8049 = vunpack.c.l.b16 %v7793
        %v8050 = vunpack.c.l.b16 %v7794
        %v8051 = vunpack.c.l.b16 %v7795
        %v8052 = vunpack.c.l.b16 %v7796
        %v8053 = vunpack.c.l.b16 %v7797
        %v8054 = vunpack.c.l.b16 %v7798
        %v8055 = vunpack.c.l.b16 %v7799
        %v8056 = vunpack.c.l.b16 %v7800
        %v8057 = vunpack.c.l.b16 %v7801
        %v8058 = vunpack.c.l.b16 %v7802
        %v8059 = vunpack.c.l.b16 %v7803
        %v8060 = vunpack.c.l.b16 %v7804
        %v8061 = vunpack.c.l.b16 %v7805
        %v8062 = vunpack.c.l.b16 %v7806
        %v8063 = vunpack.c.l.b16 %v7807
        %v8064 = vunpack.c.l.b16 %v7808
        %v8065 = vunpack.c.l.b16 %v7809
        %v8066 = vunpack.c.l.b16 %v7810
        %v8067 = vunpack.c.l.b16 %v7811
        %v8068 = vunpack.c.l.b16 %v7812
        %v8069 = vunpack.c.l.b16 %v7813
        %v8070 = vunpack.c.l.b16 %v7814
        %v8071 = vunpack.c.l.b16 %v7815
        %v8072 = vunpack.c.l.b16 %v7816
        %v8073 = vunpack.c.l.b16 %v7817
        %v8074 = vunpack.c.l.b16 %v7818
        %v8075 = vunpack.c.l.b16 %v7819
        %v8076 = vunpack.c.l.b16 %v7820
        %v8077 = vunpack.c.l.b16 %v7821
        %v8078 = vunpack.c.l.b16 %v7822
        %v8079 = vunpack.c.l.b16 %v7823
        %v8080 = vunpack.c.l.b16 %v7824
        %v8081 = vunpack.c.l.b16 %v7825
        %v8082 = vunpack.c.l.b16 %v7826
        %v8083 = vunpack.c.l.b16 %v7827
        %v8084 = vunpack.c.l.b16 %v7828
        %v8085 = vunpack.c.l.b16 %v7829
        %v8086 = vunpack.c.l.b16 %v7830
        %v8087 = vunpack.c.l.b16 %v7831
        %v8088 = vunpack.c.l.b16 %v7832
        %v8089 = vunpack.c.l.b16 %v7833
        %v8090 = vunpack.c.l.b16 %v7834
        %v8091 = vunpack.c.l.b16 %v7835
        %v8092 = vunpack.c.l.b16 %v7836
        %v8093 = vunpack.c.l.b16 %v7837
        %v8094 = vunpack.c.l.b16 %v7838
        %v8095 = vunpack.c.l.b16 %v7839
        %v8096 = vunpack.c.l.b16 %v7840
        %v8097 = vunpack.c.l.b16 %v7841
        %v8098 = vunpack.c.l.b16 %v7842
        %v8099 = vunpack.c.l.b16 %v7843
        %v8100 = vunpack.c.l.b16 %v7844
        %v8101 = vunpack.c.l.b16 %v7845
        %v8102 = vunpack.c.l.b16 %v7846
        %v8103 = vunpack.c.l.b16 %v7847
        %v8104 = vunpack.c.l.b16 %v7848
        %v8105 = vunpack.c.l.b16 %v7849
        %v8106 = vunpack.c.l.b16 %v7850
        %v8107 = vunpack.c.l.b16 %v7851
        %v8108 = vunpack.c.l.b16 %v7852
        %v8109 = vunpack.c.l.b16 %v7853
        %v8110 = vunpack.c.l.b16 %v7854
        %v8111 = vunpack.c.l.b16 %v7855
        %v8112 = vunpack.c.l.b16 %v7856
        %v8113 = vunpack.c.l.b16 %v7857
        %v8114 = vunpack.c.l.b16 %v7858
        %v8115 = vunpack.c.l.b16 %v7859
        %v8116 = vunpack.c.l.b16 %v7860
        %v8117 = vunpack.c.l.b16 %v7861
        %v8118 = vunpack.c.l.b16 %v7862
        %v8119 = vunpack.c.l.b16 %v7863
        %v8120 = vunpack.c.l.b16 %v7864
        %v8121 = vunpack.c.l.b16 %v7865
        %v8122 = vunpack.c.l.b16 %v7866
        %v8123 = vunpack.c.l.b16 %v7867
        %v8124 = vunpack.c.l.b16 %v7868
        %v8125 = vunpack.c.l.b16 %v7869
        %v8126 = vunpack.c.l.b16 %v7870
        %v8127 = vunpack.c.l.b16 %v7871
        %v8128 = vunpack.c.l.b16 %v7872
        %v8129 = vunpack.c.l.b16 %v7873
        %v8130 = vunpack.c.l.b16 %v7874
        %v8131 = vunpack.c.l.b16 %v7875
        %v8132 = vunpack.c.l.b16 %v7876
        %v8133 = vunpack.c.l.b16 %v7877
        %v8134 = vunpack.c.l.b16 %v7878
        %v8135 = vunpack.c.l.b16 %v7879
        %v8136 = vunpack.c.l.b16 %v7880
        %v8137 = vunpack.c.l.b16 %v7881
        %v8138 = vunpack.c.l.b16 %v7882
        %v8139 = vunpack.c.l.b16 %v7883
        %v8140 = vunpack.c.l.b16 %v7884
        %v8141 = vunpack.c.l.b16 %v7885
        %v8142 = vunpack.c.l.b16 %v7886
        %v8143 = vunpack.c.l.b16 %v7887
        %v8144 = vunpack.c.l.b16 %v7888
        %v8145 = vunpack.c.l.b16 %v7889
        %v8146 = vunpack.c.l.b16 %v7890
        %v8147 = vunpack.c.l.b16 %v7891
        %v8148 = vunpack.c.l.b16 %v7892
        %v8149 = vunpack.c.l.b16 %v7893
        %v8150 = vunpack.c.l.b16 %v7894
        %v8151 = vunpack.c.l.b16 %v7895
        %v8152 = vunpack.c.l.b16 %v7896
        %v8153 = vunpack.c.l.b16 %v7897
        %v8154 = vunpack.c.l.b16 %v7898
        %v8155 = vunpack.c.l.b16 %v7899
        %v8156 = vunpack.c.l.b16 %v7900
        %v8157 = vunpack.c.l.b16 %v7901
        %v8158 = vunpack.c.l.b16 %v7902
        %v8159 = vunpack.c.l.b16 %v7903
        %v8160 = vunpack.c.l.b16 %v7904
        %v8161 = vunpack.c.l.b16 %v7905
        %v8162 = vunpack.c.l.b16 %v7906
        %v8163 = vunpack.c.l.b16 %v7907
        %v8164 = vunpack.c.l.b16 %v7908
        %v8165 = vunpack.c.l.b16 %v7909
        %v8166 = vunpack.c.l.b16 %v7910
        %v8167 = vunpack.c.l.b16 %v7911
        %v8168 = vpack.c.b16 %v8041, %v8040
        %v8169 = vpack.c.b16 %v8043, %v8042
        %v8170 = vpack.c.b16 %v8045, %v8044
        %v8171 = vpack.c.b16 %v8047, %v8046
        %v8172 = vpack.c.b16 %v8049, %v8048
        %v8173 = vpack.c.b16 %v8051, %v8050
        %v8174 = vpack.c.b16 %v8053, %v8052
        %v8175 = vpack.c.b16 %v8055, %v8054
        %v8176 = vpack.c.b16 %v8057, %v8056
        %v8177 = vpack.c.b16 %v8059, %v8058
        %v8178 = vpack.c.b16 %v8061, %v8060
        %v8179 = vpack.c.b16 %v8063, %v8062
        %v8180 = vpack.c.b16 %v8065, %v8064
        %v8181 = vpack.c.b16 %v8067, %v8066
        %v8182 = vpack.c.b16 %v8069, %v8068
        %v8183 = vpack.c.b16 %v8071, %v8070
        %v8184 = vpack.c.b16 %v8073, %v8072
        %v8185 = vpack.c.b16 %v8075, %v8074
        %v8186 = vpack.c.b16 %v8077, %v8076
        %v8187 = vpack.c.b16 %v8079, %v8078
        %v8188 = vpack.c.b16 %v8081, %v8080
        %v8189 = vpack.c.b16 %v8083, %v8082
        %v8190 = vpack.c.b16 %v8085, %v8084
        %v8191 = vpack.c.b16 %v8087, %v8086
        %v8192 = vpack.c.b16 %v8089, %v8088
        %v8193 = vpack.c.b16 %v8091, %v8090
        %v8194 = vpack.c.b16 %v8093, %v8092
        %v8195 = vpack.c.b16 %v8095, %v8094
        %v8196 = vpack.c.b16 %v8097, %v8096
        %v8197 = vpack.c.b16 %v8099, %v8098
        %v8198 = vpack.c.b16 %v8101, %v8100
        %v8199 = vpack.c.b16 %v8103, %v8102
        %v8200 = vpack.c.b16 %v8105, %v8104
        %v8201 = vpack.c.b16 %v8107, %v8106
        %v8202 = vpack.c.b16 %v8109, %v8108
        %v8203 = vpack.c.b16 %v8111, %v8110
        %v8204 = vpack.c.b16 %v8113, %v8112
        %v8205 = vpack.c.b16 %v8115, %v8114
        %v8206 = vpack.c.b16 %v8117, %v8116
        %v8207 = vpack.c.b16 %v8119, %v8118
        %v8208 = vpack.c.b16 %v8121, %v8120
        %v8209 = vpack.c.b16 %v8123, %v8122
        %v8210 = vpack.c.b16 %v8125, %v8124
        %v8211 = vpack.c.b16 %v8127, %v8126
        %v8212 = vpack.c.b16 %v8129, %v8128
        %v8213 = vpack.c.b16 %v8131, %v8130
        %v8214 = vpack.c.b16 %v8133, %v8132
        %v8215 = vpack.c.b16 %v8135, %v8134
        %v8216 = vpack.c.b16 %v8137, %v8136
        %v8217 = vpack.c.b16 %v8139, %v8138
        %v8218 = vpack.c.b16 %v8141, %v8140
        %v8219 = vpack.c.b16 %v8143, %v8142
        %v8220 = vpack.c.b16 %v8145, %v8144
        %v8221 = vpack.c.b16 %v8147, %v8146
        %v8222 = vpack.c.b16 %v8149, %v8148
        %v8223 = vpack.c.b16 %v8151, %v8150
        %v8224 = vpack.c.b16 %v8153, %v8152
        %v8225 = vpack.c.b16 %v8155, %v8154
        %v8226 = vpack.c.b16 %v8157, %v8156
        %v8227 = vpack.c.b16 %v8159, %v8158
        %v8228 = vpack.c.b16 %v8161, %v8160
        %v8229 = vpack.c.b16 %v8163, %v8162
        %v8230 = vpack.c.b16 %v8165, %v8164
        %v8231 = vpack.c.b16 %v8167, %v8166
        %8296 = vmatprep.subr.bf16.mxu0 0
        %8297 = vmatpush1.bf16.msra.mxu0 %v8168
        %8298 = vmatprep.subr.bf16.mxu0 0
        %8299 = vmatpush1.bf16.msra.mxu0 %v8169
        %8300 = vmatprep.subr.bf16.mxu0 0
        %8301 = vmatpush1.bf16.msra.mxu0 %v8170
        %8302 = vmatprep.subr.bf16.mxu0 0
        %8303 = vmatpush1.bf16.msra.mxu0 %v8171
        %8304 = vmatprep.subr.bf16.mxu0 0
        %8305 = vmatpush1.bf16.msra.mxu0 %v8172
        %8306 = vmatprep.subr.bf16.mxu0 0
        %8307 = vmatpush1.bf16.msra.mxu0 %v8173
        %8308 = vmatprep.subr.bf16.mxu0 0
        %8309 = vmatpush1.bf16.msra.mxu0 %v8174
        %8310 = vmatprep.subr.bf16.mxu0 0
        %8311 = vmatpush1.bf16.msra.mxu0 %v8175
        %8312 = vmatprep.subr.bf16.mxu0 0
        %8313 = vmatpush1.bf16.msra.mxu0 %v8176
        %8314 = vmatprep.subr.bf16.mxu0 0
        %8315 = vmatpush1.bf16.msra.mxu0 %v8177
        %8316 = vmatprep.subr.bf16.mxu0 0
        %8317 = vmatpush1.bf16.msra.mxu0 %v8178
        %8318 = vmatprep.subr.bf16.mxu0 0
        %8319 = vmatpush1.bf16.msra.mxu0 %v8179
        %8320 = vmatprep.subr.bf16.mxu0 0
        %8321 = vmatpush1.bf16.msra.mxu0 %v8180
        %8322 = vmatprep.subr.bf16.mxu0 0
        %8323 = vmatpush1.bf16.msra.mxu0 %v8181
        %8324 = vmatprep.subr.bf16.mxu0 0
        %8325 = vmatpush1.bf16.msra.mxu0 %v8182
        %8326 = vmatprep.subr.bf16.mxu0 0
        %8327 = vmatpush1.bf16.msra.mxu0 %v8183
        %8328 = vmatprep.mubr.bf16.mxu0 %v7776
        %8329 = vmatmul.mubr.bf16.gmra.mrb[0].mxu0 %v7775
        %v8330 = vpop.f32.mrb[0].mxu0
        %v8331 = vadd.f32 0.0, %v8330
        %v8332 = vpop.f32.mrb[0].mxu0
        %v8333 = vpop.f32.mrb[0].mxu0
        %v8334 = vpop.f32.mrb[0].mxu0
        %8335 = vdwg.mxu0
        %8336 = vmatprep.subr.bf16.mxu0 0
        %8337 = vmatpush1.bf16.msra.mxu0 %v8184
        %8338 = vmatprep.subr.bf16.mxu0 0
        %8339 = vmatpush1.bf16.msra.mxu0 %v8185
        %8340 = vmatprep.subr.bf16.mxu0 0
        %8341 = vmatpush1.bf16.msra.mxu0 %v8186
        %8342 = vmatprep.subr.bf16.mxu0 0
        %8343 = vmatpush1.bf16.msra.mxu0 %v8187
        %8344 = vmatprep.subr.bf16.mxu0 0
        %8345 = vmatpush1.bf16.msra.mxu0 %v8188
        %8346 = vmatprep.subr.bf16.mxu0 0
        %8347 = vmatpush1.bf16.msra.mxu0 %v8189
        %8348 = vmatprep.subr.bf16.mxu0 0
        %8349 = vmatpush1.bf16.msra.mxu0 %v8190
        %8350 = vmatprep.subr.bf16.mxu0 0
        %8351 = vmatpush1.bf16.msra.mxu0 %v8191
        %8352 = vmatprep.subr.bf16.mxu0 0
        %8353 = vmatpush1.bf16.msra.mxu0 %v8192
        %8354 = vmatprep.subr.bf16.mxu0 0
        %8355 = vmatpush1.bf16.msra.mxu0 %v8193
        %8356 = vmatprep.subr.bf16.mxu0 0
        %8357 = vmatpush1.bf16.msra.mxu0 %v8194
        %8358 = vmatprep.subr.bf16.mxu0 0
        %8359 = vmatpush1.bf16.msra.mxu0 %v8195
        %8360 = vmatprep.subr.bf16.mxu0 0
        %8361 = vmatpush1.bf16.msra.mxu0 %v8196
        %8362 = vmatprep.subr.bf16.mxu0 0
        %8363 = vmatpush1.bf16.msra.mxu0 %v8197
        %8364 = vmatprep.subr.bf16.mxu0 0
        %8365 = vmatpush1.bf16.msra.mxu0 %v8198
        %8366 = vmatprep.subr.bf16.mxu0 0
        %8367 = vmatpush1.bf16.msra.mxu0 %v8199
        %8368 = vmatprep.mubr.bf16.mxu0 %v7778
        %8369 = vmatmul.mubr.bf16.gmra.mrb[0].mxu0 %v7777
        %v8370 = vpop.f32.mrb[0].mxu0
        %v8371 = vadd.f32 %v8331, %v8370
        %v8372 = vpop.f32.mrb[0].mxu0
        %v8373 = vpop.f32.mrb[0].mxu0
        %v8374 = vpop.f32.mrb[0].mxu0
        %8375 = vdwg.mxu0
        %8376 = vmatprep.subr.bf16.mxu0 0
        %8377 = vmatpush1.bf16.msra.mxu0 %v8200
        %8378 = vmatprep.subr.bf16.mxu0 0
        %8379 = vmatpush1.bf16.msra.mxu0 %v8201
        %8380 = vmatprep.subr.bf16.mxu0 0
        %8381 = vmatpush1.bf16.msra.mxu0 %v8202
        %8382 = vmatprep.subr.bf16.mxu0 0
        %8383 = vmatpush1.bf16.msra.mxu0 %v8203
        %8384 = vmatprep.subr.bf16.mxu0 0
        %8385 = vmatpush1.bf16.msra.mxu0 %v8204
        %8386 = vmatprep.subr.bf16.mxu0 0
        %8387 = vmatpush1.bf16.msra.mxu0 %v8205
        %8388 = vmatprep.subr.bf16.mxu0 0
        %8389 = vmatpush1.bf16.msra.mxu0 %v8206
        %8390 = vmatprep.subr.bf16.mxu0 0
        %8391 = vmatpush1.bf16.msra.mxu0 %v8207
        %8392 = vmatprep.subr.bf16.mxu0 0
        %8393 = vmatpush1.bf16.msra.mxu0 %v8208
        %8394 = vmatprep.subr.bf16.mxu0 0
        %8395 = vmatpush1.bf16.msra.mxu0 %v8209
        %8396 = vmatprep.subr.bf16.mxu0 0
        %8397 = vmatpush1.bf16.msra.mxu0 %v8210
        %8398 = vmatprep.subr.bf16.mxu0 0
        %8399 = vmatpush1.bf16.msra.mxu0 %v8211
        %8400 = vmatprep.subr.bf16.mxu0 0
        %8401 = vmatpush1.bf16.msra.mxu0 %v8212
        %8402 = vmatprep.subr.bf16.mxu0 0
        %8403 = vmatpush1.bf16.msra.mxu0 %v8213
        %8404 = vmatprep.subr.bf16.mxu0 0
        %8405 = vmatpush1.bf16.msra.mxu0 %v8214
        %8406 = vmatprep.subr.bf16.mxu0 0
        %8407 = vmatpush1.bf16.msra.mxu0 %v8215
        %8408 = vmatprep.mubr.bf16.mxu0 %v7780
        %8409 = vmatmul.mubr.bf16.gmra.mrb[0].mxu0 %v7779
        %v8410 = vpop.f32.mrb[0].mxu0
        %v8411 = vadd.f32 %v8371, %v8410
        %v8412 = vpop.f32.mrb[0].mxu0
        %v8413 = vpop.f32.mrb[0].mxu0
        %v8414 = vpop.f32.mrb[0].mxu0
        %8415 = vdwg.mxu0
        %8416 = vmatprep.subr.bf16.mxu0 0
        %8417 = vmatpush1.bf16.msra.mxu0 %v8216
        %8418 = vmatprep.subr.bf16.mxu0 0
        %8419 = vmatpush1.bf16.msra.mxu0 %v8217
        %8420 = vmatprep.subr.bf16.mxu0 0
        %8421 = vmatpush1.bf16.msra.mxu0 %v8218
        %8422 = vmatprep.subr.bf16.mxu0 0
        %8423 = vmatpush1.bf16.msra.mxu0 %v8219
        %8424 = vmatprep.subr.bf16.mxu0 0
        %8425 = vmatpush1.bf16.msra.mxu0 %v8220
        %8426 = vmatprep.subr.bf16.mxu0 0
        %8427 = vmatpush1.bf16.msra.mxu0 %v8221
        %8428 = vmatprep.subr.bf16.mxu0 0
        %8429 = vmatpush1.bf16.msra.mxu0 %v8222
        %8430 = vmatprep.subr.bf16.mxu0 0
        %8431 = vmatpush1.bf16.msra.mxu0 %v8223
        %8432 = vmatprep.subr.bf16.mxu0 0
        %8433 = vmatpush1.bf16.msra.mxu0 %v8224
        %8434 = vmatprep.subr.bf16.mxu0 0
        %8435 = vmatpush1.bf16.msra.mxu0 %v8225
        %8436 = vmatprep.subr.bf16.mxu0 0
        %8437 = vmatpush1.bf16.msra.mxu0 %v8226
        %8438 = vmatprep.subr.bf16.mxu0 0
        %8439 = vmatpush1.bf16.msra.mxu0 %v8227
        %8440 = vmatprep.subr.bf16.mxu0 0
        %8441 = vmatpush1.bf16.msra.mxu0 %v8228
        %8442 = vmatprep.subr.bf16.mxu0 0
        %8443 = vmatpush1.bf16.msra.mxu0 %v8229
        %8444 = vmatprep.subr.bf16.mxu0 0
        %8445 = vmatpush1.bf16.msra.mxu0 %v8230
        %8446 = vmatprep.subr.bf16.mxu0 0
        %8447 = vmatpush1.bf16.msra.mxu0 %v8231
        %8448 = vmatprep.mubr.bf16.mxu0 %v7782
        %8449 = vmatmul.mubr.bf16.gmra.mrb[0].mxu0 %v7781
        %v8450 = vpop.f32.mrb[0].mxu0
        %v8451 = vadd.f32 %v8411, %v8450
        %v8452 = vpop.f32.mrb[0].mxu0
        %v8453 = vpop.f32.mrb[0].mxu0
        %v8454 = vpop.f32.mrb[0].mxu0
        %8455 = vdwg.mxu0
        %v8456 = vadd.f32 %v7765, %v8451
        %s8457 = scalar_lea.vmem [#allocation2], 512
        %v8458 = vld [vmem:[%s8457] sm:$0xff]
        %v8459 = vld [vmem:[%s8457 + $0x8] sm:$0xff]
        %v8460 = vld [vmem:[%s8457 + $0x10] sm:$0xff]
        %v8461 = vld [vmem:[%s8457 + $0x18] sm:$0xff]
        %v8462 = vld [vmem:[%s8457 + $0x20] sm:$0xff]
        %v8463 = vld [vmem:[%s8457 + $0x28] sm:$0xff]
        %v8464 = vld [vmem:[%s8457 + $0x30] sm:$0xff]
        %v8465 = vld [vmem:[%s8457 + $0x38] sm:$0xff]
        %v8466 = vpack.c.bf16 %v8458, %v8458
        %v8467 = vpack.c.bf16 %v8459, %v8459
        %v8468 = vpack.c.bf16 %v8460, %v8460
        %v8469 = vpack.c.bf16 %v8461, %v8461
        %v8470 = vpack.c.bf16 %v8462, %v8462
        %v8471 = vpack.c.bf16 %v8463, %v8463
        %v8472 = vpack.c.bf16 %v8464, %v8464
        %v8473 = vpack.c.bf16 %v8465, %v8465
        %s8474 = scalar_lea.vmem %s3, 4096
        %v8475 = vld [vmem:[%s8474] sm:$0xf]
        %v8476 = vld [vmem:[%s8474 + $0x4] sm:$0xf]
        %v8477 = vld [vmem:[%s8474 + $0x8] sm:$0xf]
        %v8478 = vld [vmem:[%s8474 + $0xc] sm:$0xf]
        %v8479 = vld [vmem:[%s8474 + $0x10] sm:$0xf]
        %v8480 = vld [vmem:[%s8474 + $0x14] sm:$0xf]
        %v8481 = vld [vmem:[%s8474 + $0x18] sm:$0xf]
        %v8482 = vld [vmem:[%s8474 + $0x1c] sm:$0xf]
        %v8483 = vld [vmem:[%s8474 + $0x20] sm:$0xf]
        %v8484 = vld [vmem:[%s8474 + $0x24] sm:$0xf]
        %v8485 = vld [vmem:[%s8474 + $0x28] sm:$0xf]
        %v8486 = vld [vmem:[%s8474 + $0x2c] sm:$0xf]
        %v8487 = vld [vmem:[%s8474 + $0x30] sm:$0xf]
        %v8488 = vld [vmem:[%s8474 + $0x34] sm:$0xf]
        %v8489 = vld [vmem:[%s8474 + $0x38] sm:$0xf]
        %v8490 = vld [vmem:[%s8474 + $0x3c] sm:$0xf]
        %v8491 = vld [vmem:[%s8474 + $0x40] sm:$0xf]
        %v8492 = vld [vmem:[%s8474 + $0x44] sm:$0xf]
        %v8493 = vld [vmem:[%s8474 + $0x48] sm:$0xf]
        %v8494 = vld [vmem:[%s8474 + $0x4c] sm:$0xf]
        %v8495 = vld [vmem:[%s8474 + $0x50] sm:$0xf]
        %v8496 = vld [vmem:[%s8474 + $0x54] sm:$0xf]
        %v8497 = vld [vmem:[%s8474 + $0x58] sm:$0xf]
        %v8498 = vld [vmem:[%s8474 + $0x5c] sm:$0xf]
        %v8499 = vld [vmem:[%s8474 + $0x60] sm:$0xf]
        %v8500 = vld [vmem:[%s8474 + $0x64] sm:$0xf]
        %v8501 = vld [vmem:[%s8474 + $0x68] sm:$0xf]
        %v8502 = vld [vmem:[%s8474 + $0x6c] sm:$0xf]
        %v8503 = vld [vmem:[%s8474 + $0x70] sm:$0xf]
        %v8504 = vld [vmem:[%s8474 + $0x74] sm:$0xf]
        %v8505 = vld [vmem:[%s8474 + $0x78] sm:$0xf]
        %v8506 = vld [vmem:[%s8474 + $0x7c] sm:$0xf]
        %v8507 = vld [vmem:[%s8474 + $0x80] sm:$0xf]
        %v8508 = vld [vmem:[%s8474 + $0x84] sm:$0xf]
        %v8509 = vld [vmem:[%s8474 + $0x88] sm:$0xf]
        %v8510 = vld [vmem:[%s8474 + $0x8c] sm:$0xf]
        %v8511 = vld [vmem:[%s8474 + $0x90] sm:$0xf]
        %v8512 = vld [vmem:[%s8474 + $0x94] sm:$0xf]
        %v8513 = vld [vmem:[%s8474 + $0x98] sm:$0xf]
        %v8514 = vld [vmem:[%s8474 + $0x9c] sm:$0xf]
        %v8515 = vld [vmem:[%s8474 + $0xa0] sm:$0xf]
        %v8516 = vld [vmem:[%s8474 + $0xa4] sm:$0xf]
        %v8517 = vld [vmem:[%s8474 + $0xa8] sm:$0xf]
        %v8518 = vld [vmem:[%s8474 + $0xac] sm:$0xf]
        %v8519 = vld [vmem:[%s8474 + $0xb0] sm:$0xf]
        %v8520 = vld [vmem:[%s8474 + $0xb4] sm:$0xf]
        %v8521 = vld [vmem:[%s8474 + $0xb8] sm:$0xf]
        %v8522 = vld [vmem:[%s8474 + $0xbc] sm:$0xf]
        %v8523 = vld [vmem:[%s8474 + $0xc0] sm:$0xf]
        %v8524 = vld [vmem:[%s8474 + $0xc4] sm:$0xf]
        %v8525 = vld [vmem:[%s8474 + $0xc8] sm:$0xf]
        %v8526 = vld [vmem:[%s8474 + $0xcc] sm:$0xf]
        %v8527 = vld [vmem:[%s8474 + $0xd0] sm:$0xf]
        %v8528 = vld [vmem:[%s8474 + $0xd4] sm:$0xf]
        %v8529 = vld [vmem:[%s8474 + $0xd8] sm:$0xf]
        %v8530 = vld [vmem:[%s8474 + $0xdc] sm:$0xf]
        %v8531 = vld [vmem:[%s8474 + $0xe0] sm:$0xf]
        %v8532 = vld [vmem:[%s8474 + $0xe4] sm:$0xf]
        %v8533 = vld [vmem:[%s8474 + $0xe8] sm:$0xf]
        %v8534 = vld [vmem:[%s8474 + $0xec] sm:$0xf]
        %v8535 = vld [vmem:[%s8474 + $0xf0] sm:$0xf]
        %v8536 = vld [vmem:[%s8474 + $0xf4] sm:$0xf]
        %v8537 = vld [vmem:[%s8474 + $0xf8] sm:$0xf]
        %v8538 = vld [vmem:[%s8474 + $0xfc] sm:$0xf]
        %v8539 = vld [vmem:[%s8474 + $0x100] sm:$0xf]
        %v8540 = vld [vmem:[%s8474 + $0x104] sm:$0xf]
        %v8541 = vld [vmem:[%s8474 + $0x108] sm:$0xf]
        %v8542 = vld [vmem:[%s8474 + $0x10c] sm:$0xf]
        %v8543 = vld [vmem:[%s8474 + $0x110] sm:$0xf]
        %v8544 = vld [vmem:[%s8474 + $0x114] sm:$0xf]
        %v8545 = vld [vmem:[%s8474 + $0x118] sm:$0xf]
        %v8546 = vld [vmem:[%s8474 + $0x11c] sm:$0xf]
        %v8547 = vld [vmem:[%s8474 + $0x120] sm:$0xf]
        %v8548 = vld [vmem:[%s8474 + $0x124] sm:$0xf]
        %v8549 = vld [vmem:[%s8474 + $0x128] sm:$0xf]
        %v8550 = vld [vmem:[%s8474 + $0x12c] sm:$0xf]
        %v8551 = vld [vmem:[%s8474 + $0x130] sm:$0xf]
        %v8552 = vld [vmem:[%s8474 + $0x134] sm:$0xf]
        %v8553 = vld [vmem:[%s8474 + $0x138] sm:$0xf]
        %v8554 = vld [vmem:[%s8474 + $0x13c] sm:$0xf]
        %v8555 = vld [vmem:[%s8474 + $0x140] sm:$0xf]
        %v8556 = vld [vmem:[%s8474 + $0x144] sm:$0xf]
        %v8557 = vld [vmem:[%s8474 + $0x148] sm:$0xf]
        %v8558 = vld [vmem:[%s8474 + $0x14c] sm:$0xf]
        %v8559 = vld [vmem:[%s8474 + $0x150] sm:$0xf]
        %v8560 = vld [vmem:[%s8474 + $0x154] sm:$0xf]
        %v8561 = vld [vmem:[%s8474 + $0x158] sm:$0xf]
        %v8562 = vld [vmem:[%s8474 + $0x15c] sm:$0xf]
        %v8563 = vld [vmem:[%s8474 + $0x160] sm:$0xf]
        %v8564 = vld [vmem:[%s8474 + $0x164] sm:$0xf]
        %v8565 = vld [vmem:[%s8474 + $0x168] sm:$0xf]
        %v8566 = vld [vmem:[%s8474 + $0x16c] sm:$0xf]
        %v8567 = vld [vmem:[%s8474 + $0x170] sm:$0xf]
        %v8568 = vld [vmem:[%s8474 + $0x174] sm:$0xf]
        %v8569 = vld [vmem:[%s8474 + $0x178] sm:$0xf]
        %v8570 = vld [vmem:[%s8474 + $0x17c] sm:$0xf]
        %v8571 = vld [vmem:[%s8474 + $0x180] sm:$0xf]
        %v8572 = vld [vmem:[%s8474 + $0x184] sm:$0xf]
        %v8573 = vld [vmem:[%s8474 + $0x188] sm:$0xf]
        %v8574 = vld [vmem:[%s8474 + $0x18c] sm:$0xf]
        %v8575 = vld [vmem:[%s8474 + $0x190] sm:$0xf]
        %v8576 = vld [vmem:[%s8474 + $0x194] sm:$0xf]
        %v8577 = vld [vmem:[%s8474 + $0x198] sm:$0xf]
        %v8578 = vld [vmem:[%s8474 + $0x19c] sm:$0xf]
        %v8579 = vld [vmem:[%s8474 + $0x1a0] sm:$0xf]
        %v8580 = vld [vmem:[%s8474 + $0x1a4] sm:$0xf]
        %v8581 = vld [vmem:[%s8474 + $0x1a8] sm:$0xf]
        %v8582 = vld [vmem:[%s8474 + $0x1ac] sm:$0xf]
        %v8583 = vld [vmem:[%s8474 + $0x1b0] sm:$0xf]
        %v8584 = vld [vmem:[%s8474 + $0x1b4] sm:$0xf]
        %v8585 = vld [vmem:[%s8474 + $0x1b8] sm:$0xf]
        %v8586 = vld [vmem:[%s8474 + $0x1bc] sm:$0xf]
        %v8587 = vld [vmem:[%s8474 + $0x1c0] sm:$0xf]
        %v8588 = vld [vmem:[%s8474 + $0x1c4] sm:$0xf]
        %v8589 = vld [vmem:[%s8474 + $0x1c8] sm:$0xf]
        %v8590 = vld [vmem:[%s8474 + $0x1cc] sm:$0xf]
        %v8591 = vld [vmem:[%s8474 + $0x1d0] sm:$0xf]
        %v8592 = vld [vmem:[%s8474 + $0x1d4] sm:$0xf]
        %v8593 = vld [vmem:[%s8474 + $0x1d8] sm:$0xf]
        %v8594 = vld [vmem:[%s8474 + $0x1dc] sm:$0xf]
        %v8595 = vld [vmem:[%s8474 + $0x1e0] sm:$0xf]
        %v8596 = vld [vmem:[%s8474 + $0x1e4] sm:$0xf]
        %v8597 = vld [vmem:[%s8474 + $0x1e8] sm:$0xf]
        %v8598 = vld [vmem:[%s8474 + $0x1ec] sm:$0xf]
        %v8599 = vld [vmem:[%s8474 + $0x1f0] sm:$0xf]
        %v8600 = vld [vmem:[%s8474 + $0x1f4] sm:$0xf]
        %v8601 = vld [vmem:[%s8474 + $0x1f8] sm:$0xf]
        %v8602 = vld [vmem:[%s8474 + $0x1fc] sm:$0xf]
        %v8731 = vunpack.c.l.b16 %v8475
        %v8732 = vunpack.c.l.b16 %v8476
        %v8733 = vunpack.c.l.b16 %v8477
        %v8734 = vunpack.c.l.b16 %v8478
        %v8735 = vunpack.c.l.b16 %v8479
        %v8736 = vunpack.c.l.b16 %v8480
        %v8737 = vunpack.c.l.b16 %v8481
        %v8738 = vunpack.c.l.b16 %v8482
        %v8739 = vunpack.c.l.b16 %v8483
        %v8740 = vunpack.c.l.b16 %v8484
        %v8741 = vunpack.c.l.b16 %v8485
        %v8742 = vunpack.c.l.b16 %v8486
        %v8743 = vunpack.c.l.b16 %v8487
        %v8744 = vunpack.c.l.b16 %v8488
        %v8745 = vunpack.c.l.b16 %v8489
        %v8746 = vunpack.c.l.b16 %v8490
        %v8747 = vunpack.c.l.b16 %v8491
        %v8748 = vunpack.c.l.b16 %v8492
        %v8749 = vunpack.c.l.b16 %v8493
        %v8750 = vunpack.c.l.b16 %v8494
        %v8751 = vunpack.c.l.b16 %v8495
        %v8752 = vunpack.c.l.b16 %v8496
        %v8753 = vunpack.c.l.b16 %v8497
        %v8754 = vunpack.c.l.b16 %v8498
        %v8755 = vunpack.c.l.b16 %v8499
        %v8756 = vunpack.c.l.b16 %v8500
        %v8757 = vunpack.c.l.b16 %v8501
        %v8758 = vunpack.c.l.b16 %v8502
        %v8759 = vunpack.c.l.b16 %v8503
        %v8760 = vunpack.c.l.b16 %v8504
        %v8761 = vunpack.c.l.b16 %v8505
        %v8762 = vunpack.c.l.b16 %v8506
        %v8763 = vunpack.c.l.b16 %v8507
        %v8764 = vunpack.c.l.b16 %v8508
        %v8765 = vunpack.c.l.b16 %v8509
        %v8766 = vunpack.c.l.b16 %v8510
        %v8767 = vunpack.c.l.b16 %v8511
        %v8768 = vunpack.c.l.b16 %v8512
        %v8769 = vunpack.c.l.b16 %v8513
        %v8770 = vunpack.c.l.b16 %v8514
        %v8771 = vunpack.c.l.b16 %v8515
        %v8772 = vunpack.c.l.b16 %v8516
        %v8773 = vunpack.c.l.b16 %v8517
        %v8774 = vunpack.c.l.b16 %v8518
        %v8775 = vunpack.c.l.b16 %v8519
        %v8776 = vunpack.c.l.b16 %v8520
        %v8777 = vunpack.c.l.b16 %v8521
        %v8778 = vunpack.c.l.b16 %v8522
        %v8779 = vunpack.c.l.b16 %v8523
        %v8780 = vunpack.c.l.b16 %v8524
        %v8781 = vunpack.c.l.b16 %v8525
        %v8782 = vunpack.c.l.b16 %v8526
        %v8783 = vunpack.c.l.b16 %v8527
        %v8784 = vunpack.c.l.b16 %v8528
        %v8785 = vunpack.c.l.b16 %v8529
        %v8786 = vunpack.c.l.b16 %v8530
        %v8787 = vunpack.c.l.b16 %v8531
        %v8788 = vunpack.c.l.b16 %v8532
        %v8789 = vunpack.c.l.b16 %v8533
        %v8790 = vunpack.c.l.b16 %v8534
        %v8791 = vunpack.c.l.b16 %v8535
        %v8792 = vunpack.c.l.b16 %v8536
        %v8793 = vunpack.c.l.b16 %v8537
        %v8794 = vunpack.c.l.b16 %v8538
        %v8795 = vunpack.c.l.b16 %v8539
        %v8796 = vunpack.c.l.b16 %v8540
        %v8797 = vunpack.c.l.b16 %v8541
        %v8798 = vunpack.c.l.b16 %v8542
        %v8799 = vunpack.c.l.b16 %v8543
        %v8800 = vunpack.c.l.b16 %v8544
        %v8801 = vunpack.c.l.b16 %v8545
        %v8802 = vunpack.c.l.b16 %v8546
        %v8803 = vunpack.c.l.b16 %v8547
        %v8804 = vunpack.c.l.b16 %v8548
        %v8805 = vunpack.c.l.b16 %v8549
        %v8806 = vunpack.c.l.b16 %v8550
        %v8807 = vunpack.c.l.b16 %v8551
        %v8808 = vunpack.c.l.b16 %v8552
        %v8809 = vunpack.c.l.b16 %v8553
        %v8810 = vunpack.c.l.b16 %v8554
        %v8811 = vunpack.c.l.b16 %v8555
        %v8812 = vunpack.c.l.b16 %v8556
        %v8813 = vunpack.c.l.b16 %v8557
        %v8814 = vunpack.c.l.b16 %v8558
        %v8815 = vunpack.c.l.b16 %v8559
        %v8816 = vunpack.c.l.b16 %v8560
        %v8817 = vunpack.c.l.b16 %v8561
        %v8818 = vunpack.c.l.b16 %v8562
        %v8819 = vunpack.c.l.b16 %v8563
        %v8820 = vunpack.c.l.b16 %v8564
        %v8821 = vunpack.c.l.b16 %v8565
        %v8822 = vunpack.c.l.b16 %v8566
        %v8823 = vunpack.c.l.b16 %v8567
        %v8824 = vunpack.c.l.b16 %v8568
        %v8825 = vunpack.c.l.b16 %v8569
        %v8826 = vunpack.c.l.b16 %v8570
        %v8827 = vunpack.c.l.b16 %v8571
        %v8828 = vunpack.c.l.b16 %v8572
        %v8829 = vunpack.c.l.b16 %v8573
        %v8830 = vunpack.c.l.b16 %v8574
        %v8831 = vunpack.c.l.b16 %v8575
        %v8832 = vunpack.c.l.b16 %v8576
        %v8833 = vunpack.c.l.b16 %v8577
        %v8834 = vunpack.c.l.b16 %v8578
        %v8835 = vunpack.c.l.b16 %v8579
        %v8836 = vunpack.c.l.b16 %v8580
        %v8837 = vunpack.c.l.b16 %v8581
        %v8838 = vunpack.c.l.b16 %v8582
        %v8839 = vunpack.c.l.b16 %v8583
        %v8840 = vunpack.c.l.b16 %v8584
        %v8841 = vunpack.c.l.b16 %v8585
        %v8842 = vunpack.c.l.b16 %v8586
        %v8843 = vunpack.c.l.b16 %v8587
        %v8844 = vunpack.c.l.b16 %v8588
        %v8845 = vunpack.c.l.b16 %v8589
        %v8846 = vunpack.c.l.b16 %v8590
        %v8847 = vunpack.c.l.b16 %v8591
        %v8848 = vunpack.c.l.b16 %v8592
        %v8849 = vunpack.c.l.b16 %v8593
        %v8850 = vunpack.c.l.b16 %v8594
        %v8851 = vunpack.c.l.b16 %v8595
        %v8852 = vunpack.c.l.b16 %v8596
        %v8853 = vunpack.c.l.b16 %v8597
        %v8854 = vunpack.c.l.b16 %v8598
        %v8855 = vunpack.c.l.b16 %v8599
        %v8856 = vunpack.c.l.b16 %v8600
        %v8857 = vunpack.c.l.b16 %v8601
        %v8858 = vunpack.c.l.b16 %v8602
        %v8859 = vpack.c.b16 %v8732, %v8731
        %v8860 = vpack.c.b16 %v8734, %v8733
        %v8861 = vpack.c.b16 %v8736, %v8735
        %v8862 = vpack.c.b16 %v8738, %v8737
        %v8863 = vpack.c.b16 %v8740, %v8739
        %v8864 = vpack.c.b16 %v8742, %v8741
        %v8865 = vpack.c.b16 %v8744, %v8743
        %v8866 = vpack.c.b16 %v8746, %v8745
        %v8867 = vpack.c.b16 %v8748, %v8747
        %v8868 = vpack.c.b16 %v8750, %v8749
        %v8869 = vpack.c.b16 %v8752, %v8751
        %v8870 = vpack.c.b16 %v8754, %v8753
        %v8871 = vpack.c.b16 %v8756, %v8755
        %v8872 = vpack.c.b16 %v8758, %v8757
        %v8873 = vpack.c.b16 %v8760, %v8759
        %v8874 = vpack.c.b16 %v8762, %v8761
        %v8875 = vpack.c.b16 %v8764, %v8763
        %v8876 = vpack.c.b16 %v8766, %v8765
        %v8877 = vpack.c.b16 %v8768, %v8767
        %v8878 = vpack.c.b16 %v8770, %v8769
        %v8879 = vpack.c.b16 %v8772, %v8771
        %v8880 = vpack.c.b16 %v8774, %v8773
        %v8881 = vpack.c.b16 %v8776, %v8775
        %v8882 = vpack.c.b16 %v8778, %v8777
        %v8883 = vpack.c.b16 %v8780, %v8779
        %v8884 = vpack.c.b16 %v8782, %v8781
        %v8885 = vpack.c.b16 %v8784, %v8783
        %v8886 = vpack.c.b16 %v8786, %v8785
        %v8887 = vpack.c.b16 %v8788, %v8787
        %v8888 = vpack.c.b16 %v8790, %v8789
        %v8889 = vpack.c.b16 %v8792, %v8791
        %v8890 = vpack.c.b16 %v8794, %v8793
        %v8891 = vpack.c.b16 %v8796, %v8795
        %v8892 = vpack.c.b16 %v8798, %v8797
        %v8893 = vpack.c.b16 %v8800, %v8799
        %v8894 = vpack.c.b16 %v8802, %v8801
        %v8895 = vpack.c.b16 %v8804, %v8803
        %v8896 = vpack.c.b16 %v8806, %v8805
        %v8897 = vpack.c.b16 %v8808, %v8807
        %v8898 = vpack.c.b16 %v8810, %v8809
        %v8899 = vpack.c.b16 %v8812, %v8811
        %v8900 = vpack.c.b16 %v8814, %v8813
        %v8901 = vpack.c.b16 %v8816, %v8815
        %v8902 = vpack.c.b16 %v8818, %v8817
        %v8903 = vpack.c.b16 %v8820, %v8819
        %v8904 = vpack.c.b16 %v8822, %v8821
        %v8905 = vpack.c.b16 %v8824, %v8823
        %v8906 = vpack.c.b16 %v8826, %v8825
        %v8907 = vpack.c.b16 %v8828, %v8827
        %v8908 = vpack.c.b16 %v8830, %v8829
        %v8909 = vpack.c.b16 %v8832, %v8831
        %v8910 = vpack.c.b16 %v8834, %v8833
        %v8911 = vpack.c.b16 %v8836, %v8835
        %v8912 = vpack.c.b16 %v8838, %v8837
        %v8913 = vpack.c.b16 %v8840, %v8839
        %v8914 = vpack.c.b16 %v8842, %v8841
        %v8915 = vpack.c.b16 %v8844, %v8843
        %v8916 = vpack.c.b16 %v8846, %v8845
        %v8917 = vpack.c.b16 %v8848, %v8847
        %v8918 = vpack.c.b16 %v8850, %v8849
        %v8919 = vpack.c.b16 %v8852, %v8851
        %v8920 = vpack.c.b16 %v8854, %v8853
        %v8921 = vpack.c.b16 %v8856, %v8855
        %v8922 = vpack.c.b16 %v8858, %v8857
        %8987 = vmatprep.subr.bf16.mxu0 0
        %8988 = vmatpush1.bf16.msra.mxu0 %v8859
        %8989 = vmatprep.subr.bf16.mxu0 0
        %8990 = vmatpush1.bf16.msra.mxu0 %v8860
        %8991 = vmatprep.subr.bf16.mxu0 0
        %8992 = vmatpush1.bf16.msra.mxu0 %v8861
        %8993 = vmatprep.subr.bf16.mxu0 0
        %8994 = vmatpush1.bf16.msra.mxu0 %v8862
        %8995 = vmatprep.subr.bf16.mxu0 0
        %8996 = vmatpush1.bf16.msra.mxu0 %v8863
        %8997 = vmatprep.subr.bf16.mxu0 0
        %8998 = vmatpush1.bf16.msra.mxu0 %v8864
        %8999 = vmatprep.subr.bf16.mxu0 0
        %9000 = vmatpush1.bf16.msra.mxu0 %v8865
        %9001 = vmatprep.subr.bf16.mxu0 0
        %9002 = vmatpush1.bf16.msra.mxu0 %v8866
        %9003 = vmatprep.subr.bf16.mxu0 0
        %9004 = vmatpush1.bf16.msra.mxu0 %v8867
        %9005 = vmatprep.subr.bf16.mxu0 0
        %9006 = vmatpush1.bf16.msra.mxu0 %v8868
        %9007 = vmatprep.subr.bf16.mxu0 0
        %9008 = vmatpush1.bf16.msra.mxu0 %v8869
        %9009 = vmatprep.subr.bf16.mxu0 0
        %9010 = vmatpush1.bf16.msra.mxu0 %v8870
        %9011 = vmatprep.subr.bf16.mxu0 0
        %9012 = vmatpush1.bf16.msra.mxu0 %v8871
        %9013 = vmatprep.subr.bf16.mxu0 0
        %9014 = vmatpush1.bf16.msra.mxu0 %v8872
        %9015 = vmatprep.subr.bf16.mxu0 0
        %9016 = vmatpush1.bf16.msra.mxu0 %v8873
        %9017 = vmatprep.subr.bf16.mxu0 0
        %9018 = vmatpush1.bf16.msra.mxu0 %v8874
        %9019 = vmatprep.mubr.bf16.mxu0 %v8467
        %9020 = vmatmul.mubr.bf16.gmra.mrb[0].mxu0 %v8466
        %v9021 = vpop.f32.mrb[0].mxu0
        %v9022 = vadd.f32 0.0, %v9021
        %v9023 = vpop.f32.mrb[0].mxu0
        %v9024 = vpop.f32.mrb[0].mxu0
        %v9025 = vpop.f32.mrb[0].mxu0
        %9026 = vdwg.mxu0
        %9027 = vmatprep.subr.bf16.mxu0 0
        %9028 = vmatpush1.bf16.msra.mxu0 %v8875
        %9029 = vmatprep.subr.bf16.mxu0 0
        %9030 = vmatpush1.bf16.msra.mxu0 %v8876
        %9031 = vmatprep.subr.bf16.mxu0 0
        %9032 = vmatpush1.bf16.msra.mxu0 %v8877
        %9033 = vmatprep.subr.bf16.mxu0 0
        %9034 = vmatpush1.bf16.msra.mxu0 %v8878
        %9035 = vmatprep.subr.bf16.mxu0 0
        %9036 = vmatpush1.bf16.msra.mxu0 %v8879
        %9037 = vmatprep.subr.bf16.mxu0 0
        %9038 = vmatpush1.bf16.msra.mxu0 %v8880
        %9039 = vmatprep.subr.bf16.mxu0 0
        %9040 = vmatpush1.bf16.msra.mxu0 %v8881
        %9041 = vmatprep.subr.bf16.mxu0 0
        %9042 = vmatpush1.bf16.msra.mxu0 %v8882
        %9043 = vmatprep.subr.bf16.mxu0 0
        %9044 = vmatpush1.bf16.msra.mxu0 %v8883
        %9045 = vmatprep.subr.bf16.mxu0 0
        %9046 = vmatpush1.bf16.msra.mxu0 %v8884
        %9047 = vmatprep.subr.bf16.mxu0 0
        %9048 = vmatpush1.bf16.msra.mxu0 %v8885
        %9049 = vmatprep.subr.bf16.mxu0 0
        %9050 = vmatpush1.bf16.msra.mxu0 %v8886
        %9051 = vmatprep.subr.bf16.mxu0 0
        %9052 = vmatpush1.bf16.msra.mxu0 %v8887
        %9053 = vmatprep.subr.bf16.mxu0 0
        %9054 = vmatpush1.bf16.msra.mxu0 %v8888
        %9055 = vmatprep.subr.bf16.mxu0 0
        %9056 = vmatpush1.bf16.msra.mxu0 %v8889
        %9057 = vmatprep.subr.bf16.mxu0 0
        %9058 = vmatpush1.bf16.msra.mxu0 %v8890
        %9059 = vmatprep.mubr.bf16.mxu0 %v8469
        %9060 = vmatmul.mubr.bf16.gmra.mrb[0].mxu0 %v8468
        %v9061 = vpop.f32.mrb[0].mxu0
        %v9062 = vadd.f32 %v9022, %v9061
        %v9063 = vpop.f32.mrb[0].mxu0
        %v9064 = vpop.f32.mrb[0].mxu0
        %v9065 = vpop.f32.mrb[0].mxu0
        %9066 = vdwg.mxu0
        %9067 = vmatprep.subr.bf16.mxu0 0
        %9068 = vmatpush1.bf16.msra.mxu0 %v8891
        %9069 = vmatprep.subr.bf16.mxu0 0
        %9070 = vmatpush1.bf16.msra.mxu0 %v8892
        %9071 = vmatprep.subr.bf16.mxu0 0
        %9072 = vmatpush1.bf16.msra.mxu0 %v8893
        %9073 = vmatprep.subr.bf16.mxu0 0
        %9074 = vmatpush1.bf16.msra.mxu0 %v8894
        %9075 = vmatprep.subr.bf16.mxu0 0
        %9076 = vmatpush1.bf16.msra.mxu0 %v8895
        %9077 = vmatprep.subr.bf16.mxu0 0
        %9078 = vmatpush1.bf16.msra.mxu0 %v8896
        %9079 = vmatprep.subr.bf16.mxu0 0
        %9080 = vmatpush1.bf16.msra.mxu0 %v8897
        %9081 = vmatprep.subr.bf16.mxu0 0
        %9082 = vmatpush1.bf16.msra.mxu0 %v8898
        %9083 = vmatprep.subr.bf16.mxu0 0
        %9084 = vmatpush1.bf16.msra.mxu0 %v8899
        %9085 = vmatprep.subr.bf16.mxu0 0
        %9086 = vmatpush1.bf16.msra.mxu0 %v8900
        %9087 = vmatprep.subr.bf16.mxu0 0
        %9088 = vmatpush1.bf16.msra.mxu0 %v8901
        %9089 = vmatprep.subr.bf16.mxu0 0
        %9090 = vmatpush1.bf16.msra.mxu0 %v8902
        %9091 = vmatprep.subr.bf16.mxu0 0
        %9092 = vmatpush1.bf16.msra.mxu0 %v8903
        %9093 = vmatprep.subr.bf16.mxu0 0
        %9094 = vmatpush1.bf16.msra.mxu0 %v8904
        %9095 = vmatprep.subr.bf16.mxu0 0
        %9096 = vmatpush1.bf16.msra.mxu0 %v8905
        %9097 = vmatprep.subr.bf16.mxu0 0
        %9098 = vmatpush1.bf16.msra.mxu0 %v8906
        %9099 = vmatprep.mubr.bf16.mxu0 %v8471
        %9100 = vmatmul.mubr.bf16.gmra.mrb[0].mxu0 %v8470
        %v9101 = vpop.f32.mrb[0].mxu0
        %v9102 = vadd.f32 %v9062, %v9101
        %v9103 = vpop.f32.mrb[0].mxu0
        %v9104 = vpop.f32.mrb[0].mxu0
        %v9105 = vpop.f32.mrb[0].mxu0
        %9106 = vdwg.mxu0
        %9107 = vmatprep.subr.bf16.mxu0 0
        %9108 = vmatpush1.bf16.msra.mxu0 %v8907
        %9109 = vmatprep.subr.bf16.mxu0 0
        %9110 = vmatpush1.bf16.msra.mxu0 %v8908
        %9111 = vmatprep.subr.bf16.mxu0 0
        %9112 = vmatpush1.bf16.msra.mxu0 %v8909
        %9113 = vmatprep.subr.bf16.mxu0 0
        %9114 = vmatpush1.bf16.msra.mxu0 %v8910
        %9115 = vmatprep.subr.bf16.mxu0 0
        %9116 = vmatpush1.bf16.msra.mxu0 %v8911
        %9117 = vmatprep.subr.bf16.mxu0 0
        %9118 = vmatpush1.bf16.msra.mxu0 %v8912
        %9119 = vmatprep.subr.bf16.mxu0 0
        %9120 = vmatpush1.bf16.msra.mxu0 %v8913
        %9121 = vmatprep.subr.bf16.mxu0 0
        %9122 = vmatpush1.bf16.msra.mxu0 %v8914
        %9123 = vmatprep.subr.bf16.mxu0 0
        %9124 = vmatpush1.bf16.msra.mxu0 %v8915
        %9125 = vmatprep.subr.bf16.mxu0 0
        %9126 = vmatpush1.bf16.msra.mxu0 %v8916
        %9127 = vmatprep.subr.bf16.mxu0 0
        %9128 = vmatpush1.bf16.msra.mxu0 %v8917
        %9129 = vmatprep.subr.bf16.mxu0 0
        %9130 = vmatpush1.bf16.msra.mxu0 %v8918
        %9131 = vmatprep.subr.bf16.mxu0 0
        %9132 = vmatpush1.bf16.msra.mxu0 %v8919
        %9133 = vmatprep.subr.bf16.mxu0 0
        %9134 = vmatpush1.bf16.msra.mxu0 %v8920
        %9135 = vmatprep.subr.bf16.mxu0 0
        %9136 = vmatpush1.bf16.msra.mxu0 %v8921
        %9137 = vmatprep.subr.bf16.mxu0 0
        %9138 = vmatpush1.bf16.msra.mxu0 %v8922
        %9139 = vmatprep.mubr.bf16.mxu0 %v8473
        %9140 = vmatmul.mubr.bf16.gmra.mrb[0].mxu0 %v8472
        %v9141 = vpop.f32.mrb[0].mxu0
        %v9142 = vadd.f32 %v9102, %v9141
        %v9143 = vpop.f32.mrb[0].mxu0
        %v9144 = vpop.f32.mrb[0].mxu0
        %v9145 = vpop.f32.mrb[0].mxu0
        %9146 = vdwg.mxu0
        %v9147 = vadd.f32 %v8456, %v9142
        %s9148 = scalar_lea.vmem [#allocation2], 576
        %v9149 = vld [vmem:[%s9148] sm:$0xff]
        %v9150 = vld [vmem:[%s9148 + $0x8] sm:$0xff]
        %v9151 = vld [vmem:[%s9148 + $0x10] sm:$0xff]
        %v9152 = vld [vmem:[%s9148 + $0x18] sm:$0xff]
        %v9153 = vld [vmem:[%s9148 + $0x20] sm:$0xff]
        %v9154 = vld [vmem:[%s9148 + $0x28] sm:$0xff]
        %v9155 = vld [vmem:[%s9148 + $0x30] sm:$0xff]
        %v9156 = vld [vmem:[%s9148 + $0x38] sm:$0xff]
        %v9157 = vpack.c.bf16 %v9149, %v9149
        %v9158 = vpack.c.bf16 %v9150, %v9150
        %v9159 = vpack.c.bf16 %v9151, %v9151
        %v9160 = vpack.c.bf16 %v9152, %v9152
        %v9161 = vpack.c.bf16 %v9153, %v9153
        %v9162 = vpack.c.bf16 %v9154, %v9154
        %v9163 = vpack.c.bf16 %v9155, %v9155
        %v9164 = vpack.c.bf16 %v9156, %v9156
        %s9165 = scalar_lea.vmem %s3, 4608
        %v9166 = vld [vmem:[%s9165] sm:$0xf]
        %v9167 = vld [vmem:[%s9165 + $0x4] sm:$0xf]
        %v9168 = vld [vmem:[%s9165 + $0x8] sm:$0xf]
        %v9169 = vld [vmem:[%s9165 + $0xc] sm:$0xf]
        %v9170 = vld [vmem:[%s9165 + $0x10] sm:$0xf]
        %v9171 = vld [vmem:[%s9165 + $0x14] sm:$0xf]
        %v9172 = vld [vmem:[%s9165 + $0x18] sm:$0xf]
        %v9173 = vld [vmem:[%s9165 + $0x1c] sm:$0xf]
        %v9174 = vld [vmem:[%s9165 + $0x20] sm:$0xf]
        %v9175 = vld [vmem:[%s9165 + $0x24] sm:$0xf]
        %v9176 = vld [vmem:[%s9165 + $0x28] sm:$0xf]
        %v9177 = vld [vmem:[%s9165 + $0x2c] sm:$0xf]
        %v9178 = vld [vmem:[%s9165 + $0x30] sm:$0xf]
        %v9179 = vld [vmem:[%s9165 + $0x34] sm:$0xf]
        %v9180 = vld [vmem:[%s9165 + $0x38] sm:$0xf]
        %v9181 = vld [vmem:[%s9165 + $0x3c] sm:$0xf]
        %v9182 = vld [vmem:[%s9165 + $0x40] sm:$0xf]
        %v9183 = vld [vmem:[%s9165 + $0x44] sm:$0xf]
        %v9184 = vld [vmem:[%s9165 + $0x48] sm:$0xf]
        %v9185 = vld [vmem:[%s9165 + $0x4c] sm:$0xf]
        %v9186 = vld [vmem:[%s9165 + $0x50] sm:$0xf]
        %v9187 = vld [vmem:[%s9165 + $0x54] sm:$0xf]
        %v9188 = vld [vmem:[%s9165 + $0x58] sm:$0xf]
        %v9189 = vld [vmem:[%s9165 + $0x5c] sm:$0xf]
        %v9190 = vld [vmem:[%s9165 + $0x60] sm:$0xf]
        %v9191 = vld [vmem:[%s9165 + $0x64] sm:$0xf]
        %v9192 = vld [vmem:[%s9165 + $0x68] sm:$0xf]
        %v9193 = vld [vmem:[%s9165 + $0x6c] sm:$0xf]
        %v9194 = vld [vmem:[%s9165 + $0x70] sm:$0xf]
        %v9195 = vld [vmem:[%s9165 + $0x74] sm:$0xf]
        %v9196 = vld [vmem:[%s9165 + $0x78] sm:$0xf]
        %v9197 = vld [vmem:[%s9165 + $0x7c] sm:$0xf]
        %v9198 = vld [vmem:[%s9165 + $0x80] sm:$0xf]
        %v9199 = vld [vmem:[%s9165 + $0x84] sm:$0xf]
        %v9200 = vld [vmem:[%s9165 + $0x88] sm:$0xf]
        %v9201 = vld [vmem:[%s9165 + $0x8c] sm:$0xf]
        %v9202 = vld [vmem:[%s9165 + $0x90] sm:$0xf]
        %v9203 = vld [vmem:[%s9165 + $0x94] sm:$0xf]
        %v9204 = vld [vmem:[%s9165 + $0x98] sm:$0xf]
        %v9205 = vld [vmem:[%s9165 + $0x9c] sm:$0xf]
        %v9206 = vld [vmem:[%s9165 + $0xa0] sm:$0xf]
        %v9207 = vld [vmem:[%s9165 + $0xa4] sm:$0xf]
        %v9208 = vld [vmem:[%s9165 + $0xa8] sm:$0xf]
        %v9209 = vld [vmem:[%s9165 + $0xac] sm:$0xf]
        %v9210 = vld [vmem:[%s9165 + $0xb0] sm:$0xf]
        %v9211 = vld [vmem:[%s9165 + $0xb4] sm:$0xf]
        %v9212 = vld [vmem:[%s9165 + $0xb8] sm:$0xf]
        %v9213 = vld [vmem:[%s9165 + $0xbc] sm:$0xf]
        %v9214 = vld [vmem:[%s9165 + $0xc0] sm:$0xf]
        %v9215 = vld [vmem:[%s9165 + $0xc4] sm:$0xf]
        %v9216 = vld [vmem:[%s9165 + $0xc8] sm:$0xf]
        %v9217 = vld [vmem:[%s9165 + $0xcc] sm:$0xf]
        %v9218 = vld [vmem:[%s9165 + $0xd0] sm:$0xf]
        %v9219 = vld [vmem:[%s9165 + $0xd4] sm:$0xf]
        %v9220 = vld [vmem:[%s9165 + $0xd8] sm:$0xf]
        %v9221 = vld [vmem:[%s9165 + $0xdc] sm:$0xf]
        %v9222 = vld [vmem:[%s9165 + $0xe0] sm:$0xf]
        %v9223 = vld [vmem:[%s9165 + $0xe4] sm:$0xf]
        %v9224 = vld [vmem:[%s9165 + $0xe8] sm:$0xf]
        %v9225 = vld [vmem:[%s9165 + $0xec] sm:$0xf]
        %v9226 = vld [vmem:[%s9165 + $0xf0] sm:$0xf]
        %v9227 = vld [vmem:[%s9165 + $0xf4] sm:$0xf]
        %v9228 = vld [vmem:[%s9165 + $0xf8] sm:$0xf]
        %v9229 = vld [vmem:[%s9165 + $0xfc] sm:$0xf]
        %v9230 = vld [vmem:[%s9165 + $0x100] sm:$0xf]
        %v9231 = vld [vmem:[%s9165 + $0x104] sm:$0xf]
        %v9232 = vld [vmem:[%s9165 + $0x108] sm:$0xf]
        %v9233 = vld [vmem:[%s9165 + $0x10c] sm:$0xf]
        %v9234 = vld [vmem:[%s9165 + $0x110] sm:$0xf]
        %v9235 = vld [vmem:[%s9165 + $0x114] sm:$0xf]
        %v9236 = vld [vmem:[%s9165 + $0x118] sm:$0xf]
        %v9237 = vld [vmem:[%s9165 + $0x11c] sm:$0xf]
        %v9238 = vld [vmem:[%s9165 + $0x120] sm:$0xf]
        %v9239 = vld [vmem:[%s9165 + $0x124] sm:$0xf]
        %v9240 = vld [vmem:[%s9165 + $0x128] sm:$0xf]
        %v9241 = vld [vmem:[%s9165 + $0x12c] sm:$0xf]
        %v9242 = vld [vmem:[%s9165 + $0x130] sm:$0xf]
        %v9243 = vld [vmem:[%s9165 + $0x134] sm:$0xf]
        %v9244 = vld [vmem:[%s9165 + $0x138] sm:$0xf]
        %v9245 = vld [vmem:[%s9165 + $0x13c] sm:$0xf]
        %v9246 = vld [vmem:[%s9165 + $0x140] sm:$0xf]
        %v9247 = vld [vmem:[%s9165 + $0x144] sm:$0xf]
        %v9248 = vld [vmem:[%s9165 + $0x148] sm:$0xf]
        %v9249 = vld [vmem:[%s9165 + $0x14c] sm:$0xf]
        %v9250 = vld [vmem:[%s9165 + $0x150] sm:$0xf]
        %v9251 = vld [vmem:[%s9165 + $0x154] sm:$0xf]
        %v9252 = vld [vmem:[%s9165 + $0x158] sm:$0xf]
        %v9253 = vld [vmem:[%s9165 + $0x15c] sm:$0xf]
        %v9254 = vld [vmem:[%s9165 + $0x160] sm:$0xf]
        %v9255 = vld [vmem:[%s9165 + $0x164] sm:$0xf]
        %v9256 = vld [vmem:[%s9165 + $0x168] sm:$0xf]
        %v9257 = vld [vmem:[%s9165 + $0x16c] sm:$0xf]
        %v9258 = vld [vmem:[%s9165 + $0x170] sm:$0xf]
        %v9259 = vld [vmem:[%s9165 + $0x174] sm:$0xf]
        %v9260 = vld [vmem:[%s9165 + $0x178] sm:$0xf]
        %v9261 = vld [vmem:[%s9165 + $0x17c] sm:$0xf]
        %v9262 = vld [vmem:[%s9165 + $0x180] sm:$0xf]
        %v9263 = vld [vmem:[%s9165 + $0x184] sm:$0xf]
        %v9264 = vld [vmem:[%s9165 + $0x188] sm:$0xf]
        %v9265 = vld [vmem:[%s9165 + $0x18c] sm:$0xf]
        %v9266 = vld [vmem:[%s9165 + $0x190] sm:$0xf]
        %v9267 = vld [vmem:[%s9165 + $0x194] sm:$0xf]
        %v9268 = vld [vmem:[%s9165 + $0x198] sm:$0xf]
        %v9269 = vld [vmem:[%s9165 + $0x19c] sm:$0xf]
        %v9270 = vld [vmem:[%s9165 + $0x1a0] sm:$0xf]
        %v9271 = vld [vmem:[%s9165 + $0x1a4] sm:$0xf]
        %v9272 = vld [vmem:[%s9165 + $0x1a8] sm:$0xf]
        %v9273 = vld [vmem:[%s9165 + $0x1ac] sm:$0xf]
        %v9274 = vld [vmem:[%s9165 + $0x1b0] sm:$0xf]
        %v9275 = vld [vmem:[%s9165 + $0x1b4] sm:$0xf]
        %v9276 = vld [vmem:[%s9165 + $0x1b8] sm:$0xf]
        %v9277 = vld [vmem:[%s9165 + $0x1bc] sm:$0xf]
        %v9278 = vld [vmem:[%s9165 + $0x1c0] sm:$0xf]
        %v9279 = vld [vmem:[%s9165 + $0x1c4] sm:$0xf]
        %v9280 = vld [vmem:[%s9165 + $0x1c8] sm:$0xf]
        %v9281 = vld [vmem:[%s9165 + $0x1cc] sm:$0xf]
        %v9282 = vld [vmem:[%s9165 + $0x1d0] sm:$0xf]
        %v9283 = vld [vmem:[%s9165 + $0x1d4] sm:$0xf]
        %v9284 = vld [vmem:[%s9165 + $0x1d8] sm:$0xf]
        %v9285 = vld [vmem:[%s9165 + $0x1dc] sm:$0xf]
        %v9286 = vld [vmem:[%s9165 + $0x1e0] sm:$0xf]
        %v9287 = vld [vmem:[%s9165 + $0x1e4] sm:$0xf]
        %v9288 = vld [vmem:[%s9165 + $0x1e8] sm:$0xf]
        %v9289 = vld [vmem:[%s9165 + $0x1ec] sm:$0xf]
        %v9290 = vld [vmem:[%s9165 + $0x1f0] sm:$0xf]
        %v9291 = vld [vmem:[%s9165 + $0x1f4] sm:$0xf]
        %v9292 = vld [vmem:[%s9165 + $0x1f8] sm:$0xf]
        %v9293 = vld [vmem:[%s9165 + $0x1fc] sm:$0xf]
        %v9422 = vunpack.c.l.b16 %v9166
        %v9423 = vunpack.c.l.b16 %v9167
        %v9424 = vunpack.c.l.b16 %v9168
        %v9425 = vunpack.c.l.b16 %v9169
        %v9426 = vunpack.c.l.b16 %v9170
        %v9427 = vunpack.c.l.b16 %v9171
        %v9428 = vunpack.c.l.b16 %v9172
        %v9429 = vunpack.c.l.b16 %v9173
        %v9430 = vunpack.c.l.b16 %v9174
        %v9431 = vunpack.c.l.b16 %v9175
        %v9432 = vunpack.c.l.b16 %v9176
        %v9433 = vunpack.c.l.b16 %v9177
        %v9434 = vunpack.c.l.b16 %v9178
        %v9435 = vunpack.c.l.b16 %v9179
        %v9436 = vunpack.c.l.b16 %v9180
        %v9437 = vunpack.c.l.b16 %v9181
        %v9438 = vunpack.c.l.b16 %v9182
        %v9439 = vunpack.c.l.b16 %v9183
        %v9440 = vunpack.c.l.b16 %v9184
        %v9441 = vunpack.c.l.b16 %v9185
        %v9442 = vunpack.c.l.b16 %v9186
        %v9443 = vunpack.c.l.b16 %v9187
        %v9444 = vunpack.c.l.b16 %v9188
        %v9445 = vunpack.c.l.b16 %v9189
        %v9446 = vunpack.c.l.b16 %v9190
        %v9447 = vunpack.c.l.b16 %v9191
        %v9448 = vunpack.c.l.b16 %v9192
        %v9449 = vunpack.c.l.b16 %v9193
        %v9450 = vunpack.c.l.b16 %v9194
        %v9451 = vunpack.c.l.b16 %v9195
        %v9452 = vunpack.c.l.b16 %v9196
        %v9453 = vunpack.c.l.b16 %v9197
        %v9454 = vunpack.c.l.b16 %v9198
        %v9455 = vunpack.c.l.b16 %v9199
        %v9456 = vunpack.c.l.b16 %v9200
        %v9457 = vunpack.c.l.b16 %v9201
        %v9458 = vunpack.c.l.b16 %v9202
        %v9459 = vunpack.c.l.b16 %v9203
        %v9460 = vunpack.c.l.b16 %v9204
        %v9461 = vunpack.c.l.b16 %v9205
        %v9462 = vunpack.c.l.b16 %v9206
        %v9463 = vunpack.c.l.b16 %v9207
        %v9464 = vunpack.c.l.b16 %v9208
        %v9465 = vunpack.c.l.b16 %v9209
        %v9466 = vunpack.c.l.b16 %v9210
        %v9467 = vunpack.c.l.b16 %v9211
        %v9468 = vunpack.c.l.b16 %v9212
        %v9469 = vunpack.c.l.b16 %v9213
        %v9470 = vunpack.c.l.b16 %v9214
        %v9471 = vunpack.c.l.b16 %v9215
        %v9472 = vunpack.c.l.b16 %v9216
        %v9473 = vunpack.c.l.b16 %v9217
        %v9474 = vunpack.c.l.b16 %v9218
        %v9475 = vunpack.c.l.b16 %v9219
        %v9476 = vunpack.c.l.b16 %v9220
        %v9477 = vunpack.c.l.b16 %v9221
        %v9478 = vunpack.c.l.b16 %v9222
        %v9479 = vunpack.c.l.b16 %v9223
        %v9480 = vunpack.c.l.b16 %v9224
        %v9481 = vunpack.c.l.b16 %v9225
        %v9482 = vunpack.c.l.b16 %v9226
        %v9483 = vunpack.c.l.b16 %v9227
        %v9484 = vunpack.c.l.b16 %v9228
        %v9485 = vunpack.c.l.b16 %v9229
        %v9486 = vunpack.c.l.b16 %v9230
        %v9487 = vunpack.c.l.b16 %v9231
        %v9488 = vunpack.c.l.b16 %v9232
        %v9489 = vunpack.c.l.b16 %v9233
        %v9490 = vunpack.c.l.b16 %v9234
        %v9491 = vunpack.c.l.b16 %v9235
        %v9492 = vunpack.c.l.b16 %v9236
        %v9493 = vunpack.c.l.b16 %v9237
        %v9494 = vunpack.c.l.b16 %v9238
        %v9495 = vunpack.c.l.b16 %v9239
        %v9496 = vunpack.c.l.b16 %v9240
        %v9497 = vunpack.c.l.b16 %v9241
        %v9498 = vunpack.c.l.b16 %v9242
        %v9499 = vunpack.c.l.b16 %v9243
        %v9500 = vunpack.c.l.b16 %v9244
        %v9501 = vunpack.c.l.b16 %v9245
        %v9502 = vunpack.c.l.b16 %v9246
        %v9503 = vunpack.c.l.b16 %v9247
        %v9504 = vunpack.c.l.b16 %v9248
        %v9505 = vunpack.c.l.b16 %v9249
        %v9506 = vunpack.c.l.b16 %v9250
        %v9507 = vunpack.c.l.b16 %v9251
        %v9508 = vunpack.c.l.b16 %v9252
        %v9509 = vunpack.c.l.b16 %v9253
        %v9510 = vunpack.c.l.b16 %v9254
        %v9511 = vunpack.c.l.b16 %v9255
        %v9512 = vunpack.c.l.b16 %v9256
        %v9513 = vunpack.c.l.b16 %v9257
        %v9514 = vunpack.c.l.b16 %v9258
        %v9515 = vunpack.c.l.b16 %v9259
        %v9516 = vunpack.c.l.b16 %v9260
        %v9517 = vunpack.c.l.b16 %v9261
        %v9518 = vunpack.c.l.b16 %v9262
        %v9519 = vunpack.c.l.b16 %v9263
        %v9520 = vunpack.c.l.b16 %v9264
        %v9521 = vunpack.c.l.b16 %v9265
        %v9522 = vunpack.c.l.b16 %v9266
        %v9523 = vunpack.c.l.b16 %v9267
        %v9524 = vunpack.c.l.b16 %v9268
        %v9525 = vunpack.c.l.b16 %v9269
        %v9526 = vunpack.c.l.b16 %v9270
        %v9527 = vunpack.c.l.b16 %v9271
        %v9528 = vunpack.c.l.b16 %v9272
        %v9529 = vunpack.c.l.b16 %v9273
        %v9530 = vunpack.c.l.b16 %v9274
        %v9531 = vunpack.c.l.b16 %v9275
        %v9532 = vunpack.c.l.b16 %v9276
        %v9533 = vunpack.c.l.b16 %v9277
        %v9534 = vunpack.c.l.b16 %v9278
        %v9535 = vunpack.c.l.b16 %v9279
        %v9536 = vunpack.c.l.b16 %v9280
        %v9537 = vunpack.c.l.b16 %v9281
        %v9538 = vunpack.c.l.b16 %v9282
        %v9539 = vunpack.c.l.b16 %v9283
        %v9540 = vunpack.c.l.b16 %v9284
        %v9541 = vunpack.c.l.b16 %v9285
        %v9542 = vunpack.c.l.b16 %v9286
        %v9543 = vunpack.c.l.b16 %v9287
        %v9544 = vunpack.c.l.b16 %v9288
        %v9545 = vunpack.c.l.b16 %v9289
        %v9546 = vunpack.c.l.b16 %v9290
        %v9547 = vunpack.c.l.b16 %v9291
        %v9548 = vunpack.c.l.b16 %v9292
        %v9549 = vunpack.c.l.b16 %v9293
        %v9550 = vpack.c.b16 %v9423, %v9422
        %v9551 = vpack.c.b16 %v9425, %v9424
        %v9552 = vpack.c.b16 %v9427, %v9426
        %v9553 = vpack.c.b16 %v9429, %v9428
        %v9554 = vpack.c.b16 %v9431, %v9430
        %v9555 = vpack.c.b16 %v9433, %v9432
        %v9556 = vpack.c.b16 %v9435, %v9434
        %v9557 = vpack.c.b16 %v9437, %v9436
        %v9558 = vpack.c.b16 %v9439, %v9438
        %v9559 = vpack.c.b16 %v9441, %v9440
        %v9560 = vpack.c.b16 %v9443, %v9442
        %v9561 = vpack.c.b16 %v9445, %v9444
        %v9562 = vpack.c.b16 %v9447, %v9446
        %v9563 = vpack.c.b16 %v9449, %v9448
        %v9564 = vpack.c.b16 %v9451, %v9450
        %v9565 = vpack.c.b16 %v9453, %v9452
        %v9566 = vpack.c.b16 %v9455, %v9454
        %v9567 = vpack.c.b16 %v9457, %v9456
        %v9568 = vpack.c.b16 %v9459, %v9458
        %v9569 = vpack.c.b16 %v9461, %v9460
        %v9570 = vpack.c.b16 %v9463, %v9462
        %v9571 = vpack.c.b16 %v9465, %v9464
        %v9572 = vpack.c.b16 %v9467, %v9466
        %v9573 = vpack.c.b16 %v9469, %v9468
        %v9574 = vpack.c.b16 %v9471, %v9470
        %v9575 = vpack.c.b16 %v9473, %v9472
        %v9576 = vpack.c.b16 %v9475, %v9474
        %v9577 = vpack.c.b16 %v9477, %v9476
        %v9578 = vpack.c.b16 %v9479, %v9478
        %v9579 = vpack.c.b16 %v9481, %v9480
        %v9580 = vpack.c.b16 %v9483, %v9482
        %v9581 = vpack.c.b16 %v9485, %v9484
        %v9582 = vpack.c.b16 %v9487, %v9486
        %v9583 = vpack.c.b16 %v9489, %v9488
        %v9584 = vpack.c.b16 %v9491, %v9490
        %v9585 = vpack.c.b16 %v9493, %v9492
        %v9586 = vpack.c.b16 %v9495, %v9494
        %v9587 = vpack.c.b16 %v9497, %v9496
        %v9588 = vpack.c.b16 %v9499, %v9498
        %v9589 = vpack.c.b16 %v9501, %v9500
        %v9590 = vpack.c.b16 %v9503, %v9502
        %v9591 = vpack.c.b16 %v9505, %v9504
        %v9592 = vpack.c.b16 %v9507, %v9506
        %v9593 = vpack.c.b16 %v9509, %v9508
        %v9594 = vpack.c.b16 %v9511, %v9510
        %v9595 = vpack.c.b16 %v9513, %v9512
        %v9596 = vpack.c.b16 %v9515, %v9514
        %v9597 = vpack.c.b16 %v9517, %v9516
        %v9598 = vpack.c.b16 %v9519, %v9518
        %v9599 = vpack.c.b16 %v9521, %v9520
        %v9600 = vpack.c.b16 %v9523, %v9522
        %v9601 = vpack.c.b16 %v9525, %v9524
        %v9602 = vpack.c.b16 %v9527, %v9526
        %v9603 = vpack.c.b16 %v9529, %v9528
        %v9604 = vpack.c.b16 %v9531, %v9530
        %v9605 = vpack.c.b16 %v9533, %v9532
        %v9606 = vpack.c.b16 %v9535, %v9534
        %v9607 = vpack.c.b16 %v9537, %v9536
        %v9608 = vpack.c.b16 %v9539, %v9538
        %v9609 = vpack.c.b16 %v9541, %v9540
        %v9610 = vpack.c.b16 %v9543, %v9542
        %v9611 = vpack.c.b16 %v9545, %v9544
        %v9612 = vpack.c.b16 %v9547, %v9546
        %v9613 = vpack.c.b16 %v9549, %v9548
        %9678 = vmatprep.subr.bf16.mxu0 0
        %9679 = vmatpush1.bf16.msra.mxu0 %v9550
        %9680 = vmatprep.subr.bf16.mxu0 0
        %9681 = vmatpush1.bf16.msra.mxu0 %v9551
        %9682 = vmatprep.subr.bf16.mxu0 0
        %9683 = vmatpush1.bf16.msra.mxu0 %v9552
        %9684 = vmatprep.subr.bf16.mxu0 0
        %9685 = vmatpush1.bf16.msra.mxu0 %v9553
        %9686 = vmatprep.subr.bf16.mxu0 0
        %9687 = vmatpush1.bf16.msra.mxu0 %v9554
        %9688 = vmatprep.subr.bf16.mxu0 0
        %9689 = vmatpush1.bf16.msra.mxu0 %v9555
        %9690 = vmatprep.subr.bf16.mxu0 0
        %9691 = vmatpush1.bf16.msra.mxu0 %v9556
        %9692 = vmatprep.subr.bf16.mxu0 0
        %9693 = vmatpush1.bf16.msra.mxu0 %v9557
        %9694 = vmatprep.subr.bf16.mxu0 0
        %9695 = vmatpush1.bf16.msra.mxu0 %v9558
        %9696 = vmatprep.subr.bf16.mxu0 0
        %9697 = vmatpush1.bf16.msra.mxu0 %v9559
        %9698 = vmatprep.subr.bf16.mxu0 0
        %9699 = vmatpush1.bf16.msra.mxu0 %v9560
        %9700 = vmatprep.subr.bf16.mxu0 0
        %9701 = vmatpush1.bf16.msra.mxu0 %v9561
        %9702 = vmatprep.subr.bf16.mxu0 0
        %9703 = vmatpush1.bf16.msra.mxu0 %v9562
        %9704 = vmatprep.subr.bf16.mxu0 0
        %9705 = vmatpush1.bf16.msra.mxu0 %v9563
        %9706 = vmatprep.subr.bf16.mxu0 0
        %9707 = vmatpush1.bf16.msra.mxu0 %v9564
        %9708 = vmatprep.subr.bf16.mxu0 0
        %9709 = vmatpush1.bf16.msra.mxu0 %v9565
        %9710 = vmatprep.mubr.bf16.mxu0 %v9158
        %9711 = vmatmul.mubr.bf16.gmra.mrb[0].mxu0 %v9157
        %v9712 = vpop.f32.mrb[0].mxu0
        %v9713 = vadd.f32 0.0, %v9712
        %v9714 = vpop.f32.mrb[0].mxu0
        %v9715 = vpop.f32.mrb[0].mxu0
        %v9716 = vpop.f32.mrb[0].mxu0
        %9717 = vdwg.mxu0
        %9718 = vmatprep.subr.bf16.mxu0 0
        %9719 = vmatpush1.bf16.msra.mxu0 %v9566
        %9720 = vmatprep.subr.bf16.mxu0 0
        %9721 = vmatpush1.bf16.msra.mxu0 %v9567
        %9722 = vmatprep.subr.bf16.mxu0 0
        %9723 = vmatpush1.bf16.msra.mxu0 %v9568
        %9724 = vmatprep.subr.bf16.mxu0 0
        %9725 = vmatpush1.bf16.msra.mxu0 %v9569
        %9726 = vmatprep.subr.bf16.mxu0 0
        %9727 = vmatpush1.bf16.msra.mxu0 %v9570
        %9728 = vmatprep.subr.bf16.mxu0 0
        %9729 = vmatpush1.bf16.msra.mxu0 %v9571
        %9730 = vmatprep.subr.bf16.mxu0 0
        %9731 = vmatpush1.bf16.msra.mxu0 %v9572
        %9732 = vmatprep.subr.bf16.mxu0 0
        %9733 = vmatpush1.bf16.msra.mxu0 %v9573
        %9734 = vmatprep.subr.bf16.mxu0 0
        %9735 = vmatpush1.bf16.msra.mxu0 %v9574
        %9736 = vmatprep.subr.bf16.mxu0 0
        %9737 = vmatpush1.bf16.msra.mxu0 %v9575
        %9738 = vmatprep.subr.bf16.mxu0 0
        %9739 = vmatpush1.bf16.msra.mxu0 %v9576
        %9740 = vmatprep.subr.bf16.mxu0 0
        %9741 = vmatpush1.bf16.msra.mxu0 %v9577
        %9742 = vmatprep.subr.bf16.mxu0 0
        %9743 = vmatpush1.bf16.msra.mxu0 %v9578
        %9744 = vmatprep.subr.bf16.mxu0 0
        %9745 = vmatpush1.bf16.msra.mxu0 %v9579
        %9746 = vmatprep.subr.bf16.mxu0 0
        %9747 = vmatpush1.bf16.msra.mxu0 %v9580
        %9748 = vmatprep.subr.bf16.mxu0 0
        %9749 = vmatpush1.bf16.msra.mxu0 %v9581
        %9750 = vmatprep.mubr.bf16.mxu0 %v9160
        %9751 = vmatmul.mubr.bf16.gmra.mrb[0].mxu0 %v9159
        %v9752 = vpop.f32.mrb[0].mxu0
        %v9753 = vadd.f32 %v9713, %v9752
        %v9754 = vpop.f32.mrb[0].mxu0
        %v9755 = vpop.f32.mrb[0].mxu0
        %v9756 = vpop.f32.mrb[0].mxu0
        %9757 = vdwg.mxu0
        %9758 = vmatprep.subr.bf16.mxu0 0
        %9759 = vmatpush1.bf16.msra.mxu0 %v9582
        %9760 = vmatprep.subr.bf16.mxu0 0
        %9761 = vmatpush1.bf16.msra.mxu0 %v9583
        %9762 = vmatprep.subr.bf16.mxu0 0
        %9763 = vmatpush1.bf16.msra.mxu0 %v9584
        %9764 = vmatprep.subr.bf16.mxu0 0
        %9765 = vmatpush1.bf16.msra.mxu0 %v9585
        %9766 = vmatprep.subr.bf16.mxu0 0
        %9767 = vmatpush1.bf16.msra.mxu0 %v9586
        %9768 = vmatprep.subr.bf16.mxu0 0
        %9769 = vmatpush1.bf16.msra.mxu0 %v9587
        %9770 = vmatprep.subr.bf16.mxu0 0
        %9771 = vmatpush1.bf16.msra.mxu0 %v9588
        %9772 = vmatprep.subr.bf16.mxu0 0
        %9773 = vmatpush1.bf16.msra.mxu0 %v9589
        %9774 = vmatprep.subr.bf16.mxu0 0
        %9775 = vmatpush1.bf16.msra.mxu0 %v9590
        %9776 = vmatprep.subr.bf16.mxu0 0
        %9777 = vmatpush1.bf16.msra.mxu0 %v9591
        %9778 = vmatprep.subr.bf16.mxu0 0
        %9779 = vmatpush1.bf16.msra.mxu0 %v9592
        %9780 = vmatprep.subr.bf16.mxu0 0
        %9781 = vmatpush1.bf16.msra.mxu0 %v9593
        %9782 = vmatprep.subr.bf16.mxu0 0
        %9783 = vmatpush1.bf16.msra.mxu0 %v9594
        %9784 = vmatprep.subr.bf16.mxu0 0
        %9785 = vmatpush1.bf16.msra.mxu0 %v9595
        %9786 = vmatprep.subr.bf16.mxu0 0
        %9787 = vmatpush1.bf16.msra.mxu0 %v9596
        %9788 = vmatprep.subr.bf16.mxu0 0
        %9789 = vmatpush1.bf16.msra.mxu0 %v9597
        %9790 = vmatprep.mubr.bf16.mxu0 %v9162
        %9791 = vmatmul.mubr.bf16.gmra.mrb[0].mxu0 %v9161
        %v9792 = vpop.f32.mrb[0].mxu0
        %v9793 = vadd.f32 %v9753, %v9792
        %v9794 = vpop.f32.mrb[0].mxu0
        %v9795 = vpop.f32.mrb[0].mxu0
        %v9796 = vpop.f32.mrb[0].mxu0
        %9797 = vdwg.mxu0
        %9798 = vmatprep.subr.bf16.mxu0 0
        %9799 = vmatpush1.bf16.msra.mxu0 %v9598
        %9800 = vmatprep.subr.bf16.mxu0 0
        %9801 = vmatpush1.bf16.msra.mxu0 %v9599
        %9802 = vmatprep.subr.bf16.mxu0 0
        %9803 = vmatpush1.bf16.msra.mxu0 %v9600
        %9804 = vmatprep.subr.bf16.mxu0 0
        %9805 = vmatpush1.bf16.msra.mxu0 %v9601
        %9806 = vmatprep.subr.bf16.mxu0 0
        %9807 = vmatpush1.bf16.msra.mxu0 %v9602
        %9808 = vmatprep.subr.bf16.mxu0 0
        %9809 = vmatpush1.bf16.msra.mxu0 %v9603
        %9810 = vmatprep.subr.bf16.mxu0 0
        %9811 = vmatpush1.bf16.msra.mxu0 %v9604
        %9812 = vmatprep.subr.bf16.mxu0 0
        %9813 = vmatpush1.bf16.msra.mxu0 %v9605
        %9814 = vmatprep.subr.bf16.mxu0 0
        %9815 = vmatpush1.bf16.msra.mxu0 %v9606
        %9816 = vmatprep.subr.bf16.mxu0 0
        %9817 = vmatpush1.bf16.msra.mxu0 %v9607
        %9818 = vmatprep.subr.bf16.mxu0 0
        %9819 = vmatpush1.bf16.msra.mxu0 %v9608
        %9820 = vmatprep.subr.bf16.mxu0 0
        %9821 = vmatpush1.bf16.msra.mxu0 %v9609
        %9822 = vmatprep.subr.bf16.mxu0 0
        %9823 = vmatpush1.bf16.msra.mxu0 %v9610
        %9824 = vmatprep.subr.bf16.mxu0 0
        %9825 = vmatpush1.bf16.msra.mxu0 %v9611
        %9826 = vmatprep.subr.bf16.mxu0 0
        %9827 = vmatpush1.bf16.msra.mxu0 %v9612
        %9828 = vmatprep.subr.bf16.mxu0 0
        %9829 = vmatpush1.bf16.msra.mxu0 %v9613
        %9830 = vmatprep.mubr.bf16.mxu0 %v9164
        %9831 = vmatmul.mubr.bf16.gmra.mrb[0].mxu0 %v9163
        %v9832 = vpop.f32.mrb[0].mxu0
        %v9833 = vadd.f32 %v9793, %v9832
        %v9834 = vpop.f32.mrb[0].mxu0
        %v9835 = vpop.f32.mrb[0].mxu0
        %v9836 = vpop.f32.mrb[0].mxu0
        %9837 = vdwg.mxu0
        %v9838 = vadd.f32 %v9147, %v9833
        %v9839 = vld [vmem:[%s4] sm:$0x1]
        %v9841 = vlaneseq
        %v9842 = vshrl.u32 %v9841, 7
        %v9843 = vsub.s32 0, %v9842
        %v9844 = vrot.slane %v9839, %v9843
        %v9846 = vadd.f32 %v9838, %v9844
        %vm9847 = vcmask 80896
        %9848 = vst.msk [vmem:[%s244] sm:$0xff] %vm9847, %v9846
        %s9849 = sand.u32 %s139, 1
        %s9850 = scalar_lea.sflag [#allocation4], %s9849
        %s9851 = sand.u32 %s139, 1
        %s9852 = smul.addr %s9851, 8
        %s9853 = scalar_lea.vmem [#allocation8], %s9852
        // Predicated region
        $region49: #{study_net_forward.1} parent=39 // pred_check
          %p9854 = pneg %p149
        $region50: #{study_net_forward.1} parent=39 // pred_check_branch
          %9856 = sbr.rel (%p9854) target = $region52
        $region51: #{study_net_forward.1} parent=39 // pred_region
          %s9858 = ssub.s32 128, 128
          %9859 = vsyncadd %s9850, %s9858
          %s9860 = smul.addr %s21, 128
          %s9861 = scalar_lea.hbm %s5, %s9860
          %s9863 = sshll.u32 %s9853, 4
          %s9864 = int_to_ptr.vmem [resolvable:$true] %s9863
          %9866 = dma.vmem_to_hbm [thread:$0]  %s9864, 128, %s9861, %s9850
        $region52: #{study_net_forward.1} parent=39 // pred_fallthru
          _
      $region40: #{study_net_forward.1} parent=5 // pred_fallthru
        _
      %p9867 = scmp.le.s32.totalorder 2, %s16
      // Predicated region
      $region53: #{study_net_forward.1} parent=5 // pred_check
        %p9868 = pneg %p9867
      $region54: #{study_net_forward.1} parent=5 // pred_check_branch
        %9870 = sbr.rel (%p9868) target = $region56
      $region55: #{study_net_forward.1} parent=5 // pred_region
        %s9871 = ssub.s32 %s16, 2
        // Predicated region
        $region57: #{study_net_forward.1} parent=55 // pred_check
          %p9872 = pneg %p155
        $region58: #{study_net_forward.1} parent=55 // pred_check_branch
          %9874 = sbr.rel (%p9872) target = $region60
        $region59: #{study_net_forward.1} parent=55 // pred_region
          %s9875 = sand.u32 %s140, 1
          %s9876 = scalar_lea.sflag [#allocation4], %s9875
          %s9877 = sand.u32 %s140, 1
          %s9878 = smul.addr %s9877, 8
          %s9879 = scalar_lea.vmem [#allocation8], %s9878
          %9880 = dma.done %s9876, 128
        $region60: #{study_net_forward.1} parent=55 // pred_fallthru
          _
      $region56: #{study_net_forward.1} parent=5 // pred_fallthru
        _
    $region6: #{study_net_forward.1} parent=1 // loop_footer
      %s20 = sadd.s32 1, %s16
    $region7: #{study_net_forward.1} parent=1 // loop_footer_branch
      %15 = sbr.rel target = $region3
    $region8: #{study_net_forward.1} parent=1 // loop_exit
      _
    %9881 = vsyncpa [#allocation4], 1
    %s9882 = scalar_lea.sflag [#allocation4], 1
    %9883 = vsyncpa %s9882, 1
    %9884 = vsyncpa [#allocation5], 1
    %s9885 = scalar_lea.sflag [#allocation5], 1
    %9886 = vsyncpa %s9885, 1
    %9887 = vsyncpa [#allocation7], 1

</llo_original>
